<compile_context>
chip_gen: v5e
topology: v5e:2x2
jax: 0.10.0
libtpu: 0.0.40
codegen_flags: <defaults>
</compile_context>

<pallas_src>
import jax
import jax.numpy as jnp
from jax.experimental import pallas as pl
from jax.experimental.pallas import tpu as pltpu


def _upsample2x_conv3x3_kernel(x_ref, w_ref, b_ref, o_ref):
    """Fused nearest-2x upsample + 3x3 conv for one (batch, row-tile) grid step.

    x_ref: (1, H+2, W+2, C)       zero-padded bf16 input image (whole image, reused
                                  across row tiles of the same batch element)
    w_ref: (4, 4, C, Cout)        bf16 phase weights; [2*pi+pj, 2*a+b] is the (C, Cout)
                                  matrix applied to source pixel (r+pi+a-1, c+pj+b-1)
                                  for output pixel (2r+pi, 2c+pj)
    b_ref: (1, Cout)              f32 bias
    o_ref: (1, TR, 2, W, 2*Cout)  f32 output tile; [0, k, pi, w, pj*Cout+co] is the
                                  output pixel (2*(r0+k)+pi, 2*w+pj, co)
    """
    tr = o_ref.shape[1]
    w_out = o_ref.shape[3]
    c_in = x_ref.shape[3]
    c_out = b_ref.shape[1]

    t = pl.program_id(1)
    r0 = t * tr                      # first padded input row of this tile
    if tr % 8 == 0:
        r0 = pl.multiple_of(r0, 8)

    bias = b_ref[...]                # (1, Cout) f32, hoisted out of the tap loops

    for pi in range(2):
        for pj in range(2):
            acc = jnp.zeros((tr * w_out, c_out), jnp.float32)
            for a in range(2):
                for bb in range(2):
                    # (TR, W, C) window of the padded original-resolution image.
                    patch = x_ref[0, pl.ds(r0 + pi + a, tr), pl.ds(pj + bb, w_out), :]
                    acc = acc + jnp.dot(
                        patch.reshape(tr * w_out, c_in),
                        w_ref[2 * pi + pj, 2 * a + bb, :, :],
                        preferred_element_type=jnp.float32)
            acc = acc + bias
            o_ref[0, :, pi, :, pl.ds(pj * c_out, c_out)] = acc.reshape(tr, w_out, c_out)


def _phase_weights(weight):
    """Fold the 3x3 conv taps through the nearest-2x upsample.

    weight: (Cout, C, 3, 3) PyTorch layout.
    Returns (4, 4, C, Cout): [2*pi+pj, 2*a+b] is applied to source pixel offset
    (pi + a - 1, pj + b - 1) for output parity (pi, pj).
    """
    c_out, c_in = weight.shape[0], weight.shape[1]
    w_t = jnp.transpose(weight.astype(jnp.float32), (2, 3, 1, 0))   # (3, 3, C, Cout)
    zero = jnp.zeros((c_in, c_out), jnp.float32)
    phases = []
    for pi in range(2):
        for pj in range(2):
            taps = [[zero, zero], [zero, zero]]
            for dh in range(3):
                a = (pi + dh - 1) // 2 + 1 - pi        # which of the 2 source rows
                for dw in range(3):
                    b = (pj + dw - 1) // 2 + 1 - pj    # which of the 2 source cols
                    taps[a][b] = taps[a][b] + w_t[dh, dw]
            phases.append(jnp.stack([taps[0][0], taps[0][1], taps[1][0], taps[1][1]], 0))
    return jnp.stack(phases, axis=0)                   # (4, 4, C, Cout)


def _pick_tile_rows(H, W, Cout, budget_bytes=4 * 1024 * 1024):
    # Per original-resolution row, per-step VMEM is dominated by the f32 output tile
    # (2 rows x 2W x Cout, double-buffered by the pipeline) plus the f32 accumulator.
    per_row = 2 * W * 2 * Cout * 4 + W * Cout * 4
    tr = int(max(1, min(H, budget_bytes // per_row)))
    while H % tr != 0:            # keep the grid exact (no partial / masked tiles)
        tr -= 1
    return tr


def upsample_forward(x_nchw, weight=None, bias=None, *, use_conv=True,
                     tile_rows=None, out_format="NCHW"):
    """Pallas equivalent of Upsample.forward (dims=2). PyTorch NCHW layouts in/out."""
    B, C, H, W = x_nchw.shape
    if not use_conv:
        # Pure nearest-neighbour 2x upsample: data movement only, no kernel needed.
        return jnp.repeat(jnp.repeat(x_nchw, 2, axis=2), 2, axis=3)
    # TODO(synk): only the dims=2 path of Upsample is implemented (dims=1/3 unused here).

    Cout, Cin = weight.shape[0], weight.shape[1]
    assert Cin == C, (Cin, C)

    # NHWC, bf16 for the MXU, zero halo of 1 (reproduces the conv's padding=1 on the
    # upsampled image exactly under the phase decomposition).
    x = jnp.transpose(x_nchw, (0, 2, 3, 1)).astype(jnp.bfloat16)
    xp = jnp.pad(x, ((0, 0), (1, 1), (1, 1), (0, 0)))            # (B, H+2, W+2, C)

    w_taps = _phase_weights(weight).astype(jnp.bfloat16)         # (4, 4, C, Cout)
    b2 = bias.reshape(1, Cout).astype(jnp.float32)

    tr = tile_rows if tile_rows is not None else _pick_tile_rows(H, W, Cout)
    assert H % tr == 0, (H, tr)
    nt = H // tr

    in_bytes = B * (H + 2) * (W + 2) * C * 2
    w_bytes = 16 * C * Cout * 2
    out_bytes = B * H * 2 * W * 2 * Cout * 4
    out_tile_bytes = tr * 2 * W * 2 * Cout * 4
    # Double-buffered input / weights / output tile + f32 accumulator + headroom; kept
    # modest so it fits v7x's 64 MiB physical VMEM (and v5e's smaller default) easily.
    est = (2 * ((H + 2) * (W + 2) * C * 2 + w_bytes + out_tile_bytes)
           + 4 * tr * W * Cout * 4)
    vmem_limit = int(min(max(est + (4 << 20), 24 << 20), 48 << 20))

    out5 = pl.pallas_call(
        _upsample2x_conv3x3_kernel,
        out_shape=jax.ShapeDtypeStruct((B, H, 2, W, 2 * Cout), jnp.float32),
        grid=(B, nt),
        in_specs=[
            pl.BlockSpec((1, H + 2, W + 2, C), lambda b, t: (b, 0, 0, 0)),
            pl.BlockSpec((4, 4, C, Cout), lambda b, t: (0, 0, 0, 0)),
            pl.BlockSpec((1, Cout), lambda b, t: (0, 0)),
        ],
        out_specs=pl.BlockSpec((1, tr, 2, W, 2 * Cout), lambda b, t: (b, t, 0, 0, 0)),
        compiler_params=pltpu.CompilerParams(
            dimension_semantics=("parallel", "parallel"),
            vmem_limit_bytes=vmem_limit),
        cost_estimate=pl.CostEstimate(
            flops=2 * 16 * B * H * W * C * Cout,
            transcendentals=0,
            bytes_accessed=in_bytes + w_bytes + 4 * Cout + out_bytes),
    )(xp, w_taps, b2)

    # (B, H, 2, W, 2*Cout) is exactly NHWC (B, 2H, 2W, Cout) in row-major order.
    out_nhwc = out5.reshape(B, 2 * H, 2 * W, Cout)               # metadata-only reshape
    if out_format == "NHWC":
        return out_nhwc
    return jnp.transpose(out_nhwc, (0, 3, 1, 2))                 # PyTorch-facing NCHW


if __name__ == "__main__":
    key = jax.random.PRNGKey(0)
    k1, k2, k3 = jax.random.split(key, 3)

    # Upsample(channels=8, use_conv=True, dims=2, out_channels=None)
    B, C, H, W = 2, 8, 16, 16
    Cout = C
    x = jax.random.normal(k1, (B, C, H, W), jnp.float32)
    weight = jax.random.normal(k2, (Cout, C, 3, 3), jnp.float32) * 0.1
    bias = jax.random.normal(k3, (Cout,), jnp.float32) * 0.1

    # f32 reference: nearest 2x upsample + Conv2d(3x3, padding=1) + bias.
    x_up = jnp.repeat(jnp.repeat(x, 2, axis=2), 2, axis=3)
    ref = jax.lax.conv_general_dilated(
        x_up, weight, window_strides=(1, 1), padding=((1, 1), (1, 1)),
        dimension_numbers=("NCHW", "OIHW", "NCHW")) + bias[None, :, None, None]

    # Run with the auto-picked row tile (single tile here) and with a forced
    # multi-tile grid, so both the t==0 and t>0 index paths are exercised.
    for forced_tr in (None, 4):
        out = jax.block_until_ready(
            upsample_forward(x, weight, bias, use_conv=True, tile_rows=forced_tr))
        assert out.shape == (B, Cout, 2 * H, 2 * W), out.shape
        err = float(jnp.max(jnp.abs(out - ref)))
        assert err < 5e-2, err      # bf16 MXU inputs, f32 accumulation

    print("KERNEL_OK")
</pallas_src>

<mosaic_0001>
module attributes {stable_mosaic.version = 11 : i64} {
  func.func @_upsample2x_conv3x3_kernel(%arg0: i32, %arg1: i32, %arg2: memref<1x18x18x8xbf16, #tpu.memory_space<vmem>>, %arg3: memref<4x4x8x8xbf16, #tpu.memory_space<vmem>>, %arg4: memref<1x8xf32, #tpu.memory_space<vmem>>, %arg5: memref<1x16x2x16x16xf32, #tpu.memory_space<vmem>>) attributes {dimension_semantics = [#tpu.dimension_semantics<parallel>, #tpu.dimension_semantics<parallel>], iteration_bounds = array<i64: 2, 1>, scalar_prefetch = 0 : i64, scratch_operands = 0 : i64, tpu.core_type = #tpu.core_type<tc>, window_params = [{transform_indices = @transform_0, window_bounds = array<i64: 1, 18, 18, 8>}, {pipeline_mode = #tpu.pipeline_mode<synchronous>, transform_indices = @transform_1, window_bounds = array<i64: 4, 4, 8, 8>}, {pipeline_mode = #tpu.pipeline_mode<synchronous>, transform_indices = @transform_2, window_bounds = array<i64: 1, 8>}, {transform_indices = @transform_3, window_bounds = array<i64: 1, 16, 2, 16, 16>}]} {
    %c16_i32 = arith.constant 16 : i32
    %0 = arith.muli %arg1, %c16_i32 : i32
    %1 = tpu.assume_multiple %0, 8 : i32
    %c0 = arith.constant 0 : index
    %c0_0 = arith.constant 0 : index
    %2 = vector.load %arg4[%c0, %c0_0] : memref<1x8xf32, #tpu.memory_space<vmem>>, vector<1x8xf32>
    %cst = arith.constant 0.000000e+00 : f32
    %3 = vector.broadcast %cst : f32 to vector<256x8xf32>
    %c0_i32 = arith.constant 0 : i32
    %4 = arith.addi %1, %c0_i32 : i32
    %c0_i32_1 = arith.constant 0 : i32
    %5 = arith.addi %4, %c0_i32_1 : i32
    %c0_2 = arith.constant 0 : index
    %6 = arith.index_cast %5 : i32 to index
    %c0_3 = arith.constant 0 : index
    %c0_4 = arith.constant 0 : index
    %7 = vector.load %arg2[%c0_2, %6, %c0_3, %c0_4] : memref<1x18x18x8xbf16, #tpu.memory_space<vmem>>, vector<1x16x16x8xbf16>
    %8 = vector.shape_cast %7 : vector<1x16x16x8xbf16> to vector<16x16x8xbf16>
    %9 = vector.shape_cast %8 : vector<16x16x8xbf16> to vector<256x8xbf16>
    %c0_5 = arith.constant 0 : index
    %c0_6 = arith.constant 0 : index
    %c0_7 = arith.constant 0 : index
    %c0_8 = arith.constant 0 : index
    %10 = vector.load %arg3[%c0_5, %c0_6, %c0_7, %c0_8] : memref<4x4x8x8xbf16, #tpu.memory_space<vmem>>, vector<1x1x8x8xbf16>
    %11 = vector.shape_cast %10 : vector<1x1x8x8xbf16> to vector<8x8xbf16>
    %cst_9 = arith.constant dense<0.000000e+00> : vector<256x8xf32>
    %12 = tpu.matmul %9, %11, %cst_9 {dimension_numbers = #tpu.dot_dimension_numbers<[1], [0], [0], [1], [0, 0, 1, 1], [], []>} : vector<256x8xbf16>, vector<8x8xbf16>, vector<256x8xf32> -> vector<256x8xf32>
    %13 = arith.addf %3, %12 : vector<256x8xf32>
    %c0_i32_10 = arith.constant 0 : i32
    %14 = arith.addi %1, %c0_i32_10 : i32
    %c0_i32_11 = arith.constant 0 : i32
    %15 = arith.addi %14, %c0_i32_11 : i32
    %c0_12 = arith.constant 0 : index
    %16 = arith.index_cast %15 : i32 to index
    %c1 = arith.constant 1 : index
    %c0_13 = arith.constant 0 : index
    %17 = vector.load %arg2[%c0_12, %16, %c1, %c0_13] : memref<1x18x18x8xbf16, #tpu.memory_space<vmem>>, vector<1x16x16x8xbf16>
    %18 = vector.shape_cast %17 : vector<1x16x16x8xbf16> to vector<16x16x8xbf16>
    %19 = vector.shape_cast %18 : vector<16x16x8xbf16> to vector<256x8xbf16>
    %c0_14 = arith.constant 0 : index
    %c1_15 = arith.constant 1 : index
    %c0_16 = arith.constant 0 : index
    %c0_17 = arith.constant 0 : index
    %20 = vector.load %arg3[%c0_14, %c1_15, %c0_16, %c0_17] : memref<4x4x8x8xbf16, #tpu.memory_space<vmem>>, vector<1x1x8x8xbf16>
    %21 = vector.shape_cast %20 : vector<1x1x8x8xbf16> to vector<8x8xbf16>
    %cst_18 = arith.constant dense<0.000000e+00> : vector<256x8xf32>
    %22 = tpu.matmul %19, %21, %cst_18 {dimension_numbers = #tpu.dot_dimension_numbers<[1], [0], [0], [1], [0, 0, 1, 1], [], []>} : vector<256x8xbf16>, vector<8x8xbf16>, vector<256x8xf32> -> vector<256x8xf32>
    %23 = arith.addf %13, %22 : vector<256x8xf32>
    %c0_i32_19 = arith.constant 0 : i32
    %24 = arith.addi %1, %c0_i32_19 : i32
    %c1_i32 = arith.constant 1 : i32
    %25 = arith.addi %24, %c1_i32 : i32
    %c0_20 = arith.constant 0 : index
    %26 = arith.index_cast %25 : i32 to index
    %c0_21 = arith.constant 0 : index
    %c0_22 = arith.constant 0 : index
    %27 = vector.load %arg2[%c0_20, %26, %c0_21, %c0_22] : memref<1x18x18x8xbf16, #tpu.memory_space<vmem>>, vector<1x16x16x8xbf16>
    %28 = vector.shape_cast %27 : vector<1x16x16x8xbf16> to vector<16x16x8xbf16>
    %29 = vector.shape_cast %28 : vector<16x16x8xbf16> to vector<256x8xbf16>
    %c0_23 = arith.constant 0 : index
    %c2 = arith.constant 2 : index
    %c0_24 = arith.constant 0 : index
    %c0_25 = arith.constant 0 : index
    %30 = vector.load %arg3[%c0_23, %c2, %c0_24, %c0_25] : memref<4x4x8x8xbf16, #tpu.memory_space<vmem>>, vector<1x1x8x8xbf16>
    %31 = vector.shape_cast %30 : vector<1x1x8x8xbf16> to vector<8x8xbf16>
    %cst_26 = arith.constant dense<0.000000e+00> : vector<256x8xf32>
    %32 = tpu.matmul %29, %31, %cst_26 {dimension_numbers = #tpu.dot_dimension_numbers<[1], [0], [0], [1], [0, 0, 1, 1], [], []>} : vector<256x8xbf16>, vector<8x8xbf16>, vector<256x8xf32> -> vector<256x8xf32>
    %33 = arith.addf %23, %32 : vector<256x8xf32>
    %c0_i32_27 = arith.constant 0 : i32
    %34 = arith.addi %1, %c0_i32_27 : i32
    %c1_i32_28 = arith.constant 1 : i32
    %35 = arith.addi %34, %c1_i32_28 : i32
    %c0_29 = arith.constant 0 : index
    %36 = arith.index_cast %35 : i32 to index
    %c1_30 = arith.constant 1 : index
    %c0_31 = arith.constant 0 : index
    %37 = vector.load %arg2[%c0_29, %36, %c1_30, %c0_31] : memref<1x18x18x8xbf16, #tpu.memory_space<vmem>>, vector<1x16x16x8xbf16>
    %38 = vector.shape_cast %37 : vector<1x16x16x8xbf16> to vector<16x16x8xbf16>
    %39 = vector.shape_cast %38 : vector<16x16x8xbf16> to vector<256x8xbf16>
    %c0_32 = arith.constant 0 : index
    %c3 = arith.constant 3 : index
    %c0_33 = arith.constant 0 : index
    %c0_34 = arith.constant 0 : index
    %40 = vector.load %arg3[%c0_32, %c3, %c0_33, %c0_34] : memref<4x4x8x8xbf16, #tpu.memory_space<vmem>>, vector<1x1x8x8xbf16>
    %41 = vector.shape_cast %40 : vector<1x1x8x8xbf16> to vector<8x8xbf16>
    %cst_35 = arith.constant dense<0.000000e+00> : vector<256x8xf32>
    %42 = tpu.matmul %39, %41, %cst_35 {dimension_numbers = #tpu.dot_dimension_numbers<[1], [0], [0], [1], [0, 0, 1, 1], [], []>} : vector<256x8xbf16>, vector<8x8xbf16>, vector<256x8xf32> -> vector<256x8xf32>
    %43 = arith.addf %33, %42 : vector<256x8xf32>
    %44 = vector.broadcast %2 : vector<1x8xf32> to vector<256x8xf32>
    %45 = arith.addf %43, %44 : vector<256x8xf32>
    %46 = vector.shape_cast %45 : vector<256x8xf32> to vector<16x16x8xf32>
    %c0_36 = arith.constant 0 : index
    %c0_37 = arith.constant 0 : index
    %c0_38 = arith.constant 0 : index
    %c0_39 = arith.constant 0 : index
    %c0_40 = arith.constant 0 : index
    %47 = vector.load %arg5[%c0_36, %c0_37, %c0_38, %c0_39, %c0_40] : memref<1x16x2x16x16xf32, #tpu.memory_space<vmem>>, vector<1x16x1x16x8xf32>
    %48 = vector.shape_cast %47 : vector<1x16x1x16x8xf32> to vector<16x16x8xf32>
    %49 = vector.shape_cast %46 : vector<16x16x8xf32> to vector<1x16x1x16x8xf32>
    tpu.vector_store %arg5[%c0_36, %c0_37, %c0_38, %c0_39, %c0_40], %49 {strides = array<i32>} : memref<1x16x2x16x16xf32, #tpu.memory_space<vmem>>, vector<1x16x1x16x8xf32>,
    %cst_41 = arith.constant 0.000000e+00 : f32
    %50 = vector.broadcast %cst_41 : f32 to vector<256x8xf32>
    %c0_i32_42 = arith.constant 0 : i32
    %51 = arith.addi %1, %c0_i32_42 : i32
    %c0_i32_43 = arith.constant 0 : i32
    %52 = arith.addi %51, %c0_i32_43 : i32
    %c0_44 = arith.constant 0 : index
    %53 = arith.index_cast %52 : i32 to index
    %c1_45 = arith.constant 1 : index
    %c0_46 = arith.constant 0 : index
    %54 = vector.load %arg2[%c0_44, %53, %c1_45, %c0_46] : memref<1x18x18x8xbf16, #tpu.memory_space<vmem>>, vector<1x16x16x8xbf16>
    %55 = vector.shape_cast %54 : vector<1x16x16x8xbf16> to vector<16x16x8xbf16>
    %56 = vector.shape_cast %55 : vector<16x16x8xbf16> to vector<256x8xbf16>
    %c1_47 = arith.constant 1 : index
    %c0_48 = arith.constant 0 : index
    %c0_49 = arith.constant 0 : index
    %c0_50 = arith.constant 0 : index
    %57 = vector.load %arg3[%c1_47, %c0_48, %c0_49, %c0_50] : memref<4x4x8x8xbf16, #tpu.memory_space<vmem>>, vector<1x1x8x8xbf16>
    %58 = vector.shape_cast %57 : vector<1x1x8x8xbf16> to vector<8x8xbf16>
    %cst_51 = arith.constant dense<0.000000e+00> : vector<256x8xf32>
    %59 = tpu.matmul %56, %58, %cst_51 {dimension_numbers = #tpu.dot_dimension_numbers<[1], [0], [0], [1], [0, 0, 1, 1], [], []>} : vector<256x8xbf16>, vector<8x8xbf16>, vector<256x8xf32> -> vector<256x8xf32>
    %60 = arith.addf %50, %59 : vector<256x8xf32>
    %c0_i32_52 = arith.constant 0 : i32
    %61 = arith.addi %1, %c0_i32_52 : i32
    %c0_i32_53 = arith.constant 0 : i32
    %62 = arith.addi %61, %c0_i32_53 : i32
    %c0_54 = arith.constant 0 : index
    %63 = arith.index_cast %62 : i32 to index
    %c2_55 = arith.constant 2 : index
    %c0_56 = arith.constant 0 : index
    %64 = vector.load %arg2[%c0_54, %63, %c2_55, %c0_56] : memref<1x18x18x8xbf16, #tpu.memory_space<vmem>>, vector<1x16x16x8xbf16>
    %65 = vector.shape_cast %64 : vector<1x16x16x8xbf16> to vector<16x16x8xbf16>
    %66 = vector.shape_cast %65 : vector<16x16x8xbf16> to vector<256x8xbf16>
    %c1_57 = arith.constant 1 : index
    %c1_58 = arith.constant 1 : index
    %c0_59 = arith.constant 0 : index
    %c0_60 = arith.constant 0 : index
    %67 = vector.load %arg3[%c1_57, %c1_58, %c0_59, %c0_60] : memref<4x4x8x8xbf16, #tpu.memory_space<vmem>>, vector<1x1x8x8xbf16>
    %68 = vector.shape_cast %67 : vector<1x1x8x8xbf16> to vector<8x8xbf16>
    %cst_61 = arith.constant dense<0.000000e+00> : vector<256x8xf32>
    %69 = tpu.matmul %66, %68, %cst_61 {dimension_numbers = #tpu.dot_dimension_numbers<[1], [0], [0], [1], [0, 0, 1, 1], [], []>} : vector<256x8xbf16>, vector<8x8xbf16>, vector<256x8xf32> -> vector<256x8xf32>
    %70 = arith.addf %60, %69 : vector<256x8xf32>
    %c0_i32_62 = arith.constant 0 : i32
    %71 = arith.addi %1, %c0_i32_62 : i32
    %c1_i32_63 = arith.constant 1 : i32
    %72 = arith.addi %71, %c1_i32_63 : i32
    %c0_64 = arith.constant 0 : index
    %73 = arith.index_cast %72 : i32 to index
    %c1_65 = arith.constant 1 : index
    %c0_66 = arith.constant 0 : index
    %74 = vector.load %arg2[%c0_64, %73, %c1_65, %c0_66] : memref<1x18x18x8xbf16, #tpu.memory_space<vmem>>, vector<1x16x16x8xbf16>
    %75 = vector.shape_cast %74 : vector<1x16x16x8xbf16> to vector<16x16x8xbf16>
    %76 = vector.shape_cast %75 : vector<16x16x8xbf16> to vector<256x8xbf16>
    %c1_67 = arith.constant 1 : index
    %c2_68 = arith.constant 2 : index
    %c0_69 = arith.constant 0 : index
    %c0_70 = arith.constant 0 : index
    %77 = vector.load %arg3[%c1_67, %c2_68, %c0_69, %c0_70] : memref<4x4x8x8xbf16, #tpu.memory_space<vmem>>, vector<1x1x8x8xbf16>
    %78 = vector.shape_cast %77 : vector<1x1x8x8xbf16> to vector<8x8xbf16>
    %cst_71 = arith.constant dense<0.000000e+00> : vector<256x8xf32>
    %79 = tpu.matmul %76, %78, %cst_71 {dimension_numbers = #tpu.dot_dimension_numbers<[1], [0], [0], [1], [0, 0, 1, 1], [], []>} : vector<256x8xbf16>, vector<8x8xbf16>, vector<256x8xf32> -> vector<256x8xf32>
    %80 = arith.addf %70, %79 : vector<256x8xf32>
    %c0_i32_72 = arith.constant 0 : i32
    %81 = arith.addi %1, %c0_i32_72 : i32
    %c1_i32_73 = arith.constant 1 : i32
    %82 = arith.addi %81, %c1_i32_73 : i32
    %c0_74 = arith.constant 0 : index
    %83 = arith.index_cast %82 : i32 to index
    %c2_75 = arith.constant 2 : index
    %c0_76 = arith.constant 0 : index
    %84 = vector.load %arg2[%c0_74, %83, %c2_75, %c0_76] : memref<1x18x18x8xbf16, #tpu.memory_space<vmem>>, vector<1x16x16x8xbf16>
    %85 = vector.shape_cast %84 : vector<1x16x16x8xbf16> to vector<16x16x8xbf16>
    %86 = vector.shape_cast %85 : vector<16x16x8xbf16> to vector<256x8xbf16>
    %c1_77 = arith.constant 1 : index
    %c3_78 = arith.constant 3 : index
    %c0_79 = arith.constant 0 : index
    %c0_80 = arith.constant 0 : index
    %87 = vector.load %arg3[%c1_77, %c3_78, %c0_79, %c0_80] : memref<4x4x8x8xbf16, #tpu.memory_space<vmem>>, vector<1x1x8x8xbf16>
    %88 = vector.shape_cast %87 : vector<1x1x8x8xbf16> to vector<8x8xbf16>
    %cst_81 = arith.constant dense<0.000000e+00> : vector<256x8xf32>
    %89 = tpu.matmul %86, %88, %cst_81 {dimension_numbers = #tpu.dot_dimension_numbers<[1], [0], [0], [1], [0, 0, 1, 1], [], []>} : vector<256x8xbf16>, vector<8x8xbf16>, vector<256x8xf32> -> vector<256x8xf32>
    %90 = arith.addf %80, %89 : vector<256x8xf32>
    %91 = vector.broadcast %2 : vector<1x8xf32> to vector<256x8xf32>
    %92 = arith.addf %90, %91 : vector<256x8xf32>
    %93 = vector.shape_cast %92 : vector<256x8xf32> to vector<16x16x8xf32>
    %c0_82 = arith.constant 0 : index
    %c0_83 = arith.constant 0 : index
    %c0_84 = arith.constant 0 : index
    %c0_85 = arith.constant 0 : index
    %c8 = arith.constant 8 : index
    %94 = vector.load %arg5[%c0_82, %c0_83, %c0_84, %c0_85, %c8] : memref<1x16x2x16x16xf32, #tpu.memory_space<vmem>>, vector<1x16x1x16x8xf32>
    %95 = vector.shape_cast %94 : vector<1x16x1x16x8xf32> to vector<16x16x8xf32>
    %96 = vector.shape_cast %93 : vector<16x16x8xf32> to vector<1x16x1x16x8xf32>
    tpu.vector_store %arg5[%c0_82, %c0_83, %c0_84, %c0_85, %c8], %96 {strides = array<i32>} : memref<1x16x2x16x16xf32, #tpu.memory_space<vmem>>, vector<1x16x1x16x8xf32>,
    %cst_86 = arith.constant 0.000000e+00 : f32
    %97 = vector.broadcast %cst_86 : f32 to vector<256x8xf32>
    %c1_i32_87 = arith.constant 1 : i32
    %98 = arith.addi %1, %c1_i32_87 : i32
    %c0_i32_88 = arith.constant 0 : i32
    %99 = arith.addi %98, %c0_i32_88 : i32
    %c0_89 = arith.constant 0 : index
    %100 = arith.index_cast %99 : i32 to index
    %c0_90 = arith.constant 0 : index
    %c0_91 = arith.constant 0 : index
    %101 = vector.load %arg2[%c0_89, %100, %c0_90, %c0_91] : memref<1x18x18x8xbf16, #tpu.memory_space<vmem>>, vector<1x16x16x8xbf16>
    %102 = vector.shape_cast %101 : vector<1x16x16x8xbf16> to vector<16x16x8xbf16>
    %103 = vector.shape_cast %102 : vector<16x16x8xbf16> to vector<256x8xbf16>
    %c2_92 = arith.constant 2 : index
    %c0_93 = arith.constant 0 : index
    %c0_94 = arith.constant 0 : index
    %c0_95 = arith.constant 0 : index
    %104 = vector.load %arg3[%c2_92, %c0_93, %c0_94, %c0_95] : memref<4x4x8x8xbf16, #tpu.memory_space<vmem>>, vector<1x1x8x8xbf16>
    %105 = vector.shape_cast %104 : vector<1x1x8x8xbf16> to vector<8x8xbf16>
    %cst_96 = arith.constant dense<0.000000e+00> : vector<256x8xf32>
    %106 = tpu.matmul %103, %105, %cst_96 {dimension_numbers = #tpu.dot_dimension_numbers<[1], [0], [0], [1], [0, 0, 1, 1], [], []>} : vector<256x8xbf16>, vector<8x8xbf16>, vector<256x8xf32> -> vector<256x8xf32>
    %107 = arith.addf %97, %106 : vector<256x8xf32>
    %c1_i32_97 = arith.constant 1 : i32
    %108 = arith.addi %1, %c1_i32_97 : i32
    %c0_i32_98 = arith.constant 0 : i32
    %109 = arith.addi %108, %c0_i32_98 : i32
    %c0_99 = arith.constant 0 : index
    %110 = arith.index_cast %109 : i32 to index
    %c1_100 = arith.constant 1 : index
    %c0_101 = arith.constant 0 : index
    %111 = vector.load %arg2[%c0_99, %110, %c1_100, %c0_101] : memref<1x18x18x8xbf16, #tpu.memory_space<vmem>>, vector<1x16x16x8xbf16>
    %112 = vector.shape_cast %111 : vector<1x16x16x8xbf16> to vector<16x16x8xbf16>
    %113 = vector.shape_cast %112 : vector<16x16x8xbf16> to vector<256x8xbf16>
    %c2_102 = arith.constant 2 : index
    %c1_103 = arith.constant 1 : index
    %c0_104 = arith.constant 0 : index
    %c0_105 = arith.constant 0 : index
    %114 = vector.load %arg3[%c2_102, %c1_103, %c0_104, %c0_105] : memref<4x4x8x8xbf16, #tpu.memory_space<vmem>>, vector<1x1x8x8xbf16>
    %115 = vector.shape_cast %114 : vector<1x1x8x8xbf16> to vector<8x8xbf16>
    %cst_106 = arith.constant dense<0.000000e+00> : vector<256x8xf32>
    %116 = tpu.matmul %113, %115, %cst_106 {dimension_numbers = #tpu.dot_dimension_numbers<[1], [0], [0], [1], [0, 0, 1, 1], [], []>} : vector<256x8xbf16>, vector<8x8xbf16>, vector<256x8xf32> -> vector<256x8xf32>
    %117 = arith.addf %107, %116 : vector<256x8xf32>
    %c1_i32_107 = arith.constant 1 : i32
    %118 = arith.addi %1, %c1_i32_107 : i32
    %c1_i32_108 = arith.constant 1 : i32
    %119 = arith.addi %118, %c1_i32_108 : i32
    %c0_109 = arith.constant 0 : index
    %120 = arith.index_cast %119 : i32 to index
    %c0_110 = arith.constant 0 : index
    %c0_111 = arith.constant 0 : index
    %121 = vector.load %arg2[%c0_109, %120, %c0_110, %c0_111] : memref<1x18x18x8xbf16, #tpu.memory_space<vmem>>, vector<1x16x16x8xbf16>
    %122 = vector.shape_cast %121 : vector<1x16x16x8xbf16> to vector<16x16x8xbf16>
    %123 = vector.shape_cast %122 : vector<16x16x8xbf16> to vector<256x8xbf16>
    %c2_112 = arith.constant 2 : index
    %c2_113 = arith.constant 2 : index
    %c0_114 = arith.constant 0 : index
    %c0_115 = arith.constant 0 : index
    %124 = vector.load %arg3[%c2_112, %c2_113, %c0_114, %c0_115] : memref<4x4x8x8xbf16, #tpu.memory_space<vmem>>, vector<1x1x8x8xbf16>
    %125 = vector.shape_cast %124 : vector<1x1x8x8xbf16> to vector<8x8xbf16>
    %cst_116 = arith.constant dense<0.000000e+00> : vector<256x8xf32>
    %126 = tpu.matmul %123, %125, %cst_116 {dimension_numbers = #tpu.dot_dimension_numbers<[1], [0], [0], [1], [0, 0, 1, 1], [], []>} : vector<256x8xbf16>, vector<8x8xbf16>, vector<256x8xf32> -> vector<256x8xf32>
    %127 = arith.addf %117, %126 : vector<256x8xf32>
    %c1_i32_117 = arith.constant 1 : i32
    %128 = arith.addi %1, %c1_i32_117 : i32
    %c1_i32_118 = arith.constant 1 : i32
    %129 = arith.addi %128, %c1_i32_118 : i32
    %c0_119 = arith.constant 0 : index
    %130 = arith.index_cast %129 : i32 to index
    %c1_120 = arith.constant 1 : index
    %c0_121 = arith.constant 0 : index
    %131 = vector.load %arg2[%c0_119, %130, %c1_120, %c0_121] : memref<1x18x18x8xbf16, #tpu.memory_space<vmem>>, vector<1x16x16x8xbf16>
    %132 = vector.shape_cast %131 : vector<1x16x16x8xbf16> to vector<16x16x8xbf16>
    %133 = vector.shape_cast %132 : vector<16x16x8xbf16> to vector<256x8xbf16>
    %c2_122 = arith.constant 2 : index
    %c3_123 = arith.constant 3 : index
    %c0_124 = arith.constant 0 : index
    %c0_125 = arith.constant 0 : index
    %134 = vector.load %arg3[%c2_122, %c3_123, %c0_124, %c0_125] : memref<4x4x8x8xbf16, #tpu.memory_space<vmem>>, vector<1x1x8x8xbf16>
    %135 = vector.shape_cast %134 : vector<1x1x8x8xbf16> to vector<8x8xbf16>
    %cst_126 = arith.constant dense<0.000000e+00> : vector<256x8xf32>
    %136 = tpu.matmul %133, %135, %cst_126 {dimension_numbers = #tpu.dot_dimension_numbers<[1], [0], [0], [1], [0, 0, 1, 1], [], []>} : vector<256x8xbf16>, vector<8x8xbf16>, vector<256x8xf32> -> vector<256x8xf32>
    %137 = arith.addf %127, %136 : vector<256x8xf32>
    %138 = vector.broadcast %2 : vector<1x8xf32> to vector<256x8xf32>
    %139 = arith.addf %137, %138 : vector<256x8xf32>
    %140 = vector.shape_cast %139 : vector<256x8xf32> to vector<16x16x8xf32>
    %c0_127 = arith.constant 0 : index
    %c0_128 = arith.constant 0 : index
    %c1_129 = arith.constant 1 : index
    %c0_130 = arith.constant 0 : index
    %c0_131 = arith.constant 0 : index
    %141 = vector.load %arg5[%c0_127, %c0_128, %c1_129, %c0_130, %c0_131] : memref<1x16x2x16x16xf32, #tpu.memory_space<vmem>>, vector<1x16x1x16x8xf32>
    %142 = vector.shape_cast %141 : vector<1x16x1x16x8xf32> to vector<16x16x8xf32>
    %143 = vector.shape_cast %140 : vector<16x16x8xf32> to vector<1x16x1x16x8xf32>
    tpu.vector_store %arg5[%c0_127, %c0_128, %c1_129, %c0_130, %c0_131], %143 {strides = array<i32>} : memref<1x16x2x16x16xf32, #tpu.memory_space<vmem>>, vector<1x16x1x16x8xf32>,
    %cst_132 = arith.constant 0.000000e+00 : f32
    %144 = vector.broadcast %cst_132 : f32 to vector<256x8xf32>
    %c1_i32_133 = arith.constant 1 : i32
    %145 = arith.addi %1, %c1_i32_133 : i32
    %c0_i32_134 = arith.constant 0 : i32
    %146 = arith.addi %145, %c0_i32_134 : i32
    %c0_135 = arith.constant 0 : index
    %147 = arith.index_cast %146 : i32 to index
    %c1_136 = arith.constant 1 : index
    %c0_137 = arith.constant 0 : index
    %148 = vector.load %arg2[%c0_135, %147, %c1_136, %c0_137] : memref<1x18x18x8xbf16, #tpu.memory_space<vmem>>, vector<1x16x16x8xbf16>
    %149 = vector.shape_cast %148 : vector<1x16x16x8xbf16> to vector<16x16x8xbf16>
    %150 = vector.shape_cast %149 : vector<16x16x8xbf16> to vector<256x8xbf16>
    %c3_138 = arith.constant 3 : index
    %c0_139 = arith.constant 0 : index
    %c0_140 = arith.constant 0 : index
    %c0_141 = arith.constant 0 : index
    %151 = vector.load %arg3[%c3_138, %c0_139, %c0_140, %c0_141] : memref<4x4x8x8xbf16, #tpu.memory_space<vmem>>, vector<1x1x8x8xbf16>
    %152 = vector.shape_cast %151 : vector<1x1x8x8xbf16> to vector<8x8xbf16>
    %cst_142 = arith.constant dense<0.000000e+00> : vector<256x8xf32>
    %153 = tpu.matmul %150, %152, %cst_142 {dimension_numbers = #tpu.dot_dimension_numbers<[1], [0], [0], [1], [0, 0, 1, 1], [], []>} : vector<256x8xbf16>, vector<8x8xbf16>, vector<256x8xf32> -> vector<256x8xf32>
    %154 = arith.addf %144, %153 : vector<256x8xf32>
    %c1_i32_143 = arith.constant 1 : i32
    %155 = arith.addi %1, %c1_i32_143 : i32
    %c0_i32_144 = arith.constant 0 : i32
    %156 = arith.addi %155, %c0_i32_144 : i32
    %c0_145 = arith.constant 0 : index
    %157 = arith.index_cast %156 : i32 to index
    %c2_146 = arith.constant 2 : index
    %c0_147 = arith.constant 0 : index
    %158 = vector.load %arg2[%c0_145, %157, %c2_146, %c0_147] : memref<1x18x18x8xbf16, #tpu.memory_space<vmem>>, vector<1x16x16x8xbf16>
    %159 = vector.shape_cast %158 : vector<1x16x16x8xbf16> to vector<16x16x8xbf16>
    %160 = vector.shape_cast %159 : vector<16x16x8xbf16> to vector<256x8xbf16>
    %c3_148 = arith.constant 3 : index
    %c1_149 = arith.constant 1 : index
    %c0_150 = arith.constant 0 : index
    %c0_151 = arith.constant 0 : index
    %161 = vector.load %arg3[%c3_148, %c1_149, %c0_150, %c0_151] : memref<4x4x8x8xbf16, #tpu.memory_space<vmem>>, vector<1x1x8x8xbf16>
    %162 = vector.shape_cast %161 : vector<1x1x8x8xbf16> to vector<8x8xbf16>
    %cst_152 = arith.constant dense<0.000000e+00> : vector<256x8xf32>
    %163 = tpu.matmul %160, %162, %cst_152 {dimension_numbers = #tpu.dot_dimension_numbers<[1], [0], [0], [1], [0, 0, 1, 1], [], []>} : vector<256x8xbf16>, vector<8x8xbf16>, vector<256x8xf32> -> vector<256x8xf32>
    %164 = arith.addf %154, %163 : vector<256x8xf32>
    %c1_i32_153 = arith.constant 1 : i32
    %165 = arith.addi %1, %c1_i32_153 : i32
    %c1_i32_154 = arith.constant 1 : i32
    %166 = arith.addi %165, %c1_i32_154 : i32
    %c0_155 = arith.constant 0 : index
    %167 = arith.index_cast %166 : i32 to index
    %c1_156 = arith.constant 1 : index
    %c0_157 = arith.constant 0 : index
    %168 = vector.load %arg2[%c0_155, %167, %c1_156, %c0_157] : memref<1x18x18x8xbf16, #tpu.memory_space<vmem>>, vector<1x16x16x8xbf16>
    %169 = vector.shape_cast %168 : vector<1x16x16x8xbf16> to vector<16x16x8xbf16>
    %170 = vector.shape_cast %169 : vector<16x16x8xbf16> to vector<256x8xbf16>
    %c3_158 = arith.constant 3 : index
    %c2_159 = arith.constant 2 : index
    %c0_160 = arith.constant 0 : index
    %c0_161 = arith.constant 0 : index
    %171 = vector.load %arg3[%c3_158, %c2_159, %c0_160, %c0_161] : memref<4x4x8x8xbf16, #tpu.memory_space<vmem>>, vector<1x1x8x8xbf16>
    %172 = vector.shape_cast %171 : vector<1x1x8x8xbf16> to vector<8x8xbf16>
    %cst_162 = arith.constant dense<0.000000e+00> : vector<256x8xf32>
    %173 = tpu.matmul %170, %172, %cst_162 {dimension_numbers = #tpu.dot_dimension_numbers<[1], [0], [0], [1], [0, 0, 1, 1], [], []>} : vector<256x8xbf16>, vector<8x8xbf16>, vector<256x8xf32> -> vector<256x8xf32>
    %174 = arith.addf %164, %173 : vector<256x8xf32>
    %c1_i32_163 = arith.constant 1 : i32
    %175 = arith.addi %1, %c1_i32_163 : i32
    %c1_i32_164 = arith.constant 1 : i32
    %176 = arith.addi %175, %c1_i32_164 : i32
    %c0_165 = arith.constant 0 : index
    %177 = arith.index_cast %176 : i32 to index
    %c2_166 = arith.constant 2 : index
    %c0_167 = arith.constant 0 : index
    %178 = vector.load %arg2[%c0_165, %177, %c2_166, %c0_167] : memref<1x18x18x8xbf16, #tpu.memory_space<vmem>>, vector<1x16x16x8xbf16>
    %179 = vector.shape_cast %178 : vector<1x16x16x8xbf16> to vector<16x16x8xbf16>
    %180 = vector.shape_cast %179 : vector<16x16x8xbf16> to vector<256x8xbf16>
    %c3_168 = arith.constant 3 : index
    %c3_169 = arith.constant 3 : index
    %c0_170 = arith.constant 0 : index
    %c0_171 = arith.constant 0 : index
    %181 = vector.load %arg3[%c3_168, %c3_169, %c0_170, %c0_171] : memref<4x4x8x8xbf16, #tpu.memory_space<vmem>>, vector<1x1x8x8xbf16>
    %182 = vector.shape_cast %181 : vector<1x1x8x8xbf16> to vector<8x8xbf16>
    %cst_172 = arith.constant dense<0.000000e+00> : vector<256x8xf32>
    %183 = tpu.matmul %180, %182, %cst_172 {dimension_numbers = #tpu.dot_dimension_numbers<[1], [0], [0], [1], [0, 0, 1, 1], [], []>} : vector<256x8xbf16>, vector<8x8xbf16>, vector<256x8xf32> -> vector<256x8xf32>
    %184 = arith.addf %174, %183 : vector<256x8xf32>
    %185 = vector.broadcast %2 : vector<1x8xf32> to vector<256x8xf32>
    %186 = arith.addf %184, %185 : vector<256x8xf32>
    %187 = vector.shape_cast %186 : vector<256x8xf32> to vector<16x16x8xf32>
    %c0_173 = arith.constant 0 : index
    %c0_174 = arith.constant 0 : index
    %c1_175 = arith.constant 1 : index
    %c0_176 = arith.constant 0 : index
    %c8_177 = arith.constant 8 : index
    %188 = vector.load %arg5[%c0_173, %c0_174, %c1_175, %c0_176, %c8_177] : memref<1x16x2x16x16xf32, #tpu.memory_space<vmem>>, vector<1x16x1x16x8xf32>
    %189 = vector.shape_cast %188 : vector<1x16x1x16x8xf32> to vector<16x16x8xf32>
    %190 = vector.shape_cast %187 : vector<16x16x8xf32> to vector<1x16x1x16x8xf32>
    tpu.vector_store %arg5[%c0_173, %c0_174, %c1_175, %c0_176, %c8_177], %190 {strides = array<i32>} : memref<1x16x2x16x16xf32, #tpu.memory_space<vmem>>, vector<1x16x1x16x8xf32>,
    return
  }
  func.func @transform_0(%arg0: i32, %arg1: i32) -> (i32, i32, i32, i32) {
    %c0_i32 = arith.constant 0 : i32
    %c0_i32_0 = arith.constant 0 : i32
    %c0_i32_1 = arith.constant 0 : i32
    %c0_i32_2 = arith.constant 0 : i32
    return %arg0, %c0_i32, %c0_i32_0, %c0_i32_1 : i32, i32, i32, i32
  }
  func.func @transform_1(%arg0: i32, %arg1: i32) -> (i32, i32, i32, i32) {
    %c0_i32 = arith.constant 0 : i32
    %c0_i32_0 = arith.constant 0 : i32
    %c0_i32_1 = arith.constant 0 : i32
    %c0_i32_2 = arith.constant 0 : i32
    %c0_i32_3 = arith.constant 0 : i32
    return %c0_i32, %c0_i32_0, %c0_i32_1, %c0_i32_2 : i32, i32, i32, i32
  }
  func.func @transform_2(%arg0: i32, %arg1: i32) -> (i32, i32) {
    %c0_i32 = arith.constant 0 : i32
    %c0_i32_0 = arith.constant 0 : i32
    %c0_i32_1 = arith.constant 0 : i32
    return %c0_i32, %c0_i32_0 : i32, i32
  }
  func.func @transform_3(%arg0: i32, %arg1: i32) -> (i32, i32, i32, i32, i32) {
    %c0_i32 = arith.constant 0 : i32
    %c0_i32_0 = arith.constant 0 : i32
    %c0_i32_1 = arith.constant 0 : i32
    %c0_i32_2 = arith.constant 0 : i32
    return %arg0, %arg1, %c0_i32, %c0_i32_0, %c0_i32_1 : i32, i32, i32, i32, i32
  }
}

</mosaic_0001>

<llo_original>
// kernel: tpu_custom_call.1
$region0: #{tpu_custom_call.1}
  #allocation0 [shape = 'u32[]', space=smem, size = 0x4, offset = 0x4, fixed_abs, tag = 'smem constant byte address 0x4 - core index']
  #allocation1 [shape = 'u32[72,128]{1,0:T(1,128)}', space=vmem, size = 0x9000, scoped, tag = 'internal scratch']
  %s0 = inlined_call_operand.vmem [shape: bf16[2,18,18,8], index: 0, kind: input, shape index: {}]
  %s1 = inlined_call_operand.vmem [shape: bf16[4,4,8,8], index: 1, kind: input, shape index: {}]
  %s2 = inlined_call_operand.vmem [shape: f32[1,8], index: 2, kind: input, shape index: {}]
  %s3 = inlined_call_operand.hbm [shape: f32[2,16,2,16,16], index: 3, kind: output, shape index: {}]
  %s4 = sld [smem:[#allocation0]]
  $region45: #{tpu_custom_call.1} parent=0
    _
  %s6 = ssub.s32 1, %s4
  %s7 = scalar_select 0, %s6, %s4
  $region1: #{tpu_custom_call.1} parent=0
    #allocation2 [shape = 'u8[524288]{0}', space=vmem, size = 0x80000, scoped, tag = 'output window, operand 0']
    #allocation3 [shape = 's32[2]{0}', space=sflag, size = 0x8, scoped, tag = 'scoped memory for tpu_custom_call.1']
    %8 = vsyncpa [#allocation3], 0
    %s9 = scalar_lea.sflag [#allocation3], 1
    %10 = vsyncpa %s9, 0
    loop: start=0, step=1, limit=4
    $region2: #{tpu_custom_call.1} parent=1 // loop_pre_header
      _
    $region3: #{tpu_custom_call.1} parent=1 // loop_header
      %s12 = sphi 0, %s16
      %p13 = scmp.ge.s32.totalorder %s12, 4
      %s19 = sphi 0, %s31
      %s20 = sphi 0, %s27
      %s21 = sphi 0, %s19
      %s22 = sphi 0, %s20
      %s23 = sphi 0, %s21
      %s24 = sphi 0, %s22
      %s34 = sphi 0, %s36
      %s37 = sphi 0, %s34
      %s38 = sphi 0, %s37
      %s54 = sphi 0, %s38
      %s58 = sphi 0, %s58
      %s60 = sphi 0, %s58
      %s61 = sphi 0, %s60
      %s75 = sphi 0, %s61
      %s79 = sphi 0, %s79
      %s81 = sphi 0, %s79
      %s82 = sphi 0, %s81
      %s96 = sphi 0, %s82
      %s104 = sphi 0, %s106
      %s107 = sphi 0, %s104
      %s108 = sphi 0, %s107
      %s124 = sphi 0, %s108
    $region4: #{tpu_custom_call.1} parent=1 // loop_header_branch
      %15 = sbr.rel (%p13) target = $region8
    $region5: #{tpu_custom_call.1} parent=1 // loop_body
      %s17 = ssub.s32 %s12, 1
      %s18 = ssub.s32 %s12, 2
      %s25 = sadd.s32 1, %s20
      %p26 = scmp.ge.s32.totalorder %s25, 1
      %s27 = scalar_select %p26, 0, %s25
      %s28 = sadd.s32 1, %s19
      %s29 = scalar_select %p26, %s28, %s19
      %p30 = scmp.ge.s32.totalorder %s29, 2
      %s31 = scalar_select %p30, 0, %s29
      %s32 = ssub.s32 %s19, %s31
      %p33 = scmp.eq.s32.totalorder %s32, 0
      %s35 = sadd.s32 %s34, 1
      %s36 = scalar_select %p33, %s34, %s35
      %p39 = pneg %p33
      %p40 = scmp.eq.s32.totalorder %s12, 1
      %p41 = por %p39, %p40
      %p42 = scmp.ne.s32.totalorder %s34, %s37
      %p43 = scmp.eq.s32.totalorder %s12, 0
      %p44 = por %p42, %p43
      %p45 = scmp.ne.s32.totalorder %s34, %s37
      %p46 = scmp.eq.s32.totalorder %s17, 1
      %p47 = por %p45, %p46
      %p48 = scmp.ne.s32.totalorder %s37, %s38
      %p49 = scmp.eq.s32.totalorder %s17, 0
      %p50 = por %p48, %p49
      %p51 = scmp.ne.s32.totalorder %s37, %s38
      %p52 = scmp.eq.s32.totalorder %s18, 1
      %p53 = por %p51, %p52
      %p55 = scmp.ne.s32.totalorder %s38, %s54
      %p56 = scmp.eq.s32.totalorder %s18, 0
      %p57 = por %p55, %p56
      %s59 = sadd.s32 %s58, 1
      %p62 = scmp.eq.s32.totalorder %s12, 1
      %p63 = scmp.ne.s32.totalorder %s58, %s60
      %p64 = scmp.eq.s32.totalorder %s12, 0
      %p65 = por %p63, %p64
      %p66 = scmp.ne.s32.totalorder %s58, %s60
      %p67 = scmp.eq.s32.totalorder %s17, 1
      %p68 = por %p66, %p67
      %p69 = scmp.ne.s32.totalorder %s60, %s61
      %p70 = scmp.eq.s32.totalorder %s17, 0
      %p71 = por %p69, %p70
      %p72 = scmp.ne.s32.totalorder %s60, %s61
      %p73 = scmp.eq.s32.totalorder %s18, 1
      %p74 = por %p72, %p73
      %p76 = scmp.ne.s32.totalorder %s61, %s75
      %p77 = scmp.eq.s32.totalorder %s18, 0
      %p78 = por %p76, %p77
      %s80 = sadd.s32 %s79, 1
      %p83 = scmp.eq.s32.totalorder %s12, 1
      %p84 = scmp.ne.s32.totalorder %s79, %s81
      %p85 = scmp.eq.s32.totalorder %s12, 0
      %p86 = por %p84, %p85
      %p87 = scmp.ne.s32.totalorder %s79, %s81
      %p88 = scmp.eq.s32.totalorder %s17, 1
      %p89 = por %p87, %p88
      %p90 = scmp.ne.s32.totalorder %s81, %s82
      %p91 = scmp.eq.s32.totalorder %s17, 0
      %p92 = por %p90, %p91
      %p93 = scmp.ne.s32.totalorder %s81, %s82
      %p94 = scmp.eq.s32.totalorder %s18, 1
      %p95 = por %p93, %p94
      %p97 = scmp.ne.s32.totalorder %s82, %s96
      %p98 = scmp.eq.s32.totalorder %s18, 0
      %p99 = por %p97, %p98
      %s100 = ssub.s32 %s19, %s31
      %s101 = ssub.s32 %s20, %s27
      %s102 = sor.u32 %s100, %s101
      %p103 = scmp.eq.s32.totalorder %s102, 0
      %s105 = sadd.s32 %s104, 1
      %s106 = scalar_select %p103, %s104, %s105
      %p109 = pneg %p103
      %p110 = scmp.eq.s32.totalorder %s12, 1
      %p111 = por %p109, %p110
      %p112 = scmp.ne.s32.totalorder %s104, %s107
      %p113 = scmp.eq.s32.totalorder %s12, 0
      %p114 = por %p112, %p113
      %p115 = scmp.ne.s32.totalorder %s104, %s107
      %p116 = scmp.eq.s32.totalorder %s17, 1
      %p117 = por %p115, %p116
      %p118 = scmp.ne.s32.totalorder %s107, %s108
      %p119 = scmp.eq.s32.totalorder %s17, 0
      %p120 = por %p118, %p119
      %p121 = scmp.ne.s32.totalorder %s107, %s108
      %p122 = scmp.eq.s32.totalorder %s18, 1
      %p123 = por %p121, %p122
      %p125 = scmp.ne.s32.totalorder %s108, %s124
      %p126 = scmp.eq.s32.totalorder %s18, 0
      %p127 = por %p125, %p126
      %p128 = scmp.le.s32.totalorder 1, %s12
      %p129 = scmp.lt.s32.totalorder %s12, 3
      %p130 = pnand %p128, %p129
      %p131 = pneg %p130
      // Predicated region
      $region9: #{tpu_custom_call.1} parent=5 // pred_check
        _
      $region10: #{tpu_custom_call.1} parent=5 // pred_check_branch
        %133 = sbr.rel (%p130) target = $region12
      $region11: #{tpu_custom_call.1} parent=5 // pred_region
        %s134 = ssub.s32 %s12, 1
        // Predicated region
        $region13: #{tpu_custom_call.1} parent=11 // pred_check
          %p135 = pneg %p71
        $region14: #{tpu_custom_call.1} parent=11 // pred_check_branch
          %137 = sbr.rel (%p135) target = $region16
        $region15: #{tpu_custom_call.1} parent=11 // pred_region
          _
        $region16: #{tpu_custom_call.1} parent=11 // pred_fallthru
          _
        // Predicated region
        $region17: #{tpu_custom_call.1} parent=11 // pred_check
          %p138 = pneg %p92
        $region18: #{tpu_custom_call.1} parent=11 // pred_check_branch
          %140 = sbr.rel (%p138) target = $region20
        $region19: #{tpu_custom_call.1} parent=11 // pred_region
          _
        $region20: #{tpu_custom_call.1} parent=11 // pred_fallthru
          _
      $region12: #{tpu_custom_call.1} parent=5 // pred_fallthru
        _
      %p141 = scmp.lt.s32.totalorder %s12, 2
      // Predicated region
      $region21: #{tpu_custom_call.1} parent=5 // pred_check
        %p142 = pneg %p141
      $region22: #{tpu_custom_call.1} parent=5 // pred_check_branch
        %144 = sbr.rel (%p142) target = $region24
      $region23: #{tpu_custom_call.1} parent=5 // pred_region
        // Predicated region
        $region25: #{tpu_custom_call.1} parent=23 // pred_check
          %p145 = pneg %p44
        $region26: #{tpu_custom_call.1} parent=23 // pred_check_branch
          %147 = sbr.rel (%p145) target = $region28
        $region27: #{tpu_custom_call.1} parent=23 // pred_region
          %p148 = scmp.lt.s32.totalorder %s19, 1
          %s149 = scalar_select %p148, %s19, 1
          %s150 = smul.addr %s149, 54
          %s151 = smul.addr %s150, 4
          %s152 = scalar_lea.vmem %s0, %s151
        $region28: #{tpu_custom_call.1} parent=23 // pred_fallthru
          _
      $region24: #{tpu_custom_call.1} parent=5 // pred_fallthru
        _
      %p153 = scmp.le.s32.totalorder 1, %s12
      %p154 = scmp.lt.s32.totalorder %s12, 3
      %p155 = pnand %p153, %p154
      %p156 = pneg %p155
      // Predicated region
      $region29: #{tpu_custom_call.1} parent=5 // pred_check
        _
      $region30: #{tpu_custom_call.1} parent=5 // pred_check_branch
        %158 = sbr.rel (%p155) target = $region32
      $region31: #{tpu_custom_call.1} parent=5 // pred_region
        %s159 = ssub.s32 %s12, 1
        %p160 = scmp.lt.s32.totalorder %s21, 1
        %s161 = scalar_select %p160, %s21, 1
        %s162 = smul.addr %s161, 54
        %s163 = smul.addr %s162, 4
        %s164 = scalar_lea.vmem %s0, %s163
        %p165 = pneg %p50
        %p166 = pneg %p47
        %p167 = pneg %p71
        %p168 = pneg %p68
        %p169 = pneg %p92
        %p170 = pneg %p89
        %p171 = pneg %p120
        %p172 = pneg %p117
        %s173 = sand.u32 %s107, 1
        %s174 = scalar_lea.sflag [#allocation3], %s173
        %s175 = sand.u32 %s107, 1
        %s176 = smul.addr %s175, 512
        %s177 = scalar_lea.vmem [#allocation2], %s176
        %p178 = scmp.lt.s32.totalorder %s21, 1
        %s179 = scalar_select %p178, %s21, 1
        %s180 = smul.addr %s179, 54
        %s181 = smul.addr %s180, 4
        %s182 = scalar_lea.vmem %s0, %s181
        %s183 = smul.u32 16, %s22
        %s185 = smul.u32 %s22, 16
        %v186 = vld [vmem:[%s2] sm:$0x1]
        %s187 = smul.u32 %s185, 3
        %s188 = smul.addr %s187, 4
        %s189 = scalar_lea.vmem %s182, %s188
        %v190 = vld [vmem:[%s189] sm:$0xf]
        %v191 = vld [vmem:[%s189 + $0x4] sm:$0xf]
        %v192 = vld [vmem:[%s189 + $0xc] sm:$0xf]
        %v193 = vld [vmem:[%s189 + $0x10] sm:$0xf]
        %v194 = vld [vmem:[%s189 + $0x18] sm:$0xf]
        %v195 = vld [vmem:[%s189 + $0x1c] sm:$0xf]
        %v196 = vld [vmem:[%s189 + $0x24] sm:$0xf]
        %v197 = vld [vmem:[%s189 + $0x28] sm:$0xf]
        %v198 = vld [vmem:[%s189 + $0x30] sm:$0xf]
        %v199 = vld [vmem:[%s189 + $0x34] sm:$0xf]
        %v200 = vld [vmem:[%s189 + $0x3c] sm:$0xf]
        %v201 = vld [vmem:[%s189 + $0x40] sm:$0xf]
        %v202 = vld [vmem:[%s189 + $0x48] sm:$0xf]
        %v203 = vld [vmem:[%s189 + $0x4c] sm:$0xf]
        %v204 = vld [vmem:[%s189 + $0x54] sm:$0xf]
        %v205 = vld [vmem:[%s189 + $0x58] sm:$0xf]
        %v206 = vld [vmem:[%s189 + $0x60] sm:$0xf]
        %v207 = vld [vmem:[%s189 + $0x64] sm:$0xf]
        %v208 = vld [vmem:[%s189 + $0x6c] sm:$0xf]
        %v209 = vld [vmem:[%s189 + $0x70] sm:$0xf]
        %v210 = vld [vmem:[%s189 + $0x78] sm:$0xf]
        %v211 = vld [vmem:[%s189 + $0x7c] sm:$0xf]
        %v212 = vld [vmem:[%s189 + $0x84] sm:$0xf]
        %v213 = vld [vmem:[%s189 + $0x88] sm:$0xf]
        %v214 = vld [vmem:[%s189 + $0x90] sm:$0xf]
        %v215 = vld [vmem:[%s189 + $0x94] sm:$0xf]
        %v216 = vld [vmem:[%s189 + $0x9c] sm:$0xf]
        %v217 = vld [vmem:[%s189 + $0xa0] sm:$0xf]
        %v218 = vld [vmem:[%s189 + $0xa8] sm:$0xf]
        %v219 = vld [vmem:[%s189 + $0xac] sm:$0xf]
        %v220 = vld [vmem:[%s189 + $0xb4] sm:$0xf]
        %v221 = vld [vmem:[%s189 + $0xb8] sm:$0xf]
        %v222 = vld [vmem:[%s1] sm:$0xf]
        %v223 = vld [vmem:[%s189 + $0x8] sm:$0x1]
        %v224 = vld [vmem:[%s189 + $0x14] sm:$0x1]
        %v225 = vld [vmem:[%s189 + $0x20] sm:$0x1]
        %v226 = vld [vmem:[%s189 + $0x2c] sm:$0x1]
        %v227 = vld [vmem:[%s189 + $0x38] sm:$0x1]
        %v228 = vld [vmem:[%s189 + $0x44] sm:$0x1]
        %v229 = vld [vmem:[%s189 + $0x50] sm:$0x1]
        %v230 = vld [vmem:[%s189 + $0x5c] sm:$0x1]
        %v231 = vld [vmem:[%s189 + $0x68] sm:$0x1]
        %v232 = vld [vmem:[%s189 + $0x74] sm:$0x1]
        %v233 = vld [vmem:[%s189 + $0x80] sm:$0x1]
        %v234 = vld [vmem:[%s189 + $0x8c] sm:$0x1]
        %v235 = vld [vmem:[%s189 + $0x98] sm:$0x1]
        %v236 = vld [vmem:[%s189 + $0xa4] sm:$0x1]
        %v237 = vld [vmem:[%s189 + $0xb0] sm:$0x1]
        %v238 = vld [vmem:[%s189 + $0xbc] sm:$0x1]
        %vm239 = vsmask.f32 3328
        %vm240 = vsmask.f32 7440
        %vm241 = vmor %vm239, %vm240
        %v243 = vshrl.u32 %v190, 16
        %v245 = vrot.slane %v243, 4
        %v246 = vshll.u32 %v190, 16
        %v248 = vrot.slane %v246, 5
        %v249 = vor.u32 %v245, %v248
        %v250 = vrot.slane %v249, 4
        %v252 = vshll.u32 %v191, 16
        %v254 = vrot.slane %v252, 5
        %v255 = vsel %vm241, %v250, %v254
        %v256 = vshrl.u32 %v191, 16
        %v258 = vrot.slane %v256, 4
        %v259 = vor.u32 %v258, %v254
        %v260 = vrot.slane %v259, 4
        %v262 = vshll.u32 %v223, 16
        %v264 = vrot.slane %v262, 5
        %v265 = vsel %vm241, %v260, %v264
        %v267 = vshrl.u32 %v192, 16
        %v269 = vrot.slane %v267, 4
        %v270 = vshll.u32 %v192, 16
        %v272 = vrot.slane %v270, 5
        %v273 = vor.u32 %v269, %v272
        %v274 = vrot.slane %v273, 4
        %v276 = vshll.u32 %v193, 16
        %v278 = vrot.slane %v276, 5
        %v279 = vsel %vm241, %v274, %v278
        %v280 = vshrl.u32 %v193, 16
        %v282 = vrot.slane %v280, 4
        %v283 = vor.u32 %v282, %v278
        %v284 = vrot.slane %v283, 4
        %v286 = vshll.u32 %v224, 16
        %v288 = vrot.slane %v286, 5
        %v289 = vsel %vm241, %v284, %v288
        %v291 = vshrl.u32 %v194, 16
        %v293 = vrot.slane %v291, 4
        %v294 = vshll.u32 %v194, 16
        %v296 = vrot.slane %v294, 5
        %v297 = vor.u32 %v293, %v296
        %v298 = vrot.slane %v297, 4
        %v300 = vshll.u32 %v195, 16
        %v302 = vrot.slane %v300, 5
        %v303 = vsel %vm241, %v298, %v302
        %v304 = vshrl.u32 %v195, 16
        %v306 = vrot.slane %v304, 4
        %v307 = vor.u32 %v306, %v302
        %v308 = vrot.slane %v307, 4
        %v310 = vshll.u32 %v225, 16
        %v312 = vrot.slane %v310, 5
        %v313 = vsel %vm241, %v308, %v312
        %v315 = vshrl.u32 %v196, 16
        %v317 = vrot.slane %v315, 4
        %v318 = vshll.u32 %v196, 16
        %v320 = vrot.slane %v318, 5
        %v321 = vor.u32 %v317, %v320
        %v322 = vrot.slane %v321, 4
        %v324 = vshll.u32 %v197, 16
        %v326 = vrot.slane %v324, 5
        %v327 = vsel %vm241, %v322, %v326
        %v328 = vshrl.u32 %v197, 16
        %v330 = vrot.slane %v328, 4
        %v331 = vor.u32 %v330, %v326
        %v332 = vrot.slane %v331, 4
        %v334 = vshll.u32 %v226, 16
        %v336 = vrot.slane %v334, 5
        %v337 = vsel %vm241, %v332, %v336
        %v339 = vshrl.u32 %v198, 16
        %v341 = vrot.slane %v339, 4
        %v342 = vshll.u32 %v198, 16
        %v344 = vrot.slane %v342, 5
        %v345 = vor.u32 %v341, %v344
        %v346 = vrot.slane %v345, 4
        %v348 = vshll.u32 %v199, 16
        %v350 = vrot.slane %v348, 5
        %v351 = vsel %vm241, %v346, %v350
        %v352 = vshrl.u32 %v199, 16
        %v354 = vrot.slane %v352, 4
        %v355 = vor.u32 %v354, %v350
        %v356 = vrot.slane %v355, 4
        %v358 = vshll.u32 %v227, 16
        %v360 = vrot.slane %v358, 5
        %v361 = vsel %vm241, %v356, %v360
        %v363 = vshrl.u32 %v200, 16
        %v365 = vrot.slane %v363, 4
        %v366 = vshll.u32 %v200, 16
        %v368 = vrot.slane %v366, 5
        %v369 = vor.u32 %v365, %v368
        %v370 = vrot.slane %v369, 4
        %v372 = vshll.u32 %v201, 16
        %v374 = vrot.slane %v372, 5
        %v375 = vsel %vm241, %v370, %v374
        %v376 = vshrl.u32 %v201, 16
        %v378 = vrot.slane %v376, 4
        %v379 = vor.u32 %v378, %v374
        %v380 = vrot.slane %v379, 4
        %v382 = vshll.u32 %v228, 16
        %v384 = vrot.slane %v382, 5
        %v385 = vsel %vm241, %v380, %v384
        %v387 = vshrl.u32 %v202, 16
        %v389 = vrot.slane %v387, 4
        %v390 = vshll.u32 %v202, 16
        %v392 = vrot.slane %v390, 5
        %v393 = vor.u32 %v389, %v392
        %v394 = vrot.slane %v393, 4
        %v396 = vshll.u32 %v203, 16
        %v398 = vrot.slane %v396, 5
        %v399 = vsel %vm241, %v394, %v398
        %v400 = vshrl.u32 %v203, 16
        %v402 = vrot.slane %v400, 4
        %v403 = vor.u32 %v402, %v398
        %v404 = vrot.slane %v403, 4
        %v406 = vshll.u32 %v229, 16
        %v408 = vrot.slane %v406, 5
        %v409 = vsel %vm241, %v404, %v408
        %v411 = vshrl.u32 %v204, 16
        %v413 = vrot.slane %v411, 4
        %v414 = vshll.u32 %v204, 16
        %v416 = vrot.slane %v414, 5
        %v417 = vor.u32 %v413, %v416
        %v418 = vrot.slane %v417, 4
        %v420 = vshll.u32 %v205, 16
        %v422 = vrot.slane %v420, 5
        %v423 = vsel %vm241, %v418, %v422
        %v424 = vshrl.u32 %v205, 16
        %v426 = vrot.slane %v424, 4
        %v427 = vor.u32 %v426, %v422
        %v428 = vrot.slane %v427, 4
        %v430 = vshll.u32 %v230, 16
        %v432 = vrot.slane %v430, 5
        %v433 = vsel %vm241, %v428, %v432
        %v435 = vshrl.u32 %v206, 16
        %v437 = vrot.slane %v435, 4
        %v438 = vshll.u32 %v206, 16
        %v440 = vrot.slane %v438, 5
        %v441 = vor.u32 %v437, %v440
        %v442 = vrot.slane %v441, 4
        %v444 = vshll.u32 %v207, 16
        %v446 = vrot.slane %v444, 5
        %v447 = vsel %vm241, %v442, %v446
        %v448 = vshrl.u32 %v207, 16
        %v450 = vrot.slane %v448, 4
        %v451 = vor.u32 %v450, %v446
        %v452 = vrot.slane %v451, 4
        %v454 = vshll.u32 %v231, 16
        %v456 = vrot.slane %v454, 5
        %v457 = vsel %vm241, %v452, %v456
        %v459 = vshrl.u32 %v208, 16
        %v461 = vrot.slane %v459, 4
        %v462 = vshll.u32 %v208, 16
        %v464 = vrot.slane %v462, 5
        %v465 = vor.u32 %v461, %v464
        %v466 = vrot.slane %v465, 4
        %v468 = vshll.u32 %v209, 16
        %v470 = vrot.slane %v468, 5
        %v471 = vsel %vm241, %v466, %v470
        %v472 = vshrl.u32 %v209, 16
        %v474 = vrot.slane %v472, 4
        %v475 = vor.u32 %v474, %v470
        %v476 = vrot.slane %v475, 4
        %v478 = vshll.u32 %v232, 16
        %v480 = vrot.slane %v478, 5
        %v481 = vsel %vm241, %v476, %v480
        %v483 = vshrl.u32 %v210, 16
        %v485 = vrot.slane %v483, 4
        %v486 = vshll.u32 %v210, 16
        %v488 = vrot.slane %v486, 5
        %v489 = vor.u32 %v485, %v488
        %v490 = vrot.slane %v489, 4
        %v492 = vshll.u32 %v211, 16
        %v494 = vrot.slane %v492, 5
        %v495 = vsel %vm241, %v490, %v494
        %v496 = vshrl.u32 %v211, 16
        %v498 = vrot.slane %v496, 4
        %v499 = vor.u32 %v498, %v494
        %v500 = vrot.slane %v499, 4
        %v502 = vshll.u32 %v233, 16
        %v504 = vrot.slane %v502, 5
        %v505 = vsel %vm241, %v500, %v504
        %v507 = vshrl.u32 %v212, 16
        %v509 = vrot.slane %v507, 4
        %v510 = vshll.u32 %v212, 16
        %v512 = vrot.slane %v510, 5
        %v513 = vor.u32 %v509, %v512
        %v514 = vrot.slane %v513, 4
        %v516 = vshll.u32 %v213, 16
        %v518 = vrot.slane %v516, 5
        %v519 = vsel %vm241, %v514, %v518
        %v520 = vshrl.u32 %v213, 16
        %v522 = vrot.slane %v520, 4
        %v523 = vor.u32 %v522, %v518
        %v524 = vrot.slane %v523, 4
        %v526 = vshll.u32 %v234, 16
        %v528 = vrot.slane %v526, 5
        %v529 = vsel %vm241, %v524, %v528
        %v531 = vshrl.u32 %v214, 16
        %v533 = vrot.slane %v531, 4
        %v534 = vshll.u32 %v214, 16
        %v536 = vrot.slane %v534, 5
        %v537 = vor.u32 %v533, %v536
        %v538 = vrot.slane %v537, 4
        %v540 = vshll.u32 %v215, 16
        %v542 = vrot.slane %v540, 5
        %v543 = vsel %vm241, %v538, %v542
        %v544 = vshrl.u32 %v215, 16
        %v546 = vrot.slane %v544, 4
        %v547 = vor.u32 %v546, %v542
        %v548 = vrot.slane %v547, 4
        %v550 = vshll.u32 %v235, 16
        %v552 = vrot.slane %v550, 5
        %v553 = vsel %vm241, %v548, %v552
        %v555 = vshrl.u32 %v216, 16
        %v557 = vrot.slane %v555, 4
        %v558 = vshll.u32 %v216, 16
        %v560 = vrot.slane %v558, 5
        %v561 = vor.u32 %v557, %v560
        %v562 = vrot.slane %v561, 4
        %v564 = vshll.u32 %v217, 16
        %v566 = vrot.slane %v564, 5
        %v567 = vsel %vm241, %v562, %v566
        %v568 = vshrl.u32 %v217, 16
        %v570 = vrot.slane %v568, 4
        %v571 = vor.u32 %v570, %v566
        %v572 = vrot.slane %v571, 4
        %v574 = vshll.u32 %v236, 16
        %v576 = vrot.slane %v574, 5
        %v577 = vsel %vm241, %v572, %v576
        %v579 = vshrl.u32 %v218, 16
        %v581 = vrot.slane %v579, 4
        %v582 = vshll.u32 %v218, 16
        %v584 = vrot.slane %v582, 5
        %v585 = vor.u32 %v581, %v584
        %v586 = vrot.slane %v585, 4
        %v588 = vshll.u32 %v219, 16
        %v590 = vrot.slane %v588, 5
        %v591 = vsel %vm241, %v586, %v590
        %v592 = vshrl.u32 %v219, 16
        %v594 = vrot.slane %v592, 4
        %v595 = vor.u32 %v594, %v590
        %v596 = vrot.slane %v595, 4
        %v598 = vshll.u32 %v237, 16
        %v600 = vrot.slane %v598, 5
        %v601 = vsel %vm241, %v596, %v600
        %v603 = vshrl.u32 %v220, 16
        %v605 = vrot.slane %v603, 4
        %v606 = vshll.u32 %v220, 16
        %v608 = vrot.slane %v606, 5
        %v609 = vor.u32 %v605, %v608
        %v610 = vrot.slane %v609, 4
        %v612 = vshll.u32 %v221, 16
        %v614 = vrot.slane %v612, 5
        %v615 = vsel %vm241, %v610, %v614
        %v616 = vshrl.u32 %v221, 16
        %v618 = vrot.slane %v616, 4
        %v619 = vor.u32 %v618, %v614
        %v620 = vrot.slane %v619, 4
        %v622 = vshll.u32 %v238, 16
        %v624 = vrot.slane %v622, 5
        %v625 = vsel %vm241, %v620, %v624
        %s626 = scalar_lea.vmem %s1, 4
        %v627 = vld [vmem:[%s626] sm:$0xf]
        %v628 = vunpack.c.l.b16 %v255
        %v629 = vunpack.c.l.b16 %v265
        %v630 = vunpack.c.l.b16 %v279
        %v631 = vunpack.c.l.b16 %v289
        %v632 = vunpack.c.l.b16 %v303
        %v633 = vunpack.c.l.b16 %v313
        %v634 = vunpack.c.l.b16 %v327
        %v635 = vunpack.c.l.b16 %v337
        %v636 = vunpack.c.l.b16 %v351
        %v637 = vunpack.c.l.b16 %v361
        %v638 = vunpack.c.l.b16 %v375
        %v639 = vunpack.c.l.b16 %v385
        %v640 = vunpack.c.l.b16 %v399
        %v641 = vunpack.c.l.b16 %v409
        %v642 = vunpack.c.l.b16 %v423
        %v643 = vunpack.c.l.b16 %v433
        %v644 = vunpack.c.l.b16 %v447
        %v645 = vunpack.c.l.b16 %v457
        %v646 = vunpack.c.l.b16 %v471
        %v647 = vunpack.c.l.b16 %v481
        %v648 = vunpack.c.l.b16 %v495
        %v649 = vunpack.c.l.b16 %v505
        %v650 = vunpack.c.l.b16 %v519
        %v651 = vunpack.c.l.b16 %v529
        %v652 = vunpack.c.l.b16 %v543
        %v653 = vunpack.c.l.b16 %v553
        %v654 = vunpack.c.l.b16 %v567
        %v655 = vunpack.c.l.b16 %v577
        %v656 = vunpack.c.l.b16 %v591
        %v657 = vunpack.c.l.b16 %v601
        %v658 = vunpack.c.l.b16 %v615
        %v659 = vunpack.c.l.b16 %v625
        %v660 = vpack.c.b16 %v629, %v628
        %v661 = vpack.c.b16 %v631, %v630
        %v662 = vpack.c.b16 %v633, %v632
        %v663 = vpack.c.b16 %v635, %v634
        %v664 = vpack.c.b16 %v637, %v636
        %v665 = vpack.c.b16 %v639, %v638
        %v666 = vpack.c.b16 %v641, %v640
        %v667 = vpack.c.b16 %v643, %v642
        %v668 = vpack.c.b16 %v645, %v644
        %v669 = vpack.c.b16 %v647, %v646
        %v670 = vpack.c.b16 %v649, %v648
        %v671 = vpack.c.b16 %v651, %v650
        %v672 = vpack.c.b16 %v653, %v652
        %v673 = vpack.c.b16 %v655, %v654
        %v674 = vpack.c.b16 %v657, %v656
        %v675 = vpack.c.b16 %v659, %v658
        %vm676 = vcmask 64512
        %v678 = vsel %vm676, %v660, 0
        %v681 = vsel %vm676, %v661, 0
        %v684 = vsel %vm676, %v662, 0
        %v687 = vsel %vm676, %v663, 0
        %v690 = vsel %vm676, %v664, 0
        %v693 = vsel %vm676, %v665, 0
        %v696 = vsel %vm676, %v666, 0
        %v699 = vsel %vm676, %v667, 0
        %v702 = vsel %vm676, %v668, 0
        %v705 = vsel %vm676, %v669, 0
        %v708 = vsel %vm676, %v670, 0
        %v711 = vsel %vm676, %v671, 0
        %v714 = vsel %vm676, %v672, 0
        %v717 = vsel %vm676, %v673, 0
        %v720 = vsel %vm676, %v674, 0
        %v723 = vsel %vm676, %v675, 0
        %vm725 = vcmask 1043456
        %v727 = vsel %vm725, %v627, 0
        %729 = vmatpush.bf16.msra.mxu0 0
        %730 = vmatpush.bf16.msra.mxu0 0
        %731 = vmatpush.bf16.msra.mxu0 0
        %732 = vmatpush.bf16.msra.mxu0 0
        %733 = vmatpush.bf16.msra.mxu0 0
        %734 = vmatpush.bf16.msra.mxu0 0
        %735 = vmatpush.bf16.msra.mxu0 0
        %736 = vmatpush.bf16.msra.mxu0 %v727
        %737 = vmatmul.bf16.gmra.mxu0 %v678
        %v738 = vpop.f32.mrf.mxu0
        %v739 = vadd.f32 0.0, %v738
        %v740 = vpop.f32.mrf.mxu0
        %v741 = vadd.f32 0.0, %v740
        %742 = vmatmul.bf16.gmra.mxu0 %v681
        %v743 = vpop.f32.mrf.mxu0
        %v744 = vadd.f32 0.0, %v743
        %v745 = vpop.f32.mrf.mxu0
        %v746 = vadd.f32 0.0, %v745
        %747 = vmatmul.bf16.gmra.mxu0 %v684
        %v748 = vpop.f32.mrf.mxu0
        %v749 = vadd.f32 0.0, %v748
        %v750 = vpop.f32.mrf.mxu0
        %v751 = vadd.f32 0.0, %v750
        %752 = vmatmul.bf16.gmra.mxu0 %v687
        %v753 = vpop.f32.mrf.mxu0
        %v754 = vadd.f32 0.0, %v753
        %v755 = vpop.f32.mrf.mxu0
        %v756 = vadd.f32 0.0, %v755
        %757 = vmatmul.bf16.gmra.mxu0 %v690
        %v758 = vpop.f32.mrf.mxu0
        %v759 = vadd.f32 0.0, %v758
        %v760 = vpop.f32.mrf.mxu0
        %v761 = vadd.f32 0.0, %v760
        %762 = vmatmul.bf16.gmra.mxu0 %v693
        %v763 = vpop.f32.mrf.mxu0
        %v764 = vadd.f32 0.0, %v763
        %v765 = vpop.f32.mrf.mxu0
        %v766 = vadd.f32 0.0, %v765
        %767 = vmatmul.bf16.gmra.mxu0 %v696
        %v768 = vpop.f32.mrf.mxu0
        %v769 = vadd.f32 0.0, %v768
        %v770 = vpop.f32.mrf.mxu0
        %v771 = vadd.f32 0.0, %v770
        %772 = vmatmul.bf16.gmra.mxu0 %v699
        %v773 = vpop.f32.mrf.mxu0
        %v774 = vadd.f32 0.0, %v773
        %v775 = vpop.f32.mrf.mxu0
        %v776 = vadd.f32 0.0, %v775
        %777 = vmatmul.bf16.gmra.mxu0 %v702
        %v778 = vpop.f32.mrf.mxu0
        %v779 = vadd.f32 0.0, %v778
        %v780 = vpop.f32.mrf.mxu0
        %v781 = vadd.f32 0.0, %v780
        %782 = vmatmul.bf16.gmra.mxu0 %v705
        %v783 = vpop.f32.mrf.mxu0
        %v784 = vadd.f32 0.0, %v783
        %v785 = vpop.f32.mrf.mxu0
        %v786 = vadd.f32 0.0, %v785
        %787 = vmatmul.bf16.gmra.mxu0 %v708
        %v788 = vpop.f32.mrf.mxu0
        %v789 = vadd.f32 0.0, %v788
        %v790 = vpop.f32.mrf.mxu0
        %v791 = vadd.f32 0.0, %v790
        %792 = vmatmul.bf16.gmra.mxu0 %v711
        %v793 = vpop.f32.mrf.mxu0
        %v794 = vadd.f32 0.0, %v793
        %v795 = vpop.f32.mrf.mxu0
        %v796 = vadd.f32 0.0, %v795
        %797 = vmatmul.bf16.gmra.mxu0 %v714
        %v798 = vpop.f32.mrf.mxu0
        %v799 = vadd.f32 0.0, %v798
        %v800 = vpop.f32.mrf.mxu0
        %v801 = vadd.f32 0.0, %v800
        %802 = vmatmul.bf16.gmra.mxu0 %v717
        %v803 = vpop.f32.mrf.mxu0
        %v804 = vadd.f32 0.0, %v803
        %v805 = vpop.f32.mrf.mxu0
        %v806 = vadd.f32 0.0, %v805
        %807 = vmatmul.bf16.gmra.mxu0 %v720
        %v808 = vpop.f32.mrf.mxu0
        %v809 = vadd.f32 0.0, %v808
        %v810 = vpop.f32.mrf.mxu0
        %v811 = vadd.f32 0.0, %v810
        %812 = vmatmul.bf16.gmra.mxu0 %v723
        %v813 = vpop.f32.mrf.mxu0
        %v814 = vadd.f32 0.0, %v813
        %v815 = vpop.f32.mrf.mxu0
        %v816 = vadd.f32 0.0, %v815
        %817 = vdwg.mxu0
        %v850 = vunpack.c.l.b16 %v190
        %v851 = vunpack.c.l.b16 %v191
        %v852 = vunpack.c.l.b16 %v192
        %v853 = vunpack.c.l.b16 %v193
        %v854 = vunpack.c.l.b16 %v194
        %v855 = vunpack.c.l.b16 %v195
        %v856 = vunpack.c.l.b16 %v196
        %v857 = vunpack.c.l.b16 %v197
        %v858 = vunpack.c.l.b16 %v198
        %v859 = vunpack.c.l.b16 %v199
        %v860 = vunpack.c.l.b16 %v200
        %v861 = vunpack.c.l.b16 %v201
        %v862 = vunpack.c.l.b16 %v202
        %v863 = vunpack.c.l.b16 %v203
        %v864 = vunpack.c.l.b16 %v204
        %v865 = vunpack.c.l.b16 %v205
        %v866 = vunpack.c.l.b16 %v206
        %v867 = vunpack.c.l.b16 %v207
        %v868 = vunpack.c.l.b16 %v208
        %v869 = vunpack.c.l.b16 %v209
        %v870 = vunpack.c.l.b16 %v210
        %v871 = vunpack.c.l.b16 %v211
        %v872 = vunpack.c.l.b16 %v212
        %v873 = vunpack.c.l.b16 %v213
        %v874 = vunpack.c.l.b16 %v214
        %v875 = vunpack.c.l.b16 %v215
        %v876 = vunpack.c.l.b16 %v216
        %v877 = vunpack.c.l.b16 %v217
        %v878 = vunpack.c.l.b16 %v218
        %v879 = vunpack.c.l.b16 %v219
        %v880 = vunpack.c.l.b16 %v220
        %v881 = vunpack.c.l.b16 %v221
        %v882 = vpack.c.b16 %v851, %v850
        %v883 = vpack.c.b16 %v853, %v852
        %v884 = vpack.c.b16 %v855, %v854
        %v885 = vpack.c.b16 %v857, %v856
        %v886 = vpack.c.b16 %v859, %v858
        %v887 = vpack.c.b16 %v861, %v860
        %v888 = vpack.c.b16 %v863, %v862
        %v889 = vpack.c.b16 %v865, %v864
        %v890 = vpack.c.b16 %v867, %v866
        %v891 = vpack.c.b16 %v869, %v868
        %v892 = vpack.c.b16 %v871, %v870
        %v893 = vpack.c.b16 %v873, %v872
        %v894 = vpack.c.b16 %v875, %v874
        %v895 = vpack.c.b16 %v877, %v876
        %v896 = vpack.c.b16 %v879, %v878
        %v897 = vpack.c.b16 %v881, %v880
        %v899 = vsel %vm676, %v882, 0
        %v902 = vsel %vm676, %v883, 0
        %v905 = vsel %vm676, %v884, 0
        %v908 = vsel %vm676, %v885, 0
        %v911 = vsel %vm676, %v886, 0
        %v914 = vsel %vm676, %v887, 0
        %v917 = vsel %vm676, %v888, 0
        %v920 = vsel %vm676, %v889, 0
        %v923 = vsel %vm676, %v890, 0
        %v926 = vsel %vm676, %v891, 0
        %v929 = vsel %vm676, %v892, 0
        %v932 = vsel %vm676, %v893, 0
        %v935 = vsel %vm676, %v894, 0
        %v938 = vsel %vm676, %v895, 0
        %v941 = vsel %vm676, %v896, 0
        %v944 = vsel %vm676, %v897, 0
        %v947 = vsel %vm725, %v222, 0
        %949 = vmatpush.bf16.msra.mxu0 0
        %950 = vmatpush.bf16.msra.mxu0 0
        %951 = vmatpush.bf16.msra.mxu0 0
        %952 = vmatpush.bf16.msra.mxu0 0
        %953 = vmatpush.bf16.msra.mxu0 0
        %954 = vmatpush.bf16.msra.mxu0 0
        %955 = vmatpush.bf16.msra.mxu0 0
        %956 = vmatpush.bf16.msra.mxu0 %v947
        %957 = vmatmul.bf16.gmra.mxu0 %v899
        %v958 = vpop.f32.mrf.mxu0
        %v959 = vadd.f32 %v739, %v958
        %v960 = vpop.f32.mrf.mxu0
        %v961 = vadd.f32 %v741, %v960
        %962 = vmatmul.bf16.gmra.mxu0 %v902
        %v963 = vpop.f32.mrf.mxu0
        %v964 = vadd.f32 %v744, %v963
        %v965 = vpop.f32.mrf.mxu0
        %v966 = vadd.f32 %v746, %v965
        %967 = vmatmul.bf16.gmra.mxu0 %v905
        %v968 = vpop.f32.mrf.mxu0
        %v969 = vadd.f32 %v749, %v968
        %v970 = vpop.f32.mrf.mxu0
        %v971 = vadd.f32 %v751, %v970
        %972 = vmatmul.bf16.gmra.mxu0 %v908
        %v973 = vpop.f32.mrf.mxu0
        %v974 = vadd.f32 %v754, %v973
        %v975 = vpop.f32.mrf.mxu0
        %v976 = vadd.f32 %v756, %v975
        %977 = vmatmul.bf16.gmra.mxu0 %v911
        %v978 = vpop.f32.mrf.mxu0
        %v979 = vadd.f32 %v759, %v978
        %v980 = vpop.f32.mrf.mxu0
        %v981 = vadd.f32 %v761, %v980
        %982 = vmatmul.bf16.gmra.mxu0 %v914
        %v983 = vpop.f32.mrf.mxu0
        %v984 = vadd.f32 %v764, %v983
        %v985 = vpop.f32.mrf.mxu0
        %v986 = vadd.f32 %v766, %v985
        %987 = vmatmul.bf16.gmra.mxu0 %v917
        %v988 = vpop.f32.mrf.mxu0
        %v989 = vadd.f32 %v769, %v988
        %v990 = vpop.f32.mrf.mxu0
        %v991 = vadd.f32 %v771, %v990
        %992 = vmatmul.bf16.gmra.mxu0 %v920
        %v993 = vpop.f32.mrf.mxu0
        %v994 = vadd.f32 %v774, %v993
        %v995 = vpop.f32.mrf.mxu0
        %v996 = vadd.f32 %v776, %v995
        %997 = vmatmul.bf16.gmra.mxu0 %v923
        %v998 = vpop.f32.mrf.mxu0
        %v999 = vadd.f32 %v779, %v998
        %v1000 = vpop.f32.mrf.mxu0
        %v1001 = vadd.f32 %v781, %v1000
        %1002 = vmatmul.bf16.gmra.mxu0 %v926
        %v1003 = vpop.f32.mrf.mxu0
        %v1004 = vadd.f32 %v784, %v1003
        %v1005 = vpop.f32.mrf.mxu0
        %v1006 = vadd.f32 %v786, %v1005
        %1007 = vmatmul.bf16.gmra.mxu0 %v929
        %v1008 = vpop.f32.mrf.mxu0
        %v1009 = vadd.f32 %v789, %v1008
        %v1010 = vpop.f32.mrf.mxu0
        %v1011 = vadd.f32 %v791, %v1010
        %1012 = vmatmul.bf16.gmra.mxu0 %v932
        %v1013 = vpop.f32.mrf.mxu0
        %v1014 = vadd.f32 %v794, %v1013
        %v1015 = vpop.f32.mrf.mxu0
        %v1016 = vadd.f32 %v796, %v1015
        %1017 = vmatmul.bf16.gmra.mxu0 %v935
        %v1018 = vpop.f32.mrf.mxu0
        %v1019 = vadd.f32 %v799, %v1018
        %v1020 = vpop.f32.mrf.mxu0
        %v1021 = vadd.f32 %v801, %v1020
        %1022 = vmatmul.bf16.gmra.mxu0 %v938
        %v1023 = vpop.f32.mrf.mxu0
        %v1024 = vadd.f32 %v804, %v1023
        %v1025 = vpop.f32.mrf.mxu0
        %v1026 = vadd.f32 %v806, %v1025
        %1027 = vmatmul.bf16.gmra.mxu0 %v941
        %v1028 = vpop.f32.mrf.mxu0
        %v1029 = vadd.f32 %v809, %v1028
        %v1030 = vpop.f32.mrf.mxu0
        %v1031 = vadd.f32 %v811, %v1030
        %1032 = vmatmul.bf16.gmra.mxu0 %v944
        %v1033 = vpop.f32.mrf.mxu0
        %v1034 = vadd.f32 %v814, %v1033
        %v1035 = vpop.f32.mrf.mxu0
        %v1036 = vadd.f32 %v816, %v1035
        %1037 = vdwg.mxu0
        %s1038 = sadd.s32 %s185, 1
        %s1039 = smul.u32 %s1038, 3
        %s1040 = smul.addr %s1039, 4
        %s1041 = scalar_lea.vmem %s182, %s1040
        %v1042 = vld [vmem:[%s1041] sm:$0xf]
        %v1043 = vld [vmem:[%s1041 + $0x4] sm:$0xf]
        %v1044 = vld [vmem:[%s1041 + $0xc] sm:$0xf]
        %v1045 = vld [vmem:[%s1041 + $0x10] sm:$0xf]
        %v1046 = vld [vmem:[%s1041 + $0x18] sm:$0xf]
        %v1047 = vld [vmem:[%s1041 + $0x1c] sm:$0xf]
        %v1048 = vld [vmem:[%s1041 + $0x24] sm:$0xf]
        %v1049 = vld [vmem:[%s1041 + $0x28] sm:$0xf]
        %v1050 = vld [vmem:[%s1041 + $0x30] sm:$0xf]
        %v1051 = vld [vmem:[%s1041 + $0x34] sm:$0xf]
        %v1052 = vld [vmem:[%s1041 + $0x3c] sm:$0xf]
        %v1053 = vld [vmem:[%s1041 + $0x40] sm:$0xf]
        %v1054 = vld [vmem:[%s1041 + $0x48] sm:$0xf]
        %v1055 = vld [vmem:[%s1041 + $0x4c] sm:$0xf]
        %v1056 = vld [vmem:[%s1041 + $0x54] sm:$0xf]
        %v1057 = vld [vmem:[%s1041 + $0x58] sm:$0xf]
        %v1058 = vld [vmem:[%s1041 + $0x60] sm:$0xf]
        %v1059 = vld [vmem:[%s1041 + $0x64] sm:$0xf]
        %v1060 = vld [vmem:[%s1041 + $0x6c] sm:$0xf]
        %v1061 = vld [vmem:[%s1041 + $0x70] sm:$0xf]
        %v1062 = vld [vmem:[%s1041 + $0x78] sm:$0xf]
        %v1063 = vld [vmem:[%s1041 + $0x7c] sm:$0xf]
        %v1064 = vld [vmem:[%s1041 + $0x84] sm:$0xf]
        %v1065 = vld [vmem:[%s1041 + $0x88] sm:$0xf]
        %v1066 = vld [vmem:[%s1041 + $0x90] sm:$0xf]
        %v1067 = vld [vmem:[%s1041 + $0x94] sm:$0xf]
        %v1068 = vld [vmem:[%s1041 + $0x9c] sm:$0xf]
        %v1069 = vld [vmem:[%s1041 + $0xa0] sm:$0xf]
        %v1070 = vld [vmem:[%s1041 + $0xa8] sm:$0xf]
        %v1071 = vld [vmem:[%s1041 + $0xac] sm:$0xf]
        %v1072 = vld [vmem:[%s1041 + $0xb4] sm:$0xf]
        %v1073 = vld [vmem:[%s1041 + $0xb8] sm:$0xf]
        %s1074 = scalar_lea.vmem %s1, 8
        %v1075 = vld [vmem:[%s1074] sm:$0xf]
        %v1108 = vunpack.c.l.b16 %v1042
        %v1109 = vunpack.c.l.b16 %v1043
        %v1110 = vunpack.c.l.b16 %v1044
        %v1111 = vunpack.c.l.b16 %v1045
        %v1112 = vunpack.c.l.b16 %v1046
        %v1113 = vunpack.c.l.b16 %v1047
        %v1114 = vunpack.c.l.b16 %v1048
        %v1115 = vunpack.c.l.b16 %v1049
        %v1116 = vunpack.c.l.b16 %v1050
        %v1117 = vunpack.c.l.b16 %v1051
        %v1118 = vunpack.c.l.b16 %v1052
        %v1119 = vunpack.c.l.b16 %v1053
        %v1120 = vunpack.c.l.b16 %v1054
        %v1121 = vunpack.c.l.b16 %v1055
        %v1122 = vunpack.c.l.b16 %v1056
        %v1123 = vunpack.c.l.b16 %v1057
        %v1124 = vunpack.c.l.b16 %v1058
        %v1125 = vunpack.c.l.b16 %v1059
        %v1126 = vunpack.c.l.b16 %v1060
        %v1127 = vunpack.c.l.b16 %v1061
        %v1128 = vunpack.c.l.b16 %v1062
        %v1129 = vunpack.c.l.b16 %v1063
        %v1130 = vunpack.c.l.b16 %v1064
        %v1131 = vunpack.c.l.b16 %v1065
        %v1132 = vunpack.c.l.b16 %v1066
        %v1133 = vunpack.c.l.b16 %v1067
        %v1134 = vunpack.c.l.b16 %v1068
        %v1135 = vunpack.c.l.b16 %v1069
        %v1136 = vunpack.c.l.b16 %v1070
        %v1137 = vunpack.c.l.b16 %v1071
        %v1138 = vunpack.c.l.b16 %v1072
        %v1139 = vunpack.c.l.b16 %v1073
        %v1140 = vpack.c.b16 %v1109, %v1108
        %v1141 = vpack.c.b16 %v1111, %v1110
        %v1142 = vpack.c.b16 %v1113, %v1112
        %v1143 = vpack.c.b16 %v1115, %v1114
        %v1144 = vpack.c.b16 %v1117, %v1116
        %v1145 = vpack.c.b16 %v1119, %v1118
        %v1146 = vpack.c.b16 %v1121, %v1120
        %v1147 = vpack.c.b16 %v1123, %v1122
        %v1148 = vpack.c.b16 %v1125, %v1124
        %v1149 = vpack.c.b16 %v1127, %v1126
        %v1150 = vpack.c.b16 %v1129, %v1128
        %v1151 = vpack.c.b16 %v1131, %v1130
        %v1152 = vpack.c.b16 %v1133, %v1132
        %v1153 = vpack.c.b16 %v1135, %v1134
        %v1154 = vpack.c.b16 %v1137, %v1136
        %v1155 = vpack.c.b16 %v1139, %v1138
        %v1157 = vsel %vm676, %v1140, 0
        %v1160 = vsel %vm676, %v1141, 0
        %v1163 = vsel %vm676, %v1142, 0
        %v1166 = vsel %vm676, %v1143, 0
        %v1169 = vsel %vm676, %v1144, 0
        %v1172 = vsel %vm676, %v1145, 0
        %v1175 = vsel %vm676, %v1146, 0
        %v1178 = vsel %vm676, %v1147, 0
        %v1181 = vsel %vm676, %v1148, 0
        %v1184 = vsel %vm676, %v1149, 0
        %v1187 = vsel %vm676, %v1150, 0
        %v1190 = vsel %vm676, %v1151, 0
        %v1193 = vsel %vm676, %v1152, 0
        %v1196 = vsel %vm676, %v1153, 0
        %v1199 = vsel %vm676, %v1154, 0
        %v1202 = vsel %vm676, %v1155, 0
        %v1205 = vsel %vm725, %v1075, 0
        %1207 = vmatpush.bf16.msra.mxu0 0
        %1208 = vmatpush.bf16.msra.mxu0 0
        %1209 = vmatpush.bf16.msra.mxu0 0
        %1210 = vmatpush.bf16.msra.mxu0 0
        %1211 = vmatpush.bf16.msra.mxu0 0
        %1212 = vmatpush.bf16.msra.mxu0 0
        %1213 = vmatpush.bf16.msra.mxu0 0
        %1214 = vmatpush.bf16.msra.mxu0 %v1205
        %1215 = vmatmul.bf16.gmra.mxu0 %v1157
        %v1216 = vpop.f32.mrf.mxu0
        %v1217 = vadd.f32 0.0, %v1216
        %v1218 = vpop.f32.mrf.mxu0
        %v1219 = vadd.f32 0.0, %v1218
        %1220 = vmatmul.bf16.gmra.mxu0 %v1160
        %v1221 = vpop.f32.mrf.mxu0
        %v1222 = vadd.f32 0.0, %v1221
        %v1223 = vpop.f32.mrf.mxu0
        %v1224 = vadd.f32 0.0, %v1223
        %1225 = vmatmul.bf16.gmra.mxu0 %v1163
        %v1226 = vpop.f32.mrf.mxu0
        %v1227 = vadd.f32 0.0, %v1226
        %v1228 = vpop.f32.mrf.mxu0
        %v1229 = vadd.f32 0.0, %v1228
        %1230 = vmatmul.bf16.gmra.mxu0 %v1166
        %v1231 = vpop.f32.mrf.mxu0
        %v1232 = vadd.f32 0.0, %v1231
        %v1233 = vpop.f32.mrf.mxu0
        %v1234 = vadd.f32 0.0, %v1233
        %1235 = vmatmul.bf16.gmra.mxu0 %v1169
        %v1236 = vpop.f32.mrf.mxu0
        %v1237 = vadd.f32 0.0, %v1236
        %v1238 = vpop.f32.mrf.mxu0
        %v1239 = vadd.f32 0.0, %v1238
        %1240 = vmatmul.bf16.gmra.mxu0 %v1172
        %v1241 = vpop.f32.mrf.mxu0
        %v1242 = vadd.f32 0.0, %v1241
        %v1243 = vpop.f32.mrf.mxu0
        %v1244 = vadd.f32 0.0, %v1243
        %1245 = vmatmul.bf16.gmra.mxu0 %v1175
        %v1246 = vpop.f32.mrf.mxu0
        %v1247 = vadd.f32 0.0, %v1246
        %v1248 = vpop.f32.mrf.mxu0
        %v1249 = vadd.f32 0.0, %v1248
        %1250 = vmatmul.bf16.gmra.mxu0 %v1178
        %v1251 = vpop.f32.mrf.mxu0
        %v1252 = vadd.f32 0.0, %v1251
        %v1253 = vpop.f32.mrf.mxu0
        %v1254 = vadd.f32 0.0, %v1253
        %1255 = vmatmul.bf16.gmra.mxu0 %v1181
        %v1256 = vpop.f32.mrf.mxu0
        %v1257 = vadd.f32 0.0, %v1256
        %v1258 = vpop.f32.mrf.mxu0
        %v1259 = vadd.f32 0.0, %v1258
        %1260 = vmatmul.bf16.gmra.mxu0 %v1184
        %v1261 = vpop.f32.mrf.mxu0
        %v1262 = vadd.f32 0.0, %v1261
        %v1263 = vpop.f32.mrf.mxu0
        %v1264 = vadd.f32 0.0, %v1263
        %1265 = vmatmul.bf16.gmra.mxu0 %v1187
        %v1266 = vpop.f32.mrf.mxu0
        %v1267 = vadd.f32 0.0, %v1266
        %v1268 = vpop.f32.mrf.mxu0
        %v1269 = vadd.f32 0.0, %v1268
        %1270 = vmatmul.bf16.gmra.mxu0 %v1190
        %v1271 = vpop.f32.mrf.mxu0
        %v1272 = vadd.f32 0.0, %v1271
        %v1273 = vpop.f32.mrf.mxu0
        %v1274 = vadd.f32 0.0, %v1273
        %1275 = vmatmul.bf16.gmra.mxu0 %v1193
        %v1276 = vpop.f32.mrf.mxu0
        %v1277 = vadd.f32 0.0, %v1276
        %v1278 = vpop.f32.mrf.mxu0
        %v1279 = vadd.f32 0.0, %v1278
        %1280 = vmatmul.bf16.gmra.mxu0 %v1196
        %v1281 = vpop.f32.mrf.mxu0
        %v1282 = vadd.f32 0.0, %v1281
        %v1283 = vpop.f32.mrf.mxu0
        %v1284 = vadd.f32 0.0, %v1283
        %1285 = vmatmul.bf16.gmra.mxu0 %v1199
        %v1286 = vpop.f32.mrf.mxu0
        %v1287 = vadd.f32 0.0, %v1286
        %v1288 = vpop.f32.mrf.mxu0
        %v1289 = vadd.f32 0.0, %v1288
        %1290 = vmatmul.bf16.gmra.mxu0 %v1202
        %v1291 = vpop.f32.mrf.mxu0
        %v1292 = vadd.f32 0.0, %v1291
        %v1293 = vpop.f32.mrf.mxu0
        %v1294 = vadd.f32 0.0, %v1293
        %1295 = vdwg.mxu0
        %v1296 = vadd.f32 %v959, %v1217
        %v1297 = vadd.f32 %v961, %v1219
        %v1298 = vadd.f32 %v964, %v1222
        %v1299 = vadd.f32 %v966, %v1224
        %v1300 = vadd.f32 %v969, %v1227
        %v1301 = vadd.f32 %v971, %v1229
        %v1302 = vadd.f32 %v974, %v1232
        %v1303 = vadd.f32 %v976, %v1234
        %v1304 = vadd.f32 %v979, %v1237
        %v1305 = vadd.f32 %v981, %v1239
        %v1306 = vadd.f32 %v984, %v1242
        %v1307 = vadd.f32 %v986, %v1244
        %v1308 = vadd.f32 %v989, %v1247
        %v1309 = vadd.f32 %v991, %v1249
        %v1310 = vadd.f32 %v994, %v1252
        %v1311 = vadd.f32 %v996, %v1254
        %v1312 = vadd.f32 %v999, %v1257
        %v1313 = vadd.f32 %v1001, %v1259
        %v1314 = vadd.f32 %v1004, %v1262
        %v1315 = vadd.f32 %v1006, %v1264
        %v1316 = vadd.f32 %v1009, %v1267
        %v1317 = vadd.f32 %v1011, %v1269
        %v1318 = vadd.f32 %v1014, %v1272
        %v1319 = vadd.f32 %v1016, %v1274
        %v1320 = vadd.f32 %v1019, %v1277
        %v1321 = vadd.f32 %v1021, %v1279
        %v1322 = vadd.f32 %v1024, %v1282
        %v1323 = vadd.f32 %v1026, %v1284
        %v1324 = vadd.f32 %v1029, %v1287
        %v1325 = vadd.f32 %v1031, %v1289
        %v1326 = vadd.f32 %v1034, %v1292
        %v1327 = vadd.f32 %v1036, %v1294
        %v1328 = vld [vmem:[%s1041] sm:$0xf]
        %v1329 = vld [vmem:[%s1041 + $0x4] sm:$0xf]
        %v1330 = vld [vmem:[%s1041 + $0x8] sm:$0x1]
        %v1331 = vld [vmem:[%s1041 + $0xc] sm:$0xf]
        %v1332 = vld [vmem:[%s1041 + $0x10] sm:$0xf]
        %v1333 = vld [vmem:[%s1041 + $0x14] sm:$0x1]
        %v1334 = vld [vmem:[%s1041 + $0x18] sm:$0xf]
        %v1335 = vld [vmem:[%s1041 + $0x1c] sm:$0xf]
        %v1336 = vld [vmem:[%s1041 + $0x20] sm:$0x1]
        %v1337 = vld [vmem:[%s1041 + $0x24] sm:$0xf]
        %v1338 = vld [vmem:[%s1041 + $0x28] sm:$0xf]
        %v1339 = vld [vmem:[%s1041 + $0x2c] sm:$0x1]
        %v1340 = vld [vmem:[%s1041 + $0x30] sm:$0xf]
        %v1341 = vld [vmem:[%s1041 + $0x34] sm:$0xf]
        %v1342 = vld [vmem:[%s1041 + $0x38] sm:$0x1]
        %v1343 = vld [vmem:[%s1041 + $0x3c] sm:$0xf]
        %v1344 = vld [vmem:[%s1041 + $0x40] sm:$0xf]
        %v1345 = vld [vmem:[%s1041 + $0x44] sm:$0x1]
        %v1346 = vld [vmem:[%s1041 + $0x48] sm:$0xf]
        %v1347 = vld [vmem:[%s1041 + $0x4c] sm:$0xf]
        %v1348 = vld [vmem:[%s1041 + $0x50] sm:$0x1]
        %v1349 = vld [vmem:[%s1041 + $0x54] sm:$0xf]
        %v1350 = vld [vmem:[%s1041 + $0x58] sm:$0xf]
        %v1351 = vld [vmem:[%s1041 + $0x5c] sm:$0x1]
        %v1352 = vld [vmem:[%s1041 + $0x60] sm:$0xf]
        %v1353 = vld [vmem:[%s1041 + $0x64] sm:$0xf]
        %v1354 = vld [vmem:[%s1041 + $0x68] sm:$0x1]
        %v1355 = vld [vmem:[%s1041 + $0x6c] sm:$0xf]
        %v1356 = vld [vmem:[%s1041 + $0x70] sm:$0xf]
        %v1357 = vld [vmem:[%s1041 + $0x74] sm:$0x1]
        %v1358 = vld [vmem:[%s1041 + $0x78] sm:$0xf]
        %v1359 = vld [vmem:[%s1041 + $0x7c] sm:$0xf]
        %v1360 = vld [vmem:[%s1041 + $0x80] sm:$0x1]
        %v1361 = vld [vmem:[%s1041 + $0x84] sm:$0xf]
        %v1362 = vld [vmem:[%s1041 + $0x88] sm:$0xf]
        %v1363 = vld [vmem:[%s1041 + $0x8c] sm:$0x1]
        %v1364 = vld [vmem:[%s1041 + $0x90] sm:$0xf]
        %v1365 = vld [vmem:[%s1041 + $0x94] sm:$0xf]
        %v1366 = vld [vmem:[%s1041 + $0x98] sm:$0x1]
        %v1367 = vld [vmem:[%s1041 + $0x9c] sm:$0xf]
        %v1368 = vld [vmem:[%s1041 + $0xa0] sm:$0xf]
        %v1369 = vld [vmem:[%s1041 + $0xa4] sm:$0x1]
        %v1370 = vld [vmem:[%s1041 + $0xa8] sm:$0xf]
        %v1371 = vld [vmem:[%s1041 + $0xac] sm:$0xf]
        %v1372 = vld [vmem:[%s1041 + $0xb0] sm:$0x1]
        %v1373 = vld [vmem:[%s1041 + $0xb4] sm:$0xf]
        %v1374 = vld [vmem:[%s1041 + $0xb8] sm:$0xf]
        %v1375 = vld [vmem:[%s1041 + $0xbc] sm:$0x1]
        %v1377 = vshrl.u32 %v1328, 16
        %v1379 = vrot.slane %v1377, 4
        %v1380 = vshll.u32 %v1328, 16
        %v1382 = vrot.slane %v1380, 5
        %v1383 = vor.u32 %v1379, %v1382
        %v1384 = vrot.slane %v1383, 4
        %v1386 = vshll.u32 %v1329, 16
        %v1388 = vrot.slane %v1386, 5
        %v1389 = vsel %vm241, %v1384, %v1388
        %v1390 = vshrl.u32 %v1329, 16
        %v1392 = vrot.slane %v1390, 4
        %v1393 = vor.u32 %v1392, %v1388
        %v1394 = vrot.slane %v1393, 4
        %v1396 = vshll.u32 %v1330, 16
        %v1398 = vrot.slane %v1396, 5
        %v1399 = vsel %vm241, %v1394, %v1398
        %v1401 = vshrl.u32 %v1331, 16
        %v1403 = vrot.slane %v1401, 4
        %v1404 = vshll.u32 %v1331, 16
        %v1406 = vrot.slane %v1404, 5
        %v1407 = vor.u32 %v1403, %v1406
        %v1408 = vrot.slane %v1407, 4
        %v1410 = vshll.u32 %v1332, 16
        %v1412 = vrot.slane %v1410, 5
        %v1413 = vsel %vm241, %v1408, %v1412
        %v1414 = vshrl.u32 %v1332, 16
        %v1416 = vrot.slane %v1414, 4
        %v1417 = vor.u32 %v1416, %v1412
        %v1418 = vrot.slane %v1417, 4
        %v1420 = vshll.u32 %v1333, 16
        %v1422 = vrot.slane %v1420, 5
        %v1423 = vsel %vm241, %v1418, %v1422
        %v1425 = vshrl.u32 %v1334, 16
        %v1427 = vrot.slane %v1425, 4
        %v1428 = vshll.u32 %v1334, 16
        %v1430 = vrot.slane %v1428, 5
        %v1431 = vor.u32 %v1427, %v1430
        %v1432 = vrot.slane %v1431, 4
        %v1434 = vshll.u32 %v1335, 16
        %v1436 = vrot.slane %v1434, 5
        %v1437 = vsel %vm241, %v1432, %v1436
        %v1438 = vshrl.u32 %v1335, 16
        %v1440 = vrot.slane %v1438, 4
        %v1441 = vor.u32 %v1440, %v1436
        %v1442 = vrot.slane %v1441, 4
        %v1444 = vshll.u32 %v1336, 16
        %v1446 = vrot.slane %v1444, 5
        %v1447 = vsel %vm241, %v1442, %v1446
        %v1449 = vshrl.u32 %v1337, 16
        %v1451 = vrot.slane %v1449, 4
        %v1452 = vshll.u32 %v1337, 16
        %v1454 = vrot.slane %v1452, 5
        %v1455 = vor.u32 %v1451, %v1454
        %v1456 = vrot.slane %v1455, 4
        %v1458 = vshll.u32 %v1338, 16
        %v1460 = vrot.slane %v1458, 5
        %v1461 = vsel %vm241, %v1456, %v1460
        %v1462 = vshrl.u32 %v1338, 16
        %v1464 = vrot.slane %v1462, 4
        %v1465 = vor.u32 %v1464, %v1460
        %v1466 = vrot.slane %v1465, 4
        %v1468 = vshll.u32 %v1339, 16
        %v1470 = vrot.slane %v1468, 5
        %v1471 = vsel %vm241, %v1466, %v1470
        %v1473 = vshrl.u32 %v1340, 16
        %v1475 = vrot.slane %v1473, 4
        %v1476 = vshll.u32 %v1340, 16
        %v1478 = vrot.slane %v1476, 5
        %v1479 = vor.u32 %v1475, %v1478
        %v1480 = vrot.slane %v1479, 4
        %v1482 = vshll.u32 %v1341, 16
        %v1484 = vrot.slane %v1482, 5
        %v1485 = vsel %vm241, %v1480, %v1484
        %v1486 = vshrl.u32 %v1341, 16
        %v1488 = vrot.slane %v1486, 4
        %v1489 = vor.u32 %v1488, %v1484
        %v1490 = vrot.slane %v1489, 4
        %v1492 = vshll.u32 %v1342, 16
        %v1494 = vrot.slane %v1492, 5
        %v1495 = vsel %vm241, %v1490, %v1494
        %v1497 = vshrl.u32 %v1343, 16
        %v1499 = vrot.slane %v1497, 4
        %v1500 = vshll.u32 %v1343, 16
        %v1502 = vrot.slane %v1500, 5
        %v1503 = vor.u32 %v1499, %v1502
        %v1504 = vrot.slane %v1503, 4
        %v1506 = vshll.u32 %v1344, 16
        %v1508 = vrot.slane %v1506, 5
        %v1509 = vsel %vm241, %v1504, %v1508
        %v1510 = vshrl.u32 %v1344, 16
        %v1512 = vrot.slane %v1510, 4
        %v1513 = vor.u32 %v1512, %v1508
        %v1514 = vrot.slane %v1513, 4
        %v1516 = vshll.u32 %v1345, 16
        %v1518 = vrot.slane %v1516, 5
        %v1519 = vsel %vm241, %v1514, %v1518
        %v1521 = vshrl.u32 %v1346, 16
        %v1523 = vrot.slane %v1521, 4
        %v1524 = vshll.u32 %v1346, 16
        %v1526 = vrot.slane %v1524, 5
        %v1527 = vor.u32 %v1523, %v1526
        %v1528 = vrot.slane %v1527, 4
        %v1530 = vshll.u32 %v1347, 16
        %v1532 = vrot.slane %v1530, 5
        %v1533 = vsel %vm241, %v1528, %v1532
        %v1534 = vshrl.u32 %v1347, 16
        %v1536 = vrot.slane %v1534, 4
        %v1537 = vor.u32 %v1536, %v1532
        %v1538 = vrot.slane %v1537, 4
        %v1540 = vshll.u32 %v1348, 16
        %v1542 = vrot.slane %v1540, 5
        %v1543 = vsel %vm241, %v1538, %v1542
        %v1545 = vshrl.u32 %v1349, 16
        %v1547 = vrot.slane %v1545, 4
        %v1548 = vshll.u32 %v1349, 16
        %v1550 = vrot.slane %v1548, 5
        %v1551 = vor.u32 %v1547, %v1550
        %v1552 = vrot.slane %v1551, 4
        %v1554 = vshll.u32 %v1350, 16
        %v1556 = vrot.slane %v1554, 5
        %v1557 = vsel %vm241, %v1552, %v1556
        %v1558 = vshrl.u32 %v1350, 16
        %v1560 = vrot.slane %v1558, 4
        %v1561 = vor.u32 %v1560, %v1556
        %v1562 = vrot.slane %v1561, 4
        %v1564 = vshll.u32 %v1351, 16
        %v1566 = vrot.slane %v1564, 5
        %v1567 = vsel %vm241, %v1562, %v1566
        %v1569 = vshrl.u32 %v1352, 16
        %v1571 = vrot.slane %v1569, 4
        %v1572 = vshll.u32 %v1352, 16
        %v1574 = vrot.slane %v1572, 5
        %v1575 = vor.u32 %v1571, %v1574
        %v1576 = vrot.slane %v1575, 4
        %v1578 = vshll.u32 %v1353, 16
        %v1580 = vrot.slane %v1578, 5
        %v1581 = vsel %vm241, %v1576, %v1580
        %v1582 = vshrl.u32 %v1353, 16
        %v1584 = vrot.slane %v1582, 4
        %v1585 = vor.u32 %v1584, %v1580
        %v1586 = vrot.slane %v1585, 4
        %v1588 = vshll.u32 %v1354, 16
        %v1590 = vrot.slane %v1588, 5
        %v1591 = vsel %vm241, %v1586, %v1590
        %v1593 = vshrl.u32 %v1355, 16
        %v1595 = vrot.slane %v1593, 4
        %v1596 = vshll.u32 %v1355, 16
        %v1598 = vrot.slane %v1596, 5
        %v1599 = vor.u32 %v1595, %v1598
        %v1600 = vrot.slane %v1599, 4
        %v1602 = vshll.u32 %v1356, 16
        %v1604 = vrot.slane %v1602, 5
        %v1605 = vsel %vm241, %v1600, %v1604
        %v1606 = vshrl.u32 %v1356, 16
        %v1608 = vrot.slane %v1606, 4
        %v1609 = vor.u32 %v1608, %v1604
        %v1610 = vrot.slane %v1609, 4
        %v1612 = vshll.u32 %v1357, 16
        %v1614 = vrot.slane %v1612, 5
        %v1615 = vsel %vm241, %v1610, %v1614
        %v1617 = vshrl.u32 %v1358, 16
        %v1619 = vrot.slane %v1617, 4
        %v1620 = vshll.u32 %v1358, 16
        %v1622 = vrot.slane %v1620, 5
        %v1623 = vor.u32 %v1619, %v1622
        %v1624 = vrot.slane %v1623, 4
        %v1626 = vshll.u32 %v1359, 16
        %v1628 = vrot.slane %v1626, 5
        %v1629 = vsel %vm241, %v1624, %v1628
        %v1630 = vshrl.u32 %v1359, 16
        %v1632 = vrot.slane %v1630, 4
        %v1633 = vor.u32 %v1632, %v1628
        %v1634 = vrot.slane %v1633, 4
        %v1636 = vshll.u32 %v1360, 16
        %v1638 = vrot.slane %v1636, 5
        %v1639 = vsel %vm241, %v1634, %v1638
        %v1641 = vshrl.u32 %v1361, 16
        %v1643 = vrot.slane %v1641, 4
        %v1644 = vshll.u32 %v1361, 16
        %v1646 = vrot.slane %v1644, 5
        %v1647 = vor.u32 %v1643, %v1646
        %v1648 = vrot.slane %v1647, 4
        %v1650 = vshll.u32 %v1362, 16
        %v1652 = vrot.slane %v1650, 5
        %v1653 = vsel %vm241, %v1648, %v1652
        %v1654 = vshrl.u32 %v1362, 16
        %v1656 = vrot.slane %v1654, 4
        %v1657 = vor.u32 %v1656, %v1652
        %v1658 = vrot.slane %v1657, 4
        %v1660 = vshll.u32 %v1363, 16
        %v1662 = vrot.slane %v1660, 5
        %v1663 = vsel %vm241, %v1658, %v1662
        %v1665 = vshrl.u32 %v1364, 16
        %v1667 = vrot.slane %v1665, 4
        %v1668 = vshll.u32 %v1364, 16
        %v1670 = vrot.slane %v1668, 5
        %v1671 = vor.u32 %v1667, %v1670
        %v1672 = vrot.slane %v1671, 4
        %v1674 = vshll.u32 %v1365, 16
        %v1676 = vrot.slane %v1674, 5
        %v1677 = vsel %vm241, %v1672, %v1676
        %v1678 = vshrl.u32 %v1365, 16
        %v1680 = vrot.slane %v1678, 4
        %v1681 = vor.u32 %v1680, %v1676
        %v1682 = vrot.slane %v1681, 4
        %v1684 = vshll.u32 %v1366, 16
        %v1686 = vrot.slane %v1684, 5
        %v1687 = vsel %vm241, %v1682, %v1686
        %v1689 = vshrl.u32 %v1367, 16
        %v1691 = vrot.slane %v1689, 4
        %v1692 = vshll.u32 %v1367, 16
        %v1694 = vrot.slane %v1692, 5
        %v1695 = vor.u32 %v1691, %v1694
        %v1696 = vrot.slane %v1695, 4
        %v1698 = vshll.u32 %v1368, 16
        %v1700 = vrot.slane %v1698, 5
        %v1701 = vsel %vm241, %v1696, %v1700
        %v1702 = vshrl.u32 %v1368, 16
        %v1704 = vrot.slane %v1702, 4
        %v1705 = vor.u32 %v1704, %v1700
        %v1706 = vrot.slane %v1705, 4
        %v1708 = vshll.u32 %v1369, 16
        %v1710 = vrot.slane %v1708, 5
        %v1711 = vsel %vm241, %v1706, %v1710
        %v1713 = vshrl.u32 %v1370, 16
        %v1715 = vrot.slane %v1713, 4
        %v1716 = vshll.u32 %v1370, 16
        %v1718 = vrot.slane %v1716, 5
        %v1719 = vor.u32 %v1715, %v1718
        %v1720 = vrot.slane %v1719, 4
        %v1722 = vshll.u32 %v1371, 16
        %v1724 = vrot.slane %v1722, 5
        %v1725 = vsel %vm241, %v1720, %v1724
        %v1726 = vshrl.u32 %v1371, 16
        %v1728 = vrot.slane %v1726, 4
        %v1729 = vor.u32 %v1728, %v1724
        %v1730 = vrot.slane %v1729, 4
        %v1732 = vshll.u32 %v1372, 16
        %v1734 = vrot.slane %v1732, 5
        %v1735 = vsel %vm241, %v1730, %v1734
        %v1737 = vshrl.u32 %v1373, 16
        %v1739 = vrot.slane %v1737, 4
        %v1740 = vshll.u32 %v1373, 16
        %v1742 = vrot.slane %v1740, 5
        %v1743 = vor.u32 %v1739, %v1742
        %v1744 = vrot.slane %v1743, 4
        %v1746 = vshll.u32 %v1374, 16
        %v1748 = vrot.slane %v1746, 5
        %v1749 = vsel %vm241, %v1744, %v1748
        %v1750 = vshrl.u32 %v1374, 16
        %v1752 = vrot.slane %v1750, 4
        %v1753 = vor.u32 %v1752, %v1748
        %v1754 = vrot.slane %v1753, 4
        %v1756 = vshll.u32 %v1375, 16
        %v1758 = vrot.slane %v1756, 5
        %v1759 = vsel %vm241, %v1754, %v1758
        %s1760 = scalar_lea.vmem %s1, 12
        %v1761 = vld [vmem:[%s1760] sm:$0xf]
        %v1762 = vunpack.c.l.b16 %v1389
        %v1763 = vunpack.c.l.b16 %v1399
        %v1764 = vunpack.c.l.b16 %v1413
        %v1765 = vunpack.c.l.b16 %v1423
        %v1766 = vunpack.c.l.b16 %v1437
        %v1767 = vunpack.c.l.b16 %v1447
        %v1768 = vunpack.c.l.b16 %v1461
        %v1769 = vunpack.c.l.b16 %v1471
        %v1770 = vunpack.c.l.b16 %v1485
        %v1771 = vunpack.c.l.b16 %v1495
        %v1772 = vunpack.c.l.b16 %v1509
        %v1773 = vunpack.c.l.b16 %v1519
        %v1774 = vunpack.c.l.b16 %v1533
        %v1775 = vunpack.c.l.b16 %v1543
        %v1776 = vunpack.c.l.b16 %v1557
        %v1777 = vunpack.c.l.b16 %v1567
        %v1778 = vunpack.c.l.b16 %v1581
        %v1779 = vunpack.c.l.b16 %v1591
        %v1780 = vunpack.c.l.b16 %v1605
        %v1781 = vunpack.c.l.b16 %v1615
        %v1782 = vunpack.c.l.b16 %v1629
        %v1783 = vunpack.c.l.b16 %v1639
        %v1784 = vunpack.c.l.b16 %v1653
        %v1785 = vunpack.c.l.b16 %v1663
        %v1786 = vunpack.c.l.b16 %v1677
        %v1787 = vunpack.c.l.b16 %v1687
        %v1788 = vunpack.c.l.b16 %v1701
        %v1789 = vunpack.c.l.b16 %v1711
        %v1790 = vunpack.c.l.b16 %v1725
        %v1791 = vunpack.c.l.b16 %v1735
        %v1792 = vunpack.c.l.b16 %v1749
        %v1793 = vunpack.c.l.b16 %v1759
        %v1794 = vpack.c.b16 %v1763, %v1762
        %v1795 = vpack.c.b16 %v1765, %v1764
        %v1796 = vpack.c.b16 %v1767, %v1766
        %v1797 = vpack.c.b16 %v1769, %v1768
        %v1798 = vpack.c.b16 %v1771, %v1770
        %v1799 = vpack.c.b16 %v1773, %v1772
        %v1800 = vpack.c.b16 %v1775, %v1774
        %v1801 = vpack.c.b16 %v1777, %v1776
        %v1802 = vpack.c.b16 %v1779, %v1778
        %v1803 = vpack.c.b16 %v1781, %v1780
        %v1804 = vpack.c.b16 %v1783, %v1782
        %v1805 = vpack.c.b16 %v1785, %v1784
        %v1806 = vpack.c.b16 %v1787, %v1786
        %v1807 = vpack.c.b16 %v1789, %v1788
        %v1808 = vpack.c.b16 %v1791, %v1790
        %v1809 = vpack.c.b16 %v1793, %v1792
        %v1811 = vsel %vm676, %v1794, 0
        %v1814 = vsel %vm676, %v1795, 0
        %v1817 = vsel %vm676, %v1796, 0
        %v1820 = vsel %vm676, %v1797, 0
        %v1823 = vsel %vm676, %v1798, 0
        %v1826 = vsel %vm676, %v1799, 0
        %v1829 = vsel %vm676, %v1800, 0
        %v1832 = vsel %vm676, %v1801, 0
        %v1835 = vsel %vm676, %v1802, 0
        %v1838 = vsel %vm676, %v1803, 0
        %v1841 = vsel %vm676, %v1804, 0
        %v1844 = vsel %vm676, %v1805, 0
        %v1847 = vsel %vm676, %v1806, 0
        %v1850 = vsel %vm676, %v1807, 0
        %v1853 = vsel %vm676, %v1808, 0
        %v1856 = vsel %vm676, %v1809, 0
        %v1859 = vsel %vm725, %v1761, 0
        %1861 = vmatpush.bf16.msra.mxu0 0
        %1862 = vmatpush.bf16.msra.mxu0 0
        %1863 = vmatpush.bf16.msra.mxu0 0
        %1864 = vmatpush.bf16.msra.mxu0 0
        %1865 = vmatpush.bf16.msra.mxu0 0
        %1866 = vmatpush.bf16.msra.mxu0 0
        %1867 = vmatpush.bf16.msra.mxu0 0
        %1868 = vmatpush.bf16.msra.mxu0 %v1859
        %1869 = vmatmul.bf16.gmra.mxu0 %v1811
        %v1870 = vpop.f32.mrf.mxu0
        %v1871 = vadd.f32 0.0, %v1870
        %v1872 = vpop.f32.mrf.mxu0
        %v1873 = vadd.f32 0.0, %v1872
        %1874 = vmatmul.bf16.gmra.mxu0 %v1814
        %v1875 = vpop.f32.mrf.mxu0
        %v1876 = vadd.f32 0.0, %v1875
        %v1877 = vpop.f32.mrf.mxu0
        %v1878 = vadd.f32 0.0, %v1877
        %1879 = vmatmul.bf16.gmra.mxu0 %v1817
        %v1880 = vpop.f32.mrf.mxu0
        %v1881 = vadd.f32 0.0, %v1880
        %v1882 = vpop.f32.mrf.mxu0
        %v1883 = vadd.f32 0.0, %v1882
        %1884 = vmatmul.bf16.gmra.mxu0 %v1820
        %v1885 = vpop.f32.mrf.mxu0
        %v1886 = vadd.f32 0.0, %v1885
        %v1887 = vpop.f32.mrf.mxu0
        %v1888 = vadd.f32 0.0, %v1887
        %1889 = vmatmul.bf16.gmra.mxu0 %v1823
        %v1890 = vpop.f32.mrf.mxu0
        %v1891 = vadd.f32 0.0, %v1890
        %v1892 = vpop.f32.mrf.mxu0
        %v1893 = vadd.f32 0.0, %v1892
        %1894 = vmatmul.bf16.gmra.mxu0 %v1826
        %v1895 = vpop.f32.mrf.mxu0
        %v1896 = vadd.f32 0.0, %v1895
        %v1897 = vpop.f32.mrf.mxu0
        %v1898 = vadd.f32 0.0, %v1897
        %1899 = vmatmul.bf16.gmra.mxu0 %v1829
        %v1900 = vpop.f32.mrf.mxu0
        %v1901 = vadd.f32 0.0, %v1900
        %v1902 = vpop.f32.mrf.mxu0
        %v1903 = vadd.f32 0.0, %v1902
        %1904 = vmatmul.bf16.gmra.mxu0 %v1832
        %v1905 = vpop.f32.mrf.mxu0
        %v1906 = vadd.f32 0.0, %v1905
        %v1907 = vpop.f32.mrf.mxu0
        %v1908 = vadd.f32 0.0, %v1907
        %1909 = vmatmul.bf16.gmra.mxu0 %v1835
        %v1910 = vpop.f32.mrf.mxu0
        %v1911 = vadd.f32 0.0, %v1910
        %v1912 = vpop.f32.mrf.mxu0
        %v1913 = vadd.f32 0.0, %v1912
        %1914 = vmatmul.bf16.gmra.mxu0 %v1838
        %v1915 = vpop.f32.mrf.mxu0
        %v1916 = vadd.f32 0.0, %v1915
        %v1917 = vpop.f32.mrf.mxu0
        %v1918 = vadd.f32 0.0, %v1917
        %1919 = vmatmul.bf16.gmra.mxu0 %v1841
        %v1920 = vpop.f32.mrf.mxu0
        %v1921 = vadd.f32 0.0, %v1920
        %v1922 = vpop.f32.mrf.mxu0
        %v1923 = vadd.f32 0.0, %v1922
        %1924 = vmatmul.bf16.gmra.mxu0 %v1844
        %v1925 = vpop.f32.mrf.mxu0
        %v1926 = vadd.f32 0.0, %v1925
        %v1927 = vpop.f32.mrf.mxu0
        %v1928 = vadd.f32 0.0, %v1927
        %1929 = vmatmul.bf16.gmra.mxu0 %v1847
        %v1930 = vpop.f32.mrf.mxu0
        %v1931 = vadd.f32 0.0, %v1930
        %v1932 = vpop.f32.mrf.mxu0
        %v1933 = vadd.f32 0.0, %v1932
        %1934 = vmatmul.bf16.gmra.mxu0 %v1850
        %v1935 = vpop.f32.mrf.mxu0
        %v1936 = vadd.f32 0.0, %v1935
        %v1937 = vpop.f32.mrf.mxu0
        %v1938 = vadd.f32 0.0, %v1937
        %1939 = vmatmul.bf16.gmra.mxu0 %v1853
        %v1940 = vpop.f32.mrf.mxu0
        %v1941 = vadd.f32 0.0, %v1940
        %v1942 = vpop.f32.mrf.mxu0
        %v1943 = vadd.f32 0.0, %v1942
        %1944 = vmatmul.bf16.gmra.mxu0 %v1856
        %v1945 = vpop.f32.mrf.mxu0
        %v1946 = vadd.f32 0.0, %v1945
        %v1947 = vpop.f32.mrf.mxu0
        %v1948 = vadd.f32 0.0, %v1947
        %1949 = vdwg.mxu0
        %v1950 = vadd.f32 %v1296, %v1871
        %v1951 = vadd.f32 %v1297, %v1873
        %v1952 = vadd.f32 %v1298, %v1876
        %v1953 = vadd.f32 %v1299, %v1878
        %v1954 = vadd.f32 %v1300, %v1881
        %v1955 = vadd.f32 %v1301, %v1883
        %v1956 = vadd.f32 %v1302, %v1886
        %v1957 = vadd.f32 %v1303, %v1888
        %v1958 = vadd.f32 %v1304, %v1891
        %v1959 = vadd.f32 %v1305, %v1893
        %v1960 = vadd.f32 %v1306, %v1896
        %v1961 = vadd.f32 %v1307, %v1898
        %v1962 = vadd.f32 %v1308, %v1901
        %v1963 = vadd.f32 %v1309, %v1903
        %v1964 = vadd.f32 %v1310, %v1906
        %v1965 = vadd.f32 %v1311, %v1908
        %v1966 = vadd.f32 %v1312, %v1911
        %v1967 = vadd.f32 %v1313, %v1913
        %v1968 = vadd.f32 %v1314, %v1916
        %v1969 = vadd.f32 %v1315, %v1918
        %v1970 = vadd.f32 %v1316, %v1921
        %v1971 = vadd.f32 %v1317, %v1923
        %v1972 = vadd.f32 %v1318, %v1926
        %v1973 = vadd.f32 %v1319, %v1928
        %v1974 = vadd.f32 %v1320, %v1931
        %v1975 = vadd.f32 %v1321, %v1933
        %v1976 = vadd.f32 %v1322, %v1936
        %v1977 = vadd.f32 %v1323, %v1938
        %v1978 = vadd.f32 %v1324, %v1941
        %v1979 = vadd.f32 %v1325, %v1943
        %v1980 = vadd.f32 %v1326, %v1946
        %v1981 = vadd.f32 %v1327, %v1948
        %v1983 = vperm.slane %v186, 0
        %v1985 = vadd.f32 %v1950, %v1983
        %v1986 = vadd.f32 %v1951, %v1983
        %v1987 = vadd.f32 %v1952, %v1983
        %v1988 = vadd.f32 %v1953, %v1983
        %v1989 = vadd.f32 %v1954, %v1983
        %v1990 = vadd.f32 %v1955, %v1983
        %v1991 = vadd.f32 %v1956, %v1983
        %v1992 = vadd.f32 %v1957, %v1983
        %v1993 = vadd.f32 %v1958, %v1983
        %v1994 = vadd.f32 %v1959, %v1983
        %v1995 = vadd.f32 %v1960, %v1983
        %v1996 = vadd.f32 %v1961, %v1983
        %v1997 = vadd.f32 %v1962, %v1983
        %v1998 = vadd.f32 %v1963, %v1983
        %v1999 = vadd.f32 %v1964, %v1983
        %v2000 = vadd.f32 %v1965, %v1983
        %v2001 = vadd.f32 %v1966, %v1983
        %v2002 = vadd.f32 %v1967, %v1983
        %v2003 = vadd.f32 %v1968, %v1983
        %v2004 = vadd.f32 %v1969, %v1983
        %v2005 = vadd.f32 %v1970, %v1983
        %v2006 = vadd.f32 %v1971, %v1983
        %v2007 = vadd.f32 %v1972, %v1983
        %v2008 = vadd.f32 %v1973, %v1983
        %v2009 = vadd.f32 %v1974, %v1983
        %v2010 = vadd.f32 %v1975, %v1983
        %v2011 = vadd.f32 %v1976, %v1983
        %v2012 = vadd.f32 %v1977, %v1983
        %v2013 = vadd.f32 %v1978, %v1983
        %v2014 = vadd.f32 %v1979, %v1983
        %v2015 = vadd.f32 %v1980, %v1983
        %v2016 = vadd.f32 %v1981, %v1983
        %2017 = vst.msk [vmem:[%s177] sm:$0xff] %vm676, %v1985
        %2018 = vst.msk [vmem:[%s177 + $0x8] sm:$0xff] %vm676, %v1986
        %2019 = vst.msk [vmem:[%s177 + $0x20] sm:$0xff] %vm676, %v1987
        %2020 = vst.msk [vmem:[%s177 + $0x28] sm:$0xff] %vm676, %v1988
        %2021 = vst.msk [vmem:[%s177 + $0x40] sm:$0xff] %vm676, %v1989
        %2022 = vst.msk [vmem:[%s177 + $0x48] sm:$0xff] %vm676, %v1990
        %2023 = vst.msk [vmem:[%s177 + $0x60] sm:$0xff] %vm676, %v1991
        %2024 = vst.msk [vmem:[%s177 + $0x68] sm:$0xff] %vm676, %v1992
        %2025 = vst.msk [vmem:[%s177 + $0x80] sm:$0xff] %vm676, %v1993
        %2026 = vst.msk [vmem:[%s177 + $0x88] sm:$0xff] %vm676, %v1994
        %2027 = vst.msk [vmem:[%s177 + $0xa0] sm:$0xff] %vm676, %v1995
        %2028 = vst.msk [vmem:[%s177 + $0xa8] sm:$0xff] %vm676, %v1996
        %2029 = vst.msk [vmem:[%s177 + $0xc0] sm:$0xff] %vm676, %v1997
        %2030 = vst.msk [vmem:[%s177 + $0xc8] sm:$0xff] %vm676, %v1998
        %2031 = vst.msk [vmem:[%s177 + $0xe0] sm:$0xff] %vm676, %v1999
        %2032 = vst.msk [vmem:[%s177 + $0xe8] sm:$0xff] %vm676, %v2000
        %2033 = vst.msk [vmem:[%s177 + $0x100] sm:$0xff] %vm676, %v2001
        %2034 = vst.msk [vmem:[%s177 + $0x108] sm:$0xff] %vm676, %v2002
        %2035 = vst.msk [vmem:[%s177 + $0x120] sm:$0xff] %vm676, %v2003
        %2036 = vst.msk [vmem:[%s177 + $0x128] sm:$0xff] %vm676, %v2004
        %2037 = vst.msk [vmem:[%s177 + $0x140] sm:$0xff] %vm676, %v2005
        %2038 = vst.msk [vmem:[%s177 + $0x148] sm:$0xff] %vm676, %v2006
        %2039 = vst.msk [vmem:[%s177 + $0x160] sm:$0xff] %vm676, %v2007
        %2040 = vst.msk [vmem:[%s177 + $0x168] sm:$0xff] %vm676, %v2008
        %2041 = vst.msk [vmem:[%s177 + $0x180] sm:$0xff] %vm676, %v2009
        %2042 = vst.msk [vmem:[%s177 + $0x188] sm:$0xff] %vm676, %v2010
        %2043 = vst.msk [vmem:[%s177 + $0x1a0] sm:$0xff] %vm676, %v2011
        %2044 = vst.msk [vmem:[%s177 + $0x1a8] sm:$0xff] %vm676, %v2012
        %2045 = vst.msk [vmem:[%s177 + $0x1c0] sm:$0xff] %vm676, %v2013
        %2046 = vst.msk [vmem:[%s177 + $0x1c8] sm:$0xff] %vm676, %v2014
        %2047 = vst.msk [vmem:[%s177 + $0x1e0] sm:$0xff] %vm676, %v2015
        %2048 = vst.msk [vmem:[%s177 + $0x1e8] sm:$0xff] %vm676, %v2016
        %v2049 = vld [vmem:[%s189] sm:$0xf]
        %v2050 = vld [vmem:[%s189 + $0x4] sm:$0xf]
        %v2051 = vld [vmem:[%s189 + $0x8] sm:$0x1]
        %v2052 = vld [vmem:[%s189 + $0xc] sm:$0xf]
        %v2053 = vld [vmem:[%s189 + $0x10] sm:$0xf]
        %v2054 = vld [vmem:[%s189 + $0x14] sm:$0x1]
        %v2055 = vld [vmem:[%s189 + $0x18] sm:$0xf]
        %v2056 = vld [vmem:[%s189 + $0x1c] sm:$0xf]
        %v2057 = vld [vmem:[%s189 + $0x20] sm:$0x1]
        %v2058 = vld [vmem:[%s189 + $0x24] sm:$0xf]
        %v2059 = vld [vmem:[%s189 + $0x28] sm:$0xf]
        %v2060 = vld [vmem:[%s189 + $0x2c] sm:$0x1]
        %v2061 = vld [vmem:[%s189 + $0x30] sm:$0xf]
        %v2062 = vld [vmem:[%s189 + $0x34] sm:$0xf]
        %v2063 = vld [vmem:[%s189 + $0x38] sm:$0x1]
        %v2064 = vld [vmem:[%s189 + $0x3c] sm:$0xf]
        %v2065 = vld [vmem:[%s189 + $0x40] sm:$0xf]
        %v2066 = vld [vmem:[%s189 + $0x44] sm:$0x1]
        %v2067 = vld [vmem:[%s189 + $0x48] sm:$0xf]
        %v2068 = vld [vmem:[%s189 + $0x4c] sm:$0xf]
        %v2069 = vld [vmem:[%s189 + $0x50] sm:$0x1]
        %v2070 = vld [vmem:[%s189 + $0x54] sm:$0xf]
        %v2071 = vld [vmem:[%s189 + $0x58] sm:$0xf]
        %v2072 = vld [vmem:[%s189 + $0x5c] sm:$0x1]
        %v2073 = vld [vmem:[%s189 + $0x60] sm:$0xf]
        %v2074 = vld [vmem:[%s189 + $0x64] sm:$0xf]
        %v2075 = vld [vmem:[%s189 + $0x68] sm:$0x1]
        %v2076 = vld [vmem:[%s189 + $0x6c] sm:$0xf]
        %v2077 = vld [vmem:[%s189 + $0x70] sm:$0xf]
        %v2078 = vld [vmem:[%s189 + $0x74] sm:$0x1]
        %v2079 = vld [vmem:[%s189 + $0x78] sm:$0xf]
        %v2080 = vld [vmem:[%s189 + $0x7c] sm:$0xf]
        %v2081 = vld [vmem:[%s189 + $0x80] sm:$0x1]
        %v2082 = vld [vmem:[%s189 + $0x84] sm:$0xf]
        %v2083 = vld [vmem:[%s189 + $0x88] sm:$0xf]
        %v2084 = vld [vmem:[%s189 + $0x8c] sm:$0x1]
        %v2085 = vld [vmem:[%s189 + $0x90] sm:$0xf]
        %v2086 = vld [vmem:[%s189 + $0x94] sm:$0xf]
        %v2087 = vld [vmem:[%s189 + $0x98] sm:$0x1]
        %v2088 = vld [vmem:[%s189 + $0x9c] sm:$0xf]
        %v2089 = vld [vmem:[%s189 + $0xa0] sm:$0xf]
        %v2090 = vld [vmem:[%s189 + $0xa4] sm:$0x1]
        %v2091 = vld [vmem:[%s189 + $0xa8] sm:$0xf]
        %v2092 = vld [vmem:[%s189 + $0xac] sm:$0xf]
        %v2093 = vld [vmem:[%s189 + $0xb0] sm:$0x1]
        %v2094 = vld [vmem:[%s189 + $0xb4] sm:$0xf]
        %v2095 = vld [vmem:[%s189 + $0xb8] sm:$0xf]
        %v2096 = vld [vmem:[%s189 + $0xbc] sm:$0x1]
        %v2098 = vshrl.u32 %v2049, 16
        %v2100 = vrot.slane %v2098, 4
        %v2101 = vshll.u32 %v2049, 16
        %v2103 = vrot.slane %v2101, 5
        %v2104 = vor.u32 %v2100, %v2103
        %v2105 = vrot.slane %v2104, 4
        %v2107 = vshll.u32 %v2050, 16
        %v2109 = vrot.slane %v2107, 5
        %v2110 = vsel %vm241, %v2105, %v2109
        %v2111 = vshrl.u32 %v2050, 16
        %v2113 = vrot.slane %v2111, 4
        %v2114 = vor.u32 %v2113, %v2109
        %v2115 = vrot.slane %v2114, 4
        %v2117 = vshll.u32 %v2051, 16
        %v2119 = vrot.slane %v2117, 5
        %v2120 = vsel %vm241, %v2115, %v2119
        %v2122 = vshrl.u32 %v2052, 16
        %v2124 = vrot.slane %v2122, 4
        %v2125 = vshll.u32 %v2052, 16
        %v2127 = vrot.slane %v2125, 5
        %v2128 = vor.u32 %v2124, %v2127
        %v2129 = vrot.slane %v2128, 4
        %v2131 = vshll.u32 %v2053, 16
        %v2133 = vrot.slane %v2131, 5
        %v2134 = vsel %vm241, %v2129, %v2133
        %v2135 = vshrl.u32 %v2053, 16
        %v2137 = vrot.slane %v2135, 4
        %v2138 = vor.u32 %v2137, %v2133
        %v2139 = vrot.slane %v2138, 4
        %v2141 = vshll.u32 %v2054, 16
        %v2143 = vrot.slane %v2141, 5
        %v2144 = vsel %vm241, %v2139, %v2143
        %v2146 = vshrl.u32 %v2055, 16
        %v2148 = vrot.slane %v2146, 4
        %v2149 = vshll.u32 %v2055, 16
        %v2151 = vrot.slane %v2149, 5
        %v2152 = vor.u32 %v2148, %v2151
        %v2153 = vrot.slane %v2152, 4
        %v2155 = vshll.u32 %v2056, 16
        %v2157 = vrot.slane %v2155, 5
        %v2158 = vsel %vm241, %v2153, %v2157
        %v2159 = vshrl.u32 %v2056, 16
        %v2161 = vrot.slane %v2159, 4
        %v2162 = vor.u32 %v2161, %v2157
        %v2163 = vrot.slane %v2162, 4
        %v2165 = vshll.u32 %v2057, 16
        %v2167 = vrot.slane %v2165, 5
        %v2168 = vsel %vm241, %v2163, %v2167
        %v2170 = vshrl.u32 %v2058, 16
        %v2172 = vrot.slane %v2170, 4
        %v2173 = vshll.u32 %v2058, 16
        %v2175 = vrot.slane %v2173, 5
        %v2176 = vor.u32 %v2172, %v2175
        %v2177 = vrot.slane %v2176, 4
        %v2179 = vshll.u32 %v2059, 16
        %v2181 = vrot.slane %v2179, 5
        %v2182 = vsel %vm241, %v2177, %v2181
        %v2183 = vshrl.u32 %v2059, 16
        %v2185 = vrot.slane %v2183, 4
        %v2186 = vor.u32 %v2185, %v2181
        %v2187 = vrot.slane %v2186, 4
        %v2189 = vshll.u32 %v2060, 16
        %v2191 = vrot.slane %v2189, 5
        %v2192 = vsel %vm241, %v2187, %v2191
        %v2194 = vshrl.u32 %v2061, 16
        %v2196 = vrot.slane %v2194, 4
        %v2197 = vshll.u32 %v2061, 16
        %v2199 = vrot.slane %v2197, 5
        %v2200 = vor.u32 %v2196, %v2199
        %v2201 = vrot.slane %v2200, 4
        %v2203 = vshll.u32 %v2062, 16
        %v2205 = vrot.slane %v2203, 5
        %v2206 = vsel %vm241, %v2201, %v2205
        %v2207 = vshrl.u32 %v2062, 16
        %v2209 = vrot.slane %v2207, 4
        %v2210 = vor.u32 %v2209, %v2205
        %v2211 = vrot.slane %v2210, 4
        %v2213 = vshll.u32 %v2063, 16
        %v2215 = vrot.slane %v2213, 5
        %v2216 = vsel %vm241, %v2211, %v2215
        %v2218 = vshrl.u32 %v2064, 16
        %v2220 = vrot.slane %v2218, 4
        %v2221 = vshll.u32 %v2064, 16
        %v2223 = vrot.slane %v2221, 5
        %v2224 = vor.u32 %v2220, %v2223
        %v2225 = vrot.slane %v2224, 4
        %v2227 = vshll.u32 %v2065, 16
        %v2229 = vrot.slane %v2227, 5
        %v2230 = vsel %vm241, %v2225, %v2229
        %v2231 = vshrl.u32 %v2065, 16
        %v2233 = vrot.slane %v2231, 4
        %v2234 = vor.u32 %v2233, %v2229
        %v2235 = vrot.slane %v2234, 4
        %v2237 = vshll.u32 %v2066, 16
        %v2239 = vrot.slane %v2237, 5
        %v2240 = vsel %vm241, %v2235, %v2239
        %v2242 = vshrl.u32 %v2067, 16
        %v2244 = vrot.slane %v2242, 4
        %v2245 = vshll.u32 %v2067, 16
        %v2247 = vrot.slane %v2245, 5
        %v2248 = vor.u32 %v2244, %v2247
        %v2249 = vrot.slane %v2248, 4
        %v2251 = vshll.u32 %v2068, 16
        %v2253 = vrot.slane %v2251, 5
        %v2254 = vsel %vm241, %v2249, %v2253
        %v2255 = vshrl.u32 %v2068, 16
        %v2257 = vrot.slane %v2255, 4
        %v2258 = vor.u32 %v2257, %v2253
        %v2259 = vrot.slane %v2258, 4
        %v2261 = vshll.u32 %v2069, 16
        %v2263 = vrot.slane %v2261, 5
        %v2264 = vsel %vm241, %v2259, %v2263
        %v2266 = vshrl.u32 %v2070, 16
        %v2268 = vrot.slane %v2266, 4
        %v2269 = vshll.u32 %v2070, 16
        %v2271 = vrot.slane %v2269, 5
        %v2272 = vor.u32 %v2268, %v2271
        %v2273 = vrot.slane %v2272, 4
        %v2275 = vshll.u32 %v2071, 16
        %v2277 = vrot.slane %v2275, 5
        %v2278 = vsel %vm241, %v2273, %v2277
        %v2279 = vshrl.u32 %v2071, 16
        %v2281 = vrot.slane %v2279, 4
        %v2282 = vor.u32 %v2281, %v2277
        %v2283 = vrot.slane %v2282, 4
        %v2285 = vshll.u32 %v2072, 16
        %v2287 = vrot.slane %v2285, 5
        %v2288 = vsel %vm241, %v2283, %v2287
        %v2290 = vshrl.u32 %v2073, 16
        %v2292 = vrot.slane %v2290, 4
        %v2293 = vshll.u32 %v2073, 16
        %v2295 = vrot.slane %v2293, 5
        %v2296 = vor.u32 %v2292, %v2295
        %v2297 = vrot.slane %v2296, 4
        %v2299 = vshll.u32 %v2074, 16
        %v2301 = vrot.slane %v2299, 5
        %v2302 = vsel %vm241, %v2297, %v2301
        %v2303 = vshrl.u32 %v2074, 16
        %v2305 = vrot.slane %v2303, 4
        %v2306 = vor.u32 %v2305, %v2301
        %v2307 = vrot.slane %v2306, 4
        %v2309 = vshll.u32 %v2075, 16
        %v2311 = vrot.slane %v2309, 5
        %v2312 = vsel %vm241, %v2307, %v2311
        %v2314 = vshrl.u32 %v2076, 16
        %v2316 = vrot.slane %v2314, 4
        %v2317 = vshll.u32 %v2076, 16
        %v2319 = vrot.slane %v2317, 5
        %v2320 = vor.u32 %v2316, %v2319
        %v2321 = vrot.slane %v2320, 4
        %v2323 = vshll.u32 %v2077, 16
        %v2325 = vrot.slane %v2323, 5
        %v2326 = vsel %vm241, %v2321, %v2325
        %v2327 = vshrl.u32 %v2077, 16
        %v2329 = vrot.slane %v2327, 4
        %v2330 = vor.u32 %v2329, %v2325
        %v2331 = vrot.slane %v2330, 4
        %v2333 = vshll.u32 %v2078, 16
        %v2335 = vrot.slane %v2333, 5
        %v2336 = vsel %vm241, %v2331, %v2335
        %v2338 = vshrl.u32 %v2079, 16
        %v2340 = vrot.slane %v2338, 4
        %v2341 = vshll.u32 %v2079, 16
        %v2343 = vrot.slane %v2341, 5
        %v2344 = vor.u32 %v2340, %v2343
        %v2345 = vrot.slane %v2344, 4
        %v2347 = vshll.u32 %v2080, 16
        %v2349 = vrot.slane %v2347, 5
        %v2350 = vsel %vm241, %v2345, %v2349
        %v2351 = vshrl.u32 %v2080, 16
        %v2353 = vrot.slane %v2351, 4
        %v2354 = vor.u32 %v2353, %v2349
        %v2355 = vrot.slane %v2354, 4
        %v2357 = vshll.u32 %v2081, 16
        %v2359 = vrot.slane %v2357, 5
        %v2360 = vsel %vm241, %v2355, %v2359
        %v2362 = vshrl.u32 %v2082, 16
        %v2364 = vrot.slane %v2362, 4
        %v2365 = vshll.u32 %v2082, 16
        %v2367 = vrot.slane %v2365, 5
        %v2368 = vor.u32 %v2364, %v2367
        %v2369 = vrot.slane %v2368, 4
        %v2371 = vshll.u32 %v2083, 16
        %v2373 = vrot.slane %v2371, 5
        %v2374 = vsel %vm241, %v2369, %v2373
        %v2375 = vshrl.u32 %v2083, 16
        %v2377 = vrot.slane %v2375, 4
        %v2378 = vor.u32 %v2377, %v2373
        %v2379 = vrot.slane %v2378, 4
        %v2381 = vshll.u32 %v2084, 16
        %v2383 = vrot.slane %v2381, 5
        %v2384 = vsel %vm241, %v2379, %v2383
        %v2386 = vshrl.u32 %v2085, 16
        %v2388 = vrot.slane %v2386, 4
        %v2389 = vshll.u32 %v2085, 16
        %v2391 = vrot.slane %v2389, 5
        %v2392 = vor.u32 %v2388, %v2391
        %v2393 = vrot.slane %v2392, 4
        %v2395 = vshll.u32 %v2086, 16
        %v2397 = vrot.slane %v2395, 5
        %v2398 = vsel %vm241, %v2393, %v2397
        %v2399 = vshrl.u32 %v2086, 16
        %v2401 = vrot.slane %v2399, 4
        %v2402 = vor.u32 %v2401, %v2397
        %v2403 = vrot.slane %v2402, 4
        %v2405 = vshll.u32 %v2087, 16
        %v2407 = vrot.slane %v2405, 5
        %v2408 = vsel %vm241, %v2403, %v2407
        %v2410 = vshrl.u32 %v2088, 16
        %v2412 = vrot.slane %v2410, 4
        %v2413 = vshll.u32 %v2088, 16
        %v2415 = vrot.slane %v2413, 5
        %v2416 = vor.u32 %v2412, %v2415
        %v2417 = vrot.slane %v2416, 4
        %v2419 = vshll.u32 %v2089, 16
        %v2421 = vrot.slane %v2419, 5
        %v2422 = vsel %vm241, %v2417, %v2421
        %v2423 = vshrl.u32 %v2089, 16
        %v2425 = vrot.slane %v2423, 4
        %v2426 = vor.u32 %v2425, %v2421
        %v2427 = vrot.slane %v2426, 4
        %v2429 = vshll.u32 %v2090, 16
        %v2431 = vrot.slane %v2429, 5
        %v2432 = vsel %vm241, %v2427, %v2431
        %v2434 = vshrl.u32 %v2091, 16
        %v2436 = vrot.slane %v2434, 4
        %v2437 = vshll.u32 %v2091, 16
        %v2439 = vrot.slane %v2437, 5
        %v2440 = vor.u32 %v2436, %v2439
        %v2441 = vrot.slane %v2440, 4
        %v2443 = vshll.u32 %v2092, 16
        %v2445 = vrot.slane %v2443, 5
        %v2446 = vsel %vm241, %v2441, %v2445
        %v2447 = vshrl.u32 %v2092, 16
        %v2449 = vrot.slane %v2447, 4
        %v2450 = vor.u32 %v2449, %v2445
        %v2451 = vrot.slane %v2450, 4
        %v2453 = vshll.u32 %v2093, 16
        %v2455 = vrot.slane %v2453, 5
        %v2456 = vsel %vm241, %v2451, %v2455
        %v2458 = vshrl.u32 %v2094, 16
        %v2460 = vrot.slane %v2458, 4
        %v2461 = vshll.u32 %v2094, 16
        %v2463 = vrot.slane %v2461, 5
        %v2464 = vor.u32 %v2460, %v2463
        %v2465 = vrot.slane %v2464, 4
        %v2467 = vshll.u32 %v2095, 16
        %v2469 = vrot.slane %v2467, 5
        %v2470 = vsel %vm241, %v2465, %v2469
        %v2471 = vshrl.u32 %v2095, 16
        %v2473 = vrot.slane %v2471, 4
        %v2474 = vor.u32 %v2473, %v2469
        %v2475 = vrot.slane %v2474, 4
        %v2477 = vshll.u32 %v2096, 16
        %v2479 = vrot.slane %v2477, 5
        %v2480 = vsel %vm241, %v2475, %v2479
        %s2481 = scalar_lea.vmem %s1, 16
        %v2482 = vld [vmem:[%s2481] sm:$0xf]
        %v2483 = vld [vmem:[%s189] sm:$0xe]
        %v2484 = vld [vmem:[%s189 + $0xc] sm:$0xe]
        %v2485 = vld [vmem:[%s189 + $0x18] sm:$0xe]
        %v2486 = vld [vmem:[%s189 + $0x24] sm:$0xe]
        %v2487 = vld [vmem:[%s189 + $0x30] sm:$0xe]
        %v2488 = vld [vmem:[%s189 + $0x3c] sm:$0xe]
        %v2489 = vld [vmem:[%s189 + $0x48] sm:$0xe]
        %v2490 = vld [vmem:[%s189 + $0x54] sm:$0xe]
        %v2491 = vld [vmem:[%s189 + $0x60] sm:$0xe]
        %v2492 = vld [vmem:[%s189 + $0x6c] sm:$0xe]
        %v2493 = vld [vmem:[%s189 + $0x78] sm:$0xe]
        %v2494 = vld [vmem:[%s189 + $0x84] sm:$0xe]
        %v2495 = vld [vmem:[%s189 + $0x90] sm:$0xe]
        %v2496 = vld [vmem:[%s189 + $0x9c] sm:$0xe]
        %v2497 = vld [vmem:[%s189 + $0xa8] sm:$0xe]
        %v2498 = vld [vmem:[%s189 + $0xb4] sm:$0xe]
        %vm2547 = vcmask 1042432
        %vm2548 = vcmask 1046532
        %vm2549 = vmor %vm2547, %vm2548
        %v2550 = vrot.slane %v2483, 5
        %v2551 = vrot.slane %v2550, 4
        %v2552 = vrot.slane %v2050, 5
        %v2553 = vsel %vm2549, %v2551, %v2552
        %v2554 = vrot.slane %v2552, 4
        %v2555 = vrot.slane %v2051, 5
        %v2556 = vsel %vm2549, %v2554, %v2555
        %v2557 = vrot.slane %v2484, 5
        %v2558 = vrot.slane %v2557, 4
        %v2559 = vrot.slane %v2053, 5
        %v2560 = vsel %vm2549, %v2558, %v2559
        %v2561 = vrot.slane %v2559, 4
        %v2562 = vrot.slane %v2054, 5
        %v2563 = vsel %vm2549, %v2561, %v2562
        %v2564 = vrot.slane %v2485, 5
        %v2565 = vrot.slane %v2564, 4
        %v2566 = vrot.slane %v2056, 5
        %v2567 = vsel %vm2549, %v2565, %v2566
        %v2568 = vrot.slane %v2566, 4
        %v2569 = vrot.slane %v2057, 5
        %v2570 = vsel %vm2549, %v2568, %v2569
        %v2571 = vrot.slane %v2486, 5
        %v2572 = vrot.slane %v2571, 4
        %v2573 = vrot.slane %v2059, 5
        %v2574 = vsel %vm2549, %v2572, %v2573
        %v2575 = vrot.slane %v2573, 4
        %v2576 = vrot.slane %v2060, 5
        %v2577 = vsel %vm2549, %v2575, %v2576
        %v2578 = vrot.slane %v2487, 5
        %v2579 = vrot.slane %v2578, 4
        %v2580 = vrot.slane %v2062, 5
        %v2581 = vsel %vm2549, %v2579, %v2580
        %v2582 = vrot.slane %v2580, 4
        %v2583 = vrot.slane %v2063, 5
        %v2584 = vsel %vm2549, %v2582, %v2583
        %v2585 = vrot.slane %v2488, 5
        %v2586 = vrot.slane %v2585, 4
        %v2587 = vrot.slane %v2065, 5
        %v2588 = vsel %vm2549, %v2586, %v2587
        %v2589 = vrot.slane %v2587, 4
        %v2590 = vrot.slane %v2066, 5
        %v2591 = vsel %vm2549, %v2589, %v2590
        %v2592 = vrot.slane %v2489, 5
        %v2593 = vrot.slane %v2592, 4
        %v2594 = vrot.slane %v2068, 5
        %v2595 = vsel %vm2549, %v2593, %v2594
        %v2596 = vrot.slane %v2594, 4
        %v2597 = vrot.slane %v2069, 5
        %v2598 = vsel %vm2549, %v2596, %v2597
        %v2599 = vrot.slane %v2490, 5
        %v2600 = vrot.slane %v2599, 4
        %v2601 = vrot.slane %v2071, 5
        %v2602 = vsel %vm2549, %v2600, %v2601
        %v2603 = vrot.slane %v2601, 4
        %v2604 = vrot.slane %v2072, 5
        %v2605 = vsel %vm2549, %v2603, %v2604
        %v2606 = vrot.slane %v2491, 5
        %v2607 = vrot.slane %v2606, 4
        %v2608 = vrot.slane %v2074, 5
        %v2609 = vsel %vm2549, %v2607, %v2608
        %v2610 = vrot.slane %v2608, 4
        %v2611 = vrot.slane %v2075, 5
        %v2612 = vsel %vm2549, %v2610, %v2611
        %v2613 = vrot.slane %v2492, 5
        %v2614 = vrot.slane %v2613, 4
        %v2615 = vrot.slane %v2077, 5
        %v2616 = vsel %vm2549, %v2614, %v2615
        %v2617 = vrot.slane %v2615, 4
        %v2618 = vrot.slane %v2078, 5
        %v2619 = vsel %vm2549, %v2617, %v2618
        %v2620 = vrot.slane %v2493, 5
        %v2621 = vrot.slane %v2620, 4
        %v2622 = vrot.slane %v2080, 5
        %v2623 = vsel %vm2549, %v2621, %v2622
        %v2624 = vrot.slane %v2622, 4
        %v2625 = vrot.slane %v2081, 5
        %v2626 = vsel %vm2549, %v2624, %v2625
        %v2627 = vrot.slane %v2494, 5
        %v2628 = vrot.slane %v2627, 4
        %v2629 = vrot.slane %v2083, 5
        %v2630 = vsel %vm2549, %v2628, %v2629
        %v2631 = vrot.slane %v2629, 4
        %v2632 = vrot.slane %v2084, 5
        %v2633 = vsel %vm2549, %v2631, %v2632
        %v2634 = vrot.slane %v2495, 5
        %v2635 = vrot.slane %v2634, 4
        %v2636 = vrot.slane %v2086, 5
        %v2637 = vsel %vm2549, %v2635, %v2636
        %v2638 = vrot.slane %v2636, 4
        %v2639 = vrot.slane %v2087, 5
        %v2640 = vsel %vm2549, %v2638, %v2639
        %v2641 = vrot.slane %v2496, 5
        %v2642 = vrot.slane %v2641, 4
        %v2643 = vrot.slane %v2089, 5
        %v2644 = vsel %vm2549, %v2642, %v2643
        %v2645 = vrot.slane %v2643, 4
        %v2646 = vrot.slane %v2090, 5
        %v2647 = vsel %vm2549, %v2645, %v2646
        %v2648 = vrot.slane %v2497, 5
        %v2649 = vrot.slane %v2648, 4
        %v2650 = vrot.slane %v2092, 5
        %v2651 = vsel %vm2549, %v2649, %v2650
        %v2652 = vrot.slane %v2650, 4
        %v2653 = vrot.slane %v2093, 5
        %v2654 = vsel %vm2549, %v2652, %v2653
        %v2655 = vrot.slane %v2498, 5
        %v2656 = vrot.slane %v2655, 4
        %v2657 = vrot.slane %v2095, 5
        %v2658 = vsel %vm2549, %v2656, %v2657
        %v2659 = vrot.slane %v2657, 4
        %v2660 = vrot.slane %v2096, 5
        %v2661 = vsel %vm2549, %v2659, %v2660
        %s2662 = scalar_lea.vmem %s1, 20
        %v2663 = vld [vmem:[%s2662] sm:$0xf]
        %v2664 = vunpack.c.l.b16 %v2553
        %v2665 = vunpack.c.l.b16 %v2556
        %v2666 = vunpack.c.l.b16 %v2560
        %v2667 = vunpack.c.l.b16 %v2563
        %v2668 = vunpack.c.l.b16 %v2567
        %v2669 = vunpack.c.l.b16 %v2570
        %v2670 = vunpack.c.l.b16 %v2574
        %v2671 = vunpack.c.l.b16 %v2577
        %v2672 = vunpack.c.l.b16 %v2581
        %v2673 = vunpack.c.l.b16 %v2584
        %v2674 = vunpack.c.l.b16 %v2588
        %v2675 = vunpack.c.l.b16 %v2591
        %v2676 = vunpack.c.l.b16 %v2595
        %v2677 = vunpack.c.l.b16 %v2598
        %v2678 = vunpack.c.l.b16 %v2602
        %v2679 = vunpack.c.l.b16 %v2605
        %v2680 = vunpack.c.l.b16 %v2609
        %v2681 = vunpack.c.l.b16 %v2612
        %v2682 = vunpack.c.l.b16 %v2616
        %v2683 = vunpack.c.l.b16 %v2619
        %v2684 = vunpack.c.l.b16 %v2623
        %v2685 = vunpack.c.l.b16 %v2626
        %v2686 = vunpack.c.l.b16 %v2630
        %v2687 = vunpack.c.l.b16 %v2633
        %v2688 = vunpack.c.l.b16 %v2637
        %v2689 = vunpack.c.l.b16 %v2640
        %v2690 = vunpack.c.l.b16 %v2644
        %v2691 = vunpack.c.l.b16 %v2647
        %v2692 = vunpack.c.l.b16 %v2651
        %v2693 = vunpack.c.l.b16 %v2654
        %v2694 = vunpack.c.l.b16 %v2658
        %v2695 = vunpack.c.l.b16 %v2661
        %v2696 = vpack.c.b16 %v2665, %v2664
        %v2697 = vpack.c.b16 %v2667, %v2666
        %v2698 = vpack.c.b16 %v2669, %v2668
        %v2699 = vpack.c.b16 %v2671, %v2670
        %v2700 = vpack.c.b16 %v2673, %v2672
        %v2701 = vpack.c.b16 %v2675, %v2674
        %v2702 = vpack.c.b16 %v2677, %v2676
        %v2703 = vpack.c.b16 %v2679, %v2678
        %v2704 = vpack.c.b16 %v2681, %v2680
        %v2705 = vpack.c.b16 %v2683, %v2682
        %v2706 = vpack.c.b16 %v2685, %v2684
        %v2707 = vpack.c.b16 %v2687, %v2686
        %v2708 = vpack.c.b16 %v2689, %v2688
        %v2709 = vpack.c.b16 %v2691, %v2690
        %v2710 = vpack.c.b16 %v2693, %v2692
        %v2711 = vpack.c.b16 %v2695, %v2694
        %v2713 = vsel %vm676, %v2696, 0
        %v2716 = vsel %vm676, %v2697, 0
        %v2719 = vsel %vm676, %v2698, 0
        %v2722 = vsel %vm676, %v2699, 0
        %v2725 = vsel %vm676, %v2700, 0
        %v2728 = vsel %vm676, %v2701, 0
        %v2731 = vsel %vm676, %v2702, 0
        %v2734 = vsel %vm676, %v2703, 0
        %v2737 = vsel %vm676, %v2704, 0
        %v2740 = vsel %vm676, %v2705, 0
        %v2743 = vsel %vm676, %v2706, 0
        %v2746 = vsel %vm676, %v2707, 0
        %v2749 = vsel %vm676, %v2708, 0
        %v2752 = vsel %vm676, %v2709, 0
        %v2755 = vsel %vm676, %v2710, 0
        %v2758 = vsel %vm676, %v2711, 0
        %v2761 = vsel %vm725, %v2663, 0
        %2763 = vmatpush.bf16.msra.mxu0 0
        %2764 = vmatpush.bf16.msra.mxu0 0
        %2765 = vmatpush.bf16.msra.mxu0 0
        %2766 = vmatpush.bf16.msra.mxu0 0
        %2767 = vmatpush.bf16.msra.mxu0 0
        %2768 = vmatpush.bf16.msra.mxu0 0
        %2769 = vmatpush.bf16.msra.mxu0 0
        %2770 = vmatpush.bf16.msra.mxu0 %v2761
        %2771 = vmatmul.bf16.gmra.mxu0 %v2713
        %v2772 = vpop.f32.mrf.mxu0
        %v2773 = vadd.f32 0.0, %v2772
        %v2774 = vpop.f32.mrf.mxu0
        %v2775 = vadd.f32 0.0, %v2774
        %2776 = vmatmul.bf16.gmra.mxu0 %v2716
        %v2777 = vpop.f32.mrf.mxu0
        %v2778 = vadd.f32 0.0, %v2777
        %v2779 = vpop.f32.mrf.mxu0
        %v2780 = vadd.f32 0.0, %v2779
        %2781 = vmatmul.bf16.gmra.mxu0 %v2719
        %v2782 = vpop.f32.mrf.mxu0
        %v2783 = vadd.f32 0.0, %v2782
        %v2784 = vpop.f32.mrf.mxu0
        %v2785 = vadd.f32 0.0, %v2784
        %2786 = vmatmul.bf16.gmra.mxu0 %v2722
        %v2787 = vpop.f32.mrf.mxu0
        %v2788 = vadd.f32 0.0, %v2787
        %v2789 = vpop.f32.mrf.mxu0
        %v2790 = vadd.f32 0.0, %v2789
        %2791 = vmatmul.bf16.gmra.mxu0 %v2725
        %v2792 = vpop.f32.mrf.mxu0
        %v2793 = vadd.f32 0.0, %v2792
        %v2794 = vpop.f32.mrf.mxu0
        %v2795 = vadd.f32 0.0, %v2794
        %2796 = vmatmul.bf16.gmra.mxu0 %v2728
        %v2797 = vpop.f32.mrf.mxu0
        %v2798 = vadd.f32 0.0, %v2797
        %v2799 = vpop.f32.mrf.mxu0
        %v2800 = vadd.f32 0.0, %v2799
        %2801 = vmatmul.bf16.gmra.mxu0 %v2731
        %v2802 = vpop.f32.mrf.mxu0
        %v2803 = vadd.f32 0.0, %v2802
        %v2804 = vpop.f32.mrf.mxu0
        %v2805 = vadd.f32 0.0, %v2804
        %2806 = vmatmul.bf16.gmra.mxu0 %v2734
        %v2807 = vpop.f32.mrf.mxu0
        %v2808 = vadd.f32 0.0, %v2807
        %v2809 = vpop.f32.mrf.mxu0
        %v2810 = vadd.f32 0.0, %v2809
        %2811 = vmatmul.bf16.gmra.mxu0 %v2737
        %v2812 = vpop.f32.mrf.mxu0
        %v2813 = vadd.f32 0.0, %v2812
        %v2814 = vpop.f32.mrf.mxu0
        %v2815 = vadd.f32 0.0, %v2814
        %2816 = vmatmul.bf16.gmra.mxu0 %v2740
        %v2817 = vpop.f32.mrf.mxu0
        %v2818 = vadd.f32 0.0, %v2817
        %v2819 = vpop.f32.mrf.mxu0
        %v2820 = vadd.f32 0.0, %v2819
        %2821 = vmatmul.bf16.gmra.mxu0 %v2743
        %v2822 = vpop.f32.mrf.mxu0
        %v2823 = vadd.f32 0.0, %v2822
        %v2824 = vpop.f32.mrf.mxu0
        %v2825 = vadd.f32 0.0, %v2824
        %2826 = vmatmul.bf16.gmra.mxu0 %v2746
        %v2827 = vpop.f32.mrf.mxu0
        %v2828 = vadd.f32 0.0, %v2827
        %v2829 = vpop.f32.mrf.mxu0
        %v2830 = vadd.f32 0.0, %v2829
        %2831 = vmatmul.bf16.gmra.mxu0 %v2749
        %v2832 = vpop.f32.mrf.mxu0
        %v2833 = vadd.f32 0.0, %v2832
        %v2834 = vpop.f32.mrf.mxu0
        %v2835 = vadd.f32 0.0, %v2834
        %2836 = vmatmul.bf16.gmra.mxu0 %v2752
        %v2837 = vpop.f32.mrf.mxu0
        %v2838 = vadd.f32 0.0, %v2837
        %v2839 = vpop.f32.mrf.mxu0
        %v2840 = vadd.f32 0.0, %v2839
        %2841 = vmatmul.bf16.gmra.mxu0 %v2755
        %v2842 = vpop.f32.mrf.mxu0
        %v2843 = vadd.f32 0.0, %v2842
        %v2844 = vpop.f32.mrf.mxu0
        %v2845 = vadd.f32 0.0, %v2844
        %2846 = vmatmul.bf16.gmra.mxu0 %v2758
        %v2847 = vpop.f32.mrf.mxu0
        %v2848 = vadd.f32 0.0, %v2847
        %v2849 = vpop.f32.mrf.mxu0
        %v2850 = vadd.f32 0.0, %v2849
        %2851 = vdwg.mxu0
        %v2852 = vunpack.c.l.b16 %v2110
        %v2853 = vunpack.c.l.b16 %v2120
        %v2854 = vunpack.c.l.b16 %v2134
        %v2855 = vunpack.c.l.b16 %v2144
        %v2856 = vunpack.c.l.b16 %v2158
        %v2857 = vunpack.c.l.b16 %v2168
        %v2858 = vunpack.c.l.b16 %v2182
        %v2859 = vunpack.c.l.b16 %v2192
        %v2860 = vunpack.c.l.b16 %v2206
        %v2861 = vunpack.c.l.b16 %v2216
        %v2862 = vunpack.c.l.b16 %v2230
        %v2863 = vunpack.c.l.b16 %v2240
        %v2864 = vunpack.c.l.b16 %v2254
        %v2865 = vunpack.c.l.b16 %v2264
        %v2866 = vunpack.c.l.b16 %v2278
        %v2867 = vunpack.c.l.b16 %v2288
        %v2868 = vunpack.c.l.b16 %v2302
        %v2869 = vunpack.c.l.b16 %v2312
        %v2870 = vunpack.c.l.b16 %v2326
        %v2871 = vunpack.c.l.b16 %v2336
        %v2872 = vunpack.c.l.b16 %v2350
        %v2873 = vunpack.c.l.b16 %v2360
        %v2874 = vunpack.c.l.b16 %v2374
        %v2875 = vunpack.c.l.b16 %v2384
        %v2876 = vunpack.c.l.b16 %v2398
        %v2877 = vunpack.c.l.b16 %v2408
        %v2878 = vunpack.c.l.b16 %v2422
        %v2879 = vunpack.c.l.b16 %v2432
        %v2880 = vunpack.c.l.b16 %v2446
        %v2881 = vunpack.c.l.b16 %v2456
        %v2882 = vunpack.c.l.b16 %v2470
        %v2883 = vunpack.c.l.b16 %v2480
        %v2884 = vpack.c.b16 %v2853, %v2852
        %v2885 = vpack.c.b16 %v2855, %v2854
        %v2886 = vpack.c.b16 %v2857, %v2856
        %v2887 = vpack.c.b16 %v2859, %v2858
        %v2888 = vpack.c.b16 %v2861, %v2860
        %v2889 = vpack.c.b16 %v2863, %v2862
        %v2890 = vpack.c.b16 %v2865, %v2864
        %v2891 = vpack.c.b16 %v2867, %v2866
        %v2892 = vpack.c.b16 %v2869, %v2868
        %v2893 = vpack.c.b16 %v2871, %v2870
        %v2894 = vpack.c.b16 %v2873, %v2872
        %v2895 = vpack.c.b16 %v2875, %v2874
        %v2896 = vpack.c.b16 %v2877, %v2876
        %v2897 = vpack.c.b16 %v2879, %v2878
        %v2898 = vpack.c.b16 %v2881, %v2880
        %v2899 = vpack.c.b16 %v2883, %v2882
        %v2901 = vsel %vm676, %v2884, 0
        %v2904 = vsel %vm676, %v2885, 0
        %v2907 = vsel %vm676, %v2886, 0
        %v2910 = vsel %vm676, %v2887, 0
        %v2913 = vsel %vm676, %v2888, 0
        %v2916 = vsel %vm676, %v2889, 0
        %v2919 = vsel %vm676, %v2890, 0
        %v2922 = vsel %vm676, %v2891, 0
        %v2925 = vsel %vm676, %v2892, 0
        %v2928 = vsel %vm676, %v2893, 0
        %v2931 = vsel %vm676, %v2894, 0
        %v2934 = vsel %vm676, %v2895, 0
        %v2937 = vsel %vm676, %v2896, 0
        %v2940 = vsel %vm676, %v2897, 0
        %v2943 = vsel %vm676, %v2898, 0
        %v2946 = vsel %vm676, %v2899, 0
        %v2949 = vsel %vm725, %v2482, 0
        %2951 = vmatpush.bf16.msra.mxu0 0
        %2952 = vmatpush.bf16.msra.mxu0 0
        %2953 = vmatpush.bf16.msra.mxu0 0
        %2954 = vmatpush.bf16.msra.mxu0 0
        %2955 = vmatpush.bf16.msra.mxu0 0
        %2956 = vmatpush.bf16.msra.mxu0 0
        %2957 = vmatpush.bf16.msra.mxu0 0
        %2958 = vmatpush.bf16.msra.mxu0 %v2949
        %2959 = vmatmul.bf16.gmra.mxu0 %v2901
        %v2960 = vpop.f32.mrf.mxu0
        %v2961 = vadd.f32 %v2773, %v2960
        %v2962 = vpop.f32.mrf.mxu0
        %v2963 = vadd.f32 %v2775, %v2962
        %2964 = vmatmul.bf16.gmra.mxu0 %v2904
        %v2965 = vpop.f32.mrf.mxu0
        %v2966 = vadd.f32 %v2778, %v2965
        %v2967 = vpop.f32.mrf.mxu0
        %v2968 = vadd.f32 %v2780, %v2967
        %2969 = vmatmul.bf16.gmra.mxu0 %v2907
        %v2970 = vpop.f32.mrf.mxu0
        %v2971 = vadd.f32 %v2783, %v2970
        %v2972 = vpop.f32.mrf.mxu0
        %v2973 = vadd.f32 %v2785, %v2972
        %2974 = vmatmul.bf16.gmra.mxu0 %v2910
        %v2975 = vpop.f32.mrf.mxu0
        %v2976 = vadd.f32 %v2788, %v2975
        %v2977 = vpop.f32.mrf.mxu0
        %v2978 = vadd.f32 %v2790, %v2977
        %2979 = vmatmul.bf16.gmra.mxu0 %v2913
        %v2980 = vpop.f32.mrf.mxu0
        %v2981 = vadd.f32 %v2793, %v2980
        %v2982 = vpop.f32.mrf.mxu0
        %v2983 = vadd.f32 %v2795, %v2982
        %2984 = vmatmul.bf16.gmra.mxu0 %v2916
        %v2985 = vpop.f32.mrf.mxu0
        %v2986 = vadd.f32 %v2798, %v2985
        %v2987 = vpop.f32.mrf.mxu0
        %v2988 = vadd.f32 %v2800, %v2987
        %2989 = vmatmul.bf16.gmra.mxu0 %v2919
        %v2990 = vpop.f32.mrf.mxu0
        %v2991 = vadd.f32 %v2803, %v2990
        %v2992 = vpop.f32.mrf.mxu0
        %v2993 = vadd.f32 %v2805, %v2992
        %2994 = vmatmul.bf16.gmra.mxu0 %v2922
        %v2995 = vpop.f32.mrf.mxu0
        %v2996 = vadd.f32 %v2808, %v2995
        %v2997 = vpop.f32.mrf.mxu0
        %v2998 = vadd.f32 %v2810, %v2997
        %2999 = vmatmul.bf16.gmra.mxu0 %v2925
        %v3000 = vpop.f32.mrf.mxu0
        %v3001 = vadd.f32 %v2813, %v3000
        %v3002 = vpop.f32.mrf.mxu0
        %v3003 = vadd.f32 %v2815, %v3002
        %3004 = vmatmul.bf16.gmra.mxu0 %v2928
        %v3005 = vpop.f32.mrf.mxu0
        %v3006 = vadd.f32 %v2818, %v3005
        %v3007 = vpop.f32.mrf.mxu0
        %v3008 = vadd.f32 %v2820, %v3007
        %3009 = vmatmul.bf16.gmra.mxu0 %v2931
        %v3010 = vpop.f32.mrf.mxu0
        %v3011 = vadd.f32 %v2823, %v3010
        %v3012 = vpop.f32.mrf.mxu0
        %v3013 = vadd.f32 %v2825, %v3012
        %3014 = vmatmul.bf16.gmra.mxu0 %v2934
        %v3015 = vpop.f32.mrf.mxu0
        %v3016 = vadd.f32 %v2828, %v3015
        %v3017 = vpop.f32.mrf.mxu0
        %v3018 = vadd.f32 %v2830, %v3017
        %3019 = vmatmul.bf16.gmra.mxu0 %v2937
        %v3020 = vpop.f32.mrf.mxu0
        %v3021 = vadd.f32 %v2833, %v3020
        %v3022 = vpop.f32.mrf.mxu0
        %v3023 = vadd.f32 %v2835, %v3022
        %3024 = vmatmul.bf16.gmra.mxu0 %v2940
        %v3025 = vpop.f32.mrf.mxu0
        %v3026 = vadd.f32 %v2838, %v3025
        %v3027 = vpop.f32.mrf.mxu0
        %v3028 = vadd.f32 %v2840, %v3027
        %3029 = vmatmul.bf16.gmra.mxu0 %v2943
        %v3030 = vpop.f32.mrf.mxu0
        %v3031 = vadd.f32 %v2843, %v3030
        %v3032 = vpop.f32.mrf.mxu0
        %v3033 = vadd.f32 %v2845, %v3032
        %3034 = vmatmul.bf16.gmra.mxu0 %v2946
        %v3035 = vpop.f32.mrf.mxu0
        %v3036 = vadd.f32 %v2848, %v3035
        %v3037 = vpop.f32.mrf.mxu0
        %v3038 = vadd.f32 %v2850, %v3037
        %3039 = vdwg.mxu0
        %v3040 = vld [vmem:[%s1041] sm:$0xf]
        %v3041 = vld [vmem:[%s1041 + $0x4] sm:$0xf]
        %v3042 = vld [vmem:[%s1041 + $0x8] sm:$0x1]
        %v3043 = vld [vmem:[%s1041 + $0xc] sm:$0xf]
        %v3044 = vld [vmem:[%s1041 + $0x10] sm:$0xf]
        %v3045 = vld [vmem:[%s1041 + $0x14] sm:$0x1]
        %v3046 = vld [vmem:[%s1041 + $0x18] sm:$0xf]
        %v3047 = vld [vmem:[%s1041 + $0x1c] sm:$0xf]
        %v3048 = vld [vmem:[%s1041 + $0x20] sm:$0x1]
        %v3049 = vld [vmem:[%s1041 + $0x24] sm:$0xf]
        %v3050 = vld [vmem:[%s1041 + $0x28] sm:$0xf]
        %v3051 = vld [vmem:[%s1041 + $0x2c] sm:$0x1]
        %v3052 = vld [vmem:[%s1041 + $0x30] sm:$0xf]
        %v3053 = vld [vmem:[%s1041 + $0x34] sm:$0xf]
        %v3054 = vld [vmem:[%s1041 + $0x38] sm:$0x1]
        %v3055 = vld [vmem:[%s1041 + $0x3c] sm:$0xf]
        %v3056 = vld [vmem:[%s1041 + $0x40] sm:$0xf]
        %v3057 = vld [vmem:[%s1041 + $0x44] sm:$0x1]
        %v3058 = vld [vmem:[%s1041 + $0x48] sm:$0xf]
        %v3059 = vld [vmem:[%s1041 + $0x4c] sm:$0xf]
        %v3060 = vld [vmem:[%s1041 + $0x50] sm:$0x1]
        %v3061 = vld [vmem:[%s1041 + $0x54] sm:$0xf]
        %v3062 = vld [vmem:[%s1041 + $0x58] sm:$0xf]
        %v3063 = vld [vmem:[%s1041 + $0x5c] sm:$0x1]
        %v3064 = vld [vmem:[%s1041 + $0x60] sm:$0xf]
        %v3065 = vld [vmem:[%s1041 + $0x64] sm:$0xf]
        %v3066 = vld [vmem:[%s1041 + $0x68] sm:$0x1]
        %v3067 = vld [vmem:[%s1041 + $0x6c] sm:$0xf]
        %v3068 = vld [vmem:[%s1041 + $0x70] sm:$0xf]
        %v3069 = vld [vmem:[%s1041 + $0x74] sm:$0x1]
        %v3070 = vld [vmem:[%s1041 + $0x78] sm:$0xf]
        %v3071 = vld [vmem:[%s1041 + $0x7c] sm:$0xf]
        %v3072 = vld [vmem:[%s1041 + $0x80] sm:$0x1]
        %v3073 = vld [vmem:[%s1041 + $0x84] sm:$0xf]
        %v3074 = vld [vmem:[%s1041 + $0x88] sm:$0xf]
        %v3075 = vld [vmem:[%s1041 + $0x8c] sm:$0x1]
        %v3076 = vld [vmem:[%s1041 + $0x90] sm:$0xf]
        %v3077 = vld [vmem:[%s1041 + $0x94] sm:$0xf]
        %v3078 = vld [vmem:[%s1041 + $0x98] sm:$0x1]
        %v3079 = vld [vmem:[%s1041 + $0x9c] sm:$0xf]
        %v3080 = vld [vmem:[%s1041 + $0xa0] sm:$0xf]
        %v3081 = vld [vmem:[%s1041 + $0xa4] sm:$0x1]
        %v3082 = vld [vmem:[%s1041 + $0xa8] sm:$0xf]
        %v3083 = vld [vmem:[%s1041 + $0xac] sm:$0xf]
        %v3084 = vld [vmem:[%s1041 + $0xb0] sm:$0x1]
        %v3085 = vld [vmem:[%s1041 + $0xb4] sm:$0xf]
        %v3086 = vld [vmem:[%s1041 + $0xb8] sm:$0xf]
        %v3087 = vld [vmem:[%s1041 + $0xbc] sm:$0x1]
        %v3089 = vshrl.u32 %v3040, 16
        %v3091 = vrot.slane %v3089, 4
        %v3092 = vshll.u32 %v3040, 16
        %v3094 = vrot.slane %v3092, 5
        %v3095 = vor.u32 %v3091, %v3094
        %v3096 = vrot.slane %v3095, 4
        %v3098 = vshll.u32 %v3041, 16
        %v3100 = vrot.slane %v3098, 5
        %v3101 = vsel %vm241, %v3096, %v3100
        %v3102 = vshrl.u32 %v3041, 16
        %v3104 = vrot.slane %v3102, 4
        %v3105 = vor.u32 %v3104, %v3100
        %v3106 = vrot.slane %v3105, 4
        %v3108 = vshll.u32 %v3042, 16
        %v3110 = vrot.slane %v3108, 5
        %v3111 = vsel %vm241, %v3106, %v3110
        %v3113 = vshrl.u32 %v3043, 16
        %v3115 = vrot.slane %v3113, 4
        %v3116 = vshll.u32 %v3043, 16
        %v3118 = vrot.slane %v3116, 5
        %v3119 = vor.u32 %v3115, %v3118
        %v3120 = vrot.slane %v3119, 4
        %v3122 = vshll.u32 %v3044, 16
        %v3124 = vrot.slane %v3122, 5
        %v3125 = vsel %vm241, %v3120, %v3124
        %v3126 = vshrl.u32 %v3044, 16
        %v3128 = vrot.slane %v3126, 4
        %v3129 = vor.u32 %v3128, %v3124
        %v3130 = vrot.slane %v3129, 4
        %v3132 = vshll.u32 %v3045, 16
        %v3134 = vrot.slane %v3132, 5
        %v3135 = vsel %vm241, %v3130, %v3134
        %v3137 = vshrl.u32 %v3046, 16
        %v3139 = vrot.slane %v3137, 4
        %v3140 = vshll.u32 %v3046, 16
        %v3142 = vrot.slane %v3140, 5
        %v3143 = vor.u32 %v3139, %v3142
        %v3144 = vrot.slane %v3143, 4
        %v3146 = vshll.u32 %v3047, 16
        %v3148 = vrot.slane %v3146, 5
        %v3149 = vsel %vm241, %v3144, %v3148
        %v3150 = vshrl.u32 %v3047, 16
        %v3152 = vrot.slane %v3150, 4
        %v3153 = vor.u32 %v3152, %v3148
        %v3154 = vrot.slane %v3153, 4
        %v3156 = vshll.u32 %v3048, 16
        %v3158 = vrot.slane %v3156, 5
        %v3159 = vsel %vm241, %v3154, %v3158
        %v3161 = vshrl.u32 %v3049, 16
        %v3163 = vrot.slane %v3161, 4
        %v3164 = vshll.u32 %v3049, 16
        %v3166 = vrot.slane %v3164, 5
        %v3167 = vor.u32 %v3163, %v3166
        %v3168 = vrot.slane %v3167, 4
        %v3170 = vshll.u32 %v3050, 16
        %v3172 = vrot.slane %v3170, 5
        %v3173 = vsel %vm241, %v3168, %v3172
        %v3174 = vshrl.u32 %v3050, 16
        %v3176 = vrot.slane %v3174, 4
        %v3177 = vor.u32 %v3176, %v3172
        %v3178 = vrot.slane %v3177, 4
        %v3180 = vshll.u32 %v3051, 16
        %v3182 = vrot.slane %v3180, 5
        %v3183 = vsel %vm241, %v3178, %v3182
        %v3185 = vshrl.u32 %v3052, 16
        %v3187 = vrot.slane %v3185, 4
        %v3188 = vshll.u32 %v3052, 16
        %v3190 = vrot.slane %v3188, 5
        %v3191 = vor.u32 %v3187, %v3190
        %v3192 = vrot.slane %v3191, 4
        %v3194 = vshll.u32 %v3053, 16
        %v3196 = vrot.slane %v3194, 5
        %v3197 = vsel %vm241, %v3192, %v3196
        %v3198 = vshrl.u32 %v3053, 16
        %v3200 = vrot.slane %v3198, 4
        %v3201 = vor.u32 %v3200, %v3196
        %v3202 = vrot.slane %v3201, 4
        %v3204 = vshll.u32 %v3054, 16
        %v3206 = vrot.slane %v3204, 5
        %v3207 = vsel %vm241, %v3202, %v3206
        %v3209 = vshrl.u32 %v3055, 16
        %v3211 = vrot.slane %v3209, 4
        %v3212 = vshll.u32 %v3055, 16
        %v3214 = vrot.slane %v3212, 5
        %v3215 = vor.u32 %v3211, %v3214
        %v3216 = vrot.slane %v3215, 4
        %v3218 = vshll.u32 %v3056, 16
        %v3220 = vrot.slane %v3218, 5
        %v3221 = vsel %vm241, %v3216, %v3220
        %v3222 = vshrl.u32 %v3056, 16
        %v3224 = vrot.slane %v3222, 4
        %v3225 = vor.u32 %v3224, %v3220
        %v3226 = vrot.slane %v3225, 4
        %v3228 = vshll.u32 %v3057, 16
        %v3230 = vrot.slane %v3228, 5
        %v3231 = vsel %vm241, %v3226, %v3230
        %v3233 = vshrl.u32 %v3058, 16
        %v3235 = vrot.slane %v3233, 4
        %v3236 = vshll.u32 %v3058, 16
        %v3238 = vrot.slane %v3236, 5
        %v3239 = vor.u32 %v3235, %v3238
        %v3240 = vrot.slane %v3239, 4
        %v3242 = vshll.u32 %v3059, 16
        %v3244 = vrot.slane %v3242, 5
        %v3245 = vsel %vm241, %v3240, %v3244
        %v3246 = vshrl.u32 %v3059, 16
        %v3248 = vrot.slane %v3246, 4
        %v3249 = vor.u32 %v3248, %v3244
        %v3250 = vrot.slane %v3249, 4
        %v3252 = vshll.u32 %v3060, 16
        %v3254 = vrot.slane %v3252, 5
        %v3255 = vsel %vm241, %v3250, %v3254
        %v3257 = vshrl.u32 %v3061, 16
        %v3259 = vrot.slane %v3257, 4
        %v3260 = vshll.u32 %v3061, 16
        %v3262 = vrot.slane %v3260, 5
        %v3263 = vor.u32 %v3259, %v3262
        %v3264 = vrot.slane %v3263, 4
        %v3266 = vshll.u32 %v3062, 16
        %v3268 = vrot.slane %v3266, 5
        %v3269 = vsel %vm241, %v3264, %v3268
        %v3270 = vshrl.u32 %v3062, 16
        %v3272 = vrot.slane %v3270, 4
        %v3273 = vor.u32 %v3272, %v3268
        %v3274 = vrot.slane %v3273, 4
        %v3276 = vshll.u32 %v3063, 16
        %v3278 = vrot.slane %v3276, 5
        %v3279 = vsel %vm241, %v3274, %v3278
        %v3281 = vshrl.u32 %v3064, 16
        %v3283 = vrot.slane %v3281, 4
        %v3284 = vshll.u32 %v3064, 16
        %v3286 = vrot.slane %v3284, 5
        %v3287 = vor.u32 %v3283, %v3286
        %v3288 = vrot.slane %v3287, 4
        %v3290 = vshll.u32 %v3065, 16
        %v3292 = vrot.slane %v3290, 5
        %v3293 = vsel %vm241, %v3288, %v3292
        %v3294 = vshrl.u32 %v3065, 16
        %v3296 = vrot.slane %v3294, 4
        %v3297 = vor.u32 %v3296, %v3292
        %v3298 = vrot.slane %v3297, 4
        %v3300 = vshll.u32 %v3066, 16
        %v3302 = vrot.slane %v3300, 5
        %v3303 = vsel %vm241, %v3298, %v3302
        %v3305 = vshrl.u32 %v3067, 16
        %v3307 = vrot.slane %v3305, 4
        %v3308 = vshll.u32 %v3067, 16
        %v3310 = vrot.slane %v3308, 5
        %v3311 = vor.u32 %v3307, %v3310
        %v3312 = vrot.slane %v3311, 4
        %v3314 = vshll.u32 %v3068, 16
        %v3316 = vrot.slane %v3314, 5
        %v3317 = vsel %vm241, %v3312, %v3316
        %v3318 = vshrl.u32 %v3068, 16
        %v3320 = vrot.slane %v3318, 4
        %v3321 = vor.u32 %v3320, %v3316
        %v3322 = vrot.slane %v3321, 4
        %v3324 = vshll.u32 %v3069, 16
        %v3326 = vrot.slane %v3324, 5
        %v3327 = vsel %vm241, %v3322, %v3326
        %v3329 = vshrl.u32 %v3070, 16
        %v3331 = vrot.slane %v3329, 4
        %v3332 = vshll.u32 %v3070, 16
        %v3334 = vrot.slane %v3332, 5
        %v3335 = vor.u32 %v3331, %v3334
        %v3336 = vrot.slane %v3335, 4
        %v3338 = vshll.u32 %v3071, 16
        %v3340 = vrot.slane %v3338, 5
        %v3341 = vsel %vm241, %v3336, %v3340
        %v3342 = vshrl.u32 %v3071, 16
        %v3344 = vrot.slane %v3342, 4
        %v3345 = vor.u32 %v3344, %v3340
        %v3346 = vrot.slane %v3345, 4
        %v3348 = vshll.u32 %v3072, 16
        %v3350 = vrot.slane %v3348, 5
        %v3351 = vsel %vm241, %v3346, %v3350
        %v3353 = vshrl.u32 %v3073, 16
        %v3355 = vrot.slane %v3353, 4
        %v3356 = vshll.u32 %v3073, 16
        %v3358 = vrot.slane %v3356, 5
        %v3359 = vor.u32 %v3355, %v3358
        %v3360 = vrot.slane %v3359, 4
        %v3362 = vshll.u32 %v3074, 16
        %v3364 = vrot.slane %v3362, 5
        %v3365 = vsel %vm241, %v3360, %v3364
        %v3366 = vshrl.u32 %v3074, 16
        %v3368 = vrot.slane %v3366, 4
        %v3369 = vor.u32 %v3368, %v3364
        %v3370 = vrot.slane %v3369, 4
        %v3372 = vshll.u32 %v3075, 16
        %v3374 = vrot.slane %v3372, 5
        %v3375 = vsel %vm241, %v3370, %v3374
        %v3377 = vshrl.u32 %v3076, 16
        %v3379 = vrot.slane %v3377, 4
        %v3380 = vshll.u32 %v3076, 16
        %v3382 = vrot.slane %v3380, 5
        %v3383 = vor.u32 %v3379, %v3382
        %v3384 = vrot.slane %v3383, 4
        %v3386 = vshll.u32 %v3077, 16
        %v3388 = vrot.slane %v3386, 5
        %v3389 = vsel %vm241, %v3384, %v3388
        %v3390 = vshrl.u32 %v3077, 16
        %v3392 = vrot.slane %v3390, 4
        %v3393 = vor.u32 %v3392, %v3388
        %v3394 = vrot.slane %v3393, 4
        %v3396 = vshll.u32 %v3078, 16
        %v3398 = vrot.slane %v3396, 5
        %v3399 = vsel %vm241, %v3394, %v3398
        %v3401 = vshrl.u32 %v3079, 16
        %v3403 = vrot.slane %v3401, 4
        %v3404 = vshll.u32 %v3079, 16
        %v3406 = vrot.slane %v3404, 5
        %v3407 = vor.u32 %v3403, %v3406
        %v3408 = vrot.slane %v3407, 4
        %v3410 = vshll.u32 %v3080, 16
        %v3412 = vrot.slane %v3410, 5
        %v3413 = vsel %vm241, %v3408, %v3412
        %v3414 = vshrl.u32 %v3080, 16
        %v3416 = vrot.slane %v3414, 4
        %v3417 = vor.u32 %v3416, %v3412
        %v3418 = vrot.slane %v3417, 4
        %v3420 = vshll.u32 %v3081, 16
        %v3422 = vrot.slane %v3420, 5
        %v3423 = vsel %vm241, %v3418, %v3422
        %v3425 = vshrl.u32 %v3082, 16
        %v3427 = vrot.slane %v3425, 4
        %v3428 = vshll.u32 %v3082, 16
        %v3430 = vrot.slane %v3428, 5
        %v3431 = vor.u32 %v3427, %v3430
        %v3432 = vrot.slane %v3431, 4
        %v3434 = vshll.u32 %v3083, 16
        %v3436 = vrot.slane %v3434, 5
        %v3437 = vsel %vm241, %v3432, %v3436
        %v3438 = vshrl.u32 %v3083, 16
        %v3440 = vrot.slane %v3438, 4
        %v3441 = vor.u32 %v3440, %v3436
        %v3442 = vrot.slane %v3441, 4
        %v3444 = vshll.u32 %v3084, 16
        %v3446 = vrot.slane %v3444, 5
        %v3447 = vsel %vm241, %v3442, %v3446
        %v3449 = vshrl.u32 %v3085, 16
        %v3451 = vrot.slane %v3449, 4
        %v3452 = vshll.u32 %v3085, 16
        %v3454 = vrot.slane %v3452, 5
        %v3455 = vor.u32 %v3451, %v3454
        %v3456 = vrot.slane %v3455, 4
        %v3458 = vshll.u32 %v3086, 16
        %v3460 = vrot.slane %v3458, 5
        %v3461 = vsel %vm241, %v3456, %v3460
        %v3462 = vshrl.u32 %v3086, 16
        %v3464 = vrot.slane %v3462, 4
        %v3465 = vor.u32 %v3464, %v3460
        %v3466 = vrot.slane %v3465, 4
        %v3468 = vshll.u32 %v3087, 16
        %v3470 = vrot.slane %v3468, 5
        %v3471 = vsel %vm241, %v3466, %v3470
        %s3472 = scalar_lea.vmem %s1, 24
        %v3473 = vld [vmem:[%s3472] sm:$0xf]
        %v3474 = vunpack.c.l.b16 %v3101
        %v3475 = vunpack.c.l.b16 %v3111
        %v3476 = vunpack.c.l.b16 %v3125
        %v3477 = vunpack.c.l.b16 %v3135
        %v3478 = vunpack.c.l.b16 %v3149
        %v3479 = vunpack.c.l.b16 %v3159
        %v3480 = vunpack.c.l.b16 %v3173
        %v3481 = vunpack.c.l.b16 %v3183
        %v3482 = vunpack.c.l.b16 %v3197
        %v3483 = vunpack.c.l.b16 %v3207
        %v3484 = vunpack.c.l.b16 %v3221
        %v3485 = vunpack.c.l.b16 %v3231
        %v3486 = vunpack.c.l.b16 %v3245
        %v3487 = vunpack.c.l.b16 %v3255
        %v3488 = vunpack.c.l.b16 %v3269
        %v3489 = vunpack.c.l.b16 %v3279
        %v3490 = vunpack.c.l.b16 %v3293
        %v3491 = vunpack.c.l.b16 %v3303
        %v3492 = vunpack.c.l.b16 %v3317
        %v3493 = vunpack.c.l.b16 %v3327
        %v3494 = vunpack.c.l.b16 %v3341
        %v3495 = vunpack.c.l.b16 %v3351
        %v3496 = vunpack.c.l.b16 %v3365
        %v3497 = vunpack.c.l.b16 %v3375
        %v3498 = vunpack.c.l.b16 %v3389
        %v3499 = vunpack.c.l.b16 %v3399
        %v3500 = vunpack.c.l.b16 %v3413
        %v3501 = vunpack.c.l.b16 %v3423
        %v3502 = vunpack.c.l.b16 %v3437
        %v3503 = vunpack.c.l.b16 %v3447
        %v3504 = vunpack.c.l.b16 %v3461
        %v3505 = vunpack.c.l.b16 %v3471
        %v3506 = vpack.c.b16 %v3475, %v3474
        %v3507 = vpack.c.b16 %v3477, %v3476
        %v3508 = vpack.c.b16 %v3479, %v3478
        %v3509 = vpack.c.b16 %v3481, %v3480
        %v3510 = vpack.c.b16 %v3483, %v3482
        %v3511 = vpack.c.b16 %v3485, %v3484
        %v3512 = vpack.c.b16 %v3487, %v3486
        %v3513 = vpack.c.b16 %v3489, %v3488
        %v3514 = vpack.c.b16 %v3491, %v3490
        %v3515 = vpack.c.b16 %v3493, %v3492
        %v3516 = vpack.c.b16 %v3495, %v3494
        %v3517 = vpack.c.b16 %v3497, %v3496
        %v3518 = vpack.c.b16 %v3499, %v3498
        %v3519 = vpack.c.b16 %v3501, %v3500
        %v3520 = vpack.c.b16 %v3503, %v3502
        %v3521 = vpack.c.b16 %v3505, %v3504
        %v3523 = vsel %vm676, %v3506, 0
        %v3526 = vsel %vm676, %v3507, 0
        %v3529 = vsel %vm676, %v3508, 0
        %v3532 = vsel %vm676, %v3509, 0
        %v3535 = vsel %vm676, %v3510, 0
        %v3538 = vsel %vm676, %v3511, 0
        %v3541 = vsel %vm676, %v3512, 0
        %v3544 = vsel %vm676, %v3513, 0
        %v3547 = vsel %vm676, %v3514, 0
        %v3550 = vsel %vm676, %v3515, 0
        %v3553 = vsel %vm676, %v3516, 0
        %v3556 = vsel %vm676, %v3517, 0
        %v3559 = vsel %vm676, %v3518, 0
        %v3562 = vsel %vm676, %v3519, 0
        %v3565 = vsel %vm676, %v3520, 0
        %v3568 = vsel %vm676, %v3521, 0
        %v3571 = vsel %vm725, %v3473, 0
        %3573 = vmatpush.bf16.msra.mxu0 0
        %3574 = vmatpush.bf16.msra.mxu0 0
        %3575 = vmatpush.bf16.msra.mxu0 0
        %3576 = vmatpush.bf16.msra.mxu0 0
        %3577 = vmatpush.bf16.msra.mxu0 0
        %3578 = vmatpush.bf16.msra.mxu0 0
        %3579 = vmatpush.bf16.msra.mxu0 0
        %3580 = vmatpush.bf16.msra.mxu0 %v3571
        %3581 = vmatmul.bf16.gmra.mxu0 %v3523
        %v3582 = vpop.f32.mrf.mxu0
        %v3583 = vadd.f32 0.0, %v3582
        %v3584 = vpop.f32.mrf.mxu0
        %v3585 = vadd.f32 0.0, %v3584
        %3586 = vmatmul.bf16.gmra.mxu0 %v3526
        %v3587 = vpop.f32.mrf.mxu0
        %v3588 = vadd.f32 0.0, %v3587
        %v3589 = vpop.f32.mrf.mxu0
        %v3590 = vadd.f32 0.0, %v3589
        %3591 = vmatmul.bf16.gmra.mxu0 %v3529
        %v3592 = vpop.f32.mrf.mxu0
        %v3593 = vadd.f32 0.0, %v3592
        %v3594 = vpop.f32.mrf.mxu0
        %v3595 = vadd.f32 0.0, %v3594
        %3596 = vmatmul.bf16.gmra.mxu0 %v3532
        %v3597 = vpop.f32.mrf.mxu0
        %v3598 = vadd.f32 0.0, %v3597
        %v3599 = vpop.f32.mrf.mxu0
        %v3600 = vadd.f32 0.0, %v3599
        %3601 = vmatmul.bf16.gmra.mxu0 %v3535
        %v3602 = vpop.f32.mrf.mxu0
        %v3603 = vadd.f32 0.0, %v3602
        %v3604 = vpop.f32.mrf.mxu0
        %v3605 = vadd.f32 0.0, %v3604
        %3606 = vmatmul.bf16.gmra.mxu0 %v3538
        %v3607 = vpop.f32.mrf.mxu0
        %v3608 = vadd.f32 0.0, %v3607
        %v3609 = vpop.f32.mrf.mxu0
        %v3610 = vadd.f32 0.0, %v3609
        %3611 = vmatmul.bf16.gmra.mxu0 %v3541
        %v3612 = vpop.f32.mrf.mxu0
        %v3613 = vadd.f32 0.0, %v3612
        %v3614 = vpop.f32.mrf.mxu0
        %v3615 = vadd.f32 0.0, %v3614
        %3616 = vmatmul.bf16.gmra.mxu0 %v3544
        %v3617 = vpop.f32.mrf.mxu0
        %v3618 = vadd.f32 0.0, %v3617
        %v3619 = vpop.f32.mrf.mxu0
        %v3620 = vadd.f32 0.0, %v3619
        %3621 = vmatmul.bf16.gmra.mxu0 %v3547
        %v3622 = vpop.f32.mrf.mxu0
        %v3623 = vadd.f32 0.0, %v3622
        %v3624 = vpop.f32.mrf.mxu0
        %v3625 = vadd.f32 0.0, %v3624
        %3626 = vmatmul.bf16.gmra.mxu0 %v3550
        %v3627 = vpop.f32.mrf.mxu0
        %v3628 = vadd.f32 0.0, %v3627
        %v3629 = vpop.f32.mrf.mxu0
        %v3630 = vadd.f32 0.0, %v3629
        %3631 = vmatmul.bf16.gmra.mxu0 %v3553
        %v3632 = vpop.f32.mrf.mxu0
        %v3633 = vadd.f32 0.0, %v3632
        %v3634 = vpop.f32.mrf.mxu0
        %v3635 = vadd.f32 0.0, %v3634
        %3636 = vmatmul.bf16.gmra.mxu0 %v3556
        %v3637 = vpop.f32.mrf.mxu0
        %v3638 = vadd.f32 0.0, %v3637
        %v3639 = vpop.f32.mrf.mxu0
        %v3640 = vadd.f32 0.0, %v3639
        %3641 = vmatmul.bf16.gmra.mxu0 %v3559
        %v3642 = vpop.f32.mrf.mxu0
        %v3643 = vadd.f32 0.0, %v3642
        %v3644 = vpop.f32.mrf.mxu0
        %v3645 = vadd.f32 0.0, %v3644
        %3646 = vmatmul.bf16.gmra.mxu0 %v3562
        %v3647 = vpop.f32.mrf.mxu0
        %v3648 = vadd.f32 0.0, %v3647
        %v3649 = vpop.f32.mrf.mxu0
        %v3650 = vadd.f32 0.0, %v3649
        %3651 = vmatmul.bf16.gmra.mxu0 %v3565
        %v3652 = vpop.f32.mrf.mxu0
        %v3653 = vadd.f32 0.0, %v3652
        %v3654 = vpop.f32.mrf.mxu0
        %v3655 = vadd.f32 0.0, %v3654
        %3656 = vmatmul.bf16.gmra.mxu0 %v3568
        %v3657 = vpop.f32.mrf.mxu0
        %v3658 = vadd.f32 0.0, %v3657
        %v3659 = vpop.f32.mrf.mxu0
        %v3660 = vadd.f32 0.0, %v3659
        %3661 = vdwg.mxu0
        %v3662 = vadd.f32 %v2961, %v3583
        %v3663 = vadd.f32 %v2963, %v3585
        %v3664 = vadd.f32 %v2966, %v3588
        %v3665 = vadd.f32 %v2968, %v3590
        %v3666 = vadd.f32 %v2971, %v3593
        %v3667 = vadd.f32 %v2973, %v3595
        %v3668 = vadd.f32 %v2976, %v3598
        %v3669 = vadd.f32 %v2978, %v3600
        %v3670 = vadd.f32 %v2981, %v3603
        %v3671 = vadd.f32 %v2983, %v3605
        %v3672 = vadd.f32 %v2986, %v3608
        %v3673 = vadd.f32 %v2988, %v3610
        %v3674 = vadd.f32 %v2991, %v3613
        %v3675 = vadd.f32 %v2993, %v3615
        %v3676 = vadd.f32 %v2996, %v3618
        %v3677 = vadd.f32 %v2998, %v3620
        %v3678 = vadd.f32 %v3001, %v3623
        %v3679 = vadd.f32 %v3003, %v3625
        %v3680 = vadd.f32 %v3006, %v3628
        %v3681 = vadd.f32 %v3008, %v3630
        %v3682 = vadd.f32 %v3011, %v3633
        %v3683 = vadd.f32 %v3013, %v3635
        %v3684 = vadd.f32 %v3016, %v3638
        %v3685 = vadd.f32 %v3018, %v3640
        %v3686 = vadd.f32 %v3021, %v3643
        %v3687 = vadd.f32 %v3023, %v3645
        %v3688 = vadd.f32 %v3026, %v3648
        %v3689 = vadd.f32 %v3028, %v3650
        %v3690 = vadd.f32 %v3031, %v3653
        %v3691 = vadd.f32 %v3033, %v3655
        %v3692 = vadd.f32 %v3036, %v3658
        %v3693 = vadd.f32 %v3038, %v3660
        %v3694 = vld [vmem:[%s1041] sm:$0xe]
        %v3695 = vld [vmem:[%s1041 + $0xc] sm:$0xe]
        %v3696 = vld [vmem:[%s1041 + $0x18] sm:$0xe]
        %v3697 = vld [vmem:[%s1041 + $0x24] sm:$0xe]
        %v3698 = vld [vmem:[%s1041 + $0x30] sm:$0xe]
        %v3699 = vld [vmem:[%s1041 + $0x3c] sm:$0xe]
        %v3700 = vld [vmem:[%s1041 + $0x48] sm:$0xe]
        %v3701 = vld [vmem:[%s1041 + $0x54] sm:$0xe]
        %v3702 = vld [vmem:[%s1041 + $0x60] sm:$0xe]
        %v3703 = vld [vmem:[%s1041 + $0x6c] sm:$0xe]
        %v3704 = vld [vmem:[%s1041 + $0x78] sm:$0xe]
        %v3705 = vld [vmem:[%s1041 + $0x84] sm:$0xe]
        %v3706 = vld [vmem:[%s1041 + $0x90] sm:$0xe]
        %v3707 = vld [vmem:[%s1041 + $0x9c] sm:$0xe]
        %v3708 = vld [vmem:[%s1041 + $0xa8] sm:$0xe]
        %v3709 = vld [vmem:[%s1041 + $0xb4] sm:$0xe]
        %v3758 = vrot.slane %v3694, 5
        %v3759 = vrot.slane %v3758, 4
        %v3760 = vrot.slane %v3041, 5
        %v3761 = vsel %vm2549, %v3759, %v3760
        %v3762 = vrot.slane %v3760, 4
        %v3763 = vrot.slane %v3042, 5
        %v3764 = vsel %vm2549, %v3762, %v3763
        %v3765 = vrot.slane %v3695, 5
        %v3766 = vrot.slane %v3765, 4
        %v3767 = vrot.slane %v3044, 5
        %v3768 = vsel %vm2549, %v3766, %v3767
        %v3769 = vrot.slane %v3767, 4
        %v3770 = vrot.slane %v3045, 5
        %v3771 = vsel %vm2549, %v3769, %v3770
        %v3772 = vrot.slane %v3696, 5
        %v3773 = vrot.slane %v3772, 4
        %v3774 = vrot.slane %v3047, 5
        %v3775 = vsel %vm2549, %v3773, %v3774
        %v3776 = vrot.slane %v3774, 4
        %v3777 = vrot.slane %v3048, 5
        %v3778 = vsel %vm2549, %v3776, %v3777
        %v3779 = vrot.slane %v3697, 5
        %v3780 = vrot.slane %v3779, 4
        %v3781 = vrot.slane %v3050, 5
        %v3782 = vsel %vm2549, %v3780, %v3781
        %v3783 = vrot.slane %v3781, 4
        %v3784 = vrot.slane %v3051, 5
        %v3785 = vsel %vm2549, %v3783, %v3784
        %v3786 = vrot.slane %v3698, 5
        %v3787 = vrot.slane %v3786, 4
        %v3788 = vrot.slane %v3053, 5
        %v3789 = vsel %vm2549, %v3787, %v3788
        %v3790 = vrot.slane %v3788, 4
        %v3791 = vrot.slane %v3054, 5
        %v3792 = vsel %vm2549, %v3790, %v3791
        %v3793 = vrot.slane %v3699, 5
        %v3794 = vrot.slane %v3793, 4
        %v3795 = vrot.slane %v3056, 5
        %v3796 = vsel %vm2549, %v3794, %v3795
        %v3797 = vrot.slane %v3795, 4
        %v3798 = vrot.slane %v3057, 5
        %v3799 = vsel %vm2549, %v3797, %v3798
        %v3800 = vrot.slane %v3700, 5
        %v3801 = vrot.slane %v3800, 4
        %v3802 = vrot.slane %v3059, 5
        %v3803 = vsel %vm2549, %v3801, %v3802
        %v3804 = vrot.slane %v3802, 4
        %v3805 = vrot.slane %v3060, 5
        %v3806 = vsel %vm2549, %v3804, %v3805
        %v3807 = vrot.slane %v3701, 5
        %v3808 = vrot.slane %v3807, 4
        %v3809 = vrot.slane %v3062, 5
        %v3810 = vsel %vm2549, %v3808, %v3809
        %v3811 = vrot.slane %v3809, 4
        %v3812 = vrot.slane %v3063, 5
        %v3813 = vsel %vm2549, %v3811, %v3812
        %v3814 = vrot.slane %v3702, 5
        %v3815 = vrot.slane %v3814, 4
        %v3816 = vrot.slane %v3065, 5
        %v3817 = vsel %vm2549, %v3815, %v3816
        %v3818 = vrot.slane %v3816, 4
        %v3819 = vrot.slane %v3066, 5
        %v3820 = vsel %vm2549, %v3818, %v3819
        %v3821 = vrot.slane %v3703, 5
        %v3822 = vrot.slane %v3821, 4
        %v3823 = vrot.slane %v3068, 5
        %v3824 = vsel %vm2549, %v3822, %v3823
        %v3825 = vrot.slane %v3823, 4
        %v3826 = vrot.slane %v3069, 5
        %v3827 = vsel %vm2549, %v3825, %v3826
        %v3828 = vrot.slane %v3704, 5
        %v3829 = vrot.slane %v3828, 4
        %v3830 = vrot.slane %v3071, 5
        %v3831 = vsel %vm2549, %v3829, %v3830
        %v3832 = vrot.slane %v3830, 4
        %v3833 = vrot.slane %v3072, 5
        %v3834 = vsel %vm2549, %v3832, %v3833
        %v3835 = vrot.slane %v3705, 5
        %v3836 = vrot.slane %v3835, 4
        %v3837 = vrot.slane %v3074, 5
        %v3838 = vsel %vm2549, %v3836, %v3837
        %v3839 = vrot.slane %v3837, 4
        %v3840 = vrot.slane %v3075, 5
        %v3841 = vsel %vm2549, %v3839, %v3840
        %v3842 = vrot.slane %v3706, 5
        %v3843 = vrot.slane %v3842, 4
        %v3844 = vrot.slane %v3077, 5
        %v3845 = vsel %vm2549, %v3843, %v3844
        %v3846 = vrot.slane %v3844, 4
        %v3847 = vrot.slane %v3078, 5
        %v3848 = vsel %vm2549, %v3846, %v3847
        %v3849 = vrot.slane %v3707, 5
        %v3850 = vrot.slane %v3849, 4
        %v3851 = vrot.slane %v3080, 5
        %v3852 = vsel %vm2549, %v3850, %v3851
        %v3853 = vrot.slane %v3851, 4
        %v3854 = vrot.slane %v3081, 5
        %v3855 = vsel %vm2549, %v3853, %v3854
        %v3856 = vrot.slane %v3708, 5
        %v3857 = vrot.slane %v3856, 4
        %v3858 = vrot.slane %v3083, 5
        %v3859 = vsel %vm2549, %v3857, %v3858
        %v3860 = vrot.slane %v3858, 4
        %v3861 = vrot.slane %v3084, 5
        %v3862 = vsel %vm2549, %v3860, %v3861
        %v3863 = vrot.slane %v3709, 5
        %v3864 = vrot.slane %v3863, 4
        %v3865 = vrot.slane %v3086, 5
        %v3866 = vsel %vm2549, %v3864, %v3865
        %v3867 = vrot.slane %v3865, 4
        %v3868 = vrot.slane %v3087, 5
        %v3869 = vsel %vm2549, %v3867, %v3868
        %s3870 = scalar_lea.vmem %s1, 28
        %v3871 = vld [vmem:[%s3870] sm:$0xf]
        %v3872 = vunpack.c.l.b16 %v3761
        %v3873 = vunpack.c.l.b16 %v3764
        %v3874 = vunpack.c.l.b16 %v3768
        %v3875 = vunpack.c.l.b16 %v3771
        %v3876 = vunpack.c.l.b16 %v3775
        %v3877 = vunpack.c.l.b16 %v3778
        %v3878 = vunpack.c.l.b16 %v3782
        %v3879 = vunpack.c.l.b16 %v3785
        %v3880 = vunpack.c.l.b16 %v3789
        %v3881 = vunpack.c.l.b16 %v3792
        %v3882 = vunpack.c.l.b16 %v3796
        %v3883 = vunpack.c.l.b16 %v3799
        %v3884 = vunpack.c.l.b16 %v3803
        %v3885 = vunpack.c.l.b16 %v3806
        %v3886 = vunpack.c.l.b16 %v3810
        %v3887 = vunpack.c.l.b16 %v3813
        %v3888 = vunpack.c.l.b16 %v3817
        %v3889 = vunpack.c.l.b16 %v3820
        %v3890 = vunpack.c.l.b16 %v3824
        %v3891 = vunpack.c.l.b16 %v3827
        %v3892 = vunpack.c.l.b16 %v3831
        %v3893 = vunpack.c.l.b16 %v3834
        %v3894 = vunpack.c.l.b16 %v3838
        %v3895 = vunpack.c.l.b16 %v3841
        %v3896 = vunpack.c.l.b16 %v3845
        %v3897 = vunpack.c.l.b16 %v3848
        %v3898 = vunpack.c.l.b16 %v3852
        %v3899 = vunpack.c.l.b16 %v3855
        %v3900 = vunpack.c.l.b16 %v3859
        %v3901 = vunpack.c.l.b16 %v3862
        %v3902 = vunpack.c.l.b16 %v3866
        %v3903 = vunpack.c.l.b16 %v3869
        %v3904 = vpack.c.b16 %v3873, %v3872
        %v3905 = vpack.c.b16 %v3875, %v3874
        %v3906 = vpack.c.b16 %v3877, %v3876
        %v3907 = vpack.c.b16 %v3879, %v3878
        %v3908 = vpack.c.b16 %v3881, %v3880
        %v3909 = vpack.c.b16 %v3883, %v3882
        %v3910 = vpack.c.b16 %v3885, %v3884
        %v3911 = vpack.c.b16 %v3887, %v3886
        %v3912 = vpack.c.b16 %v3889, %v3888
        %v3913 = vpack.c.b16 %v3891, %v3890
        %v3914 = vpack.c.b16 %v3893, %v3892
        %v3915 = vpack.c.b16 %v3895, %v3894
        %v3916 = vpack.c.b16 %v3897, %v3896
        %v3917 = vpack.c.b16 %v3899, %v3898
        %v3918 = vpack.c.b16 %v3901, %v3900
        %v3919 = vpack.c.b16 %v3903, %v3902
        %v3921 = vsel %vm676, %v3904, 0
        %v3924 = vsel %vm676, %v3905, 0
        %v3927 = vsel %vm676, %v3906, 0
        %v3930 = vsel %vm676, %v3907, 0
        %v3933 = vsel %vm676, %v3908, 0
        %v3936 = vsel %vm676, %v3909, 0
        %v3939 = vsel %vm676, %v3910, 0
        %v3942 = vsel %vm676, %v3911, 0
        %v3945 = vsel %vm676, %v3912, 0
        %v3948 = vsel %vm676, %v3913, 0
        %v3951 = vsel %vm676, %v3914, 0
        %v3954 = vsel %vm676, %v3915, 0
        %v3957 = vsel %vm676, %v3916, 0
        %v3960 = vsel %vm676, %v3917, 0
        %v3963 = vsel %vm676, %v3918, 0
        %v3966 = vsel %vm676, %v3919, 0
        %v3969 = vsel %vm725, %v3871, 0
        %3971 = vmatpush.bf16.msra.mxu0 0
        %3972 = vmatpush.bf16.msra.mxu0 0
        %3973 = vmatpush.bf16.msra.mxu0 0
        %3974 = vmatpush.bf16.msra.mxu0 0
        %3975 = vmatpush.bf16.msra.mxu0 0
        %3976 = vmatpush.bf16.msra.mxu0 0
        %3977 = vmatpush.bf16.msra.mxu0 0
        %3978 = vmatpush.bf16.msra.mxu0 %v3969
        %3979 = vmatmul.bf16.gmra.mxu0 %v3921
        %v3980 = vpop.f32.mrf.mxu0
        %v3981 = vadd.f32 0.0, %v3980
        %v3982 = vpop.f32.mrf.mxu0
        %v3983 = vadd.f32 0.0, %v3982
        %3984 = vmatmul.bf16.gmra.mxu0 %v3924
        %v3985 = vpop.f32.mrf.mxu0
        %v3986 = vadd.f32 0.0, %v3985
        %v3987 = vpop.f32.mrf.mxu0
        %v3988 = vadd.f32 0.0, %v3987
        %3989 = vmatmul.bf16.gmra.mxu0 %v3927
        %v3990 = vpop.f32.mrf.mxu0
        %v3991 = vadd.f32 0.0, %v3990
        %v3992 = vpop.f32.mrf.mxu0
        %v3993 = vadd.f32 0.0, %v3992
        %3994 = vmatmul.bf16.gmra.mxu0 %v3930
        %v3995 = vpop.f32.mrf.mxu0
        %v3996 = vadd.f32 0.0, %v3995
        %v3997 = vpop.f32.mrf.mxu0
        %v3998 = vadd.f32 0.0, %v3997
        %3999 = vmatmul.bf16.gmra.mxu0 %v3933
        %v4000 = vpop.f32.mrf.mxu0
        %v4001 = vadd.f32 0.0, %v4000
        %v4002 = vpop.f32.mrf.mxu0
        %v4003 = vadd.f32 0.0, %v4002
        %4004 = vmatmul.bf16.gmra.mxu0 %v3936
        %v4005 = vpop.f32.mrf.mxu0
        %v4006 = vadd.f32 0.0, %v4005
        %v4007 = vpop.f32.mrf.mxu0
        %v4008 = vadd.f32 0.0, %v4007
        %4009 = vmatmul.bf16.gmra.mxu0 %v3939
        %v4010 = vpop.f32.mrf.mxu0
        %v4011 = vadd.f32 0.0, %v4010
        %v4012 = vpop.f32.mrf.mxu0
        %v4013 = vadd.f32 0.0, %v4012
        %4014 = vmatmul.bf16.gmra.mxu0 %v3942
        %v4015 = vpop.f32.mrf.mxu0
        %v4016 = vadd.f32 0.0, %v4015
        %v4017 = vpop.f32.mrf.mxu0
        %v4018 = vadd.f32 0.0, %v4017
        %4019 = vmatmul.bf16.gmra.mxu0 %v3945
        %v4020 = vpop.f32.mrf.mxu0
        %v4021 = vadd.f32 0.0, %v4020
        %v4022 = vpop.f32.mrf.mxu0
        %v4023 = vadd.f32 0.0, %v4022
        %4024 = vmatmul.bf16.gmra.mxu0 %v3948
        %v4025 = vpop.f32.mrf.mxu0
        %v4026 = vadd.f32 0.0, %v4025
        %v4027 = vpop.f32.mrf.mxu0
        %v4028 = vadd.f32 0.0, %v4027
        %4029 = vmatmul.bf16.gmra.mxu0 %v3951
        %v4030 = vpop.f32.mrf.mxu0
        %v4031 = vadd.f32 0.0, %v4030
        %v4032 = vpop.f32.mrf.mxu0
        %v4033 = vadd.f32 0.0, %v4032
        %4034 = vmatmul.bf16.gmra.mxu0 %v3954
        %v4035 = vpop.f32.mrf.mxu0
        %v4036 = vadd.f32 0.0, %v4035
        %v4037 = vpop.f32.mrf.mxu0
        %v4038 = vadd.f32 0.0, %v4037
        %4039 = vmatmul.bf16.gmra.mxu0 %v3957
        %v4040 = vpop.f32.mrf.mxu0
        %v4041 = vadd.f32 0.0, %v4040
        %v4042 = vpop.f32.mrf.mxu0
        %v4043 = vadd.f32 0.0, %v4042
        %4044 = vmatmul.bf16.gmra.mxu0 %v3960
        %v4045 = vpop.f32.mrf.mxu0
        %v4046 = vadd.f32 0.0, %v4045
        %v4047 = vpop.f32.mrf.mxu0
        %v4048 = vadd.f32 0.0, %v4047
        %4049 = vmatmul.bf16.gmra.mxu0 %v3963
        %v4050 = vpop.f32.mrf.mxu0
        %v4051 = vadd.f32 0.0, %v4050
        %v4052 = vpop.f32.mrf.mxu0
        %v4053 = vadd.f32 0.0, %v4052
        %4054 = vmatmul.bf16.gmra.mxu0 %v3966
        %v4055 = vpop.f32.mrf.mxu0
        %v4056 = vadd.f32 0.0, %v4055
        %v4057 = vpop.f32.mrf.mxu0
        %v4058 = vadd.f32 0.0, %v4057
        %4059 = vdwg.mxu0
        %v4060 = vadd.f32 %v3662, %v3981
        %v4061 = vadd.f32 %v3663, %v3983
        %v4062 = vadd.f32 %v3664, %v3986
        %v4063 = vadd.f32 %v3665, %v3988
        %v4064 = vadd.f32 %v3666, %v3991
        %v4065 = vadd.f32 %v3667, %v3993
        %v4066 = vadd.f32 %v3668, %v3996
        %v4067 = vadd.f32 %v3669, %v3998
        %v4068 = vadd.f32 %v3670, %v4001
        %v4069 = vadd.f32 %v3671, %v4003
        %v4070 = vadd.f32 %v3672, %v4006
        %v4071 = vadd.f32 %v3673, %v4008
        %v4072 = vadd.f32 %v3674, %v4011
        %v4073 = vadd.f32 %v3675, %v4013
        %v4074 = vadd.f32 %v3676, %v4016
        %v4075 = vadd.f32 %v3677, %v4018
        %v4076 = vadd.f32 %v3678, %v4021
        %v4077 = vadd.f32 %v3679, %v4023
        %v4078 = vadd.f32 %v3680, %v4026
        %v4079 = vadd.f32 %v3681, %v4028
        %v4080 = vadd.f32 %v3682, %v4031
        %v4081 = vadd.f32 %v3683, %v4033
        %v4082 = vadd.f32 %v3684, %v4036
        %v4083 = vadd.f32 %v3685, %v4038
        %v4084 = vadd.f32 %v3686, %v4041
        %v4085 = vadd.f32 %v3687, %v4043
        %v4086 = vadd.f32 %v3688, %v4046
        %v4087 = vadd.f32 %v3689, %v4048
        %v4088 = vadd.f32 %v3690, %v4051
        %v4089 = vadd.f32 %v3691, %v4053
        %v4090 = vadd.f32 %v3692, %v4056
        %v4091 = vadd.f32 %v3693, %v4058
        %v4092 = vadd.f32 %v4060, %v1983
        %v4093 = vadd.f32 %v4061, %v1983
        %v4094 = vadd.f32 %v4062, %v1983
        %v4095 = vadd.f32 %v4063, %v1983
        %v4096 = vadd.f32 %v4064, %v1983
        %v4097 = vadd.f32 %v4065, %v1983
        %v4098 = vadd.f32 %v4066, %v1983
        %v4099 = vadd.f32 %v4067, %v1983
        %v4100 = vadd.f32 %v4068, %v1983
        %v4101 = vadd.f32 %v4069, %v1983
        %v4102 = vadd.f32 %v4070, %v1983
        %v4103 = vadd.f32 %v4071, %v1983
        %v4104 = vadd.f32 %v4072, %v1983
        %v4105 = vadd.f32 %v4073, %v1983
        %v4106 = vadd.f32 %v4074, %v1983
        %v4107 = vadd.f32 %v4075, %v1983
        %v4108 = vadd.f32 %v4076, %v1983
        %v4109 = vadd.f32 %v4077, %v1983
        %v4110 = vadd.f32 %v4078, %v1983
        %v4111 = vadd.f32 %v4079, %v1983
        %v4112 = vadd.f32 %v4080, %v1983
        %v4113 = vadd.f32 %v4081, %v1983
        %v4114 = vadd.f32 %v4082, %v1983
        %v4115 = vadd.f32 %v4083, %v1983
        %v4116 = vadd.f32 %v4084, %v1983
        %v4117 = vadd.f32 %v4085, %v1983
        %v4118 = vadd.f32 %v4086, %v1983
        %v4119 = vadd.f32 %v4087, %v1983
        %v4120 = vadd.f32 %v4088, %v1983
        %v4121 = vadd.f32 %v4089, %v1983
        %v4122 = vadd.f32 %v4090, %v1983
        %v4123 = vadd.f32 %v4091, %v1983
        %4156 = vrot.lane.b32.xlu0 %v4092, 8
        %v4157 = vpop.permute.xlu0 %4156
        %4158 = vrot.lane.b32.xlu0 %v4093, 8
        %v4159 = vpop.permute.xlu0 %4158
        %4160 = vrot.lane.b32.xlu0 %v4094, 8
        %v4161 = vpop.permute.xlu0 %4160
        %4162 = vrot.lane.b32.xlu0 %v4095, 8
        %v4163 = vpop.permute.xlu0 %4162
        %4164 = vrot.lane.b32.xlu0 %v4096, 8
        %v4165 = vpop.permute.xlu0 %4164
        %4166 = vrot.lane.b32.xlu0 %v4097, 8
        %v4167 = vpop.permute.xlu0 %4166
        %4168 = vrot.lane.b32.xlu0 %v4098, 8
        %v4169 = vpop.permute.xlu0 %4168
        %4170 = vrot.lane.b32.xlu0 %v4099, 8
        %v4171 = vpop.permute.xlu0 %4170
        %4172 = vrot.lane.b32.xlu0 %v4100, 8
        %v4173 = vpop.permute.xlu0 %4172
        %4174 = vrot.lane.b32.xlu0 %v4101, 8
        %v4175 = vpop.permute.xlu0 %4174
        %4176 = vrot.lane.b32.xlu0 %v4102, 8
        %v4177 = vpop.permute.xlu0 %4176
        %4178 = vrot.lane.b32.xlu0 %v4103, 8
        %v4179 = vpop.permute.xlu0 %4178
        %4180 = vrot.lane.b32.xlu0 %v4104, 8
        %v4181 = vpop.permute.xlu0 %4180
        %4182 = vrot.lane.b32.xlu0 %v4105, 8
        %v4183 = vpop.permute.xlu0 %4182
        %4184 = vrot.lane.b32.xlu0 %v4106, 8
        %v4185 = vpop.permute.xlu0 %4184
        %4186 = vrot.lane.b32.xlu0 %v4107, 8
        %v4187 = vpop.permute.xlu0 %4186
        %4188 = vrot.lane.b32.xlu0 %v4108, 8
        %v4189 = vpop.permute.xlu0 %4188
        %4190 = vrot.lane.b32.xlu0 %v4109, 8
        %v4191 = vpop.permute.xlu0 %4190
        %4192 = vrot.lane.b32.xlu0 %v4110, 8
        %v4193 = vpop.permute.xlu0 %4192
        %4194 = vrot.lane.b32.xlu0 %v4111, 8
        %v4195 = vpop.permute.xlu0 %4194
        %4196 = vrot.lane.b32.xlu0 %v4112, 8
        %v4197 = vpop.permute.xlu0 %4196
        %4198 = vrot.lane.b32.xlu0 %v4113, 8
        %v4199 = vpop.permute.xlu0 %4198
        %4200 = vrot.lane.b32.xlu0 %v4114, 8
        %v4201 = vpop.permute.xlu0 %4200
        %4202 = vrot.lane.b32.xlu0 %v4115, 8
        %v4203 = vpop.permute.xlu0 %4202
        %4204 = vrot.lane.b32.xlu0 %v4116, 8
        %v4205 = vpop.permute.xlu0 %4204
        %4206 = vrot.lane.b32.xlu0 %v4117, 8
        %v4207 = vpop.permute.xlu0 %4206
        %4208 = vrot.lane.b32.xlu0 %v4118, 8
        %v4209 = vpop.permute.xlu0 %4208
        %4210 = vrot.lane.b32.xlu0 %v4119, 8
        %v4211 = vpop.permute.xlu0 %4210
        %4212 = vrot.lane.b32.xlu0 %v4120, 8
        %v4213 = vpop.permute.xlu0 %4212
        %4214 = vrot.lane.b32.xlu0 %v4121, 8
        %v4215 = vpop.permute.xlu0 %4214
        %4216 = vrot.lane.b32.xlu0 %v4122, 8
        %v4217 = vpop.permute.xlu0 %4216
        %4218 = vrot.lane.b32.xlu0 %v4123, 8
        %v4219 = vpop.permute.xlu0 %4218
        %vm4252 = vcmask 130112
        %4253 = vst.msk [vmem:[%s177] sm:$0xff] %vm4252, %v4157
        %4254 = vst.msk [vmem:[%s177 + $0x8] sm:$0xff] %vm4252, %v4159
        %4255 = vst.msk [vmem:[%s177 + $0x20] sm:$0xff] %vm4252, %v4161
        %4256 = vst.msk [vmem:[%s177 + $0x28] sm:$0xff] %vm4252, %v4163
        %4257 = vst.msk [vmem:[%s177 + $0x40] sm:$0xff] %vm4252, %v4165
        %4258 = vst.msk [vmem:[%s177 + $0x48] sm:$0xff] %vm4252, %v4167
        %4259 = vst.msk [vmem:[%s177 + $0x60] sm:$0xff] %vm4252, %v4169
        %4260 = vst.msk [vmem:[%s177 + $0x68] sm:$0xff] %vm4252, %v4171
        %4261 = vst.msk [vmem:[%s177 + $0x80] sm:$0xff] %vm4252, %v4173
        %4262 = vst.msk [vmem:[%s177 + $0x88] sm:$0xff] %vm4252, %v4175
        %4263 = vst.msk [vmem:[%s177 + $0xa0] sm:$0xff] %vm4252, %v4177
        %4264 = vst.msk [vmem:[%s177 + $0xa8] sm:$0xff] %vm4252, %v4179
        %4265 = vst.msk [vmem:[%s177 + $0xc0] sm:$0xff] %vm4252, %v4181
        %4266 = vst.msk [vmem:[%s177 + $0xc8] sm:$0xff] %vm4252, %v4183
        %4267 = vst.msk [vmem:[%s177 + $0xe0] sm:$0xff] %vm4252, %v4185
        %4268 = vst.msk [vmem:[%s177 + $0xe8] sm:$0xff] %vm4252, %v4187
        %4269 = vst.msk [vmem:[%s177 + $0x100] sm:$0xff] %vm4252, %v4189
        %4270 = vst.msk [vmem:[%s177 + $0x108] sm:$0xff] %vm4252, %v4191
        %4271 = vst.msk [vmem:[%s177 + $0x120] sm:$0xff] %vm4252, %v4193
        %4272 = vst.msk [vmem:[%s177 + $0x128] sm:$0xff] %vm4252, %v4195
        %4273 = vst.msk [vmem:[%s177 + $0x140] sm:$0xff] %vm4252, %v4197
        %4274 = vst.msk [vmem:[%s177 + $0x148] sm:$0xff] %vm4252, %v4199
        %4275 = vst.msk [vmem:[%s177 + $0x160] sm:$0xff] %vm4252, %v4201
        %4276 = vst.msk [vmem:[%s177 + $0x168] sm:$0xff] %vm4252, %v4203
        %4277 = vst.msk [vmem:[%s177 + $0x180] sm:$0xff] %vm4252, %v4205
        %4278 = vst.msk [vmem:[%s177 + $0x188] sm:$0xff] %vm4252, %v4207
        %4279 = vst.msk [vmem:[%s177 + $0x1a0] sm:$0xff] %vm4252, %v4209
        %4280 = vst.msk [vmem:[%s177 + $0x1a8] sm:$0xff] %vm4252, %v4211
        %4281 = vst.msk [vmem:[%s177 + $0x1c0] sm:$0xff] %vm4252, %v4213
        %4282 = vst.msk [vmem:[%s177 + $0x1c8] sm:$0xff] %vm4252, %v4215
        %4283 = vst.msk [vmem:[%s177 + $0x1e0] sm:$0xff] %vm4252, %v4217
        %4284 = vst.msk [vmem:[%s177 + $0x1e8] sm:$0xff] %vm4252, %v4219
        %v4285 = vld [vmem:[%s1041] sm:$0xf]
        %v4286 = vld [vmem:[%s1041 + $0x4] sm:$0xf]
        %v4287 = vld [vmem:[%s1041 + $0xc] sm:$0xf]
        %v4288 = vld [vmem:[%s1041 + $0x10] sm:$0xf]
        %v4289 = vld [vmem:[%s1041 + $0x18] sm:$0xf]
        %v4290 = vld [vmem:[%s1041 + $0x1c] sm:$0xf]
        %v4291 = vld [vmem:[%s1041 + $0x24] sm:$0xf]
        %v4292 = vld [vmem:[%s1041 + $0x28] sm:$0xf]
        %v4293 = vld [vmem:[%s1041 + $0x30] sm:$0xf]
        %v4294 = vld [vmem:[%s1041 + $0x34] sm:$0xf]
        %v4295 = vld [vmem:[%s1041 + $0x3c] sm:$0xf]
        %v4296 = vld [vmem:[%s1041 + $0x40] sm:$0xf]
        %v4297 = vld [vmem:[%s1041 + $0x48] sm:$0xf]
        %v4298 = vld [vmem:[%s1041 + $0x4c] sm:$0xf]
        %v4299 = vld [vmem:[%s1041 + $0x54] sm:$0xf]
        %v4300 = vld [vmem:[%s1041 + $0x58] sm:$0xf]
        %v4301 = vld [vmem:[%s1041 + $0x60] sm:$0xf]
        %v4302 = vld [vmem:[%s1041 + $0x64] sm:$0xf]
        %v4303 = vld [vmem:[%s1041 + $0x6c] sm:$0xf]
        %v4304 = vld [vmem:[%s1041 + $0x70] sm:$0xf]
        %v4305 = vld [vmem:[%s1041 + $0x78] sm:$0xf]
        %v4306 = vld [vmem:[%s1041 + $0x7c] sm:$0xf]
        %v4307 = vld [vmem:[%s1041 + $0x84] sm:$0xf]
        %v4308 = vld [vmem:[%s1041 + $0x88] sm:$0xf]
        %v4309 = vld [vmem:[%s1041 + $0x90] sm:$0xf]
        %v4310 = vld [vmem:[%s1041 + $0x94] sm:$0xf]
        %v4311 = vld [vmem:[%s1041 + $0x9c] sm:$0xf]
        %v4312 = vld [vmem:[%s1041 + $0xa0] sm:$0xf]
        %v4313 = vld [vmem:[%s1041 + $0xa8] sm:$0xf]
        %v4314 = vld [vmem:[%s1041 + $0xac] sm:$0xf]
        %v4315 = vld [vmem:[%s1041 + $0xb4] sm:$0xf]
        %v4316 = vld [vmem:[%s1041 + $0xb8] sm:$0xf]
        %s4317 = scalar_lea.vmem %s1, 32
        %v4318 = vld [vmem:[%s4317] sm:$0xf]
        %v4319 = vld [vmem:[%s1041 + $0x8] sm:$0x1]
        %v4320 = vld [vmem:[%s1041 + $0x14] sm:$0x1]
        %v4321 = vld [vmem:[%s1041 + $0x20] sm:$0x1]
        %v4322 = vld [vmem:[%s1041 + $0x2c] sm:$0x1]
        %v4323 = vld [vmem:[%s1041 + $0x38] sm:$0x1]
        %v4324 = vld [vmem:[%s1041 + $0x44] sm:$0x1]
        %v4325 = vld [vmem:[%s1041 + $0x50] sm:$0x1]
        %v4326 = vld [vmem:[%s1041 + $0x5c] sm:$0x1]
        %v4327 = vld [vmem:[%s1041 + $0x68] sm:$0x1]
        %v4328 = vld [vmem:[%s1041 + $0x74] sm:$0x1]
        %v4329 = vld [vmem:[%s1041 + $0x80] sm:$0x1]
        %v4330 = vld [vmem:[%s1041 + $0x8c] sm:$0x1]
        %v4331 = vld [vmem:[%s1041 + $0x98] sm:$0x1]
        %v4332 = vld [vmem:[%s1041 + $0xa4] sm:$0x1]
        %v4333 = vld [vmem:[%s1041 + $0xb0] sm:$0x1]
        %v4334 = vld [vmem:[%s1041 + $0xbc] sm:$0x1]
        %v4336 = vshrl.u32 %v4285, 16
        %v4338 = vrot.slane %v4336, 4
        %v4339 = vshll.u32 %v4285, 16
        %v4341 = vrot.slane %v4339, 5
        %v4342 = vor.u32 %v4338, %v4341
        %v4343 = vrot.slane %v4342, 4
        %v4345 = vshll.u32 %v4286, 16
        %v4347 = vrot.slane %v4345, 5
        %v4348 = vsel %vm241, %v4343, %v4347
        %v4349 = vshrl.u32 %v4286, 16
        %v4351 = vrot.slane %v4349, 4
        %v4352 = vor.u32 %v4351, %v4347
        %v4353 = vrot.slane %v4352, 4
        %v4355 = vshll.u32 %v4319, 16
        %v4357 = vrot.slane %v4355, 5
        %v4358 = vsel %vm241, %v4353, %v4357
        %v4360 = vshrl.u32 %v4287, 16
        %v4362 = vrot.slane %v4360, 4
        %v4363 = vshll.u32 %v4287, 16
        %v4365 = vrot.slane %v4363, 5
        %v4366 = vor.u32 %v4362, %v4365
        %v4367 = vrot.slane %v4366, 4
        %v4369 = vshll.u32 %v4288, 16
        %v4371 = vrot.slane %v4369, 5
        %v4372 = vsel %vm241, %v4367, %v4371
        %v4373 = vshrl.u32 %v4288, 16
        %v4375 = vrot.slane %v4373, 4
        %v4376 = vor.u32 %v4375, %v4371
        %v4377 = vrot.slane %v4376, 4
        %v4379 = vshll.u32 %v4320, 16
        %v4381 = vrot.slane %v4379, 5
        %v4382 = vsel %vm241, %v4377, %v4381
        %v4384 = vshrl.u32 %v4289, 16
        %v4386 = vrot.slane %v4384, 4
        %v4387 = vshll.u32 %v4289, 16
        %v4389 = vrot.slane %v4387, 5
        %v4390 = vor.u32 %v4386, %v4389
        %v4391 = vrot.slane %v4390, 4
        %v4393 = vshll.u32 %v4290, 16
        %v4395 = vrot.slane %v4393, 5
        %v4396 = vsel %vm241, %v4391, %v4395
        %v4397 = vshrl.u32 %v4290, 16
        %v4399 = vrot.slane %v4397, 4
        %v4400 = vor.u32 %v4399, %v4395
        %v4401 = vrot.slane %v4400, 4
        %v4403 = vshll.u32 %v4321, 16
        %v4405 = vrot.slane %v4403, 5
        %v4406 = vsel %vm241, %v4401, %v4405
        %v4408 = vshrl.u32 %v4291, 16
        %v4410 = vrot.slane %v4408, 4
        %v4411 = vshll.u32 %v4291, 16
        %v4413 = vrot.slane %v4411, 5
        %v4414 = vor.u32 %v4410, %v4413
        %v4415 = vrot.slane %v4414, 4
        %v4417 = vshll.u32 %v4292, 16
        %v4419 = vrot.slane %v4417, 5
        %v4420 = vsel %vm241, %v4415, %v4419
        %v4421 = vshrl.u32 %v4292, 16
        %v4423 = vrot.slane %v4421, 4
        %v4424 = vor.u32 %v4423, %v4419
        %v4425 = vrot.slane %v4424, 4
        %v4427 = vshll.u32 %v4322, 16
        %v4429 = vrot.slane %v4427, 5
        %v4430 = vsel %vm241, %v4425, %v4429
        %v4432 = vshrl.u32 %v4293, 16
        %v4434 = vrot.slane %v4432, 4
        %v4435 = vshll.u32 %v4293, 16
        %v4437 = vrot.slane %v4435, 5
        %v4438 = vor.u32 %v4434, %v4437
        %v4439 = vrot.slane %v4438, 4
        %v4441 = vshll.u32 %v4294, 16
        %v4443 = vrot.slane %v4441, 5
        %v4444 = vsel %vm241, %v4439, %v4443
        %v4445 = vshrl.u32 %v4294, 16
        %v4447 = vrot.slane %v4445, 4
        %v4448 = vor.u32 %v4447, %v4443
        %v4449 = vrot.slane %v4448, 4
        %v4451 = vshll.u32 %v4323, 16
        %v4453 = vrot.slane %v4451, 5
        %v4454 = vsel %vm241, %v4449, %v4453
        %v4456 = vshrl.u32 %v4295, 16
        %v4458 = vrot.slane %v4456, 4
        %v4459 = vshll.u32 %v4295, 16
        %v4461 = vrot.slane %v4459, 5
        %v4462 = vor.u32 %v4458, %v4461
        %v4463 = vrot.slane %v4462, 4
        %v4465 = vshll.u32 %v4296, 16
        %v4467 = vrot.slane %v4465, 5
        %v4468 = vsel %vm241, %v4463, %v4467
        %v4469 = vshrl.u32 %v4296, 16
        %v4471 = vrot.slane %v4469, 4
        %v4472 = vor.u32 %v4471, %v4467
        %v4473 = vrot.slane %v4472, 4
        %v4475 = vshll.u32 %v4324, 16
        %v4477 = vrot.slane %v4475, 5
        %v4478 = vsel %vm241, %v4473, %v4477
        %v4480 = vshrl.u32 %v4297, 16
        %v4482 = vrot.slane %v4480, 4
        %v4483 = vshll.u32 %v4297, 16
        %v4485 = vrot.slane %v4483, 5
        %v4486 = vor.u32 %v4482, %v4485
        %v4487 = vrot.slane %v4486, 4
        %v4489 = vshll.u32 %v4298, 16
        %v4491 = vrot.slane %v4489, 5
        %v4492 = vsel %vm241, %v4487, %v4491
        %v4493 = vshrl.u32 %v4298, 16
        %v4495 = vrot.slane %v4493, 4
        %v4496 = vor.u32 %v4495, %v4491
        %v4497 = vrot.slane %v4496, 4
        %v4499 = vshll.u32 %v4325, 16
        %v4501 = vrot.slane %v4499, 5
        %v4502 = vsel %vm241, %v4497, %v4501
        %v4504 = vshrl.u32 %v4299, 16
        %v4506 = vrot.slane %v4504, 4
        %v4507 = vshll.u32 %v4299, 16
        %v4509 = vrot.slane %v4507, 5
        %v4510 = vor.u32 %v4506, %v4509
        %v4511 = vrot.slane %v4510, 4
        %v4513 = vshll.u32 %v4300, 16
        %v4515 = vrot.slane %v4513, 5
        %v4516 = vsel %vm241, %v4511, %v4515
        %v4517 = vshrl.u32 %v4300, 16
        %v4519 = vrot.slane %v4517, 4
        %v4520 = vor.u32 %v4519, %v4515
        %v4521 = vrot.slane %v4520, 4
        %v4523 = vshll.u32 %v4326, 16
        %v4525 = vrot.slane %v4523, 5
        %v4526 = vsel %vm241, %v4521, %v4525
        %v4528 = vshrl.u32 %v4301, 16
        %v4530 = vrot.slane %v4528, 4
        %v4531 = vshll.u32 %v4301, 16
        %v4533 = vrot.slane %v4531, 5
        %v4534 = vor.u32 %v4530, %v4533
        %v4535 = vrot.slane %v4534, 4
        %v4537 = vshll.u32 %v4302, 16
        %v4539 = vrot.slane %v4537, 5
        %v4540 = vsel %vm241, %v4535, %v4539
        %v4541 = vshrl.u32 %v4302, 16
        %v4543 = vrot.slane %v4541, 4
        %v4544 = vor.u32 %v4543, %v4539
        %v4545 = vrot.slane %v4544, 4
        %v4547 = vshll.u32 %v4327, 16
        %v4549 = vrot.slane %v4547, 5
        %v4550 = vsel %vm241, %v4545, %v4549
        %v4552 = vshrl.u32 %v4303, 16
        %v4554 = vrot.slane %v4552, 4
        %v4555 = vshll.u32 %v4303, 16
        %v4557 = vrot.slane %v4555, 5
        %v4558 = vor.u32 %v4554, %v4557
        %v4559 = vrot.slane %v4558, 4
        %v4561 = vshll.u32 %v4304, 16
        %v4563 = vrot.slane %v4561, 5
        %v4564 = vsel %vm241, %v4559, %v4563
        %v4565 = vshrl.u32 %v4304, 16
        %v4567 = vrot.slane %v4565, 4
        %v4568 = vor.u32 %v4567, %v4563
        %v4569 = vrot.slane %v4568, 4
        %v4571 = vshll.u32 %v4328, 16
        %v4573 = vrot.slane %v4571, 5
        %v4574 = vsel %vm241, %v4569, %v4573
        %v4576 = vshrl.u32 %v4305, 16
        %v4578 = vrot.slane %v4576, 4
        %v4579 = vshll.u32 %v4305, 16
        %v4581 = vrot.slane %v4579, 5
        %v4582 = vor.u32 %v4578, %v4581
        %v4583 = vrot.slane %v4582, 4
        %v4585 = vshll.u32 %v4306, 16
        %v4587 = vrot.slane %v4585, 5
        %v4588 = vsel %vm241, %v4583, %v4587
        %v4589 = vshrl.u32 %v4306, 16
        %v4591 = vrot.slane %v4589, 4
        %v4592 = vor.u32 %v4591, %v4587
        %v4593 = vrot.slane %v4592, 4
        %v4595 = vshll.u32 %v4329, 16
        %v4597 = vrot.slane %v4595, 5
        %v4598 = vsel %vm241, %v4593, %v4597
        %v4600 = vshrl.u32 %v4307, 16
        %v4602 = vrot.slane %v4600, 4
        %v4603 = vshll.u32 %v4307, 16
        %v4605 = vrot.slane %v4603, 5
        %v4606 = vor.u32 %v4602, %v4605
        %v4607 = vrot.slane %v4606, 4
        %v4609 = vshll.u32 %v4308, 16
        %v4611 = vrot.slane %v4609, 5
        %v4612 = vsel %vm241, %v4607, %v4611
        %v4613 = vshrl.u32 %v4308, 16
        %v4615 = vrot.slane %v4613, 4
        %v4616 = vor.u32 %v4615, %v4611
        %v4617 = vrot.slane %v4616, 4
        %v4619 = vshll.u32 %v4330, 16
        %v4621 = vrot.slane %v4619, 5
        %v4622 = vsel %vm241, %v4617, %v4621
        %v4624 = vshrl.u32 %v4309, 16
        %v4626 = vrot.slane %v4624, 4
        %v4627 = vshll.u32 %v4309, 16
        %v4629 = vrot.slane %v4627, 5
        %v4630 = vor.u32 %v4626, %v4629
        %v4631 = vrot.slane %v4630, 4
        %v4633 = vshll.u32 %v4310, 16
        %v4635 = vrot.slane %v4633, 5
        %v4636 = vsel %vm241, %v4631, %v4635
        %v4637 = vshrl.u32 %v4310, 16
        %v4639 = vrot.slane %v4637, 4
        %v4640 = vor.u32 %v4639, %v4635
        %v4641 = vrot.slane %v4640, 4
        %v4643 = vshll.u32 %v4331, 16
        %v4645 = vrot.slane %v4643, 5
        %v4646 = vsel %vm241, %v4641, %v4645
        %v4648 = vshrl.u32 %v4311, 16
        %v4650 = vrot.slane %v4648, 4
        %v4651 = vshll.u32 %v4311, 16
        %v4653 = vrot.slane %v4651, 5
        %v4654 = vor.u32 %v4650, %v4653
        %v4655 = vrot.slane %v4654, 4
        %v4657 = vshll.u32 %v4312, 16
        %v4659 = vrot.slane %v4657, 5
        %v4660 = vsel %vm241, %v4655, %v4659
        %v4661 = vshrl.u32 %v4312, 16
        %v4663 = vrot.slane %v4661, 4
        %v4664 = vor.u32 %v4663, %v4659
        %v4665 = vrot.slane %v4664, 4
        %v4667 = vshll.u32 %v4332, 16
        %v4669 = vrot.slane %v4667, 5
        %v4670 = vsel %vm241, %v4665, %v4669
        %v4672 = vshrl.u32 %v4313, 16
        %v4674 = vrot.slane %v4672, 4
        %v4675 = vshll.u32 %v4313, 16
        %v4677 = vrot.slane %v4675, 5
        %v4678 = vor.u32 %v4674, %v4677
        %v4679 = vrot.slane %v4678, 4
        %v4681 = vshll.u32 %v4314, 16
        %v4683 = vrot.slane %v4681, 5
        %v4684 = vsel %vm241, %v4679, %v4683
        %v4685 = vshrl.u32 %v4314, 16
        %v4687 = vrot.slane %v4685, 4
        %v4688 = vor.u32 %v4687, %v4683
        %v4689 = vrot.slane %v4688, 4
        %v4691 = vshll.u32 %v4333, 16
        %v4693 = vrot.slane %v4691, 5
        %v4694 = vsel %vm241, %v4689, %v4693
        %v4696 = vshrl.u32 %v4315, 16
        %v4698 = vrot.slane %v4696, 4
        %v4699 = vshll.u32 %v4315, 16
        %v4701 = vrot.slane %v4699, 5
        %v4702 = vor.u32 %v4698, %v4701
        %v4703 = vrot.slane %v4702, 4
        %v4705 = vshll.u32 %v4316, 16
        %v4707 = vrot.slane %v4705, 5
        %v4708 = vsel %vm241, %v4703, %v4707
        %v4709 = vshrl.u32 %v4316, 16
        %v4711 = vrot.slane %v4709, 4
        %v4712 = vor.u32 %v4711, %v4707
        %v4713 = vrot.slane %v4712, 4
        %v4715 = vshll.u32 %v4334, 16
        %v4717 = vrot.slane %v4715, 5
        %v4718 = vsel %vm241, %v4713, %v4717
        %s4719 = scalar_lea.vmem %s1, 36
        %v4720 = vld [vmem:[%s4719] sm:$0xf]
        %v4721 = vunpack.c.l.b16 %v4348
        %v4722 = vunpack.c.l.b16 %v4358
        %v4723 = vunpack.c.l.b16 %v4372
        %v4724 = vunpack.c.l.b16 %v4382
        %v4725 = vunpack.c.l.b16 %v4396
        %v4726 = vunpack.c.l.b16 %v4406
        %v4727 = vunpack.c.l.b16 %v4420
        %v4728 = vunpack.c.l.b16 %v4430
        %v4729 = vunpack.c.l.b16 %v4444
        %v4730 = vunpack.c.l.b16 %v4454
        %v4731 = vunpack.c.l.b16 %v4468
        %v4732 = vunpack.c.l.b16 %v4478
        %v4733 = vunpack.c.l.b16 %v4492
        %v4734 = vunpack.c.l.b16 %v4502
        %v4735 = vunpack.c.l.b16 %v4516
        %v4736 = vunpack.c.l.b16 %v4526
        %v4737 = vunpack.c.l.b16 %v4540
        %v4738 = vunpack.c.l.b16 %v4550
        %v4739 = vunpack.c.l.b16 %v4564
        %v4740 = vunpack.c.l.b16 %v4574
        %v4741 = vunpack.c.l.b16 %v4588
        %v4742 = vunpack.c.l.b16 %v4598
        %v4743 = vunpack.c.l.b16 %v4612
        %v4744 = vunpack.c.l.b16 %v4622
        %v4745 = vunpack.c.l.b16 %v4636
        %v4746 = vunpack.c.l.b16 %v4646
        %v4747 = vunpack.c.l.b16 %v4660
        %v4748 = vunpack.c.l.b16 %v4670
        %v4749 = vunpack.c.l.b16 %v4684
        %v4750 = vunpack.c.l.b16 %v4694
        %v4751 = vunpack.c.l.b16 %v4708
        %v4752 = vunpack.c.l.b16 %v4718
        %v4753 = vpack.c.b16 %v4722, %v4721
        %v4754 = vpack.c.b16 %v4724, %v4723
        %v4755 = vpack.c.b16 %v4726, %v4725
        %v4756 = vpack.c.b16 %v4728, %v4727
        %v4757 = vpack.c.b16 %v4730, %v4729
        %v4758 = vpack.c.b16 %v4732, %v4731
        %v4759 = vpack.c.b16 %v4734, %v4733
        %v4760 = vpack.c.b16 %v4736, %v4735
        %v4761 = vpack.c.b16 %v4738, %v4737
        %v4762 = vpack.c.b16 %v4740, %v4739
        %v4763 = vpack.c.b16 %v4742, %v4741
        %v4764 = vpack.c.b16 %v4744, %v4743
        %v4765 = vpack.c.b16 %v4746, %v4745
        %v4766 = vpack.c.b16 %v4748, %v4747
        %v4767 = vpack.c.b16 %v4750, %v4749
        %v4768 = vpack.c.b16 %v4752, %v4751
        %v4770 = vsel %vm676, %v4753, 0
        %v4773 = vsel %vm676, %v4754, 0
        %v4776 = vsel %vm676, %v4755, 0
        %v4779 = vsel %vm676, %v4756, 0
        %v4782 = vsel %vm676, %v4757, 0
        %v4785 = vsel %vm676, %v4758, 0
        %v4788 = vsel %vm676, %v4759, 0
        %v4791 = vsel %vm676, %v4760, 0
        %v4794 = vsel %vm676, %v4761, 0
        %v4797 = vsel %vm676, %v4762, 0
        %v4800 = vsel %vm676, %v4763, 0
        %v4803 = vsel %vm676, %v4764, 0
        %v4806 = vsel %vm676, %v4765, 0
        %v4809 = vsel %vm676, %v4766, 0
        %v4812 = vsel %vm676, %v4767, 0
        %v4815 = vsel %vm676, %v4768, 0
        %v4818 = vsel %vm725, %v4720, 0
        %4820 = vmatpush.bf16.msra.mxu0 0
        %4821 = vmatpush.bf16.msra.mxu0 0
        %4822 = vmatpush.bf16.msra.mxu0 0
        %4823 = vmatpush.bf16.msra.mxu0 0
        %4824 = vmatpush.bf16.msra.mxu0 0
        %4825 = vmatpush.bf16.msra.mxu0 0
        %4826 = vmatpush.bf16.msra.mxu0 0
        %4827 = vmatpush.bf16.msra.mxu0 %v4818
        %4828 = vmatmul.bf16.gmra.mxu0 %v4770
        %v4829 = vpop.f32.mrf.mxu0
        %v4830 = vadd.f32 0.0, %v4829
        %v4831 = vpop.f32.mrf.mxu0
        %v4832 = vadd.f32 0.0, %v4831
        %4833 = vmatmul.bf16.gmra.mxu0 %v4773
        %v4834 = vpop.f32.mrf.mxu0
        %v4835 = vadd.f32 0.0, %v4834
        %v4836 = vpop.f32.mrf.mxu0
        %v4837 = vadd.f32 0.0, %v4836
        %4838 = vmatmul.bf16.gmra.mxu0 %v4776
        %v4839 = vpop.f32.mrf.mxu0
        %v4840 = vadd.f32 0.0, %v4839
        %v4841 = vpop.f32.mrf.mxu0
        %v4842 = vadd.f32 0.0, %v4841
        %4843 = vmatmul.bf16.gmra.mxu0 %v4779
        %v4844 = vpop.f32.mrf.mxu0
        %v4845 = vadd.f32 0.0, %v4844
        %v4846 = vpop.f32.mrf.mxu0
        %v4847 = vadd.f32 0.0, %v4846
        %4848 = vmatmul.bf16.gmra.mxu0 %v4782
        %v4849 = vpop.f32.mrf.mxu0
        %v4850 = vadd.f32 0.0, %v4849
        %v4851 = vpop.f32.mrf.mxu0
        %v4852 = vadd.f32 0.0, %v4851
        %4853 = vmatmul.bf16.gmra.mxu0 %v4785
        %v4854 = vpop.f32.mrf.mxu0
        %v4855 = vadd.f32 0.0, %v4854
        %v4856 = vpop.f32.mrf.mxu0
        %v4857 = vadd.f32 0.0, %v4856
        %4858 = vmatmul.bf16.gmra.mxu0 %v4788
        %v4859 = vpop.f32.mrf.mxu0
        %v4860 = vadd.f32 0.0, %v4859
        %v4861 = vpop.f32.mrf.mxu0
        %v4862 = vadd.f32 0.0, %v4861
        %4863 = vmatmul.bf16.gmra.mxu0 %v4791
        %v4864 = vpop.f32.mrf.mxu0
        %v4865 = vadd.f32 0.0, %v4864
        %v4866 = vpop.f32.mrf.mxu0
        %v4867 = vadd.f32 0.0, %v4866
        %4868 = vmatmul.bf16.gmra.mxu0 %v4794
        %v4869 = vpop.f32.mrf.mxu0
        %v4870 = vadd.f32 0.0, %v4869
        %v4871 = vpop.f32.mrf.mxu0
        %v4872 = vadd.f32 0.0, %v4871
        %4873 = vmatmul.bf16.gmra.mxu0 %v4797
        %v4874 = vpop.f32.mrf.mxu0
        %v4875 = vadd.f32 0.0, %v4874
        %v4876 = vpop.f32.mrf.mxu0
        %v4877 = vadd.f32 0.0, %v4876
        %4878 = vmatmul.bf16.gmra.mxu0 %v4800
        %v4879 = vpop.f32.mrf.mxu0
        %v4880 = vadd.f32 0.0, %v4879
        %v4881 = vpop.f32.mrf.mxu0
        %v4882 = vadd.f32 0.0, %v4881
        %4883 = vmatmul.bf16.gmra.mxu0 %v4803
        %v4884 = vpop.f32.mrf.mxu0
        %v4885 = vadd.f32 0.0, %v4884
        %v4886 = vpop.f32.mrf.mxu0
        %v4887 = vadd.f32 0.0, %v4886
        %4888 = vmatmul.bf16.gmra.mxu0 %v4806
        %v4889 = vpop.f32.mrf.mxu0
        %v4890 = vadd.f32 0.0, %v4889
        %v4891 = vpop.f32.mrf.mxu0
        %v4892 = vadd.f32 0.0, %v4891
        %4893 = vmatmul.bf16.gmra.mxu0 %v4809
        %v4894 = vpop.f32.mrf.mxu0
        %v4895 = vadd.f32 0.0, %v4894
        %v4896 = vpop.f32.mrf.mxu0
        %v4897 = vadd.f32 0.0, %v4896
        %4898 = vmatmul.bf16.gmra.mxu0 %v4812
        %v4899 = vpop.f32.mrf.mxu0
        %v4900 = vadd.f32 0.0, %v4899
        %v4901 = vpop.f32.mrf.mxu0
        %v4902 = vadd.f32 0.0, %v4901
        %4903 = vmatmul.bf16.gmra.mxu0 %v4815
        %v4904 = vpop.f32.mrf.mxu0
        %v4905 = vadd.f32 0.0, %v4904
        %v4906 = vpop.f32.mrf.mxu0
        %v4907 = vadd.f32 0.0, %v4906
        %4908 = vdwg.mxu0
        %v4941 = vunpack.c.l.b16 %v4285
        %v4942 = vunpack.c.l.b16 %v4286
        %v4943 = vunpack.c.l.b16 %v4287
        %v4944 = vunpack.c.l.b16 %v4288
        %v4945 = vunpack.c.l.b16 %v4289
        %v4946 = vunpack.c.l.b16 %v4290
        %v4947 = vunpack.c.l.b16 %v4291
        %v4948 = vunpack.c.l.b16 %v4292
        %v4949 = vunpack.c.l.b16 %v4293
        %v4950 = vunpack.c.l.b16 %v4294
        %v4951 = vunpack.c.l.b16 %v4295
        %v4952 = vunpack.c.l.b16 %v4296
        %v4953 = vunpack.c.l.b16 %v4297
        %v4954 = vunpack.c.l.b16 %v4298
        %v4955 = vunpack.c.l.b16 %v4299
        %v4956 = vunpack.c.l.b16 %v4300
        %v4957 = vunpack.c.l.b16 %v4301
        %v4958 = vunpack.c.l.b16 %v4302
        %v4959 = vunpack.c.l.b16 %v4303
        %v4960 = vunpack.c.l.b16 %v4304
        %v4961 = vunpack.c.l.b16 %v4305
        %v4962 = vunpack.c.l.b16 %v4306
        %v4963 = vunpack.c.l.b16 %v4307
        %v4964 = vunpack.c.l.b16 %v4308
        %v4965 = vunpack.c.l.b16 %v4309
        %v4966 = vunpack.c.l.b16 %v4310
        %v4967 = vunpack.c.l.b16 %v4311
        %v4968 = vunpack.c.l.b16 %v4312
        %v4969 = vunpack.c.l.b16 %v4313
        %v4970 = vunpack.c.l.b16 %v4314
        %v4971 = vunpack.c.l.b16 %v4315
        %v4972 = vunpack.c.l.b16 %v4316
        %v4973 = vpack.c.b16 %v4942, %v4941
        %v4974 = vpack.c.b16 %v4944, %v4943
        %v4975 = vpack.c.b16 %v4946, %v4945
        %v4976 = vpack.c.b16 %v4948, %v4947
        %v4977 = vpack.c.b16 %v4950, %v4949
        %v4978 = vpack.c.b16 %v4952, %v4951
        %v4979 = vpack.c.b16 %v4954, %v4953
        %v4980 = vpack.c.b16 %v4956, %v4955
        %v4981 = vpack.c.b16 %v4958, %v4957
        %v4982 = vpack.c.b16 %v4960, %v4959
        %v4983 = vpack.c.b16 %v4962, %v4961
        %v4984 = vpack.c.b16 %v4964, %v4963
        %v4985 = vpack.c.b16 %v4966, %v4965
        %v4986 = vpack.c.b16 %v4968, %v4967
        %v4987 = vpack.c.b16 %v4970, %v4969
        %v4988 = vpack.c.b16 %v4972, %v4971
        %v4990 = vsel %vm676, %v4973, 0
        %v4993 = vsel %vm676, %v4974, 0
        %v4996 = vsel %vm676, %v4975, 0
        %v4999 = vsel %vm676, %v4976, 0
        %v5002 = vsel %vm676, %v4977, 0
        %v5005 = vsel %vm676, %v4978, 0
        %v5008 = vsel %vm676, %v4979, 0
        %v5011 = vsel %vm676, %v4980, 0
        %v5014 = vsel %vm676, %v4981, 0
        %v5017 = vsel %vm676, %v4982, 0
        %v5020 = vsel %vm676, %v4983, 0
        %v5023 = vsel %vm676, %v4984, 0
        %v5026 = vsel %vm676, %v4985, 0
        %v5029 = vsel %vm676, %v4986, 0
        %v5032 = vsel %vm676, %v4987, 0
        %v5035 = vsel %vm676, %v4988, 0
        %v5038 = vsel %vm725, %v4318, 0
        %5040 = vmatpush.bf16.msra.mxu0 0
        %5041 = vmatpush.bf16.msra.mxu0 0
        %5042 = vmatpush.bf16.msra.mxu0 0
        %5043 = vmatpush.bf16.msra.mxu0 0
        %5044 = vmatpush.bf16.msra.mxu0 0
        %5045 = vmatpush.bf16.msra.mxu0 0
        %5046 = vmatpush.bf16.msra.mxu0 0
        %5047 = vmatpush.bf16.msra.mxu0 %v5038
        %5048 = vmatmul.bf16.gmra.mxu0 %v4990
        %v5049 = vpop.f32.mrf.mxu0
        %v5050 = vadd.f32 %v4830, %v5049
        %v5051 = vpop.f32.mrf.mxu0
        %v5052 = vadd.f32 %v4832, %v5051
        %5053 = vmatmul.bf16.gmra.mxu0 %v4993
        %v5054 = vpop.f32.mrf.mxu0
        %v5055 = vadd.f32 %v4835, %v5054
        %v5056 = vpop.f32.mrf.mxu0
        %v5057 = vadd.f32 %v4837, %v5056
        %5058 = vmatmul.bf16.gmra.mxu0 %v4996
        %v5059 = vpop.f32.mrf.mxu0
        %v5060 = vadd.f32 %v4840, %v5059
        %v5061 = vpop.f32.mrf.mxu0
        %v5062 = vadd.f32 %v4842, %v5061
        %5063 = vmatmul.bf16.gmra.mxu0 %v4999
        %v5064 = vpop.f32.mrf.mxu0
        %v5065 = vadd.f32 %v4845, %v5064
        %v5066 = vpop.f32.mrf.mxu0
        %v5067 = vadd.f32 %v4847, %v5066
        %5068 = vmatmul.bf16.gmra.mxu0 %v5002
        %v5069 = vpop.f32.mrf.mxu0
        %v5070 = vadd.f32 %v4850, %v5069
        %v5071 = vpop.f32.mrf.mxu0
        %v5072 = vadd.f32 %v4852, %v5071
        %5073 = vmatmul.bf16.gmra.mxu0 %v5005
        %v5074 = vpop.f32.mrf.mxu0
        %v5075 = vadd.f32 %v4855, %v5074
        %v5076 = vpop.f32.mrf.mxu0
        %v5077 = vadd.f32 %v4857, %v5076
        %5078 = vmatmul.bf16.gmra.mxu0 %v5008
        %v5079 = vpop.f32.mrf.mxu0
        %v5080 = vadd.f32 %v4860, %v5079
        %v5081 = vpop.f32.mrf.mxu0
        %v5082 = vadd.f32 %v4862, %v5081
        %5083 = vmatmul.bf16.gmra.mxu0 %v5011
        %v5084 = vpop.f32.mrf.mxu0
        %v5085 = vadd.f32 %v4865, %v5084
        %v5086 = vpop.f32.mrf.mxu0
        %v5087 = vadd.f32 %v4867, %v5086
        %5088 = vmatmul.bf16.gmra.mxu0 %v5014
        %v5089 = vpop.f32.mrf.mxu0
        %v5090 = vadd.f32 %v4870, %v5089
        %v5091 = vpop.f32.mrf.mxu0
        %v5092 = vadd.f32 %v4872, %v5091
        %5093 = vmatmul.bf16.gmra.mxu0 %v5017
        %v5094 = vpop.f32.mrf.mxu0
        %v5095 = vadd.f32 %v4875, %v5094
        %v5096 = vpop.f32.mrf.mxu0
        %v5097 = vadd.f32 %v4877, %v5096
        %5098 = vmatmul.bf16.gmra.mxu0 %v5020
        %v5099 = vpop.f32.mrf.mxu0
        %v5100 = vadd.f32 %v4880, %v5099
        %v5101 = vpop.f32.mrf.mxu0
        %v5102 = vadd.f32 %v4882, %v5101
        %5103 = vmatmul.bf16.gmra.mxu0 %v5023
        %v5104 = vpop.f32.mrf.mxu0
        %v5105 = vadd.f32 %v4885, %v5104
        %v5106 = vpop.f32.mrf.mxu0
        %v5107 = vadd.f32 %v4887, %v5106
        %5108 = vmatmul.bf16.gmra.mxu0 %v5026
        %v5109 = vpop.f32.mrf.mxu0
        %v5110 = vadd.f32 %v4890, %v5109
        %v5111 = vpop.f32.mrf.mxu0
        %v5112 = vadd.f32 %v4892, %v5111
        %5113 = vmatmul.bf16.gmra.mxu0 %v5029
        %v5114 = vpop.f32.mrf.mxu0
        %v5115 = vadd.f32 %v4895, %v5114
        %v5116 = vpop.f32.mrf.mxu0
        %v5117 = vadd.f32 %v4897, %v5116
        %5118 = vmatmul.bf16.gmra.mxu0 %v5032
        %v5119 = vpop.f32.mrf.mxu0
        %v5120 = vadd.f32 %v4900, %v5119
        %v5121 = vpop.f32.mrf.mxu0
        %v5122 = vadd.f32 %v4902, %v5121
        %5123 = vmatmul.bf16.gmra.mxu0 %v5035
        %v5124 = vpop.f32.mrf.mxu0
        %v5125 = vadd.f32 %v4905, %v5124
        %v5126 = vpop.f32.mrf.mxu0
        %v5127 = vadd.f32 %v4907, %v5126
        %5128 = vdwg.mxu0
        %s5129 = sadd.s32 %s185, 2
        %s5130 = smul.u32 %s5129, 3
        %s5131 = smul.addr %s5130, 4
        %s5132 = scalar_lea.vmem %s182, %s5131
        %v5133 = vld [vmem:[%s5132] sm:$0xf]
        %v5134 = vld [vmem:[%s5132 + $0x4] sm:$0xf]
        %v5135 = vld [vmem:[%s5132 + $0xc] sm:$0xf]
        %v5136 = vld [vmem:[%s5132 + $0x10] sm:$0xf]
        %v5137 = vld [vmem:[%s5132 + $0x18] sm:$0xf]
        %v5138 = vld [vmem:[%s5132 + $0x1c] sm:$0xf]
        %v5139 = vld [vmem:[%s5132 + $0x24] sm:$0xf]
        %v5140 = vld [vmem:[%s5132 + $0x28] sm:$0xf]
        %v5141 = vld [vmem:[%s5132 + $0x30] sm:$0xf]
        %v5142 = vld [vmem:[%s5132 + $0x34] sm:$0xf]
        %v5143 = vld [vmem:[%s5132 + $0x3c] sm:$0xf]
        %v5144 = vld [vmem:[%s5132 + $0x40] sm:$0xf]
        %v5145 = vld [vmem:[%s5132 + $0x48] sm:$0xf]
        %v5146 = vld [vmem:[%s5132 + $0x4c] sm:$0xf]
        %v5147 = vld [vmem:[%s5132 + $0x54] sm:$0xf]
        %v5148 = vld [vmem:[%s5132 + $0x58] sm:$0xf]
        %v5149 = vld [vmem:[%s5132 + $0x60] sm:$0xf]
        %v5150 = vld [vmem:[%s5132 + $0x64] sm:$0xf]
        %v5151 = vld [vmem:[%s5132 + $0x6c] sm:$0xf]
        %v5152 = vld [vmem:[%s5132 + $0x70] sm:$0xf]
        %v5153 = vld [vmem:[%s5132 + $0x78] sm:$0xf]
        %v5154 = vld [vmem:[%s5132 + $0x7c] sm:$0xf]
        %v5155 = vld [vmem:[%s5132 + $0x84] sm:$0xf]
        %v5156 = vld [vmem:[%s5132 + $0x88] sm:$0xf]
        %v5157 = vld [vmem:[%s5132 + $0x90] sm:$0xf]
        %v5158 = vld [vmem:[%s5132 + $0x94] sm:$0xf]
        %v5159 = vld [vmem:[%s5132 + $0x9c] sm:$0xf]
        %v5160 = vld [vmem:[%s5132 + $0xa0] sm:$0xf]
        %v5161 = vld [vmem:[%s5132 + $0xa8] sm:$0xf]
        %v5162 = vld [vmem:[%s5132 + $0xac] sm:$0xf]
        %v5163 = vld [vmem:[%s5132 + $0xb4] sm:$0xf]
        %v5164 = vld [vmem:[%s5132 + $0xb8] sm:$0xf]
        %s5165 = scalar_lea.vmem %s1, 40
        %v5166 = vld [vmem:[%s5165] sm:$0xf]
        %v5199 = vunpack.c.l.b16 %v5133
        %v5200 = vunpack.c.l.b16 %v5134
        %v5201 = vunpack.c.l.b16 %v5135
        %v5202 = vunpack.c.l.b16 %v5136
        %v5203 = vunpack.c.l.b16 %v5137
        %v5204 = vunpack.c.l.b16 %v5138
        %v5205 = vunpack.c.l.b16 %v5139
        %v5206 = vunpack.c.l.b16 %v5140
        %v5207 = vunpack.c.l.b16 %v5141
        %v5208 = vunpack.c.l.b16 %v5142
        %v5209 = vunpack.c.l.b16 %v5143
        %v5210 = vunpack.c.l.b16 %v5144
        %v5211 = vunpack.c.l.b16 %v5145
        %v5212 = vunpack.c.l.b16 %v5146
        %v5213 = vunpack.c.l.b16 %v5147
        %v5214 = vunpack.c.l.b16 %v5148
        %v5215 = vunpack.c.l.b16 %v5149
        %v5216 = vunpack.c.l.b16 %v5150
        %v5217 = vunpack.c.l.b16 %v5151
        %v5218 = vunpack.c.l.b16 %v5152
        %v5219 = vunpack.c.l.b16 %v5153
        %v5220 = vunpack.c.l.b16 %v5154
        %v5221 = vunpack.c.l.b16 %v5155
        %v5222 = vunpack.c.l.b16 %v5156
        %v5223 = vunpack.c.l.b16 %v5157
        %v5224 = vunpack.c.l.b16 %v5158
        %v5225 = vunpack.c.l.b16 %v5159
        %v5226 = vunpack.c.l.b16 %v5160
        %v5227 = vunpack.c.l.b16 %v5161
        %v5228 = vunpack.c.l.b16 %v5162
        %v5229 = vunpack.c.l.b16 %v5163
        %v5230 = vunpack.c.l.b16 %v5164
        %v5231 = vpack.c.b16 %v5200, %v5199
        %v5232 = vpack.c.b16 %v5202, %v5201
        %v5233 = vpack.c.b16 %v5204, %v5203
        %v5234 = vpack.c.b16 %v5206, %v5205
        %v5235 = vpack.c.b16 %v5208, %v5207
        %v5236 = vpack.c.b16 %v5210, %v5209
        %v5237 = vpack.c.b16 %v5212, %v5211
        %v5238 = vpack.c.b16 %v5214, %v5213
        %v5239 = vpack.c.b16 %v5216, %v5215
        %v5240 = vpack.c.b16 %v5218, %v5217
        %v5241 = vpack.c.b16 %v5220, %v5219
        %v5242 = vpack.c.b16 %v5222, %v5221
        %v5243 = vpack.c.b16 %v5224, %v5223
        %v5244 = vpack.c.b16 %v5226, %v5225
        %v5245 = vpack.c.b16 %v5228, %v5227
        %v5246 = vpack.c.b16 %v5230, %v5229
        %v5248 = vsel %vm676, %v5231, 0
        %v5251 = vsel %vm676, %v5232, 0
        %v5254 = vsel %vm676, %v5233, 0
        %v5257 = vsel %vm676, %v5234, 0
        %v5260 = vsel %vm676, %v5235, 0
        %v5263 = vsel %vm676, %v5236, 0
        %v5266 = vsel %vm676, %v5237, 0
        %v5269 = vsel %vm676, %v5238, 0
        %v5272 = vsel %vm676, %v5239, 0
        %v5275 = vsel %vm676, %v5240, 0
        %v5278 = vsel %vm676, %v5241, 0
        %v5281 = vsel %vm676, %v5242, 0
        %v5284 = vsel %vm676, %v5243, 0
        %v5287 = vsel %vm676, %v5244, 0
        %v5290 = vsel %vm676, %v5245, 0
        %v5293 = vsel %vm676, %v5246, 0
        %v5296 = vsel %vm725, %v5166, 0
        %5298 = vmatpush.bf16.msra.mxu0 0
        %5299 = vmatpush.bf16.msra.mxu0 0
        %5300 = vmatpush.bf16.msra.mxu0 0
        %5301 = vmatpush.bf16.msra.mxu0 0
        %5302 = vmatpush.bf16.msra.mxu0 0
        %5303 = vmatpush.bf16.msra.mxu0 0
        %5304 = vmatpush.bf16.msra.mxu0 0
        %5305 = vmatpush.bf16.msra.mxu0 %v5296
        %5306 = vmatmul.bf16.gmra.mxu0 %v5248
        %v5307 = vpop.f32.mrf.mxu0
        %v5308 = vadd.f32 0.0, %v5307
        %v5309 = vpop.f32.mrf.mxu0
        %v5310 = vadd.f32 0.0, %v5309
        %5311 = vmatmul.bf16.gmra.mxu0 %v5251
        %v5312 = vpop.f32.mrf.mxu0
        %v5313 = vadd.f32 0.0, %v5312
        %v5314 = vpop.f32.mrf.mxu0
        %v5315 = vadd.f32 0.0, %v5314
        %5316 = vmatmul.bf16.gmra.mxu0 %v5254
        %v5317 = vpop.f32.mrf.mxu0
        %v5318 = vadd.f32 0.0, %v5317
        %v5319 = vpop.f32.mrf.mxu0
        %v5320 = vadd.f32 0.0, %v5319
        %5321 = vmatmul.bf16.gmra.mxu0 %v5257
        %v5322 = vpop.f32.mrf.mxu0
        %v5323 = vadd.f32 0.0, %v5322
        %v5324 = vpop.f32.mrf.mxu0
        %v5325 = vadd.f32 0.0, %v5324
        %5326 = vmatmul.bf16.gmra.mxu0 %v5260
        %v5327 = vpop.f32.mrf.mxu0
        %v5328 = vadd.f32 0.0, %v5327
        %v5329 = vpop.f32.mrf.mxu0
        %v5330 = vadd.f32 0.0, %v5329
        %5331 = vmatmul.bf16.gmra.mxu0 %v5263
        %v5332 = vpop.f32.mrf.mxu0
        %v5333 = vadd.f32 0.0, %v5332
        %v5334 = vpop.f32.mrf.mxu0
        %v5335 = vadd.f32 0.0, %v5334
        %5336 = vmatmul.bf16.gmra.mxu0 %v5266
        %v5337 = vpop.f32.mrf.mxu0
        %v5338 = vadd.f32 0.0, %v5337
        %v5339 = vpop.f32.mrf.mxu0
        %v5340 = vadd.f32 0.0, %v5339
        %5341 = vmatmul.bf16.gmra.mxu0 %v5269
        %v5342 = vpop.f32.mrf.mxu0
        %v5343 = vadd.f32 0.0, %v5342
        %v5344 = vpop.f32.mrf.mxu0
        %v5345 = vadd.f32 0.0, %v5344
        %5346 = vmatmul.bf16.gmra.mxu0 %v5272
        %v5347 = vpop.f32.mrf.mxu0
        %v5348 = vadd.f32 0.0, %v5347
        %v5349 = vpop.f32.mrf.mxu0
        %v5350 = vadd.f32 0.0, %v5349
        %5351 = vmatmul.bf16.gmra.mxu0 %v5275
        %v5352 = vpop.f32.mrf.mxu0
        %v5353 = vadd.f32 0.0, %v5352
        %v5354 = vpop.f32.mrf.mxu0
        %v5355 = vadd.f32 0.0, %v5354
        %5356 = vmatmul.bf16.gmra.mxu0 %v5278
        %v5357 = vpop.f32.mrf.mxu0
        %v5358 = vadd.f32 0.0, %v5357
        %v5359 = vpop.f32.mrf.mxu0
        %v5360 = vadd.f32 0.0, %v5359
        %5361 = vmatmul.bf16.gmra.mxu0 %v5281
        %v5362 = vpop.f32.mrf.mxu0
        %v5363 = vadd.f32 0.0, %v5362
        %v5364 = vpop.f32.mrf.mxu0
        %v5365 = vadd.f32 0.0, %v5364
        %5366 = vmatmul.bf16.gmra.mxu0 %v5284
        %v5367 = vpop.f32.mrf.mxu0
        %v5368 = vadd.f32 0.0, %v5367
        %v5369 = vpop.f32.mrf.mxu0
        %v5370 = vadd.f32 0.0, %v5369
        %5371 = vmatmul.bf16.gmra.mxu0 %v5287
        %v5372 = vpop.f32.mrf.mxu0
        %v5373 = vadd.f32 0.0, %v5372
        %v5374 = vpop.f32.mrf.mxu0
        %v5375 = vadd.f32 0.0, %v5374
        %5376 = vmatmul.bf16.gmra.mxu0 %v5290
        %v5377 = vpop.f32.mrf.mxu0
        %v5378 = vadd.f32 0.0, %v5377
        %v5379 = vpop.f32.mrf.mxu0
        %v5380 = vadd.f32 0.0, %v5379
        %5381 = vmatmul.bf16.gmra.mxu0 %v5293
        %v5382 = vpop.f32.mrf.mxu0
        %v5383 = vadd.f32 0.0, %v5382
        %v5384 = vpop.f32.mrf.mxu0
        %v5385 = vadd.f32 0.0, %v5384
        %5386 = vdwg.mxu0
        %v5387 = vadd.f32 %v5050, %v5308
        %v5388 = vadd.f32 %v5052, %v5310
        %v5389 = vadd.f32 %v5055, %v5313
        %v5390 = vadd.f32 %v5057, %v5315
        %v5391 = vadd.f32 %v5060, %v5318
        %v5392 = vadd.f32 %v5062, %v5320
        %v5393 = vadd.f32 %v5065, %v5323
        %v5394 = vadd.f32 %v5067, %v5325
        %v5395 = vadd.f32 %v5070, %v5328
        %v5396 = vadd.f32 %v5072, %v5330
        %v5397 = vadd.f32 %v5075, %v5333
        %v5398 = vadd.f32 %v5077, %v5335
        %v5399 = vadd.f32 %v5080, %v5338
        %v5400 = vadd.f32 %v5082, %v5340
        %v5401 = vadd.f32 %v5085, %v5343
        %v5402 = vadd.f32 %v5087, %v5345
        %v5403 = vadd.f32 %v5090, %v5348
        %v5404 = vadd.f32 %v5092, %v5350
        %v5405 = vadd.f32 %v5095, %v5353
        %v5406 = vadd.f32 %v5097, %v5355
        %v5407 = vadd.f32 %v5100, %v5358
        %v5408 = vadd.f32 %v5102, %v5360
        %v5409 = vadd.f32 %v5105, %v5363
        %v5410 = vadd.f32 %v5107, %v5365
        %v5411 = vadd.f32 %v5110, %v5368
        %v5412 = vadd.f32 %v5112, %v5370
        %v5413 = vadd.f32 %v5115, %v5373
        %v5414 = vadd.f32 %v5117, %v5375
        %v5415 = vadd.f32 %v5120, %v5378
        %v5416 = vadd.f32 %v5122, %v5380
        %v5417 = vadd.f32 %v5125, %v5383
        %v5418 = vadd.f32 %v5127, %v5385
        %v5419 = vld [vmem:[%s5132] sm:$0xf]
        %v5420 = vld [vmem:[%s5132 + $0x4] sm:$0xf]
        %v5421 = vld [vmem:[%s5132 + $0x8] sm:$0x1]
        %v5422 = vld [vmem:[%s5132 + $0xc] sm:$0xf]
        %v5423 = vld [vmem:[%s5132 + $0x10] sm:$0xf]
        %v5424 = vld [vmem:[%s5132 + $0x14] sm:$0x1]
        %v5425 = vld [vmem:[%s5132 + $0x18] sm:$0xf]
        %v5426 = vld [vmem:[%s5132 + $0x1c] sm:$0xf]
        %v5427 = vld [vmem:[%s5132 + $0x20] sm:$0x1]
        %v5428 = vld [vmem:[%s5132 + $0x24] sm:$0xf]
        %v5429 = vld [vmem:[%s5132 + $0x28] sm:$0xf]
        %v5430 = vld [vmem:[%s5132 + $0x2c] sm:$0x1]
        %v5431 = vld [vmem:[%s5132 + $0x30] sm:$0xf]
        %v5432 = vld [vmem:[%s5132 + $0x34] sm:$0xf]
        %v5433 = vld [vmem:[%s5132 + $0x38] sm:$0x1]
        %v5434 = vld [vmem:[%s5132 + $0x3c] sm:$0xf]
        %v5435 = vld [vmem:[%s5132 + $0x40] sm:$0xf]
        %v5436 = vld [vmem:[%s5132 + $0x44] sm:$0x1]
        %v5437 = vld [vmem:[%s5132 + $0x48] sm:$0xf]
        %v5438 = vld [vmem:[%s5132 + $0x4c] sm:$0xf]
        %v5439 = vld [vmem:[%s5132 + $0x50] sm:$0x1]
        %v5440 = vld [vmem:[%s5132 + $0x54] sm:$0xf]
        %v5441 = vld [vmem:[%s5132 + $0x58] sm:$0xf]
        %v5442 = vld [vmem:[%s5132 + $0x5c] sm:$0x1]
        %v5443 = vld [vmem:[%s5132 + $0x60] sm:$0xf]
        %v5444 = vld [vmem:[%s5132 + $0x64] sm:$0xf]
        %v5445 = vld [vmem:[%s5132 + $0x68] sm:$0x1]
        %v5446 = vld [vmem:[%s5132 + $0x6c] sm:$0xf]
        %v5447 = vld [vmem:[%s5132 + $0x70] sm:$0xf]
        %v5448 = vld [vmem:[%s5132 + $0x74] sm:$0x1]
        %v5449 = vld [vmem:[%s5132 + $0x78] sm:$0xf]
        %v5450 = vld [vmem:[%s5132 + $0x7c] sm:$0xf]
        %v5451 = vld [vmem:[%s5132 + $0x80] sm:$0x1]
        %v5452 = vld [vmem:[%s5132 + $0x84] sm:$0xf]
        %v5453 = vld [vmem:[%s5132 + $0x88] sm:$0xf]
        %v5454 = vld [vmem:[%s5132 + $0x8c] sm:$0x1]
        %v5455 = vld [vmem:[%s5132 + $0x90] sm:$0xf]
        %v5456 = vld [vmem:[%s5132 + $0x94] sm:$0xf]
        %v5457 = vld [vmem:[%s5132 + $0x98] sm:$0x1]
        %v5458 = vld [vmem:[%s5132 + $0x9c] sm:$0xf]
        %v5459 = vld [vmem:[%s5132 + $0xa0] sm:$0xf]
        %v5460 = vld [vmem:[%s5132 + $0xa4] sm:$0x1]
        %v5461 = vld [vmem:[%s5132 + $0xa8] sm:$0xf]
        %v5462 = vld [vmem:[%s5132 + $0xac] sm:$0xf]
        %v5463 = vld [vmem:[%s5132 + $0xb0] sm:$0x1]
        %v5464 = vld [vmem:[%s5132 + $0xb4] sm:$0xf]
        %v5465 = vld [vmem:[%s5132 + $0xb8] sm:$0xf]
        %v5466 = vld [vmem:[%s5132 + $0xbc] sm:$0x1]
        %v5468 = vshrl.u32 %v5419, 16
        %v5470 = vrot.slane %v5468, 4
        %v5471 = vshll.u32 %v5419, 16
        %v5473 = vrot.slane %v5471, 5
        %v5474 = vor.u32 %v5470, %v5473
        %v5475 = vrot.slane %v5474, 4
        %v5477 = vshll.u32 %v5420, 16
        %v5479 = vrot.slane %v5477, 5
        %v5480 = vsel %vm241, %v5475, %v5479
        %v5481 = vshrl.u32 %v5420, 16
        %v5483 = vrot.slane %v5481, 4
        %v5484 = vor.u32 %v5483, %v5479
        %v5485 = vrot.slane %v5484, 4
        %v5487 = vshll.u32 %v5421, 16
        %v5489 = vrot.slane %v5487, 5
        %v5490 = vsel %vm241, %v5485, %v5489
        %v5492 = vshrl.u32 %v5422, 16
        %v5494 = vrot.slane %v5492, 4
        %v5495 = vshll.u32 %v5422, 16
        %v5497 = vrot.slane %v5495, 5
        %v5498 = vor.u32 %v5494, %v5497
        %v5499 = vrot.slane %v5498, 4
        %v5501 = vshll.u32 %v5423, 16
        %v5503 = vrot.slane %v5501, 5
        %v5504 = vsel %vm241, %v5499, %v5503
        %v5505 = vshrl.u32 %v5423, 16
        %v5507 = vrot.slane %v5505, 4
        %v5508 = vor.u32 %v5507, %v5503
        %v5509 = vrot.slane %v5508, 4
        %v5511 = vshll.u32 %v5424, 16
        %v5513 = vrot.slane %v5511, 5
        %v5514 = vsel %vm241, %v5509, %v5513
        %v5516 = vshrl.u32 %v5425, 16
        %v5518 = vrot.slane %v5516, 4
        %v5519 = vshll.u32 %v5425, 16
        %v5521 = vrot.slane %v5519, 5
        %v5522 = vor.u32 %v5518, %v5521
        %v5523 = vrot.slane %v5522, 4
        %v5525 = vshll.u32 %v5426, 16
        %v5527 = vrot.slane %v5525, 5
        %v5528 = vsel %vm241, %v5523, %v5527
        %v5529 = vshrl.u32 %v5426, 16
        %v5531 = vrot.slane %v5529, 4
        %v5532 = vor.u32 %v5531, %v5527
        %v5533 = vrot.slane %v5532, 4
        %v5535 = vshll.u32 %v5427, 16
        %v5537 = vrot.slane %v5535, 5
        %v5538 = vsel %vm241, %v5533, %v5537
        %v5540 = vshrl.u32 %v5428, 16
        %v5542 = vrot.slane %v5540, 4
        %v5543 = vshll.u32 %v5428, 16
        %v5545 = vrot.slane %v5543, 5
        %v5546 = vor.u32 %v5542, %v5545
        %v5547 = vrot.slane %v5546, 4
        %v5549 = vshll.u32 %v5429, 16
        %v5551 = vrot.slane %v5549, 5
        %v5552 = vsel %vm241, %v5547, %v5551
        %v5553 = vshrl.u32 %v5429, 16
        %v5555 = vrot.slane %v5553, 4
        %v5556 = vor.u32 %v5555, %v5551
        %v5557 = vrot.slane %v5556, 4
        %v5559 = vshll.u32 %v5430, 16
        %v5561 = vrot.slane %v5559, 5
        %v5562 = vsel %vm241, %v5557, %v5561
        %v5564 = vshrl.u32 %v5431, 16
        %v5566 = vrot.slane %v5564, 4
        %v5567 = vshll.u32 %v5431, 16
        %v5569 = vrot.slane %v5567, 5
        %v5570 = vor.u32 %v5566, %v5569
        %v5571 = vrot.slane %v5570, 4
        %v5573 = vshll.u32 %v5432, 16
        %v5575 = vrot.slane %v5573, 5
        %v5576 = vsel %vm241, %v5571, %v5575
        %v5577 = vshrl.u32 %v5432, 16
        %v5579 = vrot.slane %v5577, 4
        %v5580 = vor.u32 %v5579, %v5575
        %v5581 = vrot.slane %v5580, 4
        %v5583 = vshll.u32 %v5433, 16
        %v5585 = vrot.slane %v5583, 5
        %v5586 = vsel %vm241, %v5581, %v5585
        %v5588 = vshrl.u32 %v5434, 16
        %v5590 = vrot.slane %v5588, 4
        %v5591 = vshll.u32 %v5434, 16
        %v5593 = vrot.slane %v5591, 5
        %v5594 = vor.u32 %v5590, %v5593
        %v5595 = vrot.slane %v5594, 4
        %v5597 = vshll.u32 %v5435, 16
        %v5599 = vrot.slane %v5597, 5
        %v5600 = vsel %vm241, %v5595, %v5599
        %v5601 = vshrl.u32 %v5435, 16
        %v5603 = vrot.slane %v5601, 4
        %v5604 = vor.u32 %v5603, %v5599
        %v5605 = vrot.slane %v5604, 4
        %v5607 = vshll.u32 %v5436, 16
        %v5609 = vrot.slane %v5607, 5
        %v5610 = vsel %vm241, %v5605, %v5609
        %v5612 = vshrl.u32 %v5437, 16
        %v5614 = vrot.slane %v5612, 4
        %v5615 = vshll.u32 %v5437, 16
        %v5617 = vrot.slane %v5615, 5
        %v5618 = vor.u32 %v5614, %v5617
        %v5619 = vrot.slane %v5618, 4
        %v5621 = vshll.u32 %v5438, 16
        %v5623 = vrot.slane %v5621, 5
        %v5624 = vsel %vm241, %v5619, %v5623
        %v5625 = vshrl.u32 %v5438, 16
        %v5627 = vrot.slane %v5625, 4
        %v5628 = vor.u32 %v5627, %v5623
        %v5629 = vrot.slane %v5628, 4
        %v5631 = vshll.u32 %v5439, 16
        %v5633 = vrot.slane %v5631, 5
        %v5634 = vsel %vm241, %v5629, %v5633
        %v5636 = vshrl.u32 %v5440, 16
        %v5638 = vrot.slane %v5636, 4
        %v5639 = vshll.u32 %v5440, 16
        %v5641 = vrot.slane %v5639, 5
        %v5642 = vor.u32 %v5638, %v5641
        %v5643 = vrot.slane %v5642, 4
        %v5645 = vshll.u32 %v5441, 16
        %v5647 = vrot.slane %v5645, 5
        %v5648 = vsel %vm241, %v5643, %v5647
        %v5649 = vshrl.u32 %v5441, 16
        %v5651 = vrot.slane %v5649, 4
        %v5652 = vor.u32 %v5651, %v5647
        %v5653 = vrot.slane %v5652, 4
        %v5655 = vshll.u32 %v5442, 16
        %v5657 = vrot.slane %v5655, 5
        %v5658 = vsel %vm241, %v5653, %v5657
        %v5660 = vshrl.u32 %v5443, 16
        %v5662 = vrot.slane %v5660, 4
        %v5663 = vshll.u32 %v5443, 16
        %v5665 = vrot.slane %v5663, 5
        %v5666 = vor.u32 %v5662, %v5665
        %v5667 = vrot.slane %v5666, 4
        %v5669 = vshll.u32 %v5444, 16
        %v5671 = vrot.slane %v5669, 5
        %v5672 = vsel %vm241, %v5667, %v5671
        %v5673 = vshrl.u32 %v5444, 16
        %v5675 = vrot.slane %v5673, 4
        %v5676 = vor.u32 %v5675, %v5671
        %v5677 = vrot.slane %v5676, 4
        %v5679 = vshll.u32 %v5445, 16
        %v5681 = vrot.slane %v5679, 5
        %v5682 = vsel %vm241, %v5677, %v5681
        %v5684 = vshrl.u32 %v5446, 16
        %v5686 = vrot.slane %v5684, 4
        %v5687 = vshll.u32 %v5446, 16
        %v5689 = vrot.slane %v5687, 5
        %v5690 = vor.u32 %v5686, %v5689
        %v5691 = vrot.slane %v5690, 4
        %v5693 = vshll.u32 %v5447, 16
        %v5695 = vrot.slane %v5693, 5
        %v5696 = vsel %vm241, %v5691, %v5695
        %v5697 = vshrl.u32 %v5447, 16
        %v5699 = vrot.slane %v5697, 4
        %v5700 = vor.u32 %v5699, %v5695
        %v5701 = vrot.slane %v5700, 4
        %v5703 = vshll.u32 %v5448, 16
        %v5705 = vrot.slane %v5703, 5
        %v5706 = vsel %vm241, %v5701, %v5705
        %v5708 = vshrl.u32 %v5449, 16
        %v5710 = vrot.slane %v5708, 4
        %v5711 = vshll.u32 %v5449, 16
        %v5713 = vrot.slane %v5711, 5
        %v5714 = vor.u32 %v5710, %v5713
        %v5715 = vrot.slane %v5714, 4
        %v5717 = vshll.u32 %v5450, 16
        %v5719 = vrot.slane %v5717, 5
        %v5720 = vsel %vm241, %v5715, %v5719
        %v5721 = vshrl.u32 %v5450, 16
        %v5723 = vrot.slane %v5721, 4
        %v5724 = vor.u32 %v5723, %v5719
        %v5725 = vrot.slane %v5724, 4
        %v5727 = vshll.u32 %v5451, 16
        %v5729 = vrot.slane %v5727, 5
        %v5730 = vsel %vm241, %v5725, %v5729
        %v5732 = vshrl.u32 %v5452, 16
        %v5734 = vrot.slane %v5732, 4
        %v5735 = vshll.u32 %v5452, 16
        %v5737 = vrot.slane %v5735, 5
        %v5738 = vor.u32 %v5734, %v5737
        %v5739 = vrot.slane %v5738, 4
        %v5741 = vshll.u32 %v5453, 16
        %v5743 = vrot.slane %v5741, 5
        %v5744 = vsel %vm241, %v5739, %v5743
        %v5745 = vshrl.u32 %v5453, 16
        %v5747 = vrot.slane %v5745, 4
        %v5748 = vor.u32 %v5747, %v5743
        %v5749 = vrot.slane %v5748, 4
        %v5751 = vshll.u32 %v5454, 16
        %v5753 = vrot.slane %v5751, 5
        %v5754 = vsel %vm241, %v5749, %v5753
        %v5756 = vshrl.u32 %v5455, 16
        %v5758 = vrot.slane %v5756, 4
        %v5759 = vshll.u32 %v5455, 16
        %v5761 = vrot.slane %v5759, 5
        %v5762 = vor.u32 %v5758, %v5761
        %v5763 = vrot.slane %v5762, 4
        %v5765 = vshll.u32 %v5456, 16
        %v5767 = vrot.slane %v5765, 5
        %v5768 = vsel %vm241, %v5763, %v5767
        %v5769 = vshrl.u32 %v5456, 16
        %v5771 = vrot.slane %v5769, 4
        %v5772 = vor.u32 %v5771, %v5767
        %v5773 = vrot.slane %v5772, 4
        %v5775 = vshll.u32 %v5457, 16
        %v5777 = vrot.slane %v5775, 5
        %v5778 = vsel %vm241, %v5773, %v5777
        %v5780 = vshrl.u32 %v5458, 16
        %v5782 = vrot.slane %v5780, 4
        %v5783 = vshll.u32 %v5458, 16
        %v5785 = vrot.slane %v5783, 5
        %v5786 = vor.u32 %v5782, %v5785
        %v5787 = vrot.slane %v5786, 4
        %v5789 = vshll.u32 %v5459, 16
        %v5791 = vrot.slane %v5789, 5
        %v5792 = vsel %vm241, %v5787, %v5791
        %v5793 = vshrl.u32 %v5459, 16
        %v5795 = vrot.slane %v5793, 4
        %v5796 = vor.u32 %v5795, %v5791
        %v5797 = vrot.slane %v5796, 4
        %v5799 = vshll.u32 %v5460, 16
        %v5801 = vrot.slane %v5799, 5
        %v5802 = vsel %vm241, %v5797, %v5801
        %v5804 = vshrl.u32 %v5461, 16
        %v5806 = vrot.slane %v5804, 4
        %v5807 = vshll.u32 %v5461, 16
        %v5809 = vrot.slane %v5807, 5
        %v5810 = vor.u32 %v5806, %v5809
        %v5811 = vrot.slane %v5810, 4
        %v5813 = vshll.u32 %v5462, 16
        %v5815 = vrot.slane %v5813, 5
        %v5816 = vsel %vm241, %v5811, %v5815
        %v5817 = vshrl.u32 %v5462, 16
        %v5819 = vrot.slane %v5817, 4
        %v5820 = vor.u32 %v5819, %v5815
        %v5821 = vrot.slane %v5820, 4
        %v5823 = vshll.u32 %v5463, 16
        %v5825 = vrot.slane %v5823, 5
        %v5826 = vsel %vm241, %v5821, %v5825
        %v5828 = vshrl.u32 %v5464, 16
        %v5830 = vrot.slane %v5828, 4
        %v5831 = vshll.u32 %v5464, 16
        %v5833 = vrot.slane %v5831, 5
        %v5834 = vor.u32 %v5830, %v5833
        %v5835 = vrot.slane %v5834, 4
        %v5837 = vshll.u32 %v5465, 16
        %v5839 = vrot.slane %v5837, 5
        %v5840 = vsel %vm241, %v5835, %v5839
        %v5841 = vshrl.u32 %v5465, 16
        %v5843 = vrot.slane %v5841, 4
        %v5844 = vor.u32 %v5843, %v5839
        %v5845 = vrot.slane %v5844, 4
        %v5847 = vshll.u32 %v5466, 16
        %v5849 = vrot.slane %v5847, 5
        %v5850 = vsel %vm241, %v5845, %v5849
        %s5851 = scalar_lea.vmem %s1, 44
        %v5852 = vld [vmem:[%s5851] sm:$0xf]
        %v5853 = vunpack.c.l.b16 %v5480
        %v5854 = vunpack.c.l.b16 %v5490
        %v5855 = vunpack.c.l.b16 %v5504
        %v5856 = vunpack.c.l.b16 %v5514
        %v5857 = vunpack.c.l.b16 %v5528
        %v5858 = vunpack.c.l.b16 %v5538
        %v5859 = vunpack.c.l.b16 %v5552
        %v5860 = vunpack.c.l.b16 %v5562
        %v5861 = vunpack.c.l.b16 %v5576
        %v5862 = vunpack.c.l.b16 %v5586
        %v5863 = vunpack.c.l.b16 %v5600
        %v5864 = vunpack.c.l.b16 %v5610
        %v5865 = vunpack.c.l.b16 %v5624
        %v5866 = vunpack.c.l.b16 %v5634
        %v5867 = vunpack.c.l.b16 %v5648
        %v5868 = vunpack.c.l.b16 %v5658
        %v5869 = vunpack.c.l.b16 %v5672
        %v5870 = vunpack.c.l.b16 %v5682
        %v5871 = vunpack.c.l.b16 %v5696
        %v5872 = vunpack.c.l.b16 %v5706
        %v5873 = vunpack.c.l.b16 %v5720
        %v5874 = vunpack.c.l.b16 %v5730
        %v5875 = vunpack.c.l.b16 %v5744
        %v5876 = vunpack.c.l.b16 %v5754
        %v5877 = vunpack.c.l.b16 %v5768
        %v5878 = vunpack.c.l.b16 %v5778
        %v5879 = vunpack.c.l.b16 %v5792
        %v5880 = vunpack.c.l.b16 %v5802
        %v5881 = vunpack.c.l.b16 %v5816
        %v5882 = vunpack.c.l.b16 %v5826
        %v5883 = vunpack.c.l.b16 %v5840
        %v5884 = vunpack.c.l.b16 %v5850
        %v5885 = vpack.c.b16 %v5854, %v5853
        %v5886 = vpack.c.b16 %v5856, %v5855
        %v5887 = vpack.c.b16 %v5858, %v5857
        %v5888 = vpack.c.b16 %v5860, %v5859
        %v5889 = vpack.c.b16 %v5862, %v5861
        %v5890 = vpack.c.b16 %v5864, %v5863
        %v5891 = vpack.c.b16 %v5866, %v5865
        %v5892 = vpack.c.b16 %v5868, %v5867
        %v5893 = vpack.c.b16 %v5870, %v5869
        %v5894 = vpack.c.b16 %v5872, %v5871
        %v5895 = vpack.c.b16 %v5874, %v5873
        %v5896 = vpack.c.b16 %v5876, %v5875
        %v5897 = vpack.c.b16 %v5878, %v5877
        %v5898 = vpack.c.b16 %v5880, %v5879
        %v5899 = vpack.c.b16 %v5882, %v5881
        %v5900 = vpack.c.b16 %v5884, %v5883
        %v5902 = vsel %vm676, %v5885, 0
        %v5905 = vsel %vm676, %v5886, 0
        %v5908 = vsel %vm676, %v5887, 0
        %v5911 = vsel %vm676, %v5888, 0
        %v5914 = vsel %vm676, %v5889, 0
        %v5917 = vsel %vm676, %v5890, 0
        %v5920 = vsel %vm676, %v5891, 0
        %v5923 = vsel %vm676, %v5892, 0
        %v5926 = vsel %vm676, %v5893, 0
        %v5929 = vsel %vm676, %v5894, 0
        %v5932 = vsel %vm676, %v5895, 0
        %v5935 = vsel %vm676, %v5896, 0
        %v5938 = vsel %vm676, %v5897, 0
        %v5941 = vsel %vm676, %v5898, 0
        %v5944 = vsel %vm676, %v5899, 0
        %v5947 = vsel %vm676, %v5900, 0
        %v5950 = vsel %vm725, %v5852, 0
        %5952 = vmatpush.bf16.msra.mxu0 0
        %5953 = vmatpush.bf16.msra.mxu0 0
        %5954 = vmatpush.bf16.msra.mxu0 0
        %5955 = vmatpush.bf16.msra.mxu0 0
        %5956 = vmatpush.bf16.msra.mxu0 0
        %5957 = vmatpush.bf16.msra.mxu0 0
        %5958 = vmatpush.bf16.msra.mxu0 0
        %5959 = vmatpush.bf16.msra.mxu0 %v5950
        %5960 = vmatmul.bf16.gmra.mxu0 %v5902
        %v5961 = vpop.f32.mrf.mxu0
        %v5962 = vadd.f32 0.0, %v5961
        %v5963 = vpop.f32.mrf.mxu0
        %v5964 = vadd.f32 0.0, %v5963
        %5965 = vmatmul.bf16.gmra.mxu0 %v5905
        %v5966 = vpop.f32.mrf.mxu0
        %v5967 = vadd.f32 0.0, %v5966
        %v5968 = vpop.f32.mrf.mxu0
        %v5969 = vadd.f32 0.0, %v5968
        %5970 = vmatmul.bf16.gmra.mxu0 %v5908
        %v5971 = vpop.f32.mrf.mxu0
        %v5972 = vadd.f32 0.0, %v5971
        %v5973 = vpop.f32.mrf.mxu0
        %v5974 = vadd.f32 0.0, %v5973
        %5975 = vmatmul.bf16.gmra.mxu0 %v5911
        %v5976 = vpop.f32.mrf.mxu0
        %v5977 = vadd.f32 0.0, %v5976
        %v5978 = vpop.f32.mrf.mxu0
        %v5979 = vadd.f32 0.0, %v5978
        %5980 = vmatmul.bf16.gmra.mxu0 %v5914
        %v5981 = vpop.f32.mrf.mxu0
        %v5982 = vadd.f32 0.0, %v5981
        %v5983 = vpop.f32.mrf.mxu0
        %v5984 = vadd.f32 0.0, %v5983
        %5985 = vmatmul.bf16.gmra.mxu0 %v5917
        %v5986 = vpop.f32.mrf.mxu0
        %v5987 = vadd.f32 0.0, %v5986
        %v5988 = vpop.f32.mrf.mxu0
        %v5989 = vadd.f32 0.0, %v5988
        %5990 = vmatmul.bf16.gmra.mxu0 %v5920
        %v5991 = vpop.f32.mrf.mxu0
        %v5992 = vadd.f32 0.0, %v5991
        %v5993 = vpop.f32.mrf.mxu0
        %v5994 = vadd.f32 0.0, %v5993
        %5995 = vmatmul.bf16.gmra.mxu0 %v5923
        %v5996 = vpop.f32.mrf.mxu0
        %v5997 = vadd.f32 0.0, %v5996
        %v5998 = vpop.f32.mrf.mxu0
        %v5999 = vadd.f32 0.0, %v5998
        %6000 = vmatmul.bf16.gmra.mxu0 %v5926
        %v6001 = vpop.f32.mrf.mxu0
        %v6002 = vadd.f32 0.0, %v6001
        %v6003 = vpop.f32.mrf.mxu0
        %v6004 = vadd.f32 0.0, %v6003
        %6005 = vmatmul.bf16.gmra.mxu0 %v5929
        %v6006 = vpop.f32.mrf.mxu0
        %v6007 = vadd.f32 0.0, %v6006
        %v6008 = vpop.f32.mrf.mxu0
        %v6009 = vadd.f32 0.0, %v6008
        %6010 = vmatmul.bf16.gmra.mxu0 %v5932
        %v6011 = vpop.f32.mrf.mxu0
        %v6012 = vadd.f32 0.0, %v6011
        %v6013 = vpop.f32.mrf.mxu0
        %v6014 = vadd.f32 0.0, %v6013
        %6015 = vmatmul.bf16.gmra.mxu0 %v5935
        %v6016 = vpop.f32.mrf.mxu0
        %v6017 = vadd.f32 0.0, %v6016
        %v6018 = vpop.f32.mrf.mxu0
        %v6019 = vadd.f32 0.0, %v6018
        %6020 = vmatmul.bf16.gmra.mxu0 %v5938
        %v6021 = vpop.f32.mrf.mxu0
        %v6022 = vadd.f32 0.0, %v6021
        %v6023 = vpop.f32.mrf.mxu0
        %v6024 = vadd.f32 0.0, %v6023
        %6025 = vmatmul.bf16.gmra.mxu0 %v5941
        %v6026 = vpop.f32.mrf.mxu0
        %v6027 = vadd.f32 0.0, %v6026
        %v6028 = vpop.f32.mrf.mxu0
        %v6029 = vadd.f32 0.0, %v6028
        %6030 = vmatmul.bf16.gmra.mxu0 %v5944
        %v6031 = vpop.f32.mrf.mxu0
        %v6032 = vadd.f32 0.0, %v6031
        %v6033 = vpop.f32.mrf.mxu0
        %v6034 = vadd.f32 0.0, %v6033
        %6035 = vmatmul.bf16.gmra.mxu0 %v5947
        %v6036 = vpop.f32.mrf.mxu0
        %v6037 = vadd.f32 0.0, %v6036
        %v6038 = vpop.f32.mrf.mxu0
        %v6039 = vadd.f32 0.0, %v6038
        %6040 = vdwg.mxu0
        %v6041 = vadd.f32 %v5387, %v5962
        %v6042 = vadd.f32 %v5388, %v5964
        %v6043 = vadd.f32 %v5389, %v5967
        %v6044 = vadd.f32 %v5390, %v5969
        %v6045 = vadd.f32 %v5391, %v5972
        %v6046 = vadd.f32 %v5392, %v5974
        %v6047 = vadd.f32 %v5393, %v5977
        %v6048 = vadd.f32 %v5394, %v5979
        %v6049 = vadd.f32 %v5395, %v5982
        %v6050 = vadd.f32 %v5396, %v5984
        %v6051 = vadd.f32 %v5397, %v5987
        %v6052 = vadd.f32 %v5398, %v5989
        %v6053 = vadd.f32 %v5399, %v5992
        %v6054 = vadd.f32 %v5400, %v5994
        %v6055 = vadd.f32 %v5401, %v5997
        %v6056 = vadd.f32 %v5402, %v5999
        %v6057 = vadd.f32 %v5403, %v6002
        %v6058 = vadd.f32 %v5404, %v6004
        %v6059 = vadd.f32 %v5405, %v6007
        %v6060 = vadd.f32 %v5406, %v6009
        %v6061 = vadd.f32 %v5407, %v6012
        %v6062 = vadd.f32 %v5408, %v6014
        %v6063 = vadd.f32 %v5409, %v6017
        %v6064 = vadd.f32 %v5410, %v6019
        %v6065 = vadd.f32 %v5411, %v6022
        %v6066 = vadd.f32 %v5412, %v6024
        %v6067 = vadd.f32 %v5413, %v6027
        %v6068 = vadd.f32 %v5414, %v6029
        %v6069 = vadd.f32 %v5415, %v6032
        %v6070 = vadd.f32 %v5416, %v6034
        %v6071 = vadd.f32 %v5417, %v6037
        %v6072 = vadd.f32 %v5418, %v6039
        %v6073 = vadd.f32 %v6041, %v1983
        %v6074 = vadd.f32 %v6042, %v1983
        %v6075 = vadd.f32 %v6043, %v1983
        %v6076 = vadd.f32 %v6044, %v1983
        %v6077 = vadd.f32 %v6045, %v1983
        %v6078 = vadd.f32 %v6046, %v1983
        %v6079 = vadd.f32 %v6047, %v1983
        %v6080 = vadd.f32 %v6048, %v1983
        %v6081 = vadd.f32 %v6049, %v1983
        %v6082 = vadd.f32 %v6050, %v1983
        %v6083 = vadd.f32 %v6051, %v1983
        %v6084 = vadd.f32 %v6052, %v1983
        %v6085 = vadd.f32 %v6053, %v1983
        %v6086 = vadd.f32 %v6054, %v1983
        %v6087 = vadd.f32 %v6055, %v1983
        %v6088 = vadd.f32 %v6056, %v1983
        %v6089 = vadd.f32 %v6057, %v1983
        %v6090 = vadd.f32 %v6058, %v1983
        %v6091 = vadd.f32 %v6059, %v1983
        %v6092 = vadd.f32 %v6060, %v1983
        %v6093 = vadd.f32 %v6061, %v1983
        %v6094 = vadd.f32 %v6062, %v1983
        %v6095 = vadd.f32 %v6063, %v1983
        %v6096 = vadd.f32 %v6064, %v1983
        %v6097 = vadd.f32 %v6065, %v1983
        %v6098 = vadd.f32 %v6066, %v1983
        %v6099 = vadd.f32 %v6067, %v1983
        %v6100 = vadd.f32 %v6068, %v1983
        %v6101 = vadd.f32 %v6069, %v1983
        %v6102 = vadd.f32 %v6070, %v1983
        %v6103 = vadd.f32 %v6071, %v1983
        %v6104 = vadd.f32 %v6072, %v1983
        %s6105 = scalar_lea.vmem %s177, 16 [#allocation2]
        %6106 = vst.msk [vmem:[%s6105] sm:$0xff] %vm676, %v6073
        %6107 = vst.msk [vmem:[%s6105 + $0x8] sm:$0xff] %vm676, %v6074
        %6108 = vst.msk [vmem:[%s6105 + $0x20] sm:$0xff] %vm676, %v6075
        %6109 = vst.msk [vmem:[%s6105 + $0x28] sm:$0xff] %vm676, %v6076
        %6110 = vst.msk [vmem:[%s6105 + $0x40] sm:$0xff] %vm676, %v6077
        %6111 = vst.msk [vmem:[%s6105 + $0x48] sm:$0xff] %vm676, %v6078
        %6112 = vst.msk [vmem:[%s6105 + $0x60] sm:$0xff] %vm676, %v6079
        %6113 = vst.msk [vmem:[%s6105 + $0x68] sm:$0xff] %vm676, %v6080
        %6114 = vst.msk [vmem:[%s6105 + $0x80] sm:$0xff] %vm676, %v6081
        %6115 = vst.msk [vmem:[%s6105 + $0x88] sm:$0xff] %vm676, %v6082
        %6116 = vst.msk [vmem:[%s6105 + $0xa0] sm:$0xff] %vm676, %v6083
        %6117 = vst.msk [vmem:[%s6105 + $0xa8] sm:$0xff] %vm676, %v6084
        %6118 = vst.msk [vmem:[%s6105 + $0xc0] sm:$0xff] %vm676, %v6085
        %6119 = vst.msk [vmem:[%s6105 + $0xc8] sm:$0xff] %vm676, %v6086
        %6120 = vst.msk [vmem:[%s6105 + $0xe0] sm:$0xff] %vm676, %v6087
        %6121 = vst.msk [vmem:[%s6105 + $0xe8] sm:$0xff] %vm676, %v6088
        %6122 = vst.msk [vmem:[%s6105 + $0x100] sm:$0xff] %vm676, %v6089
        %6123 = vst.msk [vmem:[%s6105 + $0x108] sm:$0xff] %vm676, %v6090
        %6124 = vst.msk [vmem:[%s6105 + $0x120] sm:$0xff] %vm676, %v6091
        %6125 = vst.msk [vmem:[%s6105 + $0x128] sm:$0xff] %vm676, %v6092
        %6126 = vst.msk [vmem:[%s6105 + $0x140] sm:$0xff] %vm676, %v6093
        %6127 = vst.msk [vmem:[%s6105 + $0x148] sm:$0xff] %vm676, %v6094
        %6128 = vst.msk [vmem:[%s6105 + $0x160] sm:$0xff] %vm676, %v6095
        %6129 = vst.msk [vmem:[%s6105 + $0x168] sm:$0xff] %vm676, %v6096
        %6130 = vst.msk [vmem:[%s6105 + $0x180] sm:$0xff] %vm676, %v6097
        %6131 = vst.msk [vmem:[%s6105 + $0x188] sm:$0xff] %vm676, %v6098
        %6132 = vst.msk [vmem:[%s6105 + $0x1a0] sm:$0xff] %vm676, %v6099
        %6133 = vst.msk [vmem:[%s6105 + $0x1a8] sm:$0xff] %vm676, %v6100
        %6134 = vst.msk [vmem:[%s6105 + $0x1c0] sm:$0xff] %vm676, %v6101
        %6135 = vst.msk [vmem:[%s6105 + $0x1c8] sm:$0xff] %vm676, %v6102
        %6136 = vst.msk [vmem:[%s6105 + $0x1e0] sm:$0xff] %vm676, %v6103
        %6137 = vst.msk [vmem:[%s6105 + $0x1e8] sm:$0xff] %vm676, %v6104
        %v6138 = vld [vmem:[%s1041] sm:$0xf]
        %v6139 = vld [vmem:[%s1041 + $0x4] sm:$0xf]
        %v6140 = vld [vmem:[%s1041 + $0x8] sm:$0x1]
        %v6141 = vld [vmem:[%s1041 + $0xc] sm:$0xf]
        %v6142 = vld [vmem:[%s1041 + $0x10] sm:$0xf]
        %v6143 = vld [vmem:[%s1041 + $0x14] sm:$0x1]
        %v6144 = vld [vmem:[%s1041 + $0x18] sm:$0xf]
        %v6145 = vld [vmem:[%s1041 + $0x1c] sm:$0xf]
        %v6146 = vld [vmem:[%s1041 + $0x20] sm:$0x1]
        %v6147 = vld [vmem:[%s1041 + $0x24] sm:$0xf]
        %v6148 = vld [vmem:[%s1041 + $0x28] sm:$0xf]
        %v6149 = vld [vmem:[%s1041 + $0x2c] sm:$0x1]
        %v6150 = vld [vmem:[%s1041 + $0x30] sm:$0xf]
        %v6151 = vld [vmem:[%s1041 + $0x34] sm:$0xf]
        %v6152 = vld [vmem:[%s1041 + $0x38] sm:$0x1]
        %v6153 = vld [vmem:[%s1041 + $0x3c] sm:$0xf]
        %v6154 = vld [vmem:[%s1041 + $0x40] sm:$0xf]
        %v6155 = vld [vmem:[%s1041 + $0x44] sm:$0x1]
        %v6156 = vld [vmem:[%s1041 + $0x48] sm:$0xf]
        %v6157 = vld [vmem:[%s1041 + $0x4c] sm:$0xf]
        %v6158 = vld [vmem:[%s1041 + $0x50] sm:$0x1]
        %v6159 = vld [vmem:[%s1041 + $0x54] sm:$0xf]
        %v6160 = vld [vmem:[%s1041 + $0x58] sm:$0xf]
        %v6161 = vld [vmem:[%s1041 + $0x5c] sm:$0x1]
        %v6162 = vld [vmem:[%s1041 + $0x60] sm:$0xf]
        %v6163 = vld [vmem:[%s1041 + $0x64] sm:$0xf]
        %v6164 = vld [vmem:[%s1041 + $0x68] sm:$0x1]
        %v6165 = vld [vmem:[%s1041 + $0x6c] sm:$0xf]
        %v6166 = vld [vmem:[%s1041 + $0x70] sm:$0xf]
        %v6167 = vld [vmem:[%s1041 + $0x74] sm:$0x1]
        %v6168 = vld [vmem:[%s1041 + $0x78] sm:$0xf]
        %v6169 = vld [vmem:[%s1041 + $0x7c] sm:$0xf]
        %v6170 = vld [vmem:[%s1041 + $0x80] sm:$0x1]
        %v6171 = vld [vmem:[%s1041 + $0x84] sm:$0xf]
        %v6172 = vld [vmem:[%s1041 + $0x88] sm:$0xf]
        %v6173 = vld [vmem:[%s1041 + $0x8c] sm:$0x1]
        %v6174 = vld [vmem:[%s1041 + $0x90] sm:$0xf]
        %v6175 = vld [vmem:[%s1041 + $0x94] sm:$0xf]
        %v6176 = vld [vmem:[%s1041 + $0x98] sm:$0x1]
        %v6177 = vld [vmem:[%s1041 + $0x9c] sm:$0xf]
        %v6178 = vld [vmem:[%s1041 + $0xa0] sm:$0xf]
        %v6179 = vld [vmem:[%s1041 + $0xa4] sm:$0x1]
        %v6180 = vld [vmem:[%s1041 + $0xa8] sm:$0xf]
        %v6181 = vld [vmem:[%s1041 + $0xac] sm:$0xf]
        %v6182 = vld [vmem:[%s1041 + $0xb0] sm:$0x1]
        %v6183 = vld [vmem:[%s1041 + $0xb4] sm:$0xf]
        %v6184 = vld [vmem:[%s1041 + $0xb8] sm:$0xf]
        %v6185 = vld [vmem:[%s1041 + $0xbc] sm:$0x1]
        %v6187 = vshrl.u32 %v6138, 16
        %v6189 = vrot.slane %v6187, 4
        %v6190 = vshll.u32 %v6138, 16
        %v6192 = vrot.slane %v6190, 5
        %v6193 = vor.u32 %v6189, %v6192
        %v6194 = vrot.slane %v6193, 4
        %v6196 = vshll.u32 %v6139, 16
        %v6198 = vrot.slane %v6196, 5
        %v6199 = vsel %vm241, %v6194, %v6198
        %v6200 = vshrl.u32 %v6139, 16
        %v6202 = vrot.slane %v6200, 4
        %v6203 = vor.u32 %v6202, %v6198
        %v6204 = vrot.slane %v6203, 4
        %v6206 = vshll.u32 %v6140, 16
        %v6208 = vrot.slane %v6206, 5
        %v6209 = vsel %vm241, %v6204, %v6208
        %v6211 = vshrl.u32 %v6141, 16
        %v6213 = vrot.slane %v6211, 4
        %v6214 = vshll.u32 %v6141, 16
        %v6216 = vrot.slane %v6214, 5
        %v6217 = vor.u32 %v6213, %v6216
        %v6218 = vrot.slane %v6217, 4
        %v6220 = vshll.u32 %v6142, 16
        %v6222 = vrot.slane %v6220, 5
        %v6223 = vsel %vm241, %v6218, %v6222
        %v6224 = vshrl.u32 %v6142, 16
        %v6226 = vrot.slane %v6224, 4
        %v6227 = vor.u32 %v6226, %v6222
        %v6228 = vrot.slane %v6227, 4
        %v6230 = vshll.u32 %v6143, 16
        %v6232 = vrot.slane %v6230, 5
        %v6233 = vsel %vm241, %v6228, %v6232
        %v6235 = vshrl.u32 %v6144, 16
        %v6237 = vrot.slane %v6235, 4
        %v6238 = vshll.u32 %v6144, 16
        %v6240 = vrot.slane %v6238, 5
        %v6241 = vor.u32 %v6237, %v6240
        %v6242 = vrot.slane %v6241, 4
        %v6244 = vshll.u32 %v6145, 16
        %v6246 = vrot.slane %v6244, 5
        %v6247 = vsel %vm241, %v6242, %v6246
        %v6248 = vshrl.u32 %v6145, 16
        %v6250 = vrot.slane %v6248, 4
        %v6251 = vor.u32 %v6250, %v6246
        %v6252 = vrot.slane %v6251, 4
        %v6254 = vshll.u32 %v6146, 16
        %v6256 = vrot.slane %v6254, 5
        %v6257 = vsel %vm241, %v6252, %v6256
        %v6259 = vshrl.u32 %v6147, 16
        %v6261 = vrot.slane %v6259, 4
        %v6262 = vshll.u32 %v6147, 16
        %v6264 = vrot.slane %v6262, 5
        %v6265 = vor.u32 %v6261, %v6264
        %v6266 = vrot.slane %v6265, 4
        %v6268 = vshll.u32 %v6148, 16
        %v6270 = vrot.slane %v6268, 5
        %v6271 = vsel %vm241, %v6266, %v6270
        %v6272 = vshrl.u32 %v6148, 16
        %v6274 = vrot.slane %v6272, 4
        %v6275 = vor.u32 %v6274, %v6270
        %v6276 = vrot.slane %v6275, 4
        %v6278 = vshll.u32 %v6149, 16
        %v6280 = vrot.slane %v6278, 5
        %v6281 = vsel %vm241, %v6276, %v6280
        %v6283 = vshrl.u32 %v6150, 16
        %v6285 = vrot.slane %v6283, 4
        %v6286 = vshll.u32 %v6150, 16
        %v6288 = vrot.slane %v6286, 5
        %v6289 = vor.u32 %v6285, %v6288
        %v6290 = vrot.slane %v6289, 4
        %v6292 = vshll.u32 %v6151, 16
        %v6294 = vrot.slane %v6292, 5
        %v6295 = vsel %vm241, %v6290, %v6294
        %v6296 = vshrl.u32 %v6151, 16
        %v6298 = vrot.slane %v6296, 4
        %v6299 = vor.u32 %v6298, %v6294
        %v6300 = vrot.slane %v6299, 4
        %v6302 = vshll.u32 %v6152, 16
        %v6304 = vrot.slane %v6302, 5
        %v6305 = vsel %vm241, %v6300, %v6304
        %v6307 = vshrl.u32 %v6153, 16
        %v6309 = vrot.slane %v6307, 4
        %v6310 = vshll.u32 %v6153, 16
        %v6312 = vrot.slane %v6310, 5
        %v6313 = vor.u32 %v6309, %v6312
        %v6314 = vrot.slane %v6313, 4
        %v6316 = vshll.u32 %v6154, 16
        %v6318 = vrot.slane %v6316, 5
        %v6319 = vsel %vm241, %v6314, %v6318
        %v6320 = vshrl.u32 %v6154, 16
        %v6322 = vrot.slane %v6320, 4
        %v6323 = vor.u32 %v6322, %v6318
        %v6324 = vrot.slane %v6323, 4
        %v6326 = vshll.u32 %v6155, 16
        %v6328 = vrot.slane %v6326, 5
        %v6329 = vsel %vm241, %v6324, %v6328
        %v6331 = vshrl.u32 %v6156, 16
        %v6333 = vrot.slane %v6331, 4
        %v6334 = vshll.u32 %v6156, 16
        %v6336 = vrot.slane %v6334, 5
        %v6337 = vor.u32 %v6333, %v6336
        %v6338 = vrot.slane %v6337, 4
        %v6340 = vshll.u32 %v6157, 16
        %v6342 = vrot.slane %v6340, 5
        %v6343 = vsel %vm241, %v6338, %v6342
        %v6344 = vshrl.u32 %v6157, 16
        %v6346 = vrot.slane %v6344, 4
        %v6347 = vor.u32 %v6346, %v6342
        %v6348 = vrot.slane %v6347, 4
        %v6350 = vshll.u32 %v6158, 16
        %v6352 = vrot.slane %v6350, 5
        %v6353 = vsel %vm241, %v6348, %v6352
        %v6355 = vshrl.u32 %v6159, 16
        %v6357 = vrot.slane %v6355, 4
        %v6358 = vshll.u32 %v6159, 16
        %v6360 = vrot.slane %v6358, 5
        %v6361 = vor.u32 %v6357, %v6360
        %v6362 = vrot.slane %v6361, 4
        %v6364 = vshll.u32 %v6160, 16
        %v6366 = vrot.slane %v6364, 5
        %v6367 = vsel %vm241, %v6362, %v6366
        %v6368 = vshrl.u32 %v6160, 16
        %v6370 = vrot.slane %v6368, 4
        %v6371 = vor.u32 %v6370, %v6366
        %v6372 = vrot.slane %v6371, 4
        %v6374 = vshll.u32 %v6161, 16
        %v6376 = vrot.slane %v6374, 5
        %v6377 = vsel %vm241, %v6372, %v6376
        %v6379 = vshrl.u32 %v6162, 16
        %v6381 = vrot.slane %v6379, 4
        %v6382 = vshll.u32 %v6162, 16
        %v6384 = vrot.slane %v6382, 5
        %v6385 = vor.u32 %v6381, %v6384
        %v6386 = vrot.slane %v6385, 4
        %v6388 = vshll.u32 %v6163, 16
        %v6390 = vrot.slane %v6388, 5
        %v6391 = vsel %vm241, %v6386, %v6390
        %v6392 = vshrl.u32 %v6163, 16
        %v6394 = vrot.slane %v6392, 4
        %v6395 = vor.u32 %v6394, %v6390
        %v6396 = vrot.slane %v6395, 4
        %v6398 = vshll.u32 %v6164, 16
        %v6400 = vrot.slane %v6398, 5
        %v6401 = vsel %vm241, %v6396, %v6400
        %v6403 = vshrl.u32 %v6165, 16
        %v6405 = vrot.slane %v6403, 4
        %v6406 = vshll.u32 %v6165, 16
        %v6408 = vrot.slane %v6406, 5
        %v6409 = vor.u32 %v6405, %v6408
        %v6410 = vrot.slane %v6409, 4
        %v6412 = vshll.u32 %v6166, 16
        %v6414 = vrot.slane %v6412, 5
        %v6415 = vsel %vm241, %v6410, %v6414
        %v6416 = vshrl.u32 %v6166, 16
        %v6418 = vrot.slane %v6416, 4
        %v6419 = vor.u32 %v6418, %v6414
        %v6420 = vrot.slane %v6419, 4
        %v6422 = vshll.u32 %v6167, 16
        %v6424 = vrot.slane %v6422, 5
        %v6425 = vsel %vm241, %v6420, %v6424
        %v6427 = vshrl.u32 %v6168, 16
        %v6429 = vrot.slane %v6427, 4
        %v6430 = vshll.u32 %v6168, 16
        %v6432 = vrot.slane %v6430, 5
        %v6433 = vor.u32 %v6429, %v6432
        %v6434 = vrot.slane %v6433, 4
        %v6436 = vshll.u32 %v6169, 16
        %v6438 = vrot.slane %v6436, 5
        %v6439 = vsel %vm241, %v6434, %v6438
        %v6440 = vshrl.u32 %v6169, 16
        %v6442 = vrot.slane %v6440, 4
        %v6443 = vor.u32 %v6442, %v6438
        %v6444 = vrot.slane %v6443, 4
        %v6446 = vshll.u32 %v6170, 16
        %v6448 = vrot.slane %v6446, 5
        %v6449 = vsel %vm241, %v6444, %v6448
        %v6451 = vshrl.u32 %v6171, 16
        %v6453 = vrot.slane %v6451, 4
        %v6454 = vshll.u32 %v6171, 16
        %v6456 = vrot.slane %v6454, 5
        %v6457 = vor.u32 %v6453, %v6456
        %v6458 = vrot.slane %v6457, 4
        %v6460 = vshll.u32 %v6172, 16
        %v6462 = vrot.slane %v6460, 5
        %v6463 = vsel %vm241, %v6458, %v6462
        %v6464 = vshrl.u32 %v6172, 16
        %v6466 = vrot.slane %v6464, 4
        %v6467 = vor.u32 %v6466, %v6462
        %v6468 = vrot.slane %v6467, 4
        %v6470 = vshll.u32 %v6173, 16
        %v6472 = vrot.slane %v6470, 5
        %v6473 = vsel %vm241, %v6468, %v6472
        %v6475 = vshrl.u32 %v6174, 16
        %v6477 = vrot.slane %v6475, 4
        %v6478 = vshll.u32 %v6174, 16
        %v6480 = vrot.slane %v6478, 5
        %v6481 = vor.u32 %v6477, %v6480
        %v6482 = vrot.slane %v6481, 4
        %v6484 = vshll.u32 %v6175, 16
        %v6486 = vrot.slane %v6484, 5
        %v6487 = vsel %vm241, %v6482, %v6486
        %v6488 = vshrl.u32 %v6175, 16
        %v6490 = vrot.slane %v6488, 4
        %v6491 = vor.u32 %v6490, %v6486
        %v6492 = vrot.slane %v6491, 4
        %v6494 = vshll.u32 %v6176, 16
        %v6496 = vrot.slane %v6494, 5
        %v6497 = vsel %vm241, %v6492, %v6496
        %v6499 = vshrl.u32 %v6177, 16
        %v6501 = vrot.slane %v6499, 4
        %v6502 = vshll.u32 %v6177, 16
        %v6504 = vrot.slane %v6502, 5
        %v6505 = vor.u32 %v6501, %v6504
        %v6506 = vrot.slane %v6505, 4
        %v6508 = vshll.u32 %v6178, 16
        %v6510 = vrot.slane %v6508, 5
        %v6511 = vsel %vm241, %v6506, %v6510
        %v6512 = vshrl.u32 %v6178, 16
        %v6514 = vrot.slane %v6512, 4
        %v6515 = vor.u32 %v6514, %v6510
        %v6516 = vrot.slane %v6515, 4
        %v6518 = vshll.u32 %v6179, 16
        %v6520 = vrot.slane %v6518, 5
        %v6521 = vsel %vm241, %v6516, %v6520
        %v6523 = vshrl.u32 %v6180, 16
        %v6525 = vrot.slane %v6523, 4
        %v6526 = vshll.u32 %v6180, 16
        %v6528 = vrot.slane %v6526, 5
        %v6529 = vor.u32 %v6525, %v6528
        %v6530 = vrot.slane %v6529, 4
        %v6532 = vshll.u32 %v6181, 16
        %v6534 = vrot.slane %v6532, 5
        %v6535 = vsel %vm241, %v6530, %v6534
        %v6536 = vshrl.u32 %v6181, 16
        %v6538 = vrot.slane %v6536, 4
        %v6539 = vor.u32 %v6538, %v6534
        %v6540 = vrot.slane %v6539, 4
        %v6542 = vshll.u32 %v6182, 16
        %v6544 = vrot.slane %v6542, 5
        %v6545 = vsel %vm241, %v6540, %v6544
        %v6547 = vshrl.u32 %v6183, 16
        %v6549 = vrot.slane %v6547, 4
        %v6550 = vshll.u32 %v6183, 16
        %v6552 = vrot.slane %v6550, 5
        %v6553 = vor.u32 %v6549, %v6552
        %v6554 = vrot.slane %v6553, 4
        %v6556 = vshll.u32 %v6184, 16
        %v6558 = vrot.slane %v6556, 5
        %v6559 = vsel %vm241, %v6554, %v6558
        %v6560 = vshrl.u32 %v6184, 16
        %v6562 = vrot.slane %v6560, 4
        %v6563 = vor.u32 %v6562, %v6558
        %v6564 = vrot.slane %v6563, 4
        %v6566 = vshll.u32 %v6185, 16
        %v6568 = vrot.slane %v6566, 5
        %v6569 = vsel %vm241, %v6564, %v6568
        %s6570 = scalar_lea.vmem %s1, 48
        %v6571 = vld [vmem:[%s6570] sm:$0xf]
        %v6572 = vld [vmem:[%s1041] sm:$0xe]
        %v6573 = vld [vmem:[%s1041 + $0xc] sm:$0xe]
        %v6574 = vld [vmem:[%s1041 + $0x18] sm:$0xe]
        %v6575 = vld [vmem:[%s1041 + $0x24] sm:$0xe]
        %v6576 = vld [vmem:[%s1041 + $0x30] sm:$0xe]
        %v6577 = vld [vmem:[%s1041 + $0x3c] sm:$0xe]
        %v6578 = vld [vmem:[%s1041 + $0x48] sm:$0xe]
        %v6579 = vld [vmem:[%s1041 + $0x54] sm:$0xe]
        %v6580 = vld [vmem:[%s1041 + $0x60] sm:$0xe]
        %v6581 = vld [vmem:[%s1041 + $0x6c] sm:$0xe]
        %v6582 = vld [vmem:[%s1041 + $0x78] sm:$0xe]
        %v6583 = vld [vmem:[%s1041 + $0x84] sm:$0xe]
        %v6584 = vld [vmem:[%s1041 + $0x90] sm:$0xe]
        %v6585 = vld [vmem:[%s1041 + $0x9c] sm:$0xe]
        %v6586 = vld [vmem:[%s1041 + $0xa8] sm:$0xe]
        %v6587 = vld [vmem:[%s1041 + $0xb4] sm:$0xe]
        %v6636 = vrot.slane %v6572, 5
        %v6637 = vrot.slane %v6636, 4
        %v6638 = vrot.slane %v6139, 5
        %v6639 = vsel %vm2549, %v6637, %v6638
        %v6640 = vrot.slane %v6638, 4
        %v6641 = vrot.slane %v6140, 5
        %v6642 = vsel %vm2549, %v6640, %v6641
        %v6643 = vrot.slane %v6573, 5
        %v6644 = vrot.slane %v6643, 4
        %v6645 = vrot.slane %v6142, 5
        %v6646 = vsel %vm2549, %v6644, %v6645
        %v6647 = vrot.slane %v6645, 4
        %v6648 = vrot.slane %v6143, 5
        %v6649 = vsel %vm2549, %v6647, %v6648
        %v6650 = vrot.slane %v6574, 5
        %v6651 = vrot.slane %v6650, 4
        %v6652 = vrot.slane %v6145, 5
        %v6653 = vsel %vm2549, %v6651, %v6652
        %v6654 = vrot.slane %v6652, 4
        %v6655 = vrot.slane %v6146, 5
        %v6656 = vsel %vm2549, %v6654, %v6655
        %v6657 = vrot.slane %v6575, 5
        %v6658 = vrot.slane %v6657, 4
        %v6659 = vrot.slane %v6148, 5
        %v6660 = vsel %vm2549, %v6658, %v6659
        %v6661 = vrot.slane %v6659, 4
        %v6662 = vrot.slane %v6149, 5
        %v6663 = vsel %vm2549, %v6661, %v6662
        %v6664 = vrot.slane %v6576, 5
        %v6665 = vrot.slane %v6664, 4
        %v6666 = vrot.slane %v6151, 5
        %v6667 = vsel %vm2549, %v6665, %v6666
        %v6668 = vrot.slane %v6666, 4
        %v6669 = vrot.slane %v6152, 5
        %v6670 = vsel %vm2549, %v6668, %v6669
        %v6671 = vrot.slane %v6577, 5
        %v6672 = vrot.slane %v6671, 4
        %v6673 = vrot.slane %v6154, 5
        %v6674 = vsel %vm2549, %v6672, %v6673
        %v6675 = vrot.slane %v6673, 4
        %v6676 = vrot.slane %v6155, 5
        %v6677 = vsel %vm2549, %v6675, %v6676
        %v6678 = vrot.slane %v6578, 5
        %v6679 = vrot.slane %v6678, 4
        %v6680 = vrot.slane %v6157, 5
        %v6681 = vsel %vm2549, %v6679, %v6680
        %v6682 = vrot.slane %v6680, 4
        %v6683 = vrot.slane %v6158, 5
        %v6684 = vsel %vm2549, %v6682, %v6683
        %v6685 = vrot.slane %v6579, 5
        %v6686 = vrot.slane %v6685, 4
        %v6687 = vrot.slane %v6160, 5
        %v6688 = vsel %vm2549, %v6686, %v6687
        %v6689 = vrot.slane %v6687, 4
        %v6690 = vrot.slane %v6161, 5
        %v6691 = vsel %vm2549, %v6689, %v6690
        %v6692 = vrot.slane %v6580, 5
        %v6693 = vrot.slane %v6692, 4
        %v6694 = vrot.slane %v6163, 5
        %v6695 = vsel %vm2549, %v6693, %v6694
        %v6696 = vrot.slane %v6694, 4
        %v6697 = vrot.slane %v6164, 5
        %v6698 = vsel %vm2549, %v6696, %v6697
        %v6699 = vrot.slane %v6581, 5
        %v6700 = vrot.slane %v6699, 4
        %v6701 = vrot.slane %v6166, 5
        %v6702 = vsel %vm2549, %v6700, %v6701
        %v6703 = vrot.slane %v6701, 4
        %v6704 = vrot.slane %v6167, 5
        %v6705 = vsel %vm2549, %v6703, %v6704
        %v6706 = vrot.slane %v6582, 5
        %v6707 = vrot.slane %v6706, 4
        %v6708 = vrot.slane %v6169, 5
        %v6709 = vsel %vm2549, %v6707, %v6708
        %v6710 = vrot.slane %v6708, 4
        %v6711 = vrot.slane %v6170, 5
        %v6712 = vsel %vm2549, %v6710, %v6711
        %v6713 = vrot.slane %v6583, 5
        %v6714 = vrot.slane %v6713, 4
        %v6715 = vrot.slane %v6172, 5
        %v6716 = vsel %vm2549, %v6714, %v6715
        %v6717 = vrot.slane %v6715, 4
        %v6718 = vrot.slane %v6173, 5
        %v6719 = vsel %vm2549, %v6717, %v6718
        %v6720 = vrot.slane %v6584, 5
        %v6721 = vrot.slane %v6720, 4
        %v6722 = vrot.slane %v6175, 5
        %v6723 = vsel %vm2549, %v6721, %v6722
        %v6724 = vrot.slane %v6722, 4
        %v6725 = vrot.slane %v6176, 5
        %v6726 = vsel %vm2549, %v6724, %v6725
        %v6727 = vrot.slane %v6585, 5
        %v6728 = vrot.slane %v6727, 4
        %v6729 = vrot.slane %v6178, 5
        %v6730 = vsel %vm2549, %v6728, %v6729
        %v6731 = vrot.slane %v6729, 4
        %v6732 = vrot.slane %v6179, 5
        %v6733 = vsel %vm2549, %v6731, %v6732
        %v6734 = vrot.slane %v6586, 5
        %v6735 = vrot.slane %v6734, 4
        %v6736 = vrot.slane %v6181, 5
        %v6737 = vsel %vm2549, %v6735, %v6736
        %v6738 = vrot.slane %v6736, 4
        %v6739 = vrot.slane %v6182, 5
        %v6740 = vsel %vm2549, %v6738, %v6739
        %v6741 = vrot.slane %v6587, 5
        %v6742 = vrot.slane %v6741, 4
        %v6743 = vrot.slane %v6184, 5
        %v6744 = vsel %vm2549, %v6742, %v6743
        %v6745 = vrot.slane %v6743, 4
        %v6746 = vrot.slane %v6185, 5
        %v6747 = vsel %vm2549, %v6745, %v6746
        %s6748 = scalar_lea.vmem %s1, 52
        %v6749 = vld [vmem:[%s6748] sm:$0xf]
        %v6750 = vunpack.c.l.b16 %v6639
        %v6751 = vunpack.c.l.b16 %v6642
        %v6752 = vunpack.c.l.b16 %v6646
        %v6753 = vunpack.c.l.b16 %v6649
        %v6754 = vunpack.c.l.b16 %v6653
        %v6755 = vunpack.c.l.b16 %v6656
        %v6756 = vunpack.c.l.b16 %v6660
        %v6757 = vunpack.c.l.b16 %v6663
        %v6758 = vunpack.c.l.b16 %v6667
        %v6759 = vunpack.c.l.b16 %v6670
        %v6760 = vunpack.c.l.b16 %v6674
        %v6761 = vunpack.c.l.b16 %v6677
        %v6762 = vunpack.c.l.b16 %v6681
        %v6763 = vunpack.c.l.b16 %v6684
        %v6764 = vunpack.c.l.b16 %v6688
        %v6765 = vunpack.c.l.b16 %v6691
        %v6766 = vunpack.c.l.b16 %v6695
        %v6767 = vunpack.c.l.b16 %v6698
        %v6768 = vunpack.c.l.b16 %v6702
        %v6769 = vunpack.c.l.b16 %v6705
        %v6770 = vunpack.c.l.b16 %v6709
        %v6771 = vunpack.c.l.b16 %v6712
        %v6772 = vunpack.c.l.b16 %v6716
        %v6773 = vunpack.c.l.b16 %v6719
        %v6774 = vunpack.c.l.b16 %v6723
        %v6775 = vunpack.c.l.b16 %v6726
        %v6776 = vunpack.c.l.b16 %v6730
        %v6777 = vunpack.c.l.b16 %v6733
        %v6778 = vunpack.c.l.b16 %v6737
        %v6779 = vunpack.c.l.b16 %v6740
        %v6780 = vunpack.c.l.b16 %v6744
        %v6781 = vunpack.c.l.b16 %v6747
        %v6782 = vpack.c.b16 %v6751, %v6750
        %v6783 = vpack.c.b16 %v6753, %v6752
        %v6784 = vpack.c.b16 %v6755, %v6754
        %v6785 = vpack.c.b16 %v6757, %v6756
        %v6786 = vpack.c.b16 %v6759, %v6758
        %v6787 = vpack.c.b16 %v6761, %v6760
        %v6788 = vpack.c.b16 %v6763, %v6762
        %v6789 = vpack.c.b16 %v6765, %v6764
        %v6790 = vpack.c.b16 %v6767, %v6766
        %v6791 = vpack.c.b16 %v6769, %v6768
        %v6792 = vpack.c.b16 %v6771, %v6770
        %v6793 = vpack.c.b16 %v6773, %v6772
        %v6794 = vpack.c.b16 %v6775, %v6774
        %v6795 = vpack.c.b16 %v6777, %v6776
        %v6796 = vpack.c.b16 %v6779, %v6778
        %v6797 = vpack.c.b16 %v6781, %v6780
        %v6799 = vsel %vm676, %v6782, 0
        %v6802 = vsel %vm676, %v6783, 0
        %v6805 = vsel %vm676, %v6784, 0
        %v6808 = vsel %vm676, %v6785, 0
        %v6811 = vsel %vm676, %v6786, 0
        %v6814 = vsel %vm676, %v6787, 0
        %v6817 = vsel %vm676, %v6788, 0
        %v6820 = vsel %vm676, %v6789, 0
        %v6823 = vsel %vm676, %v6790, 0
        %v6826 = vsel %vm676, %v6791, 0
        %v6829 = vsel %vm676, %v6792, 0
        %v6832 = vsel %vm676, %v6793, 0
        %v6835 = vsel %vm676, %v6794, 0
        %v6838 = vsel %vm676, %v6795, 0
        %v6841 = vsel %vm676, %v6796, 0
        %v6844 = vsel %vm676, %v6797, 0
        %v6847 = vsel %vm725, %v6749, 0
        %6849 = vmatpush.bf16.msra.mxu0 0
        %6850 = vmatpush.bf16.msra.mxu0 0
        %6851 = vmatpush.bf16.msra.mxu0 0
        %6852 = vmatpush.bf16.msra.mxu0 0
        %6853 = vmatpush.bf16.msra.mxu0 0
        %6854 = vmatpush.bf16.msra.mxu0 0
        %6855 = vmatpush.bf16.msra.mxu0 0
        %6856 = vmatpush.bf16.msra.mxu0 %v6847
        %6857 = vmatmul.bf16.gmra.mxu0 %v6799
        %v6858 = vpop.f32.mrf.mxu0
        %v6859 = vadd.f32 0.0, %v6858
        %v6860 = vpop.f32.mrf.mxu0
        %v6861 = vadd.f32 0.0, %v6860
        %6862 = vmatmul.bf16.gmra.mxu0 %v6802
        %v6863 = vpop.f32.mrf.mxu0
        %v6864 = vadd.f32 0.0, %v6863
        %v6865 = vpop.f32.mrf.mxu0
        %v6866 = vadd.f32 0.0, %v6865
        %6867 = vmatmul.bf16.gmra.mxu0 %v6805
        %v6868 = vpop.f32.mrf.mxu0
        %v6869 = vadd.f32 0.0, %v6868
        %v6870 = vpop.f32.mrf.mxu0
        %v6871 = vadd.f32 0.0, %v6870
        %6872 = vmatmul.bf16.gmra.mxu0 %v6808
        %v6873 = vpop.f32.mrf.mxu0
        %v6874 = vadd.f32 0.0, %v6873
        %v6875 = vpop.f32.mrf.mxu0
        %v6876 = vadd.f32 0.0, %v6875
        %6877 = vmatmul.bf16.gmra.mxu0 %v6811
        %v6878 = vpop.f32.mrf.mxu0
        %v6879 = vadd.f32 0.0, %v6878
        %v6880 = vpop.f32.mrf.mxu0
        %v6881 = vadd.f32 0.0, %v6880
        %6882 = vmatmul.bf16.gmra.mxu0 %v6814
        %v6883 = vpop.f32.mrf.mxu0
        %v6884 = vadd.f32 0.0, %v6883
        %v6885 = vpop.f32.mrf.mxu0
        %v6886 = vadd.f32 0.0, %v6885
        %6887 = vmatmul.bf16.gmra.mxu0 %v6817
        %v6888 = vpop.f32.mrf.mxu0
        %v6889 = vadd.f32 0.0, %v6888
        %v6890 = vpop.f32.mrf.mxu0
        %v6891 = vadd.f32 0.0, %v6890
        %6892 = vmatmul.bf16.gmra.mxu0 %v6820
        %v6893 = vpop.f32.mrf.mxu0
        %v6894 = vadd.f32 0.0, %v6893
        %v6895 = vpop.f32.mrf.mxu0
        %v6896 = vadd.f32 0.0, %v6895
        %6897 = vmatmul.bf16.gmra.mxu0 %v6823
        %v6898 = vpop.f32.mrf.mxu0
        %v6899 = vadd.f32 0.0, %v6898
        %v6900 = vpop.f32.mrf.mxu0
        %v6901 = vadd.f32 0.0, %v6900
        %6902 = vmatmul.bf16.gmra.mxu0 %v6826
        %v6903 = vpop.f32.mrf.mxu0
        %v6904 = vadd.f32 0.0, %v6903
        %v6905 = vpop.f32.mrf.mxu0
        %v6906 = vadd.f32 0.0, %v6905
        %6907 = vmatmul.bf16.gmra.mxu0 %v6829
        %v6908 = vpop.f32.mrf.mxu0
        %v6909 = vadd.f32 0.0, %v6908
        %v6910 = vpop.f32.mrf.mxu0
        %v6911 = vadd.f32 0.0, %v6910
        %6912 = vmatmul.bf16.gmra.mxu0 %v6832
        %v6913 = vpop.f32.mrf.mxu0
        %v6914 = vadd.f32 0.0, %v6913
        %v6915 = vpop.f32.mrf.mxu0
        %v6916 = vadd.f32 0.0, %v6915
        %6917 = vmatmul.bf16.gmra.mxu0 %v6835
        %v6918 = vpop.f32.mrf.mxu0
        %v6919 = vadd.f32 0.0, %v6918
        %v6920 = vpop.f32.mrf.mxu0
        %v6921 = vadd.f32 0.0, %v6920
        %6922 = vmatmul.bf16.gmra.mxu0 %v6838
        %v6923 = vpop.f32.mrf.mxu0
        %v6924 = vadd.f32 0.0, %v6923
        %v6925 = vpop.f32.mrf.mxu0
        %v6926 = vadd.f32 0.0, %v6925
        %6927 = vmatmul.bf16.gmra.mxu0 %v6841
        %v6928 = vpop.f32.mrf.mxu0
        %v6929 = vadd.f32 0.0, %v6928
        %v6930 = vpop.f32.mrf.mxu0
        %v6931 = vadd.f32 0.0, %v6930
        %6932 = vmatmul.bf16.gmra.mxu0 %v6844
        %v6933 = vpop.f32.mrf.mxu0
        %v6934 = vadd.f32 0.0, %v6933
        %v6935 = vpop.f32.mrf.mxu0
        %v6936 = vadd.f32 0.0, %v6935
        %6937 = vdwg.mxu0
        %v6938 = vunpack.c.l.b16 %v6199
        %v6939 = vunpack.c.l.b16 %v6209
        %v6940 = vunpack.c.l.b16 %v6223
        %v6941 = vunpack.c.l.b16 %v6233
        %v6942 = vunpack.c.l.b16 %v6247
        %v6943 = vunpack.c.l.b16 %v6257
        %v6944 = vunpack.c.l.b16 %v6271
        %v6945 = vunpack.c.l.b16 %v6281
        %v6946 = vunpack.c.l.b16 %v6295
        %v6947 = vunpack.c.l.b16 %v6305
        %v6948 = vunpack.c.l.b16 %v6319
        %v6949 = vunpack.c.l.b16 %v6329
        %v6950 = vunpack.c.l.b16 %v6343
        %v6951 = vunpack.c.l.b16 %v6353
        %v6952 = vunpack.c.l.b16 %v6367
        %v6953 = vunpack.c.l.b16 %v6377
        %v6954 = vunpack.c.l.b16 %v6391
        %v6955 = vunpack.c.l.b16 %v6401
        %v6956 = vunpack.c.l.b16 %v6415
        %v6957 = vunpack.c.l.b16 %v6425
        %v6958 = vunpack.c.l.b16 %v6439
        %v6959 = vunpack.c.l.b16 %v6449
        %v6960 = vunpack.c.l.b16 %v6463
        %v6961 = vunpack.c.l.b16 %v6473
        %v6962 = vunpack.c.l.b16 %v6487
        %v6963 = vunpack.c.l.b16 %v6497
        %v6964 = vunpack.c.l.b16 %v6511
        %v6965 = vunpack.c.l.b16 %v6521
        %v6966 = vunpack.c.l.b16 %v6535
        %v6967 = vunpack.c.l.b16 %v6545
        %v6968 = vunpack.c.l.b16 %v6559
        %v6969 = vunpack.c.l.b16 %v6569
        %v6970 = vpack.c.b16 %v6939, %v6938
        %v6971 = vpack.c.b16 %v6941, %v6940
        %v6972 = vpack.c.b16 %v6943, %v6942
        %v6973 = vpack.c.b16 %v6945, %v6944
        %v6974 = vpack.c.b16 %v6947, %v6946
        %v6975 = vpack.c.b16 %v6949, %v6948
        %v6976 = vpack.c.b16 %v6951, %v6950
        %v6977 = vpack.c.b16 %v6953, %v6952
        %v6978 = vpack.c.b16 %v6955, %v6954
        %v6979 = vpack.c.b16 %v6957, %v6956
        %v6980 = vpack.c.b16 %v6959, %v6958
        %v6981 = vpack.c.b16 %v6961, %v6960
        %v6982 = vpack.c.b16 %v6963, %v6962
        %v6983 = vpack.c.b16 %v6965, %v6964
        %v6984 = vpack.c.b16 %v6967, %v6966
        %v6985 = vpack.c.b16 %v6969, %v6968
        %v6987 = vsel %vm676, %v6970, 0
        %v6990 = vsel %vm676, %v6971, 0
        %v6993 = vsel %vm676, %v6972, 0
        %v6996 = vsel %vm676, %v6973, 0
        %v6999 = vsel %vm676, %v6974, 0
        %v7002 = vsel %vm676, %v6975, 0
        %v7005 = vsel %vm676, %v6976, 0
        %v7008 = vsel %vm676, %v6977, 0
        %v7011 = vsel %vm676, %v6978, 0
        %v7014 = vsel %vm676, %v6979, 0
        %v7017 = vsel %vm676, %v6980, 0
        %v7020 = vsel %vm676, %v6981, 0
        %v7023 = vsel %vm676, %v6982, 0
        %v7026 = vsel %vm676, %v6983, 0
        %v7029 = vsel %vm676, %v6984, 0
        %v7032 = vsel %vm676, %v6985, 0
        %v7035 = vsel %vm725, %v6571, 0
        %7037 = vmatpush.bf16.msra.mxu0 0
        %7038 = vmatpush.bf16.msra.mxu0 0
        %7039 = vmatpush.bf16.msra.mxu0 0
        %7040 = vmatpush.bf16.msra.mxu0 0
        %7041 = vmatpush.bf16.msra.mxu0 0
        %7042 = vmatpush.bf16.msra.mxu0 0
        %7043 = vmatpush.bf16.msra.mxu0 0
        %7044 = vmatpush.bf16.msra.mxu0 %v7035
        %7045 = vmatmul.bf16.gmra.mxu0 %v6987
        %v7046 = vpop.f32.mrf.mxu0
        %v7047 = vadd.f32 %v6859, %v7046
        %v7048 = vpop.f32.mrf.mxu0
        %v7049 = vadd.f32 %v6861, %v7048
        %7050 = vmatmul.bf16.gmra.mxu0 %v6990
        %v7051 = vpop.f32.mrf.mxu0
        %v7052 = vadd.f32 %v6864, %v7051
        %v7053 = vpop.f32.mrf.mxu0
        %v7054 = vadd.f32 %v6866, %v7053
        %7055 = vmatmul.bf16.gmra.mxu0 %v6993
        %v7056 = vpop.f32.mrf.mxu0
        %v7057 = vadd.f32 %v6869, %v7056
        %v7058 = vpop.f32.mrf.mxu0
        %v7059 = vadd.f32 %v6871, %v7058
        %7060 = vmatmul.bf16.gmra.mxu0 %v6996
        %v7061 = vpop.f32.mrf.mxu0
        %v7062 = vadd.f32 %v6874, %v7061
        %v7063 = vpop.f32.mrf.mxu0
        %v7064 = vadd.f32 %v6876, %v7063
        %7065 = vmatmul.bf16.gmra.mxu0 %v6999
        %v7066 = vpop.f32.mrf.mxu0
        %v7067 = vadd.f32 %v6879, %v7066
        %v7068 = vpop.f32.mrf.mxu0
        %v7069 = vadd.f32 %v6881, %v7068
        %7070 = vmatmul.bf16.gmra.mxu0 %v7002
        %v7071 = vpop.f32.mrf.mxu0
        %v7072 = vadd.f32 %v6884, %v7071
        %v7073 = vpop.f32.mrf.mxu0
        %v7074 = vadd.f32 %v6886, %v7073
        %7075 = vmatmul.bf16.gmra.mxu0 %v7005
        %v7076 = vpop.f32.mrf.mxu0
        %v7077 = vadd.f32 %v6889, %v7076
        %v7078 = vpop.f32.mrf.mxu0
        %v7079 = vadd.f32 %v6891, %v7078
        %7080 = vmatmul.bf16.gmra.mxu0 %v7008
        %v7081 = vpop.f32.mrf.mxu0
        %v7082 = vadd.f32 %v6894, %v7081
        %v7083 = vpop.f32.mrf.mxu0
        %v7084 = vadd.f32 %v6896, %v7083
        %7085 = vmatmul.bf16.gmra.mxu0 %v7011
        %v7086 = vpop.f32.mrf.mxu0
        %v7087 = vadd.f32 %v6899, %v7086
        %v7088 = vpop.f32.mrf.mxu0
        %v7089 = vadd.f32 %v6901, %v7088
        %7090 = vmatmul.bf16.gmra.mxu0 %v7014
        %v7091 = vpop.f32.mrf.mxu0
        %v7092 = vadd.f32 %v6904, %v7091
        %v7093 = vpop.f32.mrf.mxu0
        %v7094 = vadd.f32 %v6906, %v7093
        %7095 = vmatmul.bf16.gmra.mxu0 %v7017
        %v7096 = vpop.f32.mrf.mxu0
        %v7097 = vadd.f32 %v6909, %v7096
        %v7098 = vpop.f32.mrf.mxu0
        %v7099 = vadd.f32 %v6911, %v7098
        %7100 = vmatmul.bf16.gmra.mxu0 %v7020
        %v7101 = vpop.f32.mrf.mxu0
        %v7102 = vadd.f32 %v6914, %v7101
        %v7103 = vpop.f32.mrf.mxu0
        %v7104 = vadd.f32 %v6916, %v7103
        %7105 = vmatmul.bf16.gmra.mxu0 %v7023
        %v7106 = vpop.f32.mrf.mxu0
        %v7107 = vadd.f32 %v6919, %v7106
        %v7108 = vpop.f32.mrf.mxu0
        %v7109 = vadd.f32 %v6921, %v7108
        %7110 = vmatmul.bf16.gmra.mxu0 %v7026
        %v7111 = vpop.f32.mrf.mxu0
        %v7112 = vadd.f32 %v6924, %v7111
        %v7113 = vpop.f32.mrf.mxu0
        %v7114 = vadd.f32 %v6926, %v7113
        %7115 = vmatmul.bf16.gmra.mxu0 %v7029
        %v7116 = vpop.f32.mrf.mxu0
        %v7117 = vadd.f32 %v6929, %v7116
        %v7118 = vpop.f32.mrf.mxu0
        %v7119 = vadd.f32 %v6931, %v7118
        %7120 = vmatmul.bf16.gmra.mxu0 %v7032
        %v7121 = vpop.f32.mrf.mxu0
        %v7122 = vadd.f32 %v6934, %v7121
        %v7123 = vpop.f32.mrf.mxu0
        %v7124 = vadd.f32 %v6936, %v7123
        %7125 = vdwg.mxu0
        %v7126 = vld [vmem:[%s5132] sm:$0xf]
        %v7127 = vld [vmem:[%s5132 + $0x4] sm:$0xf]
        %v7128 = vld [vmem:[%s5132 + $0x8] sm:$0x1]
        %v7129 = vld [vmem:[%s5132 + $0xc] sm:$0xf]
        %v7130 = vld [vmem:[%s5132 + $0x10] sm:$0xf]
        %v7131 = vld [vmem:[%s5132 + $0x14] sm:$0x1]
        %v7132 = vld [vmem:[%s5132 + $0x18] sm:$0xf]
        %v7133 = vld [vmem:[%s5132 + $0x1c] sm:$0xf]
        %v7134 = vld [vmem:[%s5132 + $0x20] sm:$0x1]
        %v7135 = vld [vmem:[%s5132 + $0x24] sm:$0xf]
        %v7136 = vld [vmem:[%s5132 + $0x28] sm:$0xf]
        %v7137 = vld [vmem:[%s5132 + $0x2c] sm:$0x1]
        %v7138 = vld [vmem:[%s5132 + $0x30] sm:$0xf]
        %v7139 = vld [vmem:[%s5132 + $0x34] sm:$0xf]
        %v7140 = vld [vmem:[%s5132 + $0x38] sm:$0x1]
        %v7141 = vld [vmem:[%s5132 + $0x3c] sm:$0xf]
        %v7142 = vld [vmem:[%s5132 + $0x40] sm:$0xf]
        %v7143 = vld [vmem:[%s5132 + $0x44] sm:$0x1]
        %v7144 = vld [vmem:[%s5132 + $0x48] sm:$0xf]
        %v7145 = vld [vmem:[%s5132 + $0x4c] sm:$0xf]
        %v7146 = vld [vmem:[%s5132 + $0x50] sm:$0x1]
        %v7147 = vld [vmem:[%s5132 + $0x54] sm:$0xf]
        %v7148 = vld [vmem:[%s5132 + $0x58] sm:$0xf]
        %v7149 = vld [vmem:[%s5132 + $0x5c] sm:$0x1]
        %v7150 = vld [vmem:[%s5132 + $0x60] sm:$0xf]
        %v7151 = vld [vmem:[%s5132 + $0x64] sm:$0xf]
        %v7152 = vld [vmem:[%s5132 + $0x68] sm:$0x1]
        %v7153 = vld [vmem:[%s5132 + $0x6c] sm:$0xf]
        %v7154 = vld [vmem:[%s5132 + $0x70] sm:$0xf]
        %v7155 = vld [vmem:[%s5132 + $0x74] sm:$0x1]
        %v7156 = vld [vmem:[%s5132 + $0x78] sm:$0xf]
        %v7157 = vld [vmem:[%s5132 + $0x7c] sm:$0xf]
        %v7158 = vld [vmem:[%s5132 + $0x80] sm:$0x1]
        %v7159 = vld [vmem:[%s5132 + $0x84] sm:$0xf]
        %v7160 = vld [vmem:[%s5132 + $0x88] sm:$0xf]
        %v7161 = vld [vmem:[%s5132 + $0x8c] sm:$0x1]
        %v7162 = vld [vmem:[%s5132 + $0x90] sm:$0xf]
        %v7163 = vld [vmem:[%s5132 + $0x94] sm:$0xf]
        %v7164 = vld [vmem:[%s5132 + $0x98] sm:$0x1]
        %v7165 = vld [vmem:[%s5132 + $0x9c] sm:$0xf]
        %v7166 = vld [vmem:[%s5132 + $0xa0] sm:$0xf]
        %v7167 = vld [vmem:[%s5132 + $0xa4] sm:$0x1]
        %v7168 = vld [vmem:[%s5132 + $0xa8] sm:$0xf]
        %v7169 = vld [vmem:[%s5132 + $0xac] sm:$0xf]
        %v7170 = vld [vmem:[%s5132 + $0xb0] sm:$0x1]
        %v7171 = vld [vmem:[%s5132 + $0xb4] sm:$0xf]
        %v7172 = vld [vmem:[%s5132 + $0xb8] sm:$0xf]
        %v7173 = vld [vmem:[%s5132 + $0xbc] sm:$0x1]
        %v7175 = vshrl.u32 %v7126, 16
        %v7177 = vrot.slane %v7175, 4
        %v7178 = vshll.u32 %v7126, 16
        %v7180 = vrot.slane %v7178, 5
        %v7181 = vor.u32 %v7177, %v7180
        %v7182 = vrot.slane %v7181, 4
        %v7184 = vshll.u32 %v7127, 16
        %v7186 = vrot.slane %v7184, 5
        %v7187 = vsel %vm241, %v7182, %v7186
        %v7188 = vshrl.u32 %v7127, 16
        %v7190 = vrot.slane %v7188, 4
        %v7191 = vor.u32 %v7190, %v7186
        %v7192 = vrot.slane %v7191, 4
        %v7194 = vshll.u32 %v7128, 16
        %v7196 = vrot.slane %v7194, 5
        %v7197 = vsel %vm241, %v7192, %v7196
        %v7199 = vshrl.u32 %v7129, 16
        %v7201 = vrot.slane %v7199, 4
        %v7202 = vshll.u32 %v7129, 16
        %v7204 = vrot.slane %v7202, 5
        %v7205 = vor.u32 %v7201, %v7204
        %v7206 = vrot.slane %v7205, 4
        %v7208 = vshll.u32 %v7130, 16
        %v7210 = vrot.slane %v7208, 5
        %v7211 = vsel %vm241, %v7206, %v7210
        %v7212 = vshrl.u32 %v7130, 16
        %v7214 = vrot.slane %v7212, 4
        %v7215 = vor.u32 %v7214, %v7210
        %v7216 = vrot.slane %v7215, 4
        %v7218 = vshll.u32 %v7131, 16
        %v7220 = vrot.slane %v7218, 5
        %v7221 = vsel %vm241, %v7216, %v7220
        %v7223 = vshrl.u32 %v7132, 16
        %v7225 = vrot.slane %v7223, 4
        %v7226 = vshll.u32 %v7132, 16
        %v7228 = vrot.slane %v7226, 5
        %v7229 = vor.u32 %v7225, %v7228
        %v7230 = vrot.slane %v7229, 4
        %v7232 = vshll.u32 %v7133, 16
        %v7234 = vrot.slane %v7232, 5
        %v7235 = vsel %vm241, %v7230, %v7234
        %v7236 = vshrl.u32 %v7133, 16
        %v7238 = vrot.slane %v7236, 4
        %v7239 = vor.u32 %v7238, %v7234
        %v7240 = vrot.slane %v7239, 4
        %v7242 = vshll.u32 %v7134, 16
        %v7244 = vrot.slane %v7242, 5
        %v7245 = vsel %vm241, %v7240, %v7244
        %v7247 = vshrl.u32 %v7135, 16
        %v7249 = vrot.slane %v7247, 4
        %v7250 = vshll.u32 %v7135, 16
        %v7252 = vrot.slane %v7250, 5
        %v7253 = vor.u32 %v7249, %v7252
        %v7254 = vrot.slane %v7253, 4
        %v7256 = vshll.u32 %v7136, 16
        %v7258 = vrot.slane %v7256, 5
        %v7259 = vsel %vm241, %v7254, %v7258
        %v7260 = vshrl.u32 %v7136, 16
        %v7262 = vrot.slane %v7260, 4
        %v7263 = vor.u32 %v7262, %v7258
        %v7264 = vrot.slane %v7263, 4
        %v7266 = vshll.u32 %v7137, 16
        %v7268 = vrot.slane %v7266, 5
        %v7269 = vsel %vm241, %v7264, %v7268
        %v7271 = vshrl.u32 %v7138, 16
        %v7273 = vrot.slane %v7271, 4
        %v7274 = vshll.u32 %v7138, 16
        %v7276 = vrot.slane %v7274, 5
        %v7277 = vor.u32 %v7273, %v7276
        %v7278 = vrot.slane %v7277, 4
        %v7280 = vshll.u32 %v7139, 16
        %v7282 = vrot.slane %v7280, 5
        %v7283 = vsel %vm241, %v7278, %v7282
        %v7284 = vshrl.u32 %v7139, 16
        %v7286 = vrot.slane %v7284, 4
        %v7287 = vor.u32 %v7286, %v7282
        %v7288 = vrot.slane %v7287, 4
        %v7290 = vshll.u32 %v7140, 16
        %v7292 = vrot.slane %v7290, 5
        %v7293 = vsel %vm241, %v7288, %v7292
        %v7295 = vshrl.u32 %v7141, 16
        %v7297 = vrot.slane %v7295, 4
        %v7298 = vshll.u32 %v7141, 16
        %v7300 = vrot.slane %v7298, 5
        %v7301 = vor.u32 %v7297, %v7300
        %v7302 = vrot.slane %v7301, 4
        %v7304 = vshll.u32 %v7142, 16
        %v7306 = vrot.slane %v7304, 5
        %v7307 = vsel %vm241, %v7302, %v7306
        %v7308 = vshrl.u32 %v7142, 16
        %v7310 = vrot.slane %v7308, 4
        %v7311 = vor.u32 %v7310, %v7306
        %v7312 = vrot.slane %v7311, 4
        %v7314 = vshll.u32 %v7143, 16
        %v7316 = vrot.slane %v7314, 5
        %v7317 = vsel %vm241, %v7312, %v7316
        %v7319 = vshrl.u32 %v7144, 16
        %v7321 = vrot.slane %v7319, 4
        %v7322 = vshll.u32 %v7144, 16
        %v7324 = vrot.slane %v7322, 5
        %v7325 = vor.u32 %v7321, %v7324
        %v7326 = vrot.slane %v7325, 4
        %v7328 = vshll.u32 %v7145, 16
        %v7330 = vrot.slane %v7328, 5
        %v7331 = vsel %vm241, %v7326, %v7330
        %v7332 = vshrl.u32 %v7145, 16
        %v7334 = vrot.slane %v7332, 4
        %v7335 = vor.u32 %v7334, %v7330
        %v7336 = vrot.slane %v7335, 4
        %v7338 = vshll.u32 %v7146, 16
        %v7340 = vrot.slane %v7338, 5
        %v7341 = vsel %vm241, %v7336, %v7340
        %v7343 = vshrl.u32 %v7147, 16
        %v7345 = vrot.slane %v7343, 4
        %v7346 = vshll.u32 %v7147, 16
        %v7348 = vrot.slane %v7346, 5
        %v7349 = vor.u32 %v7345, %v7348
        %v7350 = vrot.slane %v7349, 4
        %v7352 = vshll.u32 %v7148, 16
        %v7354 = vrot.slane %v7352, 5
        %v7355 = vsel %vm241, %v7350, %v7354
        %v7356 = vshrl.u32 %v7148, 16
        %v7358 = vrot.slane %v7356, 4
        %v7359 = vor.u32 %v7358, %v7354
        %v7360 = vrot.slane %v7359, 4
        %v7362 = vshll.u32 %v7149, 16
        %v7364 = vrot.slane %v7362, 5
        %v7365 = vsel %vm241, %v7360, %v7364
        %v7367 = vshrl.u32 %v7150, 16
        %v7369 = vrot.slane %v7367, 4
        %v7370 = vshll.u32 %v7150, 16
        %v7372 = vrot.slane %v7370, 5
        %v7373 = vor.u32 %v7369, %v7372
        %v7374 = vrot.slane %v7373, 4
        %v7376 = vshll.u32 %v7151, 16
        %v7378 = vrot.slane %v7376, 5
        %v7379 = vsel %vm241, %v7374, %v7378
        %v7380 = vshrl.u32 %v7151, 16
        %v7382 = vrot.slane %v7380, 4
        %v7383 = vor.u32 %v7382, %v7378
        %v7384 = vrot.slane %v7383, 4
        %v7386 = vshll.u32 %v7152, 16
        %v7388 = vrot.slane %v7386, 5
        %v7389 = vsel %vm241, %v7384, %v7388
        %v7391 = vshrl.u32 %v7153, 16
        %v7393 = vrot.slane %v7391, 4
        %v7394 = vshll.u32 %v7153, 16
        %v7396 = vrot.slane %v7394, 5
        %v7397 = vor.u32 %v7393, %v7396
        %v7398 = vrot.slane %v7397, 4
        %v7400 = vshll.u32 %v7154, 16
        %v7402 = vrot.slane %v7400, 5
        %v7403 = vsel %vm241, %v7398, %v7402
        %v7404 = vshrl.u32 %v7154, 16
        %v7406 = vrot.slane %v7404, 4
        %v7407 = vor.u32 %v7406, %v7402
        %v7408 = vrot.slane %v7407, 4
        %v7410 = vshll.u32 %v7155, 16
        %v7412 = vrot.slane %v7410, 5
        %v7413 = vsel %vm241, %v7408, %v7412
        %v7415 = vshrl.u32 %v7156, 16
        %v7417 = vrot.slane %v7415, 4
        %v7418 = vshll.u32 %v7156, 16
        %v7420 = vrot.slane %v7418, 5
        %v7421 = vor.u32 %v7417, %v7420
        %v7422 = vrot.slane %v7421, 4
        %v7424 = vshll.u32 %v7157, 16
        %v7426 = vrot.slane %v7424, 5
        %v7427 = vsel %vm241, %v7422, %v7426
        %v7428 = vshrl.u32 %v7157, 16
        %v7430 = vrot.slane %v7428, 4
        %v7431 = vor.u32 %v7430, %v7426
        %v7432 = vrot.slane %v7431, 4
        %v7434 = vshll.u32 %v7158, 16
        %v7436 = vrot.slane %v7434, 5
        %v7437 = vsel %vm241, %v7432, %v7436
        %v7439 = vshrl.u32 %v7159, 16
        %v7441 = vrot.slane %v7439, 4
        %v7442 = vshll.u32 %v7159, 16
        %v7444 = vrot.slane %v7442, 5
        %v7445 = vor.u32 %v7441, %v7444
        %v7446 = vrot.slane %v7445, 4
        %v7448 = vshll.u32 %v7160, 16
        %v7450 = vrot.slane %v7448, 5
        %v7451 = vsel %vm241, %v7446, %v7450
        %v7452 = vshrl.u32 %v7160, 16
        %v7454 = vrot.slane %v7452, 4
        %v7455 = vor.u32 %v7454, %v7450
        %v7456 = vrot.slane %v7455, 4
        %v7458 = vshll.u32 %v7161, 16
        %v7460 = vrot.slane %v7458, 5
        %v7461 = vsel %vm241, %v7456, %v7460
        %v7463 = vshrl.u32 %v7162, 16
        %v7465 = vrot.slane %v7463, 4
        %v7466 = vshll.u32 %v7162, 16
        %v7468 = vrot.slane %v7466, 5
        %v7469 = vor.u32 %v7465, %v7468
        %v7470 = vrot.slane %v7469, 4
        %v7472 = vshll.u32 %v7163, 16
        %v7474 = vrot.slane %v7472, 5
        %v7475 = vsel %vm241, %v7470, %v7474
        %v7476 = vshrl.u32 %v7163, 16
        %v7478 = vrot.slane %v7476, 4
        %v7479 = vor.u32 %v7478, %v7474
        %v7480 = vrot.slane %v7479, 4
        %v7482 = vshll.u32 %v7164, 16
        %v7484 = vrot.slane %v7482, 5
        %v7485 = vsel %vm241, %v7480, %v7484
        %v7487 = vshrl.u32 %v7165, 16
        %v7489 = vrot.slane %v7487, 4
        %v7490 = vshll.u32 %v7165, 16
        %v7492 = vrot.slane %v7490, 5
        %v7493 = vor.u32 %v7489, %v7492
        %v7494 = vrot.slane %v7493, 4
        %v7496 = vshll.u32 %v7166, 16
        %v7498 = vrot.slane %v7496, 5
        %v7499 = vsel %vm241, %v7494, %v7498
        %v7500 = vshrl.u32 %v7166, 16
        %v7502 = vrot.slane %v7500, 4
        %v7503 = vor.u32 %v7502, %v7498
        %v7504 = vrot.slane %v7503, 4
        %v7506 = vshll.u32 %v7167, 16
        %v7508 = vrot.slane %v7506, 5
        %v7509 = vsel %vm241, %v7504, %v7508
        %v7511 = vshrl.u32 %v7168, 16
        %v7513 = vrot.slane %v7511, 4
        %v7514 = vshll.u32 %v7168, 16
        %v7516 = vrot.slane %v7514, 5
        %v7517 = vor.u32 %v7513, %v7516
        %v7518 = vrot.slane %v7517, 4
        %v7520 = vshll.u32 %v7169, 16
        %v7522 = vrot.slane %v7520, 5
        %v7523 = vsel %vm241, %v7518, %v7522
        %v7524 = vshrl.u32 %v7169, 16
        %v7526 = vrot.slane %v7524, 4
        %v7527 = vor.u32 %v7526, %v7522
        %v7528 = vrot.slane %v7527, 4
        %v7530 = vshll.u32 %v7170, 16
        %v7532 = vrot.slane %v7530, 5
        %v7533 = vsel %vm241, %v7528, %v7532
        %v7535 = vshrl.u32 %v7171, 16
        %v7537 = vrot.slane %v7535, 4
        %v7538 = vshll.u32 %v7171, 16
        %v7540 = vrot.slane %v7538, 5
        %v7541 = vor.u32 %v7537, %v7540
        %v7542 = vrot.slane %v7541, 4
        %v7544 = vshll.u32 %v7172, 16
        %v7546 = vrot.slane %v7544, 5
        %v7547 = vsel %vm241, %v7542, %v7546
        %v7548 = vshrl.u32 %v7172, 16
        %v7550 = vrot.slane %v7548, 4
        %v7551 = vor.u32 %v7550, %v7546
        %v7552 = vrot.slane %v7551, 4
        %v7554 = vshll.u32 %v7173, 16
        %v7556 = vrot.slane %v7554, 5
        %v7557 = vsel %vm241, %v7552, %v7556
        %s7558 = scalar_lea.vmem %s1, 56
        %v7559 = vld [vmem:[%s7558] sm:$0xf]
        %v7560 = vunpack.c.l.b16 %v7187
        %v7561 = vunpack.c.l.b16 %v7197
        %v7562 = vunpack.c.l.b16 %v7211
        %v7563 = vunpack.c.l.b16 %v7221
        %v7564 = vunpack.c.l.b16 %v7235
        %v7565 = vunpack.c.l.b16 %v7245
        %v7566 = vunpack.c.l.b16 %v7259
        %v7567 = vunpack.c.l.b16 %v7269
        %v7568 = vunpack.c.l.b16 %v7283
        %v7569 = vunpack.c.l.b16 %v7293
        %v7570 = vunpack.c.l.b16 %v7307
        %v7571 = vunpack.c.l.b16 %v7317
        %v7572 = vunpack.c.l.b16 %v7331
        %v7573 = vunpack.c.l.b16 %v7341
        %v7574 = vunpack.c.l.b16 %v7355
        %v7575 = vunpack.c.l.b16 %v7365
        %v7576 = vunpack.c.l.b16 %v7379
        %v7577 = vunpack.c.l.b16 %v7389
        %v7578 = vunpack.c.l.b16 %v7403
        %v7579 = vunpack.c.l.b16 %v7413
        %v7580 = vunpack.c.l.b16 %v7427
        %v7581 = vunpack.c.l.b16 %v7437
        %v7582 = vunpack.c.l.b16 %v7451
        %v7583 = vunpack.c.l.b16 %v7461
        %v7584 = vunpack.c.l.b16 %v7475
        %v7585 = vunpack.c.l.b16 %v7485
        %v7586 = vunpack.c.l.b16 %v7499
        %v7587 = vunpack.c.l.b16 %v7509
        %v7588 = vunpack.c.l.b16 %v7523
        %v7589 = vunpack.c.l.b16 %v7533
        %v7590 = vunpack.c.l.b16 %v7547
        %v7591 = vunpack.c.l.b16 %v7557
        %v7592 = vpack.c.b16 %v7561, %v7560
        %v7593 = vpack.c.b16 %v7563, %v7562
        %v7594 = vpack.c.b16 %v7565, %v7564
        %v7595 = vpack.c.b16 %v7567, %v7566
        %v7596 = vpack.c.b16 %v7569, %v7568
        %v7597 = vpack.c.b16 %v7571, %v7570
        %v7598 = vpack.c.b16 %v7573, %v7572
        %v7599 = vpack.c.b16 %v7575, %v7574
        %v7600 = vpack.c.b16 %v7577, %v7576
        %v7601 = vpack.c.b16 %v7579, %v7578
        %v7602 = vpack.c.b16 %v7581, %v7580
        %v7603 = vpack.c.b16 %v7583, %v7582
        %v7604 = vpack.c.b16 %v7585, %v7584
        %v7605 = vpack.c.b16 %v7587, %v7586
        %v7606 = vpack.c.b16 %v7589, %v7588
        %v7607 = vpack.c.b16 %v7591, %v7590
        %v7609 = vsel %vm676, %v7592, 0
        %v7612 = vsel %vm676, %v7593, 0
        %v7615 = vsel %vm676, %v7594, 0
        %v7618 = vsel %vm676, %v7595, 0
        %v7621 = vsel %vm676, %v7596, 0
        %v7624 = vsel %vm676, %v7597, 0
        %v7627 = vsel %vm676, %v7598, 0
        %v7630 = vsel %vm676, %v7599, 0
        %v7633 = vsel %vm676, %v7600, 0
        %v7636 = vsel %vm676, %v7601, 0
        %v7639 = vsel %vm676, %v7602, 0
        %v7642 = vsel %vm676, %v7603, 0
        %v7645 = vsel %vm676, %v7604, 0
        %v7648 = vsel %vm676, %v7605, 0
        %v7651 = vsel %vm676, %v7606, 0
        %v7654 = vsel %vm676, %v7607, 0
        %v7657 = vsel %vm725, %v7559, 0
        %7659 = vmatpush.bf16.msra.mxu0 0
        %7660 = vmatpush.bf16.msra.mxu0 0
        %7661 = vmatpush.bf16.msra.mxu0 0
        %7662 = vmatpush.bf16.msra.mxu0 0
        %7663 = vmatpush.bf16.msra.mxu0 0
        %7664 = vmatpush.bf16.msra.mxu0 0
        %7665 = vmatpush.bf16.msra.mxu0 0
        %7666 = vmatpush.bf16.msra.mxu0 %v7657
        %7667 = vmatmul.bf16.gmra.mxu0 %v7609
        %v7668 = vpop.f32.mrf.mxu0
        %v7669 = vadd.f32 0.0, %v7668
        %v7670 = vpop.f32.mrf.mxu0
        %v7671 = vadd.f32 0.0, %v7670
        %7672 = vmatmul.bf16.gmra.mxu0 %v7612
        %v7673 = vpop.f32.mrf.mxu0
        %v7674 = vadd.f32 0.0, %v7673
        %v7675 = vpop.f32.mrf.mxu0
        %v7676 = vadd.f32 0.0, %v7675
        %7677 = vmatmul.bf16.gmra.mxu0 %v7615
        %v7678 = vpop.f32.mrf.mxu0
        %v7679 = vadd.f32 0.0, %v7678
        %v7680 = vpop.f32.mrf.mxu0
        %v7681 = vadd.f32 0.0, %v7680
        %7682 = vmatmul.bf16.gmra.mxu0 %v7618
        %v7683 = vpop.f32.mrf.mxu0
        %v7684 = vadd.f32 0.0, %v7683
        %v7685 = vpop.f32.mrf.mxu0
        %v7686 = vadd.f32 0.0, %v7685
        %7687 = vmatmul.bf16.gmra.mxu0 %v7621
        %v7688 = vpop.f32.mrf.mxu0
        %v7689 = vadd.f32 0.0, %v7688
        %v7690 = vpop.f32.mrf.mxu0
        %v7691 = vadd.f32 0.0, %v7690
        %7692 = vmatmul.bf16.gmra.mxu0 %v7624
        %v7693 = vpop.f32.mrf.mxu0
        %v7694 = vadd.f32 0.0, %v7693
        %v7695 = vpop.f32.mrf.mxu0
        %v7696 = vadd.f32 0.0, %v7695
        %7697 = vmatmul.bf16.gmra.mxu0 %v7627
        %v7698 = vpop.f32.mrf.mxu0
        %v7699 = vadd.f32 0.0, %v7698
        %v7700 = vpop.f32.mrf.mxu0
        %v7701 = vadd.f32 0.0, %v7700
        %7702 = vmatmul.bf16.gmra.mxu0 %v7630
        %v7703 = vpop.f32.mrf.mxu0
        %v7704 = vadd.f32 0.0, %v7703
        %v7705 = vpop.f32.mrf.mxu0
        %v7706 = vadd.f32 0.0, %v7705
        %7707 = vmatmul.bf16.gmra.mxu0 %v7633
        %v7708 = vpop.f32.mrf.mxu0
        %v7709 = vadd.f32 0.0, %v7708
        %v7710 = vpop.f32.mrf.mxu0
        %v7711 = vadd.f32 0.0, %v7710
        %7712 = vmatmul.bf16.gmra.mxu0 %v7636
        %v7713 = vpop.f32.mrf.mxu0
        %v7714 = vadd.f32 0.0, %v7713
        %v7715 = vpop.f32.mrf.mxu0
        %v7716 = vadd.f32 0.0, %v7715
        %7717 = vmatmul.bf16.gmra.mxu0 %v7639
        %v7718 = vpop.f32.mrf.mxu0
        %v7719 = vadd.f32 0.0, %v7718
        %v7720 = vpop.f32.mrf.mxu0
        %v7721 = vadd.f32 0.0, %v7720
        %7722 = vmatmul.bf16.gmra.mxu0 %v7642
        %v7723 = vpop.f32.mrf.mxu0
        %v7724 = vadd.f32 0.0, %v7723
        %v7725 = vpop.f32.mrf.mxu0
        %v7726 = vadd.f32 0.0, %v7725
        %7727 = vmatmul.bf16.gmra.mxu0 %v7645
        %v7728 = vpop.f32.mrf.mxu0
        %v7729 = vadd.f32 0.0, %v7728
        %v7730 = vpop.f32.mrf.mxu0
        %v7731 = vadd.f32 0.0, %v7730
        %7732 = vmatmul.bf16.gmra.mxu0 %v7648
        %v7733 = vpop.f32.mrf.mxu0
        %v7734 = vadd.f32 0.0, %v7733
        %v7735 = vpop.f32.mrf.mxu0
        %v7736 = vadd.f32 0.0, %v7735
        %7737 = vmatmul.bf16.gmra.mxu0 %v7651
        %v7738 = vpop.f32.mrf.mxu0
        %v7739 = vadd.f32 0.0, %v7738
        %v7740 = vpop.f32.mrf.mxu0
        %v7741 = vadd.f32 0.0, %v7740
        %7742 = vmatmul.bf16.gmra.mxu0 %v7654
        %v7743 = vpop.f32.mrf.mxu0
        %v7744 = vadd.f32 0.0, %v7743
        %v7745 = vpop.f32.mrf.mxu0
        %v7746 = vadd.f32 0.0, %v7745
        %7747 = vdwg.mxu0
        %v7748 = vadd.f32 %v7047, %v7669
        %v7749 = vadd.f32 %v7049, %v7671
        %v7750 = vadd.f32 %v7052, %v7674
        %v7751 = vadd.f32 %v7054, %v7676
        %v7752 = vadd.f32 %v7057, %v7679
        %v7753 = vadd.f32 %v7059, %v7681
        %v7754 = vadd.f32 %v7062, %v7684
        %v7755 = vadd.f32 %v7064, %v7686
        %v7756 = vadd.f32 %v7067, %v7689
        %v7757 = vadd.f32 %v7069, %v7691
        %v7758 = vadd.f32 %v7072, %v7694
        %v7759 = vadd.f32 %v7074, %v7696
        %v7760 = vadd.f32 %v7077, %v7699
        %v7761 = vadd.f32 %v7079, %v7701
        %v7762 = vadd.f32 %v7082, %v7704
        %v7763 = vadd.f32 %v7084, %v7706
        %v7764 = vadd.f32 %v7087, %v7709
        %v7765 = vadd.f32 %v7089, %v7711
        %v7766 = vadd.f32 %v7092, %v7714
        %v7767 = vadd.f32 %v7094, %v7716
        %v7768 = vadd.f32 %v7097, %v7719
        %v7769 = vadd.f32 %v7099, %v7721
        %v7770 = vadd.f32 %v7102, %v7724
        %v7771 = vadd.f32 %v7104, %v7726
        %v7772 = vadd.f32 %v7107, %v7729
        %v7773 = vadd.f32 %v7109, %v7731
        %v7774 = vadd.f32 %v7112, %v7734
        %v7775 = vadd.f32 %v7114, %v7736
        %v7776 = vadd.f32 %v7117, %v7739
        %v7777 = vadd.f32 %v7119, %v7741
        %v7778 = vadd.f32 %v7122, %v7744
        %v7779 = vadd.f32 %v7124, %v7746
        %v7780 = vld [vmem:[%s5132] sm:$0xe]
        %v7781 = vld [vmem:[%s5132 + $0xc] sm:$0xe]
        %v7782 = vld [vmem:[%s5132 + $0x18] sm:$0xe]
        %v7783 = vld [vmem:[%s5132 + $0x24] sm:$0xe]
        %v7784 = vld [vmem:[%s5132 + $0x30] sm:$0xe]
        %v7785 = vld [vmem:[%s5132 + $0x3c] sm:$0xe]
        %v7786 = vld [vmem:[%s5132 + $0x48] sm:$0xe]
        %v7787 = vld [vmem:[%s5132 + $0x54] sm:$0xe]
        %v7788 = vld [vmem:[%s5132 + $0x60] sm:$0xe]
        %v7789 = vld [vmem:[%s5132 + $0x6c] sm:$0xe]
        %v7790 = vld [vmem:[%s5132 + $0x78] sm:$0xe]
        %v7791 = vld [vmem:[%s5132 + $0x84] sm:$0xe]
        %v7792 = vld [vmem:[%s5132 + $0x90] sm:$0xe]
        %v7793 = vld [vmem:[%s5132 + $0x9c] sm:$0xe]
        %v7794 = vld [vmem:[%s5132 + $0xa8] sm:$0xe]
        %v7795 = vld [vmem:[%s5132 + $0xb4] sm:$0xe]
        %v7844 = vrot.slane %v7780, 5
        %v7845 = vrot.slane %v7844, 4
        %v7846 = vrot.slane %v7127, 5
        %v7847 = vsel %vm2549, %v7845, %v7846
        %v7848 = vrot.slane %v7846, 4
        %v7849 = vrot.slane %v7128, 5
        %v7850 = vsel %vm2549, %v7848, %v7849
        %v7851 = vrot.slane %v7781, 5
        %v7852 = vrot.slane %v7851, 4
        %v7853 = vrot.slane %v7130, 5
        %v7854 = vsel %vm2549, %v7852, %v7853
        %v7855 = vrot.slane %v7853, 4
        %v7856 = vrot.slane %v7131, 5
        %v7857 = vsel %vm2549, %v7855, %v7856
        %v7858 = vrot.slane %v7782, 5
        %v7859 = vrot.slane %v7858, 4
        %v7860 = vrot.slane %v7133, 5
        %v7861 = vsel %vm2549, %v7859, %v7860
        %v7862 = vrot.slane %v7860, 4
        %v7863 = vrot.slane %v7134, 5
        %v7864 = vsel %vm2549, %v7862, %v7863
        %v7865 = vrot.slane %v7783, 5
        %v7866 = vrot.slane %v7865, 4
        %v7867 = vrot.slane %v7136, 5
        %v7868 = vsel %vm2549, %v7866, %v7867
        %v7869 = vrot.slane %v7867, 4
        %v7870 = vrot.slane %v7137, 5
        %v7871 = vsel %vm2549, %v7869, %v7870
        %v7872 = vrot.slane %v7784, 5
        %v7873 = vrot.slane %v7872, 4
        %v7874 = vrot.slane %v7139, 5
        %v7875 = vsel %vm2549, %v7873, %v7874
        %v7876 = vrot.slane %v7874, 4
        %v7877 = vrot.slane %v7140, 5
        %v7878 = vsel %vm2549, %v7876, %v7877
        %v7879 = vrot.slane %v7785, 5
        %v7880 = vrot.slane %v7879, 4
        %v7881 = vrot.slane %v7142, 5
        %v7882 = vsel %vm2549, %v7880, %v7881
        %v7883 = vrot.slane %v7881, 4
        %v7884 = vrot.slane %v7143, 5
        %v7885 = vsel %vm2549, %v7883, %v7884
        %v7886 = vrot.slane %v7786, 5
        %v7887 = vrot.slane %v7886, 4
        %v7888 = vrot.slane %v7145, 5
        %v7889 = vsel %vm2549, %v7887, %v7888
        %v7890 = vrot.slane %v7888, 4
        %v7891 = vrot.slane %v7146, 5
        %v7892 = vsel %vm2549, %v7890, %v7891
        %v7893 = vrot.slane %v7787, 5
        %v7894 = vrot.slane %v7893, 4
        %v7895 = vrot.slane %v7148, 5
        %v7896 = vsel %vm2549, %v7894, %v7895
        %v7897 = vrot.slane %v7895, 4
        %v7898 = vrot.slane %v7149, 5
        %v7899 = vsel %vm2549, %v7897, %v7898
        %v7900 = vrot.slane %v7788, 5
        %v7901 = vrot.slane %v7900, 4
        %v7902 = vrot.slane %v7151, 5
        %v7903 = vsel %vm2549, %v7901, %v7902
        %v7904 = vrot.slane %v7902, 4
        %v7905 = vrot.slane %v7152, 5
        %v7906 = vsel %vm2549, %v7904, %v7905
        %v7907 = vrot.slane %v7789, 5
        %v7908 = vrot.slane %v7907, 4
        %v7909 = vrot.slane %v7154, 5
        %v7910 = vsel %vm2549, %v7908, %v7909
        %v7911 = vrot.slane %v7909, 4
        %v7912 = vrot.slane %v7155, 5
        %v7913 = vsel %vm2549, %v7911, %v7912
        %v7914 = vrot.slane %v7790, 5
        %v7915 = vrot.slane %v7914, 4
        %v7916 = vrot.slane %v7157, 5
        %v7917 = vsel %vm2549, %v7915, %v7916
        %v7918 = vrot.slane %v7916, 4
        %v7919 = vrot.slane %v7158, 5
        %v7920 = vsel %vm2549, %v7918, %v7919
        %v7921 = vrot.slane %v7791, 5
        %v7922 = vrot.slane %v7921, 4
        %v7923 = vrot.slane %v7160, 5
        %v7924 = vsel %vm2549, %v7922, %v7923
        %v7925 = vrot.slane %v7923, 4
        %v7926 = vrot.slane %v7161, 5
        %v7927 = vsel %vm2549, %v7925, %v7926
        %v7928 = vrot.slane %v7792, 5
        %v7929 = vrot.slane %v7928, 4
        %v7930 = vrot.slane %v7163, 5
        %v7931 = vsel %vm2549, %v7929, %v7930
        %v7932 = vrot.slane %v7930, 4
        %v7933 = vrot.slane %v7164, 5
        %v7934 = vsel %vm2549, %v7932, %v7933
        %v7935 = vrot.slane %v7793, 5
        %v7936 = vrot.slane %v7935, 4
        %v7937 = vrot.slane %v7166, 5
        %v7938 = vsel %vm2549, %v7936, %v7937
        %v7939 = vrot.slane %v7937, 4
        %v7940 = vrot.slane %v7167, 5
        %v7941 = vsel %vm2549, %v7939, %v7940
        %v7942 = vrot.slane %v7794, 5
        %v7943 = vrot.slane %v7942, 4
        %v7944 = vrot.slane %v7169, 5
        %v7945 = vsel %vm2549, %v7943, %v7944
        %v7946 = vrot.slane %v7944, 4
        %v7947 = vrot.slane %v7170, 5
        %v7948 = vsel %vm2549, %v7946, %v7947
        %v7949 = vrot.slane %v7795, 5
        %v7950 = vrot.slane %v7949, 4
        %v7951 = vrot.slane %v7172, 5
        %v7952 = vsel %vm2549, %v7950, %v7951
        %v7953 = vrot.slane %v7951, 4
        %v7954 = vrot.slane %v7173, 5
        %v7955 = vsel %vm2549, %v7953, %v7954
        %s7956 = scalar_lea.vmem %s1, 60
        %v7957 = vld [vmem:[%s7956] sm:$0xf]
        %v7958 = vunpack.c.l.b16 %v7847
        %v7959 = vunpack.c.l.b16 %v7850
        %v7960 = vunpack.c.l.b16 %v7854
        %v7961 = vunpack.c.l.b16 %v7857
        %v7962 = vunpack.c.l.b16 %v7861
        %v7963 = vunpack.c.l.b16 %v7864
        %v7964 = vunpack.c.l.b16 %v7868
        %v7965 = vunpack.c.l.b16 %v7871
        %v7966 = vunpack.c.l.b16 %v7875
        %v7967 = vunpack.c.l.b16 %v7878
        %v7968 = vunpack.c.l.b16 %v7882
        %v7969 = vunpack.c.l.b16 %v7885
        %v7970 = vunpack.c.l.b16 %v7889
        %v7971 = vunpack.c.l.b16 %v7892
        %v7972 = vunpack.c.l.b16 %v7896
        %v7973 = vunpack.c.l.b16 %v7899
        %v7974 = vunpack.c.l.b16 %v7903
        %v7975 = vunpack.c.l.b16 %v7906
        %v7976 = vunpack.c.l.b16 %v7910
        %v7977 = vunpack.c.l.b16 %v7913
        %v7978 = vunpack.c.l.b16 %v7917
        %v7979 = vunpack.c.l.b16 %v7920
        %v7980 = vunpack.c.l.b16 %v7924
        %v7981 = vunpack.c.l.b16 %v7927
        %v7982 = vunpack.c.l.b16 %v7931
        %v7983 = vunpack.c.l.b16 %v7934
        %v7984 = vunpack.c.l.b16 %v7938
        %v7985 = vunpack.c.l.b16 %v7941
        %v7986 = vunpack.c.l.b16 %v7945
        %v7987 = vunpack.c.l.b16 %v7948
        %v7988 = vunpack.c.l.b16 %v7952
        %v7989 = vunpack.c.l.b16 %v7955
        %v7990 = vpack.c.b16 %v7959, %v7958
        %v7991 = vpack.c.b16 %v7961, %v7960
        %v7992 = vpack.c.b16 %v7963, %v7962
        %v7993 = vpack.c.b16 %v7965, %v7964
        %v7994 = vpack.c.b16 %v7967, %v7966
        %v7995 = vpack.c.b16 %v7969, %v7968
        %v7996 = vpack.c.b16 %v7971, %v7970
        %v7997 = vpack.c.b16 %v7973, %v7972
        %v7998 = vpack.c.b16 %v7975, %v7974
        %v7999 = vpack.c.b16 %v7977, %v7976
        %v8000 = vpack.c.b16 %v7979, %v7978
        %v8001 = vpack.c.b16 %v7981, %v7980
        %v8002 = vpack.c.b16 %v7983, %v7982
        %v8003 = vpack.c.b16 %v7985, %v7984
        %v8004 = vpack.c.b16 %v7987, %v7986
        %v8005 = vpack.c.b16 %v7989, %v7988
        %v8007 = vsel %vm676, %v7990, 0
        %v8010 = vsel %vm676, %v7991, 0
        %v8013 = vsel %vm676, %v7992, 0
        %v8016 = vsel %vm676, %v7993, 0
        %v8019 = vsel %vm676, %v7994, 0
        %v8022 = vsel %vm676, %v7995, 0
        %v8025 = vsel %vm676, %v7996, 0
        %v8028 = vsel %vm676, %v7997, 0
        %v8031 = vsel %vm676, %v7998, 0
        %v8034 = vsel %vm676, %v7999, 0
        %v8037 = vsel %vm676, %v8000, 0
        %v8040 = vsel %vm676, %v8001, 0
        %v8043 = vsel %vm676, %v8002, 0
        %v8046 = vsel %vm676, %v8003, 0
        %v8049 = vsel %vm676, %v8004, 0
        %v8052 = vsel %vm676, %v8005, 0
        %v8055 = vsel %vm725, %v7957, 0
        %8057 = vmatpush.bf16.msra.mxu0 0
        %8058 = vmatpush.bf16.msra.mxu0 0
        %8059 = vmatpush.bf16.msra.mxu0 0
        %8060 = vmatpush.bf16.msra.mxu0 0
        %8061 = vmatpush.bf16.msra.mxu0 0
        %8062 = vmatpush.bf16.msra.mxu0 0
        %8063 = vmatpush.bf16.msra.mxu0 0
        %8064 = vmatpush.bf16.msra.mxu0 %v8055
        %8065 = vmatmul.bf16.gmra.mxu0 %v8007
        %v8066 = vpop.f32.mrf.mxu0
        %v8067 = vadd.f32 0.0, %v8066
        %v8068 = vpop.f32.mrf.mxu0
        %v8069 = vadd.f32 0.0, %v8068
        %8070 = vmatmul.bf16.gmra.mxu0 %v8010
        %v8071 = vpop.f32.mrf.mxu0
        %v8072 = vadd.f32 0.0, %v8071
        %v8073 = vpop.f32.mrf.mxu0
        %v8074 = vadd.f32 0.0, %v8073
        %8075 = vmatmul.bf16.gmra.mxu0 %v8013
        %v8076 = vpop.f32.mrf.mxu0
        %v8077 = vadd.f32 0.0, %v8076
        %v8078 = vpop.f32.mrf.mxu0
        %v8079 = vadd.f32 0.0, %v8078
        %8080 = vmatmul.bf16.gmra.mxu0 %v8016
        %v8081 = vpop.f32.mrf.mxu0
        %v8082 = vadd.f32 0.0, %v8081
        %v8083 = vpop.f32.mrf.mxu0
        %v8084 = vadd.f32 0.0, %v8083
        %8085 = vmatmul.bf16.gmra.mxu0 %v8019
        %v8086 = vpop.f32.mrf.mxu0
        %v8087 = vadd.f32 0.0, %v8086
        %v8088 = vpop.f32.mrf.mxu0
        %v8089 = vadd.f32 0.0, %v8088
        %8090 = vmatmul.bf16.gmra.mxu0 %v8022
        %v8091 = vpop.f32.mrf.mxu0
        %v8092 = vadd.f32 0.0, %v8091
        %v8093 = vpop.f32.mrf.mxu0
        %v8094 = vadd.f32 0.0, %v8093
        %8095 = vmatmul.bf16.gmra.mxu0 %v8025
        %v8096 = vpop.f32.mrf.mxu0
        %v8097 = vadd.f32 0.0, %v8096
        %v8098 = vpop.f32.mrf.mxu0
        %v8099 = vadd.f32 0.0, %v8098
        %8100 = vmatmul.bf16.gmra.mxu0 %v8028
        %v8101 = vpop.f32.mrf.mxu0
        %v8102 = vadd.f32 0.0, %v8101
        %v8103 = vpop.f32.mrf.mxu0
        %v8104 = vadd.f32 0.0, %v8103
        %8105 = vmatmul.bf16.gmra.mxu0 %v8031
        %v8106 = vpop.f32.mrf.mxu0
        %v8107 = vadd.f32 0.0, %v8106
        %v8108 = vpop.f32.mrf.mxu0
        %v8109 = vadd.f32 0.0, %v8108
        %8110 = vmatmul.bf16.gmra.mxu0 %v8034
        %v8111 = vpop.f32.mrf.mxu0
        %v8112 = vadd.f32 0.0, %v8111
        %v8113 = vpop.f32.mrf.mxu0
        %v8114 = vadd.f32 0.0, %v8113
        %8115 = vmatmul.bf16.gmra.mxu0 %v8037
        %v8116 = vpop.f32.mrf.mxu0
        %v8117 = vadd.f32 0.0, %v8116
        %v8118 = vpop.f32.mrf.mxu0
        %v8119 = vadd.f32 0.0, %v8118
        %8120 = vmatmul.bf16.gmra.mxu0 %v8040
        %v8121 = vpop.f32.mrf.mxu0
        %v8122 = vadd.f32 0.0, %v8121
        %v8123 = vpop.f32.mrf.mxu0
        %v8124 = vadd.f32 0.0, %v8123
        %8125 = vmatmul.bf16.gmra.mxu0 %v8043
        %v8126 = vpop.f32.mrf.mxu0
        %v8127 = vadd.f32 0.0, %v8126
        %v8128 = vpop.f32.mrf.mxu0
        %v8129 = vadd.f32 0.0, %v8128
        %8130 = vmatmul.bf16.gmra.mxu0 %v8046
        %v8131 = vpop.f32.mrf.mxu0
        %v8132 = vadd.f32 0.0, %v8131
        %v8133 = vpop.f32.mrf.mxu0
        %v8134 = vadd.f32 0.0, %v8133
        %8135 = vmatmul.bf16.gmra.mxu0 %v8049
        %v8136 = vpop.f32.mrf.mxu0
        %v8137 = vadd.f32 0.0, %v8136
        %v8138 = vpop.f32.mrf.mxu0
        %v8139 = vadd.f32 0.0, %v8138
        %8140 = vmatmul.bf16.gmra.mxu0 %v8052
        %v8141 = vpop.f32.mrf.mxu0
        %v8142 = vadd.f32 0.0, %v8141
        %v8143 = vpop.f32.mrf.mxu0
        %v8144 = vadd.f32 0.0, %v8143
        %8145 = vdwg.mxu0
        %v8146 = vadd.f32 %v7748, %v8067
        %v8147 = vadd.f32 %v7749, %v8069
        %v8148 = vadd.f32 %v7750, %v8072
        %v8149 = vadd.f32 %v7751, %v8074
        %v8150 = vadd.f32 %v7752, %v8077
        %v8151 = vadd.f32 %v7753, %v8079
        %v8152 = vadd.f32 %v7754, %v8082
        %v8153 = vadd.f32 %v7755, %v8084
        %v8154 = vadd.f32 %v7756, %v8087
        %v8155 = vadd.f32 %v7757, %v8089
        %v8156 = vadd.f32 %v7758, %v8092
        %v8157 = vadd.f32 %v7759, %v8094
        %v8158 = vadd.f32 %v7760, %v8097
        %v8159 = vadd.f32 %v7761, %v8099
        %v8160 = vadd.f32 %v7762, %v8102
        %v8161 = vadd.f32 %v7763, %v8104
        %v8162 = vadd.f32 %v7764, %v8107
        %v8163 = vadd.f32 %v7765, %v8109
        %v8164 = vadd.f32 %v7766, %v8112
        %v8165 = vadd.f32 %v7767, %v8114
        %v8166 = vadd.f32 %v7768, %v8117
        %v8167 = vadd.f32 %v7769, %v8119
        %v8168 = vadd.f32 %v7770, %v8122
        %v8169 = vadd.f32 %v7771, %v8124
        %v8170 = vadd.f32 %v7772, %v8127
        %v8171 = vadd.f32 %v7773, %v8129
        %v8172 = vadd.f32 %v7774, %v8132
        %v8173 = vadd.f32 %v7775, %v8134
        %v8174 = vadd.f32 %v7776, %v8137
        %v8175 = vadd.f32 %v7777, %v8139
        %v8176 = vadd.f32 %v7778, %v8142
        %v8177 = vadd.f32 %v7779, %v8144
        %v8178 = vadd.f32 %v8146, %v1983
        %v8179 = vadd.f32 %v8147, %v1983
        %v8180 = vadd.f32 %v8148, %v1983
        %v8181 = vadd.f32 %v8149, %v1983
        %v8182 = vadd.f32 %v8150, %v1983
        %v8183 = vadd.f32 %v8151, %v1983
        %v8184 = vadd.f32 %v8152, %v1983
        %v8185 = vadd.f32 %v8153, %v1983
        %v8186 = vadd.f32 %v8154, %v1983
        %v8187 = vadd.f32 %v8155, %v1983
        %v8188 = vadd.f32 %v8156, %v1983
        %v8189 = vadd.f32 %v8157, %v1983
        %v8190 = vadd.f32 %v8158, %v1983
        %v8191 = vadd.f32 %v8159, %v1983
        %v8192 = vadd.f32 %v8160, %v1983
        %v8193 = vadd.f32 %v8161, %v1983
        %v8194 = vadd.f32 %v8162, %v1983
        %v8195 = vadd.f32 %v8163, %v1983
        %v8196 = vadd.f32 %v8164, %v1983
        %v8197 = vadd.f32 %v8165, %v1983
        %v8198 = vadd.f32 %v8166, %v1983
        %v8199 = vadd.f32 %v8167, %v1983
        %v8200 = vadd.f32 %v8168, %v1983
        %v8201 = vadd.f32 %v8169, %v1983
        %v8202 = vadd.f32 %v8170, %v1983
        %v8203 = vadd.f32 %v8171, %v1983
        %v8204 = vadd.f32 %v8172, %v1983
        %v8205 = vadd.f32 %v8173, %v1983
        %v8206 = vadd.f32 %v8174, %v1983
        %v8207 = vadd.f32 %v8175, %v1983
        %v8208 = vadd.f32 %v8176, %v1983
        %v8209 = vadd.f32 %v8177, %v1983
        %8242 = vrot.lane.b32.xlu0 %v8178, 8
        %v8243 = vpop.permute.xlu0 %8242
        %8244 = vrot.lane.b32.xlu0 %v8179, 8
        %v8245 = vpop.permute.xlu0 %8244
        %8246 = vrot.lane.b32.xlu0 %v8180, 8
        %v8247 = vpop.permute.xlu0 %8246
        %8248 = vrot.lane.b32.xlu0 %v8181, 8
        %v8249 = vpop.permute.xlu0 %8248
        %8250 = vrot.lane.b32.xlu0 %v8182, 8
        %v8251 = vpop.permute.xlu0 %8250
        %8252 = vrot.lane.b32.xlu0 %v8183, 8
        %v8253 = vpop.permute.xlu0 %8252
        %8254 = vrot.lane.b32.xlu0 %v8184, 8
        %v8255 = vpop.permute.xlu0 %8254
        %8256 = vrot.lane.b32.xlu0 %v8185, 8
        %v8257 = vpop.permute.xlu0 %8256
        %8258 = vrot.lane.b32.xlu0 %v8186, 8
        %v8259 = vpop.permute.xlu0 %8258
        %8260 = vrot.lane.b32.xlu0 %v8187, 8
        %v8261 = vpop.permute.xlu0 %8260
        %8262 = vrot.lane.b32.xlu0 %v8188, 8
        %v8263 = vpop.permute.xlu0 %8262
        %8264 = vrot.lane.b32.xlu0 %v8189, 8
        %v8265 = vpop.permute.xlu0 %8264
        %8266 = vrot.lane.b32.xlu0 %v8190, 8
        %v8267 = vpop.permute.xlu0 %8266
        %8268 = vrot.lane.b32.xlu0 %v8191, 8
        %v8269 = vpop.permute.xlu0 %8268
        %8270 = vrot.lane.b32.xlu0 %v8192, 8
        %v8271 = vpop.permute.xlu0 %8270
        %8272 = vrot.lane.b32.xlu0 %v8193, 8
        %v8273 = vpop.permute.xlu0 %8272
        %8274 = vrot.lane.b32.xlu0 %v8194, 8
        %v8275 = vpop.permute.xlu0 %8274
        %8276 = vrot.lane.b32.xlu0 %v8195, 8
        %v8277 = vpop.permute.xlu0 %8276
        %8278 = vrot.lane.b32.xlu0 %v8196, 8
        %v8279 = vpop.permute.xlu0 %8278
        %8280 = vrot.lane.b32.xlu0 %v8197, 8
        %v8281 = vpop.permute.xlu0 %8280
        %8282 = vrot.lane.b32.xlu0 %v8198, 8
        %v8283 = vpop.permute.xlu0 %8282
        %8284 = vrot.lane.b32.xlu0 %v8199, 8
        %v8285 = vpop.permute.xlu0 %8284
        %8286 = vrot.lane.b32.xlu0 %v8200, 8
        %v8287 = vpop.permute.xlu0 %8286
        %8288 = vrot.lane.b32.xlu0 %v8201, 8
        %v8289 = vpop.permute.xlu0 %8288
        %8290 = vrot.lane.b32.xlu0 %v8202, 8
        %v8291 = vpop.permute.xlu0 %8290
        %8292 = vrot.lane.b32.xlu0 %v8203, 8
        %v8293 = vpop.permute.xlu0 %8292
        %8294 = vrot.lane.b32.xlu0 %v8204, 8
        %v8295 = vpop.permute.xlu0 %8294
        %8296 = vrot.lane.b32.xlu0 %v8205, 8
        %v8297 = vpop.permute.xlu0 %8296
        %8298 = vrot.lane.b32.xlu0 %v8206, 8
        %v8299 = vpop.permute.xlu0 %8298
        %8300 = vrot.lane.b32.xlu0 %v8207, 8
        %v8301 = vpop.permute.xlu0 %8300
        %8302 = vrot.lane.b32.xlu0 %v8208, 8
        %v8303 = vpop.permute.xlu0 %8302
        %8304 = vrot.lane.b32.xlu0 %v8209, 8
        %v8305 = vpop.permute.xlu0 %8304
        %8338 = vst.msk [vmem:[%s6105] sm:$0xff] %vm4252, %v8243
        %8339 = vst.msk [vmem:[%s6105 + $0x8] sm:$0xff] %vm4252, %v8245
        %8340 = vst.msk [vmem:[%s6105 + $0x20] sm:$0xff] %vm4252, %v8247
        %8341 = vst.msk [vmem:[%s6105 + $0x28] sm:$0xff] %vm4252, %v8249
        %8342 = vst.msk [vmem:[%s6105 + $0x40] sm:$0xff] %vm4252, %v8251
        %8343 = vst.msk [vmem:[%s6105 + $0x48] sm:$0xff] %vm4252, %v8253
        %8344 = vst.msk [vmem:[%s6105 + $0x60] sm:$0xff] %vm4252, %v8255
        %8345 = vst.msk [vmem:[%s6105 + $0x68] sm:$0xff] %vm4252, %v8257
        %8346 = vst.msk [vmem:[%s6105 + $0x80] sm:$0xff] %vm4252, %v8259
        %8347 = vst.msk [vmem:[%s6105 + $0x88] sm:$0xff] %vm4252, %v8261
        %8348 = vst.msk [vmem:[%s6105 + $0xa0] sm:$0xff] %vm4252, %v8263
        %8349 = vst.msk [vmem:[%s6105 + $0xa8] sm:$0xff] %vm4252, %v8265
        %8350 = vst.msk [vmem:[%s6105 + $0xc0] sm:$0xff] %vm4252, %v8267
        %8351 = vst.msk [vmem:[%s6105 + $0xc8] sm:$0xff] %vm4252, %v8269
        %8352 = vst.msk [vmem:[%s6105 + $0xe0] sm:$0xff] %vm4252, %v8271
        %8353 = vst.msk [vmem:[%s6105 + $0xe8] sm:$0xff] %vm4252, %v8273
        %8354 = vst.msk [vmem:[%s6105 + $0x100] sm:$0xff] %vm4252, %v8275
        %8355 = vst.msk [vmem:[%s6105 + $0x108] sm:$0xff] %vm4252, %v8277
        %8356 = vst.msk [vmem:[%s6105 + $0x120] sm:$0xff] %vm4252, %v8279
        %8357 = vst.msk [vmem:[%s6105 + $0x128] sm:$0xff] %vm4252, %v8281
        %8358 = vst.msk [vmem:[%s6105 + $0x140] sm:$0xff] %vm4252, %v8283
        %8359 = vst.msk [vmem:[%s6105 + $0x148] sm:$0xff] %vm4252, %v8285
        %8360 = vst.msk [vmem:[%s6105 + $0x160] sm:$0xff] %vm4252, %v8287
        %8361 = vst.msk [vmem:[%s6105 + $0x168] sm:$0xff] %vm4252, %v8289
        %8362 = vst.msk [vmem:[%s6105 + $0x180] sm:$0xff] %vm4252, %v8291
        %8363 = vst.msk [vmem:[%s6105 + $0x188] sm:$0xff] %vm4252, %v8293
        %8364 = vst.msk [vmem:[%s6105 + $0x1a0] sm:$0xff] %vm4252, %v8295
        %8365 = vst.msk [vmem:[%s6105 + $0x1a8] sm:$0xff] %vm4252, %v8297
        %8366 = vst.msk [vmem:[%s6105 + $0x1c0] sm:$0xff] %vm4252, %v8299
        %8367 = vst.msk [vmem:[%s6105 + $0x1c8] sm:$0xff] %vm4252, %v8301
        %8368 = vst.msk [vmem:[%s6105 + $0x1e0] sm:$0xff] %vm4252, %v8303
        %8369 = vst.msk [vmem:[%s6105 + $0x1e8] sm:$0xff] %vm4252, %v8305
        %s8370 = sand.u32 %s107, 1
        %s8371 = scalar_lea.sflag [#allocation3], %s8370
        %s8372 = sand.u32 %s107, 1
        %s8373 = smul.addr %s8372, 512
        %s8374 = scalar_lea.vmem [#allocation2], %s8373
        // Predicated region
        $region33: #{tpu_custom_call.1} parent=31 // pred_check
          %p8375 = pneg %p117
        $region34: #{tpu_custom_call.1} parent=31 // pred_check_branch
          %8377 = sbr.rel (%p8375) target = $region36
        $region35: #{tpu_custom_call.1} parent=31 // pred_region
          %s8378 = smul.u32 16, %s22
          %8380 = vsyncadd %s8371, 0
          %s8381 = smul.addr %s8378, 4
          %s8382 = smul.addr %s21, 64
          %s8383 = sadd.s32 %s8381, %s8382
          %s8384 = smul.addr %s8383, 8
          %s8385 = scalar_lea.hbm %s3, %s8384
          %s8386 = sshll.u32 %s8374, 4
          %s8387 = int_to_ptr.vmem [resolvable:$true] %s8386
          %s8388 = sshll.u32 %s8385, 4
          %s8389 = int_to_ptr.hbm [resolvable:$true] %s8388
          %8394 = dma.vmem_to_hbm [thread:$0]  %s8387, 8192, %s8389, %s8371, 128, 128, 8
        $region36: #{tpu_custom_call.1} parent=31 // pred_fallthru
          _
      $region32: #{tpu_custom_call.1} parent=5 // pred_fallthru
        _
      %p8395 = scmp.le.s32.totalorder 2, %s12
      // Predicated region
      $region37: #{tpu_custom_call.1} parent=5 // pred_check
        %p8396 = pneg %p8395
      $region38: #{tpu_custom_call.1} parent=5 // pred_check_branch
        %8398 = sbr.rel (%p8396) target = $region40
      $region39: #{tpu_custom_call.1} parent=5 // pred_region
        %s8399 = ssub.s32 %s12, 2
        // Predicated region
        $region41: #{tpu_custom_call.1} parent=39 // pred_check
          %p8400 = pneg %p123
        $region42: #{tpu_custom_call.1} parent=39 // pred_check_branch
          %8402 = sbr.rel (%p8400) target = $region44
        $region43: #{tpu_custom_call.1} parent=39 // pred_region
          %s8403 = sand.u32 %s108, 1
          %s8404 = scalar_lea.sflag [#allocation3], %s8403
          %s8405 = sand.u32 %s108, 1
          %s8406 = smul.addr %s8405, 512
          %s8407 = scalar_lea.vmem [#allocation2], %s8406
          %8409 = dma.done %s8404, 8192
        $region44: #{tpu_custom_call.1} parent=39 // pred_fallthru
          _
      $region40: #{tpu_custom_call.1} parent=5 // pred_fallthru
        _
    $region6: #{tpu_custom_call.1} parent=1 // loop_footer
      %s16 = sadd.s32 1, %s12
    $region7: #{tpu_custom_call.1} parent=1 // loop_footer_branch
      %11 = sbr.rel target = $region3
    $region8: #{tpu_custom_call.1} parent=1 // loop_exit
      _
    %8410 = vsyncpa [#allocation3], 1
    %s8411 = scalar_lea.sflag [#allocation3], 1
    %8412 = vsyncpa %s8411, 1

</llo_original>
